<compile_context>
chip_gen: v5e
topology: v5e:2x2
jax: 0.10.0
libtpu: 0.0.40
codegen_flags: <defaults>
</compile_context>

<pallas_src>
import functools
import numpy as np
import jax
import jax.numpy as jnp
from jax import lax
from jax.experimental import pallas as pl
from jax.experimental.pallas import tpu as pltpu


def _reduction_b_kernel(W, rows_a, rows_b, rows_m,
                        anchors_mp, anchors_s2, anchors_b4, c2, c3,
                        x_ref, wf_ref, bf_ref, wbd_ref, bbd_ref, w4c_ref, b4c_ref,
                        mp_ref, b2_ref, b3_ref, b4_ref,
                        y_scr, a_scr, b4_scr, mp_scr):
    tb = x_ref.shape[0]                                   # images per grid step
    taps = tuple(ky * W + kx for ky in range(3) for kx in range(3))

    for img in range(tb):                                  # static loop
        x = x_ref[img]                                     # (HW, 448) f32

        # ---- fused 1x1 convs of branches 2/3/4: one (HW,448)@(448,384) matmul
        y = jnp.dot(x.astype(jnp.bfloat16), wf_ref[...],
                    preferred_element_type=jnp.float32) + bf_ref[...]
        y_scr[...] = y.astype(jnp.bfloat16)

        # ---- fused block-diagonal 3x3 stage (b2 3x3/s2 | b3 3x3/s2 | b4 first 3x3/s1)
        #      9 shifted-window matmuls over anchors 0..rows_a-1 (strides resolved
        #      later by selecting the right anchor rows; VALID => no masks needed).
        acc_a = jnp.zeros((rows_a, wbd_ref.shape[-1]), jnp.float32)
        for t, off in enumerate(taps):
            acc_a = acc_a + jnp.dot(y_scr[pl.ds(off, rows_a), :], wbd_ref[t],
                                    preferred_element_type=jnp.float32)
        a_scr[...] = acc_a + bbd_ref[...]

        # ---- branch4 second 3x3 (stride 1) on its stage-1 lane slab
        acc_b = jnp.zeros((rows_b, w4c_ref.shape[-1]), jnp.float32)
        for t, off in enumerate(taps):
            win = a_scr[pl.ds(off, rows_b), c2 + c3:].astype(jnp.bfloat16)
            acc_b = acc_b + jnp.dot(win, w4c_ref[t],
                                    preferred_element_type=jnp.float32)
        b4_scr[...] = acc_b + b4c_ref[...]

        # ---- branch1: MaxPool2d(3) (stride 3) = elementwise max over 9 shifted windows
        mp = x_ref[img, pl.ds(0, rows_m), :]
        for off in taps[1:]:
            mp = jnp.maximum(mp, x_ref[img, pl.ds(off, rows_m), :])
        mp_scr[...] = mp

        # ---- select each branch's valid output anchors (this is where the different
        #      strides show up) and store per output pixel
        for r in range(len(anchors_mp)):
            a1, a2, a4 = anchors_mp[r], anchors_s2[r], anchors_b4[r]
            mp_ref[img, pl.ds(r, 1), :] = mp_scr[pl.ds(a1, 1), :]
            b2_ref[img, pl.ds(r, 1), :] = a_scr[pl.ds(a2, 1), 0:c2]
            b3_ref[img, pl.ds(r, 1), :] = a_scr[pl.ds(a2, 1), c2:c2 + c3]
            b4_ref[img, pl.ds(r, 1), :] = b4_scr[pl.ds(a4, 1), :]


def _const_spec(a):
    nd = a.ndim
    return pl.BlockSpec(a.shape, lambda n, _nd=nd: (0,) * _nd)


def _images_per_step(n):
    # Batch images per grid step to amortize per-step overhead, but keep >= 2 grid
    # steps when possible so both v7x TensorCores get work.
    best = 1
    for d in range(1, n + 1):
        if n % d == 0 and n // d >= 2:
            best = d
    return best


def reduction_b(x_nchw, params):
    (w2a, b2a, w2b, b2b, w3a, b3a, w3b, b3b,
     w4a, b4a, w4b, b4b, w4c, b4c) = params

    N, C, H, W = x_nchw.shape
    assert C == w2a.shape[1] == 448
    Ho, Wo = H - 4, W - 4
    # torch.cat requires all four branches to produce the same spatial size
    assert Ho >= 1 and (H - 3) // 3 + 1 == Ho and (H - 3) // 2 + 1 == Ho
    assert Wo >= 1 and (W - 3) // 3 + 1 == Wo and (W - 3) // 2 + 1 == Wo

    HW, n_out = H * W, Ho * Wo
    c1, c2, c3, c4 = C, w2b.shape[0], w3b.shape[0], w4c.shape[0]
    cf = w2a.shape[0] + w3a.shape[0] + w4a.shape[0]          # 384 fused 1x1 channels

    # flattened-row anchors (top-left corners) of each branch's output pixels
    anchors_mp = tuple(3 * oy * W + 3 * ox for oy in range(Ho) for ox in range(Wo))
    anchors_s2 = tuple(2 * oy * W + 2 * ox for oy in range(Ho) for ox in range(Wo))
    anchors_b4 = tuple(oy * W + ox for oy in range(Ho) for ox in range(Wo))
    rows_a = max(max(anchors_s2), (Ho + 1) * W + (Wo + 1)) + 1   # block-diag stage rows
    rows_b = max(anchors_b4) + 1                                 # branch4 stage-2 rows
    rows_m = max(anchors_mp) + 1                                 # max-pool rows

    # ---- host-side weight packing (layout plumbing, done once) -----------------
    def t1(w):   # (O, I, 1, 1) -> (I, O)
        return jnp.transpose(w[:, :, 0, 0], (1, 0))

    def t3(w):   # (O, I, 3, 3) -> (9, I, O), tap index = ky*3+kx
        return jnp.transpose(w, (2, 3, 1, 0)).reshape(9, w.shape[1], w.shape[0])

    wf = jnp.concatenate([t1(w2a), t1(w3a), t1(w4a)], axis=1).astype(jnp.bfloat16)
    bfv = jnp.concatenate([b2a, b3a, b4a]).reshape(1, cf).astype(jnp.float32)

    i2, i3 = w2a.shape[0], w3a.shape[0]
    wbd = jnp.zeros((9, cf, c2 + c3 + c4), jnp.float32)
    wbd = wbd.at[:, 0:i2, 0:c2].set(t3(w2b))
    wbd = wbd.at[:, i2:i2 + i3, c2:c2 + c3].set(t3(w3b))
    wbd = wbd.at[:, i2 + i3:, c2 + c3:].set(t3(w4b))
    wbd = wbd.astype(jnp.bfloat16)
    bbd = jnp.concatenate([b2b, b3b, b4b]).reshape(1, c2 + c3 + c4).astype(jnp.float32)

    w4c_k = t3(w4c).astype(jnp.bfloat16)
    b4c_k = b4c.reshape(1, c4).astype(jnp.float32)

    x_flat = jnp.transpose(x_nchw, (0, 2, 3, 1)).reshape(N, HW, C)

    tb = _images_per_step(N)
    kernel = functools.partial(_reduction_b_kernel, W, rows_a, rows_b, rows_m,
                               anchors_mp, anchors_s2, anchors_b4, c2, c3)

    mp_o, b2_o, b3_o, b4_o = pl.pallas_call(
        kernel,
        out_shape=(jax.ShapeDtypeStruct((N, n_out, c1), jnp.float32),
                   jax.ShapeDtypeStruct((N, n_out, c2), jnp.float32),
                   jax.ShapeDtypeStruct((N, n_out, c3), jnp.float32),
                   jax.ShapeDtypeStruct((N, n_out, c4), jnp.float32)),
        grid_spec=pltpu.PrefetchScalarGridSpec(
            num_scalar_prefetch=0,
            grid=(N // tb,),
            in_specs=[pl.BlockSpec((tb, HW, C), lambda n: (n, 0, 0)),
                      _const_spec(wf), _const_spec(bfv),
                      _const_spec(wbd), _const_spec(bbd),
                      _const_spec(w4c_k), _const_spec(b4c_k)],
            out_specs=[pl.BlockSpec((tb, n_out, c1), lambda n: (n, 0, 0)),
                       pl.BlockSpec((tb, n_out, c2), lambda n: (n, 0, 0)),
                       pl.BlockSpec((tb, n_out, c3), lambda n: (n, 0, 0)),
                       pl.BlockSpec((tb, n_out, c4), lambda n: (n, 0, 0))],
            scratch_shapes=[pltpu.VMEM((HW, cf), jnp.bfloat16),
                            pltpu.VMEM((rows_a, c2 + c3 + c4), jnp.float32),
                            pltpu.VMEM((rows_b, c4), jnp.float32),
                            pltpu.VMEM((rows_m, c1), jnp.float32)],
        ),
        compiler_params=pltpu.CompilerParams(dimension_semantics=("parallel",)),
    )(x_flat, wf, bfv, wbd, bbd, w4c_k, b4c_k)

    out = jnp.concatenate([mp_o, b2_o, b3_o, b4_o], axis=-1)     # (N, Ho*Wo, 896)
    return jnp.transpose(out.reshape(N, Ho, Wo, c1 + c2 + c3 + c4), (0, 3, 1, 2))


def init_params(key):
    # Conv2d weight layout matches PyTorch: (out_ch, in_ch, kh, kw)
    specs = [
        (128, 448, 1), (192, 128, 3),                      # branch2: 1x1, 3x3/s2
        (128, 448, 1), (128, 128, 3),                      # branch3: 1x1, 3x3/s2
        (128, 448, 1), (128, 128, 3), (128, 128, 3),       # branch4: 1x1, 3x3, 3x3
    ]
    keys = jax.random.split(key, 2 * len(specs))
    params = []
    for i, (o, ci, k) in enumerate(specs):
        fan_in = ci * k * k
        w = jax.random.normal(keys[2 * i], (o, ci, k, k), jnp.float32) / np.sqrt(fan_in)
        b = 0.1 * jax.random.normal(keys[2 * i + 1], (o,), jnp.float32)
        params += [w, b]
    return tuple(params)


def reference(x, params):
    # independent pure-JAX reference (NCHW, f32, HIGHEST) mirroring the PyTorch forward
    (w2a, b2a, w2b, b2b, w3a, b3a, w3b, b3b,
     w4a, b4a, w4b, b4b, w4c, b4c) = params

    def conv(x, w, b, stride=1):
        y = lax.conv_general_dilated(x, w, (stride, stride), 'VALID',
                                     dimension_numbers=('NCHW', 'OIHW', 'NCHW'),
                                     precision=lax.Precision.HIGHEST)
        return y + b[None, :, None, None]

    br1 = lax.reduce_window(x, -jnp.inf, lax.max, (1, 1, 3, 3), (1, 1, 3, 3), 'VALID')
    br2 = conv(conv(x, w2a, b2a), w2b, b2b, stride=2)
    br3 = conv(conv(x, w3a, b3a), w3b, b3b, stride=2)
    br4 = conv(conv(conv(x, w4a, b4a), w4b, b4b), w4c, b4c)
    return jnp.concatenate([br1, br2, br3, br4], axis=1)


if __name__ == "__main__":
    # H = W = 6 is the spatial size at which torch.cat over the four branch outputs
    # is shape-compatible (every branch yields a 2x2 map); C=448 is fixed by the module.
    N, C, H, W = 2, 448, 6, 6
    key = jax.random.PRNGKey(0)
    kx, kp = jax.random.split(key)
    x = jax.random.normal(kx, (N, C, H, W), jnp.float32)
    params = init_params(kp)

    out = reduction_b(x, params)
    out = jax.block_until_ready(out)

    ref = reference(x, params)
    assert out.shape == ref.shape == (N, 448 + 192 + 128 + 128, H - 4, W - 4)
    err = float(jnp.max(jnp.abs(out - ref)))
    assert err < 5e-2, f"max abs error {err}"   # bf16 MXU vs f32 HIGHEST reference
    print("KERNEL_OK")
</pallas_src>

<mosaic_0001>
module attributes {stable_mosaic.version = 11 : i64} {
  func.func @_reduction_b_kernel(%arg0: i32, %arg1: memref<1x36x448xf32, #tpu.memory_space<vmem>>, %arg2: memref<448x384xbf16, #tpu.memory_space<vmem>>, %arg3: memref<1x384xf32, #tpu.memory_space<vmem>>, %arg4: memref<9x384x448xbf16, #tpu.memory_space<vmem>>, %arg5: memref<1x448xf32, #tpu.memory_space<vmem>>, %arg6: memref<9x128x128xbf16, #tpu.memory_space<vmem>>, %arg7: memref<1x128xf32, #tpu.memory_space<vmem>>, %arg8: memref<1x4x448xf32, #tpu.memory_space<vmem>>, %arg9: memref<1x4x192xf32, #tpu.memory_space<vmem>>, %arg10: memref<1x4x128xf32, #tpu.memory_space<vmem>>, %arg11: memref<1x4x128xf32, #tpu.memory_space<vmem>>, %arg12: memref<36x384xbf16, #tpu.memory_space<vmem>>, %arg13: memref<22x448xf32, #tpu.memory_space<vmem>>, %arg14: memref<8x128xf32, #tpu.memory_space<vmem>>, %arg15: memref<22x448xf32, #tpu.memory_space<vmem>>) attributes {dimension_semantics = [#tpu.dimension_semantics<parallel>], iteration_bounds = array<i64: 2>, scalar_prefetch = 0 : i64, scratch_operands = 4 : i64, tpu.core_type = #tpu.core_type<tc>, window_params = [{transform_indices = @transform_0, window_bounds = array<i64: 1, 36, 448>}, {pipeline_mode = #tpu.pipeline_mode<synchronous>, transform_indices = @transform_1, window_bounds = array<i64: 448, 384>}, {pipeline_mode = #tpu.pipeline_mode<synchronous>, transform_indices = @transform_2, window_bounds = array<i64: 1, 384>}, {pipeline_mode = #tpu.pipeline_mode<synchronous>, transform_indices = @transform_3, window_bounds = array<i64: 9, 384, 448>}, {pipeline_mode = #tpu.pipeline_mode<synchronous>, transform_indices = @transform_4, window_bounds = array<i64: 1, 448>}, {pipeline_mode = #tpu.pipeline_mode<synchronous>, transform_indices = @transform_5, window_bounds = array<i64: 9, 128, 128>}, {pipeline_mode = #tpu.pipeline_mode<synchronous>, transform_indices = @transform_6, window_bounds = array<i64: 1, 128>}, {transform_indices = @transform_7, window_bounds = array<i64: 1, 4, 448>}, {transform_indices = @transform_8, window_bounds = array<i64: 1, 4, 192>}, {transform_indices = @transform_9, window_bounds = array<i64: 1, 4, 128>}, {transform_indices = @transform_10, window_bounds = array<i64: 1, 4, 128>}]} {
    %c0 = arith.constant 0 : index
    %c0_0 = arith.constant 0 : index
    %c0_1 = arith.constant 0 : index
    %0 = vector.load %arg1[%c0, %c0_0, %c0_1] : memref<1x36x448xf32, #tpu.memory_space<vmem>>, vector<1x36x448xf32>
    %1 = vector.shape_cast %0 : vector<1x36x448xf32> to vector<36x448xf32>
    %2 = arith.truncf %1 : vector<36x448xf32> to vector<36x448xbf16>
    %c0_2 = arith.constant 0 : index
    %c0_3 = arith.constant 0 : index
    %3 = vector.load %arg2[%c0_2, %c0_3] : memref<448x384xbf16, #tpu.memory_space<vmem>>, vector<448x384xbf16>
    %cst = arith.constant dense<0.000000e+00> : vector<36x384xf32>
    %4 = tpu.matmul %2, %3, %cst {dimension_numbers = #tpu.dot_dimension_numbers<[1], [0], [0], [1], [0, 0, 1, 1], [], []>} : vector<36x448xbf16>, vector<448x384xbf16>, vector<36x384xf32> -> vector<36x384xf32>
    %c0_4 = arith.constant 0 : index
    %c0_5 = arith.constant 0 : index
    %5 = vector.load %arg3[%c0_4, %c0_5] : memref<1x384xf32, #tpu.memory_space<vmem>>, vector<1x384xf32>
    %6 = vector.broadcast %5 : vector<1x384xf32> to vector<36x384xf32>
    %7 = arith.addf %4, %6 : vector<36x384xf32>
    %8 = arith.truncf %7 : vector<36x384xf32> to vector<36x384xbf16>
    %c0_6 = arith.constant 0 : index
    %c0_7 = arith.constant 0 : index
    %9 = vector.load %arg12[%c0_6, %c0_7] : memref<36x384xbf16, #tpu.memory_space<vmem>>, vector<36x384xbf16>
    tpu.vector_store %arg12[%c0_6, %c0_7], %8 {strides = array<i32>} : memref<36x384xbf16, #tpu.memory_space<vmem>>, vector<36x384xbf16>,
    %cst_8 = arith.constant 0.000000e+00 : f32
    %10 = vector.broadcast %cst_8 : f32 to vector<22x448xf32>
    %c0_9 = arith.constant 0 : index
    %c0_10 = arith.constant 0 : index
    %11 = vector.load %arg12[%c0_9, %c0_10] : memref<36x384xbf16, #tpu.memory_space<vmem>>, vector<22x384xbf16>
    %c0_11 = arith.constant 0 : index
    %c0_12 = arith.constant 0 : index
    %c0_13 = arith.constant 0 : index
    %12 = vector.load %arg4[%c0_11, %c0_12, %c0_13] : memref<9x384x448xbf16, #tpu.memory_space<vmem>>, vector<1x384x448xbf16>
    %13 = vector.shape_cast %12 : vector<1x384x448xbf16> to vector<384x448xbf16>
    %cst_14 = arith.constant dense<0.000000e+00> : vector<22x448xf32>
    %14 = tpu.matmul %11, %13, %cst_14 {dimension_numbers = #tpu.dot_dimension_numbers<[1], [0], [0], [1], [0, 0, 1, 1], [], []>} : vector<22x384xbf16>, vector<384x448xbf16>, vector<22x448xf32> -> vector<22x448xf32>
    %15 = arith.addf %10, %14 : vector<22x448xf32>
    %c1 = arith.constant 1 : index
    %c0_15 = arith.constant 0 : index
    %16 = vector.load %arg12[%c1, %c0_15] : memref<36x384xbf16, #tpu.memory_space<vmem>>, vector<22x384xbf16>
    %c1_16 = arith.constant 1 : index
    %c0_17 = arith.constant 0 : index
    %c0_18 = arith.constant 0 : index
    %17 = vector.load %arg4[%c1_16, %c0_17, %c0_18] : memref<9x384x448xbf16, #tpu.memory_space<vmem>>, vector<1x384x448xbf16>
    %18 = vector.shape_cast %17 : vector<1x384x448xbf16> to vector<384x448xbf16>
    %cst_19 = arith.constant dense<0.000000e+00> : vector<22x448xf32>
    %19 = tpu.matmul %16, %18, %cst_19 {dimension_numbers = #tpu.dot_dimension_numbers<[1], [0], [0], [1], [0, 0, 1, 1], [], []>} : vector<22x384xbf16>, vector<384x448xbf16>, vector<22x448xf32> -> vector<22x448xf32>
    %20 = arith.addf %15, %19 : vector<22x448xf32>
    %c2 = arith.constant 2 : index
    %c0_20 = arith.constant 0 : index
    %21 = vector.load %arg12[%c2, %c0_20] : memref<36x384xbf16, #tpu.memory_space<vmem>>, vector<22x384xbf16>
    %c2_21 = arith.constant 2 : index
    %c0_22 = arith.constant 0 : index
    %c0_23 = arith.constant 0 : index
    %22 = vector.load %arg4[%c2_21, %c0_22, %c0_23] : memref<9x384x448xbf16, #tpu.memory_space<vmem>>, vector<1x384x448xbf16>
    %23 = vector.shape_cast %22 : vector<1x384x448xbf16> to vector<384x448xbf16>
    %cst_24 = arith.constant dense<0.000000e+00> : vector<22x448xf32>
    %24 = tpu.matmul %21, %23, %cst_24 {dimension_numbers = #tpu.dot_dimension_numbers<[1], [0], [0], [1], [0, 0, 1, 1], [], []>} : vector<22x384xbf16>, vector<384x448xbf16>, vector<22x448xf32> -> vector<22x448xf32>
    %25 = arith.addf %20, %24 : vector<22x448xf32>
    %c6 = arith.constant 6 : index
    %c0_25 = arith.constant 0 : index
    %26 = vector.load %arg12[%c6, %c0_25] : memref<36x384xbf16, #tpu.memory_space<vmem>>, vector<22x384xbf16>
    %c3 = arith.constant 3 : index
    %c0_26 = arith.constant 0 : index
    %c0_27 = arith.constant 0 : index
    %27 = vector.load %arg4[%c3, %c0_26, %c0_27] : memref<9x384x448xbf16, #tpu.memory_space<vmem>>, vector<1x384x448xbf16>
    %28 = vector.shape_cast %27 : vector<1x384x448xbf16> to vector<384x448xbf16>
    %cst_28 = arith.constant dense<0.000000e+00> : vector<22x448xf32>
    %29 = tpu.matmul %26, %28, %cst_28 {dimension_numbers = #tpu.dot_dimension_numbers<[1], [0], [0], [1], [0, 0, 1, 1], [], []>} : vector<22x384xbf16>, vector<384x448xbf16>, vector<22x448xf32> -> vector<22x448xf32>
    %30 = arith.addf %25, %29 : vector<22x448xf32>
    %c7 = arith.constant 7 : index
    %c0_29 = arith.constant 0 : index
    %31 = vector.load %arg12[%c7, %c0_29] : memref<36x384xbf16, #tpu.memory_space<vmem>>, vector<22x384xbf16>
    %c4 = arith.constant 4 : index
    %c0_30 = arith.constant 0 : index
    %c0_31 = arith.constant 0 : index
    %32 = vector.load %arg4[%c4, %c0_30, %c0_31] : memref<9x384x448xbf16, #tpu.memory_space<vmem>>, vector<1x384x448xbf16>
    %33 = vector.shape_cast %32 : vector<1x384x448xbf16> to vector<384x448xbf16>
    %cst_32 = arith.constant dense<0.000000e+00> : vector<22x448xf32>
    %34 = tpu.matmul %31, %33, %cst_32 {dimension_numbers = #tpu.dot_dimension_numbers<[1], [0], [0], [1], [0, 0, 1, 1], [], []>} : vector<22x384xbf16>, vector<384x448xbf16>, vector<22x448xf32> -> vector<22x448xf32>
    %35 = arith.addf %30, %34 : vector<22x448xf32>
    %c8 = arith.constant 8 : index
    %c0_33 = arith.constant 0 : index
    %36 = vector.load %arg12[%c8, %c0_33] : memref<36x384xbf16, #tpu.memory_space<vmem>>, vector<22x384xbf16>
    %c5 = arith.constant 5 : index
    %c0_34 = arith.constant 0 : index
    %c0_35 = arith.constant 0 : index
    %37 = vector.load %arg4[%c5, %c0_34, %c0_35] : memref<9x384x448xbf16, #tpu.memory_space<vmem>>, vector<1x384x448xbf16>
    %38 = vector.shape_cast %37 : vector<1x384x448xbf16> to vector<384x448xbf16>
    %cst_36 = arith.constant dense<0.000000e+00> : vector<22x448xf32>
    %39 = tpu.matmul %36, %38, %cst_36 {dimension_numbers = #tpu.dot_dimension_numbers<[1], [0], [0], [1], [0, 0, 1, 1], [], []>} : vector<22x384xbf16>, vector<384x448xbf16>, vector<22x448xf32> -> vector<22x448xf32>
    %40 = arith.addf %35, %39 : vector<22x448xf32>
    %c12 = arith.constant 12 : index
    %c0_37 = arith.constant 0 : index
    %41 = vector.load %arg12[%c12, %c0_37] : memref<36x384xbf16, #tpu.memory_space<vmem>>, vector<22x384xbf16>
    %c6_38 = arith.constant 6 : index
    %c0_39 = arith.constant 0 : index
    %c0_40 = arith.constant 0 : index
    %42 = vector.load %arg4[%c6_38, %c0_39, %c0_40] : memref<9x384x448xbf16, #tpu.memory_space<vmem>>, vector<1x384x448xbf16>
    %43 = vector.shape_cast %42 : vector<1x384x448xbf16> to vector<384x448xbf16>
    %cst_41 = arith.constant dense<0.000000e+00> : vector<22x448xf32>
    %44 = tpu.matmul %41, %43, %cst_41 {dimension_numbers = #tpu.dot_dimension_numbers<[1], [0], [0], [1], [0, 0, 1, 1], [], []>} : vector<22x384xbf16>, vector<384x448xbf16>, vector<22x448xf32> -> vector<22x448xf32>
    %45 = arith.addf %40, %44 : vector<22x448xf32>
    %c13 = arith.constant 13 : index
    %c0_42 = arith.constant 0 : index
    %46 = vector.load %arg12[%c13, %c0_42] : memref<36x384xbf16, #tpu.memory_space<vmem>>, vector<22x384xbf16>
    %c7_43 = arith.constant 7 : index
    %c0_44 = arith.constant 0 : index
    %c0_45 = arith.constant 0 : index
    %47 = vector.load %arg4[%c7_43, %c0_44, %c0_45] : memref<9x384x448xbf16, #tpu.memory_space<vmem>>, vector<1x384x448xbf16>
    %48 = vector.shape_cast %47 : vector<1x384x448xbf16> to vector<384x448xbf16>
    %cst_46 = arith.constant dense<0.000000e+00> : vector<22x448xf32>
    %49 = tpu.matmul %46, %48, %cst_46 {dimension_numbers = #tpu.dot_dimension_numbers<[1], [0], [0], [1], [0, 0, 1, 1], [], []>} : vector<22x384xbf16>, vector<384x448xbf16>, vector<22x448xf32> -> vector<22x448xf32>
    %50 = arith.addf %45, %49 : vector<22x448xf32>
    %c14 = arith.constant 14 : index
    %c0_47 = arith.constant 0 : index
    %51 = vector.load %arg12[%c14, %c0_47] : memref<36x384xbf16, #tpu.memory_space<vmem>>, vector<22x384xbf16>
    %c8_48 = arith.constant 8 : index
    %c0_49 = arith.constant 0 : index
    %c0_50 = arith.constant 0 : index
    %52 = vector.load %arg4[%c8_48, %c0_49, %c0_50] : memref<9x384x448xbf16, #tpu.memory_space<vmem>>, vector<1x384x448xbf16>
    %53 = vector.shape_cast %52 : vector<1x384x448xbf16> to vector<384x448xbf16>
    %cst_51 = arith.constant dense<0.000000e+00> : vector<22x448xf32>
    %54 = tpu.matmul %51, %53, %cst_51 {dimension_numbers = #tpu.dot_dimension_numbers<[1], [0], [0], [1], [0, 0, 1, 1], [], []>} : vector<22x384xbf16>, vector<384x448xbf16>, vector<22x448xf32> -> vector<22x448xf32>
    %55 = arith.addf %50, %54 : vector<22x448xf32>
    %c0_52 = arith.constant 0 : index
    %c0_53 = arith.constant 0 : index
    %56 = vector.load %arg5[%c0_52, %c0_53] : memref<1x448xf32, #tpu.memory_space<vmem>>, vector<1x448xf32>
    %57 = vector.broadcast %56 : vector<1x448xf32> to vector<22x448xf32>
    %58 = arith.addf %55, %57 : vector<22x448xf32>
    %c0_54 = arith.constant 0 : index
    %c0_55 = arith.constant 0 : index
    %59 = vector.load %arg13[%c0_54, %c0_55] : memref<22x448xf32, #tpu.memory_space<vmem>>, vector<22x448xf32>
    tpu.vector_store %arg13[%c0_54, %c0_55], %58 {strides = array<i32>} : memref<22x448xf32, #tpu.memory_space<vmem>>, vector<22x448xf32>,
    %cst_56 = arith.constant 0.000000e+00 : f32
    %60 = vector.broadcast %cst_56 : f32 to vector<8x128xf32>
    %c0_57 = arith.constant 0 : index
    %c320 = arith.constant 320 : index
    %61 = vector.load %arg13[%c0_57, %c320] : memref<22x448xf32, #tpu.memory_space<vmem>>, vector<8x128xf32>
    %62 = arith.truncf %61 : vector<8x128xf32> to vector<8x128xbf16>
    %c0_58 = arith.constant 0 : index
    %c0_59 = arith.constant 0 : index
    %c0_60 = arith.constant 0 : index
    %63 = vector.load %arg6[%c0_58, %c0_59, %c0_60] : memref<9x128x128xbf16, #tpu.memory_space<vmem>>, vector<1x128x128xbf16>
    %64 = vector.shape_cast %63 : vector<1x128x128xbf16> to vector<128x128xbf16>
    %cst_61 = arith.constant dense<0.000000e+00> : vector<8x128xf32>
    %65 = tpu.matmul %62, %64, %cst_61 {dimension_numbers = #tpu.dot_dimension_numbers<[1], [0], [0], [1], [0, 0, 1, 1], [], []>} : vector<8x128xbf16>, vector<128x128xbf16>, vector<8x128xf32> -> vector<8x128xf32>
    %66 = arith.addf %60, %65 : vector<8x128xf32>
    %c1_62 = arith.constant 1 : index
    %c320_63 = arith.constant 320 : index
    %67 = vector.load %arg13[%c1_62, %c320_63] : memref<22x448xf32, #tpu.memory_space<vmem>>, vector<8x128xf32>
    %68 = arith.truncf %67 : vector<8x128xf32> to vector<8x128xbf16>
    %c1_64 = arith.constant 1 : index
    %c0_65 = arith.constant 0 : index
    %c0_66 = arith.constant 0 : index
    %69 = vector.load %arg6[%c1_64, %c0_65, %c0_66] : memref<9x128x128xbf16, #tpu.memory_space<vmem>>, vector<1x128x128xbf16>
    %70 = vector.shape_cast %69 : vector<1x128x128xbf16> to vector<128x128xbf16>
    %cst_67 = arith.constant dense<0.000000e+00> : vector<8x128xf32>
    %71 = tpu.matmul %68, %70, %cst_67 {dimension_numbers = #tpu.dot_dimension_numbers<[1], [0], [0], [1], [0, 0, 1, 1], [], []>} : vector<8x128xbf16>, vector<128x128xbf16>, vector<8x128xf32> -> vector<8x128xf32>
    %72 = arith.addf %66, %71 : vector<8x128xf32>
    %c2_68 = arith.constant 2 : index
    %c320_69 = arith.constant 320 : index
    %73 = vector.load %arg13[%c2_68, %c320_69] : memref<22x448xf32, #tpu.memory_space<vmem>>, vector<8x128xf32>
    %74 = arith.truncf %73 : vector<8x128xf32> to vector<8x128xbf16>
    %c2_70 = arith.constant 2 : index
    %c0_71 = arith.constant 0 : index
    %c0_72 = arith.constant 0 : index
    %75 = vector.load %arg6[%c2_70, %c0_71, %c0_72] : memref<9x128x128xbf16, #tpu.memory_space<vmem>>, vector<1x128x128xbf16>
    %76 = vector.shape_cast %75 : vector<1x128x128xbf16> to vector<128x128xbf16>
    %cst_73 = arith.constant dense<0.000000e+00> : vector<8x128xf32>
    %77 = tpu.matmul %74, %76, %cst_73 {dimension_numbers = #tpu.dot_dimension_numbers<[1], [0], [0], [1], [0, 0, 1, 1], [], []>} : vector<8x128xbf16>, vector<128x128xbf16>, vector<8x128xf32> -> vector<8x128xf32>
    %78 = arith.addf %72, %77 : vector<8x128xf32>
    %c6_74 = arith.constant 6 : index
    %c320_75 = arith.constant 320 : index
    %79 = vector.load %arg13[%c6_74, %c320_75] : memref<22x448xf32, #tpu.memory_space<vmem>>, vector<8x128xf32>
    %80 = arith.truncf %79 : vector<8x128xf32> to vector<8x128xbf16>
    %c3_76 = arith.constant 3 : index
    %c0_77 = arith.constant 0 : index
    %c0_78 = arith.constant 0 : index
    %81 = vector.load %arg6[%c3_76, %c0_77, %c0_78] : memref<9x128x128xbf16, #tpu.memory_space<vmem>>, vector<1x128x128xbf16>
    %82 = vector.shape_cast %81 : vector<1x128x128xbf16> to vector<128x128xbf16>
    %cst_79 = arith.constant dense<0.000000e+00> : vector<8x128xf32>
    %83 = tpu.matmul %80, %82, %cst_79 {dimension_numbers = #tpu.dot_dimension_numbers<[1], [0], [0], [1], [0, 0, 1, 1], [], []>} : vector<8x128xbf16>, vector<128x128xbf16>, vector<8x128xf32> -> vector<8x128xf32>
    %84 = arith.addf %78, %83 : vector<8x128xf32>
    %c7_80 = arith.constant 7 : index
    %c320_81 = arith.constant 320 : index
    %85 = vector.load %arg13[%c7_80, %c320_81] : memref<22x448xf32, #tpu.memory_space<vmem>>, vector<8x128xf32>
    %86 = arith.truncf %85 : vector<8x128xf32> to vector<8x128xbf16>
    %c4_82 = arith.constant 4 : index
    %c0_83 = arith.constant 0 : index
    %c0_84 = arith.constant 0 : index
    %87 = vector.load %arg6[%c4_82, %c0_83, %c0_84] : memref<9x128x128xbf16, #tpu.memory_space<vmem>>, vector<1x128x128xbf16>
    %88 = vector.shape_cast %87 : vector<1x128x128xbf16> to vector<128x128xbf16>
    %cst_85 = arith.constant dense<0.000000e+00> : vector<8x128xf32>
    %89 = tpu.matmul %86, %88, %cst_85 {dimension_numbers = #tpu.dot_dimension_numbers<[1], [0], [0], [1], [0, 0, 1, 1], [], []>} : vector<8x128xbf16>, vector<128x128xbf16>, vector<8x128xf32> -> vector<8x128xf32>
    %90 = arith.addf %84, %89 : vector<8x128xf32>
    %c8_86 = arith.constant 8 : index
    %c320_87 = arith.constant 320 : index
    %91 = vector.load %arg13[%c8_86, %c320_87] : memref<22x448xf32, #tpu.memory_space<vmem>>, vector<8x128xf32>
    %92 = arith.truncf %91 : vector<8x128xf32> to vector<8x128xbf16>
    %c5_88 = arith.constant 5 : index
    %c0_89 = arith.constant 0 : index
    %c0_90 = arith.constant 0 : index
    %93 = vector.load %arg6[%c5_88, %c0_89, %c0_90] : memref<9x128x128xbf16, #tpu.memory_space<vmem>>, vector<1x128x128xbf16>
    %94 = vector.shape_cast %93 : vector<1x128x128xbf16> to vector<128x128xbf16>
    %cst_91 = arith.constant dense<0.000000e+00> : vector<8x128xf32>
    %95 = tpu.matmul %92, %94, %cst_91 {dimension_numbers = #tpu.dot_dimension_numbers<[1], [0], [0], [1], [0, 0, 1, 1], [], []>} : vector<8x128xbf16>, vector<128x128xbf16>, vector<8x128xf32> -> vector<8x128xf32>
    %96 = arith.addf %90, %95 : vector<8x128xf32>
    %c12_92 = arith.constant 12 : index
    %c320_93 = arith.constant 320 : index
    %97 = vector.load %arg13[%c12_92, %c320_93] : memref<22x448xf32, #tpu.memory_space<vmem>>, vector<8x128xf32>
    %98 = arith.truncf %97 : vector<8x128xf32> to vector<8x128xbf16>
    %c6_94 = arith.constant 6 : index
    %c0_95 = arith.constant 0 : index
    %c0_96 = arith.constant 0 : index
    %99 = vector.load %arg6[%c6_94, %c0_95, %c0_96] : memref<9x128x128xbf16, #tpu.memory_space<vmem>>, vector<1x128x128xbf16>
    %100 = vector.shape_cast %99 : vector<1x128x128xbf16> to vector<128x128xbf16>
    %cst_97 = arith.constant dense<0.000000e+00> : vector<8x128xf32>
    %101 = tpu.matmul %98, %100, %cst_97 {dimension_numbers = #tpu.dot_dimension_numbers<[1], [0], [0], [1], [0, 0, 1, 1], [], []>} : vector<8x128xbf16>, vector<128x128xbf16>, vector<8x128xf32> -> vector<8x128xf32>
    %102 = arith.addf %96, %101 : vector<8x128xf32>
    %c13_98 = arith.constant 13 : index
    %c320_99 = arith.constant 320 : index
    %103 = vector.load %arg13[%c13_98, %c320_99] : memref<22x448xf32, #tpu.memory_space<vmem>>, vector<8x128xf32>
    %104 = arith.truncf %103 : vector<8x128xf32> to vector<8x128xbf16>
    %c7_100 = arith.constant 7 : index
    %c0_101 = arith.constant 0 : index
    %c0_102 = arith.constant 0 : index
    %105 = vector.load %arg6[%c7_100, %c0_101, %c0_102] : memref<9x128x128xbf16, #tpu.memory_space<vmem>>, vector<1x128x128xbf16>
    %106 = vector.shape_cast %105 : vector<1x128x128xbf16> to vector<128x128xbf16>
    %cst_103 = arith.constant dense<0.000000e+00> : vector<8x128xf32>
    %107 = tpu.matmul %104, %106, %cst_103 {dimension_numbers = #tpu.dot_dimension_numbers<[1], [0], [0], [1], [0, 0, 1, 1], [], []>} : vector<8x128xbf16>, vector<128x128xbf16>, vector<8x128xf32> -> vector<8x128xf32>
    %108 = arith.addf %102, %107 : vector<8x128xf32>
    %c14_104 = arith.constant 14 : index
    %c320_105 = arith.constant 320 : index
    %109 = vector.load %arg13[%c14_104, %c320_105] : memref<22x448xf32, #tpu.memory_space<vmem>>, vector<8x128xf32>
    %110 = arith.truncf %109 : vector<8x128xf32> to vector<8x128xbf16>
    %c8_106 = arith.constant 8 : index
    %c0_107 = arith.constant 0 : index
    %c0_108 = arith.constant 0 : index
    %111 = vector.load %arg6[%c8_106, %c0_107, %c0_108] : memref<9x128x128xbf16, #tpu.memory_space<vmem>>, vector<1x128x128xbf16>
    %112 = vector.shape_cast %111 : vector<1x128x128xbf16> to vector<128x128xbf16>
    %cst_109 = arith.constant dense<0.000000e+00> : vector<8x128xf32>
    %113 = tpu.matmul %110, %112, %cst_109 {dimension_numbers = #tpu.dot_dimension_numbers<[1], [0], [0], [1], [0, 0, 1, 1], [], []>} : vector<8x128xbf16>, vector<128x128xbf16>, vector<8x128xf32> -> vector<8x128xf32>
    %114 = arith.addf %108, %113 : vector<8x128xf32>
    %c0_110 = arith.constant 0 : index
    %c0_111 = arith.constant 0 : index
    %115 = vector.load %arg7[%c0_110, %c0_111] : memref<1x128xf32, #tpu.memory_space<vmem>>, vector<1x128xf32>
    %116 = vector.broadcast %115 : vector<1x128xf32> to vector<8x128xf32>
    %117 = arith.addf %114, %116 : vector<8x128xf32>
    %c0_112 = arith.constant 0 : index
    %c0_113 = arith.constant 0 : index
    %118 = vector.load %arg14[%c0_112, %c0_113] : memref<8x128xf32, #tpu.memory_space<vmem>>, vector<8x128xf32>
    tpu.vector_store %arg14[%c0_112, %c0_113], %117 {strides = array<i32>} : memref<8x128xf32, #tpu.memory_space<vmem>>, vector<8x128xf32>,
    %c0_114 = arith.constant 0 : index
    %c0_115 = arith.constant 0 : index
    %c0_116 = arith.constant 0 : index
    %119 = vector.load %arg1[%c0_114, %c0_115, %c0_116] : memref<1x36x448xf32, #tpu.memory_space<vmem>>, vector<1x22x448xf32>
    %120 = vector.shape_cast %119 : vector<1x22x448xf32> to vector<22x448xf32>
    %c0_117 = arith.constant 0 : index
    %c1_118 = arith.constant 1 : index
    %c0_119 = arith.constant 0 : index
    %121 = vector.load %arg1[%c0_117, %c1_118, %c0_119] : memref<1x36x448xf32, #tpu.memory_space<vmem>>, vector<1x22x448xf32>
    %122 = vector.shape_cast %121 : vector<1x22x448xf32> to vector<22x448xf32>
    %123 = arith.maximumf %120, %122 : vector<22x448xf32>
    %c0_120 = arith.constant 0 : index
    %c2_121 = arith.constant 2 : index
    %c0_122 = arith.constant 0 : index
    %124 = vector.load %arg1[%c0_120, %c2_121, %c0_122] : memref<1x36x448xf32, #tpu.memory_space<vmem>>, vector<1x22x448xf32>
    %125 = vector.shape_cast %124 : vector<1x22x448xf32> to vector<22x448xf32>
    %126 = arith.maximumf %123, %125 : vector<22x448xf32>
    %c0_123 = arith.constant 0 : index
    %c6_124 = arith.constant 6 : index
    %c0_125 = arith.constant 0 : index
    %127 = vector.load %arg1[%c0_123, %c6_124, %c0_125] : memref<1x36x448xf32, #tpu.memory_space<vmem>>, vector<1x22x448xf32>
    %128 = vector.shape_cast %127 : vector<1x22x448xf32> to vector<22x448xf32>
    %129 = arith.maximumf %126, %128 : vector<22x448xf32>
    %c0_126 = arith.constant 0 : index
    %c7_127 = arith.constant 7 : index
    %c0_128 = arith.constant 0 : index
    %130 = vector.load %arg1[%c0_126, %c7_127, %c0_128] : memref<1x36x448xf32, #tpu.memory_space<vmem>>, vector<1x22x448xf32>
    %131 = vector.shape_cast %130 : vector<1x22x448xf32> to vector<22x448xf32>
    %132 = arith.maximumf %129, %131 : vector<22x448xf32>
    %c0_129 = arith.constant 0 : index
    %c8_130 = arith.constant 8 : index
    %c0_131 = arith.constant 0 : index
    %133 = vector.load %arg1[%c0_129, %c8_130, %c0_131] : memref<1x36x448xf32, #tpu.memory_space<vmem>>, vector<1x22x448xf32>
    %134 = vector.shape_cast %133 : vector<1x22x448xf32> to vector<22x448xf32>
    %135 = arith.maximumf %132, %134 : vector<22x448xf32>
    %c0_132 = arith.constant 0 : index
    %c12_133 = arith.constant 12 : index
    %c0_134 = arith.constant 0 : index
    %136 = vector.load %arg1[%c0_132, %c12_133, %c0_134] : memref<1x36x448xf32, #tpu.memory_space<vmem>>, vector<1x22x448xf32>
    %137 = vector.shape_cast %136 : vector<1x22x448xf32> to vector<22x448xf32>
    %138 = arith.maximumf %135, %137 : vector<22x448xf32>
    %c0_135 = arith.constant 0 : index
    %c13_136 = arith.constant 13 : index
    %c0_137 = arith.constant 0 : index
    %139 = vector.load %arg1[%c0_135, %c13_136, %c0_137] : memref<1x36x448xf32, #tpu.memory_space<vmem>>, vector<1x22x448xf32>
    %140 = vector.shape_cast %139 : vector<1x22x448xf32> to vector<22x448xf32>
    %141 = arith.maximumf %138, %140 : vector<22x448xf32>
    %c0_138 = arith.constant 0 : index
    %c14_139 = arith.constant 14 : index
    %c0_140 = arith.constant 0 : index
    %142 = vector.load %arg1[%c0_138, %c14_139, %c0_140] : memref<1x36x448xf32, #tpu.memory_space<vmem>>, vector<1x22x448xf32>
    %143 = vector.shape_cast %142 : vector<1x22x448xf32> to vector<22x448xf32>
    %144 = arith.maximumf %141, %143 : vector<22x448xf32>
    %c0_141 = arith.constant 0 : index
    %c0_142 = arith.constant 0 : index
    %145 = vector.load %arg15[%c0_141, %c0_142] : memref<22x448xf32, #tpu.memory_space<vmem>>, vector<22x448xf32>
    tpu.vector_store %arg15[%c0_141, %c0_142], %144 {strides = array<i32>} : memref<22x448xf32, #tpu.memory_space<vmem>>, vector<22x448xf32>,
    %c0_143 = arith.constant 0 : index
    %c0_144 = arith.constant 0 : index
    %146 = vector.load %arg15[%c0_143, %c0_144] : memref<22x448xf32, #tpu.memory_space<vmem>>, vector<1x448xf32>
    %c0_145 = arith.constant 0 : index
    %c0_146 = arith.constant 0 : index
    %c0_147 = arith.constant 0 : index
    %147 = vector.load %arg8[%c0_145, %c0_146, %c0_147] : memref<1x4x448xf32, #tpu.memory_space<vmem>>, vector<1x1x448xf32>
    %148 = vector.shape_cast %147 : vector<1x1x448xf32> to vector<1x448xf32>
    %149 = vector.shape_cast %146 : vector<1x448xf32> to vector<1x1x448xf32>
    tpu.vector_store %arg8[%c0_145, %c0_146, %c0_147], %149 {strides = array<i32>} : memref<1x4x448xf32, #tpu.memory_space<vmem>>, vector<1x1x448xf32>,
    %c0_148 = arith.constant 0 : index
    %c0_149 = arith.constant 0 : index
    %150 = vector.load %arg13[%c0_148, %c0_149] : memref<22x448xf32, #tpu.memory_space<vmem>>, vector<1x192xf32>
    %c0_150 = arith.constant 0 : index
    %c0_151 = arith.constant 0 : index
    %c0_152 = arith.constant 0 : index
    %151 = vector.load %arg9[%c0_150, %c0_151, %c0_152] : memref<1x4x192xf32, #tpu.memory_space<vmem>>, vector<1x1x192xf32>
    %152 = vector.shape_cast %151 : vector<1x1x192xf32> to vector<1x192xf32>
    %153 = vector.shape_cast %150 : vector<1x192xf32> to vector<1x1x192xf32>
    tpu.vector_store %arg9[%c0_150, %c0_151, %c0_152], %153 {strides = array<i32>} : memref<1x4x192xf32, #tpu.memory_space<vmem>>, vector<1x1x192xf32>,
    %c0_153 = arith.constant 0 : index
    %c192 = arith.constant 192 : index
    %154 = vector.load %arg13[%c0_153, %c192] : memref<22x448xf32, #tpu.memory_space<vmem>>, vector<1x128xf32>
    %c0_154 = arith.constant 0 : index
    %c0_155 = arith.constant 0 : index
    %c0_156 = arith.constant 0 : index
    %155 = vector.load %arg10[%c0_154, %c0_155, %c0_156] : memref<1x4x128xf32, #tpu.memory_space<vmem>>, vector<1x1x128xf32>
    %156 = vector.shape_cast %155 : vector<1x1x128xf32> to vector<1x128xf32>
    %157 = vector.shape_cast %154 : vector<1x128xf32> to vector<1x1x128xf32>
    tpu.vector_store %arg10[%c0_154, %c0_155, %c0_156], %157 {strides = array<i32>} : memref<1x4x128xf32, #tpu.memory_space<vmem>>, vector<1x1x128xf32>,
    %c0_157 = arith.constant 0 : index
    %c0_158 = arith.constant 0 : index
    %158 = vector.load %arg14[%c0_157, %c0_158] : memref<8x128xf32, #tpu.memory_space<vmem>>, vector<1x128xf32>
    %c0_159 = arith.constant 0 : index
    %c0_160 = arith.constant 0 : index
    %c0_161 = arith.constant 0 : index
    %159 = vector.load %arg11[%c0_159, %c0_160, %c0_161] : memref<1x4x128xf32, #tpu.memory_space<vmem>>, vector<1x1x128xf32>
    %160 = vector.shape_cast %159 : vector<1x1x128xf32> to vector<1x128xf32>
    %161 = vector.shape_cast %158 : vector<1x128xf32> to vector<1x1x128xf32>
    tpu.vector_store %arg11[%c0_159, %c0_160, %c0_161], %161 {strides = array<i32>} : memref<1x4x128xf32, #tpu.memory_space<vmem>>, vector<1x1x128xf32>,
    %c3_162 = arith.constant 3 : index
    %c0_163 = arith.constant 0 : index
    %162 = vector.load %arg15[%c3_162, %c0_163] : memref<22x448xf32, #tpu.memory_space<vmem>>, vector<1x448xf32>
    %c0_164 = arith.constant 0 : index
    %c1_165 = arith.constant 1 : index
    %c0_166 = arith.constant 0 : index
    %163 = vector.load %arg8[%c0_164, %c1_165, %c0_166] : memref<1x4x448xf32, #tpu.memory_space<vmem>>, vector<1x1x448xf32>
    %164 = vector.shape_cast %163 : vector<1x1x448xf32> to vector<1x448xf32>
    %165 = vector.shape_cast %162 : vector<1x448xf32> to vector<1x1x448xf32>
    tpu.vector_store %arg8[%c0_164, %c1_165, %c0_166], %165 {strides = array<i32>} : memref<1x4x448xf32, #tpu.memory_space<vmem>>, vector<1x1x448xf32>,
    %c2_167 = arith.constant 2 : index
    %c0_168 = arith.constant 0 : index
    %166 = vector.load %arg13[%c2_167, %c0_168] : memref<22x448xf32, #tpu.memory_space<vmem>>, vector<1x192xf32>
    %c0_169 = arith.constant 0 : index
    %c1_170 = arith.constant 1 : index
    %c0_171 = arith.constant 0 : index
    %167 = vector.load %arg9[%c0_169, %c1_170, %c0_171] : memref<1x4x192xf32, #tpu.memory_space<vmem>>, vector<1x1x192xf32>
    %168 = vector.shape_cast %167 : vector<1x1x192xf32> to vector<1x192xf32>
    %169 = vector.shape_cast %166 : vector<1x192xf32> to vector<1x1x192xf32>
    tpu.vector_store %arg9[%c0_169, %c1_170, %c0_171], %169 {strides = array<i32>} : memref<1x4x192xf32, #tpu.memory_space<vmem>>, vector<1x1x192xf32>,
    %c2_172 = arith.constant 2 : index
    %c192_173 = arith.constant 192 : index
    %170 = vector.load %arg13[%c2_172, %c192_173] : memref<22x448xf32, #tpu.memory_space<vmem>>, vector<1x128xf32>
    %c0_174 = arith.constant 0 : index
    %c1_175 = arith.constant 1 : index
    %c0_176 = arith.constant 0 : index
    %171 = vector.load %arg10[%c0_174, %c1_175, %c0_176] : memref<1x4x128xf32, #tpu.memory_space<vmem>>, vector<1x1x128xf32>
    %172 = vector.shape_cast %171 : vector<1x1x128xf32> to vector<1x128xf32>
    %173 = vector.shape_cast %170 : vector<1x128xf32> to vector<1x1x128xf32>
    tpu.vector_store %arg10[%c0_174, %c1_175, %c0_176], %173 {strides = array<i32>} : memref<1x4x128xf32, #tpu.memory_space<vmem>>, vector<1x1x128xf32>,
    %c1_177 = arith.constant 1 : index
    %c0_178 = arith.constant 0 : index
    %174 = vector.load %arg14[%c1_177, %c0_178] : memref<8x128xf32, #tpu.memory_space<vmem>>, vector<1x128xf32>
    %c0_179 = arith.constant 0 : index
    %c1_180 = arith.constant 1 : index
    %c0_181 = arith.constant 0 : index
    %175 = vector.load %arg11[%c0_179, %c1_180, %c0_181] : memref<1x4x128xf32, #tpu.memory_space<vmem>>, vector<1x1x128xf32>
    %176 = vector.shape_cast %175 : vector<1x1x128xf32> to vector<1x128xf32>
    %177 = vector.shape_cast %174 : vector<1x128xf32> to vector<1x1x128xf32>
    tpu.vector_store %arg11[%c0_179, %c1_180, %c0_181], %177 {strides = array<i32>} : memref<1x4x128xf32, #tpu.memory_space<vmem>>, vector<1x1x128xf32>,
    %c18 = arith.constant 18 : index
    %c0_182 = arith.constant 0 : index
    %178 = vector.load %arg15[%c18, %c0_182] : memref<22x448xf32, #tpu.memory_space<vmem>>, vector<1x448xf32>
    %c0_183 = arith.constant 0 : index
    %c2_184 = arith.constant 2 : index
    %c0_185 = arith.constant 0 : index
    %179 = vector.load %arg8[%c0_183, %c2_184, %c0_185] : memref<1x4x448xf32, #tpu.memory_space<vmem>>, vector<1x1x448xf32>
    %180 = vector.shape_cast %179 : vector<1x1x448xf32> to vector<1x448xf32>
    %181 = vector.shape_cast %178 : vector<1x448xf32> to vector<1x1x448xf32>
    tpu.vector_store %arg8[%c0_183, %c2_184, %c0_185], %181 {strides = array<i32>} : memref<1x4x448xf32, #tpu.memory_space<vmem>>, vector<1x1x448xf32>,
    %c12_186 = arith.constant 12 : index
    %c0_187 = arith.constant 0 : index
    %182 = vector.load %arg13[%c12_186, %c0_187] : memref<22x448xf32, #tpu.memory_space<vmem>>, vector<1x192xf32>
    %c0_188 = arith.constant 0 : index
    %c2_189 = arith.constant 2 : index
    %c0_190 = arith.constant 0 : index
    %183 = vector.load %arg9[%c0_188, %c2_189, %c0_190] : memref<1x4x192xf32, #tpu.memory_space<vmem>>, vector<1x1x192xf32>
    %184 = vector.shape_cast %183 : vector<1x1x192xf32> to vector<1x192xf32>
    %185 = vector.shape_cast %182 : vector<1x192xf32> to vector<1x1x192xf32>
    tpu.vector_store %arg9[%c0_188, %c2_189, %c0_190], %185 {strides = array<i32>} : memref<1x4x192xf32, #tpu.memory_space<vmem>>, vector<1x1x192xf32>,
    %c12_191 = arith.constant 12 : index
    %c192_192 = arith.constant 192 : index
    %186 = vector.load %arg13[%c12_191, %c192_192] : memref<22x448xf32, #tpu.memory_space<vmem>>, vector<1x128xf32>
    %c0_193 = arith.constant 0 : index
    %c2_194 = arith.constant 2 : index
    %c0_195 = arith.constant 0 : index
    %187 = vector.load %arg10[%c0_193, %c2_194, %c0_195] : memref<1x4x128xf32, #tpu.memory_space<vmem>>, vector<1x1x128xf32>
    %188 = vector.shape_cast %187 : vector<1x1x128xf32> to vector<1x128xf32>
    %189 = vector.shape_cast %186 : vector<1x128xf32> to vector<1x1x128xf32>
    tpu.vector_store %arg10[%c0_193, %c2_194, %c0_195], %189 {strides = array<i32>} : memref<1x4x128xf32, #tpu.memory_space<vmem>>, vector<1x1x128xf32>,
    %c6_196 = arith.constant 6 : index
    %c0_197 = arith.constant 0 : index
    %190 = vector.load %arg14[%c6_196, %c0_197] : memref<8x128xf32, #tpu.memory_space<vmem>>, vector<1x128xf32>
    %c0_198 = arith.constant 0 : index
    %c2_199 = arith.constant 2 : index
    %c0_200 = arith.constant 0 : index
    %191 = vector.load %arg11[%c0_198, %c2_199, %c0_200] : memref<1x4x128xf32, #tpu.memory_space<vmem>>, vector<1x1x128xf32>
    %192 = vector.shape_cast %191 : vector<1x1x128xf32> to vector<1x128xf32>
    %193 = vector.shape_cast %190 : vector<1x128xf32> to vector<1x1x128xf32>
    tpu.vector_store %arg11[%c0_198, %c2_199, %c0_200], %193 {strides = array<i32>} : memref<1x4x128xf32, #tpu.memory_space<vmem>>, vector<1x1x128xf32>,
    %c21 = arith.constant 21 : index
    %c0_201 = arith.constant 0 : index
    %194 = vector.load %arg15[%c21, %c0_201] : memref<22x448xf32, #tpu.memory_space<vmem>>, vector<1x448xf32>
    %c0_202 = arith.constant 0 : index
    %c3_203 = arith.constant 3 : index
    %c0_204 = arith.constant 0 : index
    %195 = vector.load %arg8[%c0_202, %c3_203, %c0_204] : memref<1x4x448xf32, #tpu.memory_space<vmem>>, vector<1x1x448xf32>
    %196 = vector.shape_cast %195 : vector<1x1x448xf32> to vector<1x448xf32>
    %197 = vector.shape_cast %194 : vector<1x448xf32> to vector<1x1x448xf32>
    tpu.vector_store %arg8[%c0_202, %c3_203, %c0_204], %197 {strides = array<i32>} : memref<1x4x448xf32, #tpu.memory_space<vmem>>, vector<1x1x448xf32>,
    %c14_205 = arith.constant 14 : index
    %c0_206 = arith.constant 0 : index
    %198 = vector.load %arg13[%c14_205, %c0_206] : memref<22x448xf32, #tpu.memory_space<vmem>>, vector<1x192xf32>
    %c0_207 = arith.constant 0 : index
    %c3_208 = arith.constant 3 : index
    %c0_209 = arith.constant 0 : index
    %199 = vector.load %arg9[%c0_207, %c3_208, %c0_209] : memref<1x4x192xf32, #tpu.memory_space<vmem>>, vector<1x1x192xf32>
    %200 = vector.shape_cast %199 : vector<1x1x192xf32> to vector<1x192xf32>
    %201 = vector.shape_cast %198 : vector<1x192xf32> to vector<1x1x192xf32>
    tpu.vector_store %arg9[%c0_207, %c3_208, %c0_209], %201 {strides = array<i32>} : memref<1x4x192xf32, #tpu.memory_space<vmem>>, vector<1x1x192xf32>,
    %c14_210 = arith.constant 14 : index
    %c192_211 = arith.constant 192 : index
    %202 = vector.load %arg13[%c14_210, %c192_211] : memref<22x448xf32, #tpu.memory_space<vmem>>, vector<1x128xf32>
    %c0_212 = arith.constant 0 : index
    %c3_213 = arith.constant 3 : index
    %c0_214 = arith.constant 0 : index
    %203 = vector.load %arg10[%c0_212, %c3_213, %c0_214] : memref<1x4x128xf32, #tpu.memory_space<vmem>>, vector<1x1x128xf32>
    %204 = vector.shape_cast %203 : vector<1x1x128xf32> to vector<1x128xf32>
    %205 = vector.shape_cast %202 : vector<1x128xf32> to vector<1x1x128xf32>
    tpu.vector_store %arg10[%c0_212, %c3_213, %c0_214], %205 {strides = array<i32>} : memref<1x4x128xf32, #tpu.memory_space<vmem>>, vector<1x1x128xf32>,
    %c7_215 = arith.constant 7 : index
    %c0_216 = arith.constant 0 : index
    %206 = vector.load %arg14[%c7_215, %c0_216] : memref<8x128xf32, #tpu.memory_space<vmem>>, vector<1x128xf32>
    %c0_217 = arith.constant 0 : index
    %c3_218 = arith.constant 3 : index
    %c0_219 = arith.constant 0 : index
    %207 = vector.load %arg11[%c0_217, %c3_218, %c0_219] : memref<1x4x128xf32, #tpu.memory_space<vmem>>, vector<1x1x128xf32>
    %208 = vector.shape_cast %207 : vector<1x1x128xf32> to vector<1x128xf32>
    %209 = vector.shape_cast %206 : vector<1x128xf32> to vector<1x1x128xf32>
    tpu.vector_store %arg11[%c0_217, %c3_218, %c0_219], %209 {strides = array<i32>} : memref<1x4x128xf32, #tpu.memory_space<vmem>>, vector<1x1x128xf32>,
    return
  }
  func.func @transform_0(%arg0: i32) -> (i32, i32, i32) {
    %c0_i32 = arith.constant 0 : i32
    %c0_i32_0 = arith.constant 0 : i32
    %c0_i32_1 = arith.constant 0 : i32
    return %arg0, %c0_i32, %c0_i32_0 : i32, i32, i32
  }
  func.func @transform_1(%arg0: i32) -> (i32, i32) {
    %c0_i32 = arith.constant 0 : i32
    %c0_i32_0 = arith.constant 0 : i32
    %c0_i32_1 = arith.constant 0 : i32
    return %c0_i32, %c0_i32_0 : i32, i32
  }
  func.func @transform_2(%arg0: i32) -> (i32, i32) {
    %c0_i32 = arith.constant 0 : i32
    %c0_i32_0 = arith.constant 0 : i32
    %c0_i32_1 = arith.constant 0 : i32
    return %c0_i32, %c0_i32_0 : i32, i32
  }
  func.func @transform_3(%arg0: i32) -> (i32, i32, i32) {
    %c0_i32 = arith.constant 0 : i32
    %c0_i32_0 = arith.constant 0 : i32
    %c0_i32_1 = arith.constant 0 : i32
    %c0_i32_2 = arith.constant 0 : i32
    return %c0_i32, %c0_i32_0, %c0_i32_1 : i32, i32, i32
  }
  func.func @transform_4(%arg0: i32) -> (i32, i32) {
    %c0_i32 = arith.constant 0 : i32
    %c0_i32_0 = arith.constant 0 : i32
    %c0_i32_1 = arith.constant 0 : i32
    return %c0_i32, %c0_i32_0 : i32, i32
  }
  func.func @transform_5(%arg0: i32) -> (i32, i32, i32) {
    %c0_i32 = arith.constant 0 : i32
    %c0_i32_0 = arith.constant 0 : i32
    %c0_i32_1 = arith.constant 0 : i32
    %c0_i32_2 = arith.constant 0 : i32
    return %c0_i32, %c0_i32_0, %c0_i32_1 : i32, i32, i32
  }
  func.func @transform_6(%arg0: i32) -> (i32, i32) {
    %c0_i32 = arith.constant 0 : i32
    %c0_i32_0 = arith.constant 0 : i32
    %c0_i32_1 = arith.constant 0 : i32
    return %c0_i32, %c0_i32_0 : i32, i32
  }
  func.func @transform_7(%arg0: i32) -> (i32, i32, i32) {
    %c0_i32 = arith.constant 0 : i32
    %c0_i32_0 = arith.constant 0 : i32
    %c0_i32_1 = arith.constant 0 : i32
    return %arg0, %c0_i32, %c0_i32_0 : i32, i32, i32
  }
  func.func @transform_8(%arg0: i32) -> (i32, i32, i32) {
    %c0_i32 = arith.constant 0 : i32
    %c0_i32_0 = arith.constant 0 : i32
    %c0_i32_1 = arith.constant 0 : i32
    return %arg0, %c0_i32, %c0_i32_0 : i32, i32, i32
  }
  func.func @transform_9(%arg0: i32) -> (i32, i32, i32) {
    %c0_i32 = arith.constant 0 : i32
    %c0_i32_0 = arith.constant 0 : i32
    %c0_i32_1 = arith.constant 0 : i32
    return %arg0, %c0_i32, %c0_i32_0 : i32, i32, i32
  }
  func.func @transform_10(%arg0: i32) -> (i32, i32, i32) {
    %c0_i32 = arith.constant 0 : i32
    %c0_i32_0 = arith.constant 0 : i32
    %c0_i32_1 = arith.constant 0 : i32
    return %arg0, %c0_i32, %c0_i32_0 : i32, i32, i32
  }
}

</mosaic_0001>

<llo_original>
// kernel: tpu_custom_call.1
$region0: #{tpu_custom_call.1}
  #allocation0 [shape = 'u32[]', space=smem, size = 0x4, offset = 0x4, fixed_abs, tag = 'smem constant byte address 0x4 - core index']
  #allocation1 [shape = 'u32[72,128]{1,0:T(1,128)}', space=vmem, size = 0x9000, scoped, tag = 'internal scratch']
  #allocation2 [shape = 'bf16[36,384]{1,0:T(8,128)(2,1)}', space=vmem, size = 0x7800, scoped, tag = 'scratch operand']
  #allocation3 [shape = 'f32[22,448]{1,0:T(8,128)}', space=vmem, size = 0xc000, scoped, tag = 'scratch operand']
  #allocation4 [shape = 'f32[8,128]{1,0:T(8,128)}', space=vmem, size = 0x1000, scoped, tag = 'scratch operand']
  #allocation5 [shape = 'f32[22,448]{1,0:T(8,128)}', space=vmem, size = 0xc000, scoped, tag = 'scratch operand']
  %s0 = inlined_call_operand.vmem [shape: f32[2,36,448], index: 0, kind: input, shape index: {}]
  %s1 = inlined_call_operand.vmem [shape: bf16[448,384], index: 1, kind: input, shape index: {}]
  %s2 = inlined_call_operand.vmem [shape: f32[1,384], index: 2, kind: input, shape index: {}]
  %s3 = inlined_call_operand.vmem [shape: bf16[9,384,448], index: 3, kind: input, shape index: {}]
  %s4 = inlined_call_operand.vmem [shape: f32[1,448], index: 4, kind: input, shape index: {}]
  %s5 = inlined_call_operand.vmem [shape: bf16[9,128,128], index: 5, kind: input, shape index: {}]
  %s6 = inlined_call_operand.vmem [shape: f32[1,128], index: 6, kind: input, shape index: {}]
  %s7 = inlined_call_operand.hbm [shape: f32[2,4,448], index: 7, kind: output, shape index: {0}]
  %s8 = inlined_call_operand.hbm [shape: f32[2,4,192], index: 8, kind: output, shape index: {1}]
  %s9 = inlined_call_operand.hbm [shape: f32[2,4,128], index: 9, kind: output, shape index: {2}]
  %s10 = inlined_call_operand.hbm [shape: f32[2,4,128], index: 10, kind: output, shape index: {3}]
  %11 = xla_tuple %s7, %s8, %s9, %s10
  %s12 = sld [smem:[#allocation0]]
  $region85: #{tpu_custom_call.1} parent=0
    _
  %s14 = ssub.s32 1, %s12
  %s15 = scalar_select 0, %s14, %s12
  $region1: #{tpu_custom_call.1} parent=0
    #allocation6 [shape = 'u8[16384]{0}', space=vmem, size = 0x4000, scoped, tag = 'output window, operand 0']
    #allocation7 [shape = 's32[2]{0}', space=sflag, size = 0x8, scoped, tag = 'scoped memory for tpu_custom_call.1']
    #allocation8 [shape = 'u8[8192]{0}', space=vmem, size = 0x2000, scoped, tag = 'output window, operand 1']
    #allocation9 [shape = 's32[2]{0}', space=sflag, size = 0x8, scoped, tag = 'scoped memory for tpu_custom_call.1']
    #allocation10 [shape = 'u8[4096]{0}', space=vmem, size = 0x1000, scoped, tag = 'output window, operand 2']
    #allocation11 [shape = 'u8[4096]{0}', space=vmem, size = 0x1000, scoped, tag = 'output window, operand 3']
    #allocation12 [shape = 's32[2]{0}', space=sflag, size = 0x8, scoped, tag = 'scoped memory for tpu_custom_call.1']
    %16 = vsyncpa [#allocation7], 0
    %s17 = scalar_lea.sflag [#allocation7], 1
    %18 = vsyncpa %s17, 0
    %19 = vsyncpa [#allocation9], 0
    %s20 = scalar_lea.sflag [#allocation9], 1
    %21 = vsyncpa %s20, 0
    %22 = vsyncpa [#allocation12], 0
    %s23 = scalar_lea.sflag [#allocation12], 1
    %24 = vsyncpa %s23, 0
    loop: start=0, step=1, limit=4
    $region2: #{tpu_custom_call.1} parent=1 // loop_pre_header
      _
    $region3: #{tpu_custom_call.1} parent=1 // loop_header
      %s26 = sphi 0, %s30
      %p27 = scmp.ge.s32.totalorder %s26, 4
      %s36 = sphi 0, %s38
      %s39 = sphi 0, %s36
      %s40 = sphi 0, %s39
      %s56 = sphi 0, %s40
      %s60 = sphi 0, %s60
      %s62 = sphi 0, %s60
      %s63 = sphi 0, %s62
      %s77 = sphi 0, %s63
      %s81 = sphi 0, %s81
      %s83 = sphi 0, %s81
      %s84 = sphi 0, %s83
      %s98 = sphi 0, %s84
      %s102 = sphi 0, %s102
      %s104 = sphi 0, %s102
      %s105 = sphi 0, %s104
      %s119 = sphi 0, %s105
      %s123 = sphi 0, %s123
      %s125 = sphi 0, %s123
      %s126 = sphi 0, %s125
      %s140 = sphi 0, %s126
      %s144 = sphi 0, %s144
      %s146 = sphi 0, %s144
      %s147 = sphi 0, %s146
      %s161 = sphi 0, %s147
      %s165 = sphi 0, %s165
      %s167 = sphi 0, %s165
      %s168 = sphi 0, %s167
      %s182 = sphi 0, %s168
      %s188 = sphi 0, %s190
      %s191 = sphi 0, %s188
      %s192 = sphi 0, %s191
      %s208 = sphi 0, %s192
      %s214 = sphi 0, %s216
      %s217 = sphi 0, %s214
      %s218 = sphi 0, %s217
      %s234 = sphi 0, %s218
      %s240 = sphi 0, %s242
      %s243 = sphi 0, %s240
      %s244 = sphi 0, %s243
      %s260 = sphi 0, %s244
      %s266 = sphi 0, %s268
      %s269 = sphi 0, %s266
      %s270 = sphi 0, %s269
      %s286 = sphi 0, %s270
    $region4: #{tpu_custom_call.1} parent=1 // loop_header_branch
      %29 = sbr.rel (%p27) target = $region8
    $region5: #{tpu_custom_call.1} parent=1 // loop_body
      %s31 = ssub.s32 %s26, 1
      %s32 = ssub.s32 %s26, 2
      %s33 = sadd.s32 %s26, 1
      %s34 = ssub.s32 %s26, %s33
      %p35 = scmp.eq.s32.totalorder %s34, 0
      %s37 = sadd.s32 %s36, 1
      %s38 = scalar_select %p35, %s36, %s37
      %p41 = pneg %p35
      %p42 = scmp.eq.s32.totalorder %s26, 1
      %p43 = por %p41, %p42
      %p44 = scmp.ne.s32.totalorder %s36, %s39
      %p45 = scmp.eq.s32.totalorder %s26, 0
      %p46 = por %p44, %p45
      %p47 = scmp.ne.s32.totalorder %s36, %s39
      %p48 = scmp.eq.s32.totalorder %s31, 1
      %p49 = por %p47, %p48
      %p50 = scmp.ne.s32.totalorder %s39, %s40
      %p51 = scmp.eq.s32.totalorder %s31, 0
      %p52 = por %p50, %p51
      %p53 = scmp.ne.s32.totalorder %s39, %s40
      %p54 = scmp.eq.s32.totalorder %s32, 1
      %p55 = por %p53, %p54
      %p57 = scmp.ne.s32.totalorder %s40, %s56
      %p58 = scmp.eq.s32.totalorder %s32, 0
      %p59 = por %p57, %p58
      %s61 = sadd.s32 %s60, 1
      %p64 = scmp.eq.s32.totalorder %s26, 1
      %p65 = scmp.ne.s32.totalorder %s60, %s62
      %p66 = scmp.eq.s32.totalorder %s26, 0
      %p67 = por %p65, %p66
      %p68 = scmp.ne.s32.totalorder %s60, %s62
      %p69 = scmp.eq.s32.totalorder %s31, 1
      %p70 = por %p68, %p69
      %p71 = scmp.ne.s32.totalorder %s62, %s63
      %p72 = scmp.eq.s32.totalorder %s31, 0
      %p73 = por %p71, %p72
      %p74 = scmp.ne.s32.totalorder %s62, %s63
      %p75 = scmp.eq.s32.totalorder %s32, 1
      %p76 = por %p74, %p75
      %p78 = scmp.ne.s32.totalorder %s63, %s77
      %p79 = scmp.eq.s32.totalorder %s32, 0
      %p80 = por %p78, %p79
      %s82 = sadd.s32 %s81, 1
      %p85 = scmp.eq.s32.totalorder %s26, 1
      %p86 = scmp.ne.s32.totalorder %s81, %s83
      %p87 = scmp.eq.s32.totalorder %s26, 0
      %p88 = por %p86, %p87
      %p89 = scmp.ne.s32.totalorder %s81, %s83
      %p90 = scmp.eq.s32.totalorder %s31, 1
      %p91 = por %p89, %p90
      %p92 = scmp.ne.s32.totalorder %s83, %s84
      %p93 = scmp.eq.s32.totalorder %s31, 0
      %p94 = por %p92, %p93
      %p95 = scmp.ne.s32.totalorder %s83, %s84
      %p96 = scmp.eq.s32.totalorder %s32, 1
      %p97 = por %p95, %p96
      %p99 = scmp.ne.s32.totalorder %s84, %s98
      %p100 = scmp.eq.s32.totalorder %s32, 0
      %p101 = por %p99, %p100
      %s103 = sadd.s32 %s102, 1
      %p106 = scmp.eq.s32.totalorder %s26, 1
      %p107 = scmp.ne.s32.totalorder %s102, %s104
      %p108 = scmp.eq.s32.totalorder %s26, 0
      %p109 = por %p107, %p108
      %p110 = scmp.ne.s32.totalorder %s102, %s104
      %p111 = scmp.eq.s32.totalorder %s31, 1
      %p112 = por %p110, %p111
      %p113 = scmp.ne.s32.totalorder %s104, %s105
      %p114 = scmp.eq.s32.totalorder %s31, 0
      %p115 = por %p113, %p114
      %p116 = scmp.ne.s32.totalorder %s104, %s105
      %p117 = scmp.eq.s32.totalorder %s32, 1
      %p118 = por %p116, %p117
      %p120 = scmp.ne.s32.totalorder %s105, %s119
      %p121 = scmp.eq.s32.totalorder %s32, 0
      %p122 = por %p120, %p121
      %s124 = sadd.s32 %s123, 1
      %p127 = scmp.eq.s32.totalorder %s26, 1
      %p128 = scmp.ne.s32.totalorder %s123, %s125
      %p129 = scmp.eq.s32.totalorder %s26, 0
      %p130 = por %p128, %p129
      %p131 = scmp.ne.s32.totalorder %s123, %s125
      %p132 = scmp.eq.s32.totalorder %s31, 1
      %p133 = por %p131, %p132
      %p134 = scmp.ne.s32.totalorder %s125, %s126
      %p135 = scmp.eq.s32.totalorder %s31, 0
      %p136 = por %p134, %p135
      %p137 = scmp.ne.s32.totalorder %s125, %s126
      %p138 = scmp.eq.s32.totalorder %s32, 1
      %p139 = por %p137, %p138
      %p141 = scmp.ne.s32.totalorder %s126, %s140
      %p142 = scmp.eq.s32.totalorder %s32, 0
      %p143 = por %p141, %p142
      %s145 = sadd.s32 %s144, 1
      %p148 = scmp.eq.s32.totalorder %s26, 1
      %p149 = scmp.ne.s32.totalorder %s144, %s146
      %p150 = scmp.eq.s32.totalorder %s26, 0
      %p151 = por %p149, %p150
      %p152 = scmp.ne.s32.totalorder %s144, %s146
      %p153 = scmp.eq.s32.totalorder %s31, 1
      %p154 = por %p152, %p153
      %p155 = scmp.ne.s32.totalorder %s146, %s147
      %p156 = scmp.eq.s32.totalorder %s31, 0
      %p157 = por %p155, %p156
      %p158 = scmp.ne.s32.totalorder %s146, %s147
      %p159 = scmp.eq.s32.totalorder %s32, 1
      %p160 = por %p158, %p159
      %p162 = scmp.ne.s32.totalorder %s147, %s161
      %p163 = scmp.eq.s32.totalorder %s32, 0
      %p164 = por %p162, %p163
      %s166 = sadd.s32 %s165, 1
      %p169 = scmp.eq.s32.totalorder %s26, 1
      %p170 = scmp.ne.s32.totalorder %s165, %s167
      %p171 = scmp.eq.s32.totalorder %s26, 0
      %p172 = por %p170, %p171
      %p173 = scmp.ne.s32.totalorder %s165, %s167
      %p174 = scmp.eq.s32.totalorder %s31, 1
      %p175 = por %p173, %p174
      %p176 = scmp.ne.s32.totalorder %s167, %s168
      %p177 = scmp.eq.s32.totalorder %s31, 0
      %p178 = por %p176, %p177
      %p179 = scmp.ne.s32.totalorder %s167, %s168
      %p180 = scmp.eq.s32.totalorder %s32, 1
      %p181 = por %p179, %p180
      %p183 = scmp.ne.s32.totalorder %s168, %s182
      %p184 = scmp.eq.s32.totalorder %s32, 0
      %p185 = por %p183, %p184
      %s186 = ssub.s32 %s26, %s33
      %p187 = scmp.eq.s32.totalorder %s186, 0
      %s189 = sadd.s32 %s188, 1
      %s190 = scalar_select %p187, %s188, %s189
      %p193 = pneg %p187
      %p194 = scmp.eq.s32.totalorder %s26, 1
      %p195 = por %p193, %p194
      %p196 = scmp.ne.s32.totalorder %s188, %s191
      %p197 = scmp.eq.s32.totalorder %s26, 0
      %p198 = por %p196, %p197
      %p199 = scmp.ne.s32.totalorder %s188, %s191
      %p200 = scmp.eq.s32.totalorder %s31, 1
      %p201 = por %p199, %p200
      %p202 = scmp.ne.s32.totalorder %s191, %s192
      %p203 = scmp.eq.s32.totalorder %s31, 0
      %p204 = por %p202, %p203
      %p205 = scmp.ne.s32.totalorder %s191, %s192
      %p206 = scmp.eq.s32.totalorder %s32, 1
      %p207 = por %p205, %p206
      %p209 = scmp.ne.s32.totalorder %s192, %s208
      %p210 = scmp.eq.s32.totalorder %s32, 0
      %p211 = por %p209, %p210
      %s212 = ssub.s32 %s26, %s33
      %p213 = scmp.eq.s32.totalorder %s212, 0
      %s215 = sadd.s32 %s214, 1
      %s216 = scalar_select %p213, %s214, %s215
      %p219 = pneg %p213
      %p220 = scmp.eq.s32.totalorder %s26, 1
      %p221 = por %p219, %p220
      %p222 = scmp.ne.s32.totalorder %s214, %s217
      %p223 = scmp.eq.s32.totalorder %s26, 0
      %p224 = por %p222, %p223
      %p225 = scmp.ne.s32.totalorder %s214, %s217
      %p226 = scmp.eq.s32.totalorder %s31, 1
      %p227 = por %p225, %p226
      %p228 = scmp.ne.s32.totalorder %s217, %s218
      %p229 = scmp.eq.s32.totalorder %s31, 0
      %p230 = por %p228, %p229
      %p231 = scmp.ne.s32.totalorder %s217, %s218
      %p232 = scmp.eq.s32.totalorder %s32, 1
      %p233 = por %p231, %p232
      %p235 = scmp.ne.s32.totalorder %s218, %s234
      %p236 = scmp.eq.s32.totalorder %s32, 0
      %p237 = por %p235, %p236
      %s238 = ssub.s32 %s26, %s33
      %p239 = scmp.eq.s32.totalorder %s238, 0
      %s241 = sadd.s32 %s240, 1
      %s242 = scalar_select %p239, %s240, %s241
      %p245 = pneg %p239
      %p246 = scmp.eq.s32.totalorder %s26, 1
      %p247 = por %p245, %p246
      %p248 = scmp.ne.s32.totalorder %s240, %s243
      %p249 = scmp.eq.s32.totalorder %s26, 0
      %p250 = por %p248, %p249
      %p251 = scmp.ne.s32.totalorder %s240, %s243
      %p252 = scmp.eq.s32.totalorder %s31, 1
      %p253 = por %p251, %p252
      %p254 = scmp.ne.s32.totalorder %s243, %s244
      %p255 = scmp.eq.s32.totalorder %s31, 0
      %p256 = por %p254, %p255
      %p257 = scmp.ne.s32.totalorder %s243, %s244
      %p258 = scmp.eq.s32.totalorder %s32, 1
      %p259 = por %p257, %p258
      %p261 = scmp.ne.s32.totalorder %s244, %s260
      %p262 = scmp.eq.s32.totalorder %s32, 0
      %p263 = por %p261, %p262
      %s264 = ssub.s32 %s26, %s33
      %p265 = scmp.eq.s32.totalorder %s264, 0
      %s267 = sadd.s32 %s266, 1
      %s268 = scalar_select %p265, %s266, %s267
      %p271 = pneg %p265
      %p272 = scmp.eq.s32.totalorder %s26, 1
      %p273 = por %p271, %p272
      %p274 = scmp.ne.s32.totalorder %s266, %s269
      %p275 = scmp.eq.s32.totalorder %s26, 0
      %p276 = por %p274, %p275
      %p277 = scmp.ne.s32.totalorder %s266, %s269
      %p278 = scmp.eq.s32.totalorder %s31, 1
      %p279 = por %p277, %p278
      %p280 = scmp.ne.s32.totalorder %s269, %s270
      %p281 = scmp.eq.s32.totalorder %s31, 0
      %p282 = por %p280, %p281
      %p283 = scmp.ne.s32.totalorder %s269, %s270
      %p284 = scmp.eq.s32.totalorder %s32, 1
      %p285 = por %p283, %p284
      %p287 = scmp.ne.s32.totalorder %s270, %s286
      %p288 = scmp.eq.s32.totalorder %s32, 0
      %p289 = por %p287, %p288
      %p290 = scmp.le.s32.totalorder 1, %s26
      %p291 = scmp.lt.s32.totalorder %s26, 3
      %p292 = pnand %p290, %p291
      %p293 = pneg %p292
      // Predicated region
      $region9: #{tpu_custom_call.1} parent=5 // pred_check
        _
      $region10: #{tpu_custom_call.1} parent=5 // pred_check_branch
        %295 = sbr.rel (%p292) target = $region12
      $region11: #{tpu_custom_call.1} parent=5 // pred_region
        %s296 = ssub.s32 %s26, 1
        // Predicated region
        $region13: #{tpu_custom_call.1} parent=11 // pred_check
          %p297 = pneg %p73
        $region14: #{tpu_custom_call.1} parent=11 // pred_check_branch
          %299 = sbr.rel (%p297) target = $region16
        $region15: #{tpu_custom_call.1} parent=11 // pred_region
          _
        $region16: #{tpu_custom_call.1} parent=11 // pred_fallthru
          _
        // Predicated region
        $region17: #{tpu_custom_call.1} parent=11 // pred_check
          %p300 = pneg %p94
        $region18: #{tpu_custom_call.1} parent=11 // pred_check_branch
          %302 = sbr.rel (%p300) target = $region20
        $region19: #{tpu_custom_call.1} parent=11 // pred_region
          _
        $region20: #{tpu_custom_call.1} parent=11 // pred_fallthru
          _
        // Predicated region
        $region21: #{tpu_custom_call.1} parent=11 // pred_check
          %p303 = pneg %p115
        $region22: #{tpu_custom_call.1} parent=11 // pred_check_branch
          %305 = sbr.rel (%p303) target = $region24
        $region23: #{tpu_custom_call.1} parent=11 // pred_region
          _
        $region24: #{tpu_custom_call.1} parent=11 // pred_fallthru
          _
        // Predicated region
        $region25: #{tpu_custom_call.1} parent=11 // pred_check
          %p306 = pneg %p136
        $region26: #{tpu_custom_call.1} parent=11 // pred_check_branch
          %308 = sbr.rel (%p306) target = $region28
        $region27: #{tpu_custom_call.1} parent=11 // pred_region
          _
        $region28: #{tpu_custom_call.1} parent=11 // pred_fallthru
          _
        // Predicated region
        $region29: #{tpu_custom_call.1} parent=11 // pred_check
          %p309 = pneg %p157
        $region30: #{tpu_custom_call.1} parent=11 // pred_check_branch
          %311 = sbr.rel (%p309) target = $region32
        $region31: #{tpu_custom_call.1} parent=11 // pred_region
          _
        $region32: #{tpu_custom_call.1} parent=11 // pred_fallthru
          _
        // Predicated region
        $region33: #{tpu_custom_call.1} parent=11 // pred_check
          %p312 = pneg %p178
        $region34: #{tpu_custom_call.1} parent=11 // pred_check_branch
          %314 = sbr.rel (%p312) target = $region36
        $region35: #{tpu_custom_call.1} parent=11 // pred_region
          _
        $region36: #{tpu_custom_call.1} parent=11 // pred_fallthru
          _
      $region12: #{tpu_custom_call.1} parent=5 // pred_fallthru
        _
      %p315 = scmp.lt.s32.totalorder %s26, 2
      // Predicated region
      $region37: #{tpu_custom_call.1} parent=5 // pred_check
        %p316 = pneg %p315
      $region38: #{tpu_custom_call.1} parent=5 // pred_check_branch
        %318 = sbr.rel (%p316) target = $region40
      $region39: #{tpu_custom_call.1} parent=5 // pred_region
        // Predicated region
        $region41: #{tpu_custom_call.1} parent=39 // pred_check
          %p319 = pneg %p46
        $region42: #{tpu_custom_call.1} parent=39 // pred_check_branch
          %321 = sbr.rel (%p319) target = $region44
        $region43: #{tpu_custom_call.1} parent=39 // pred_region
          %p322 = scmp.lt.s32.totalorder %s26, 1
          %s323 = scalar_select %p322, %s26, 1
          %s324 = smul.addr %s323, 20
          %s325 = smul.addr %s324, 8
          %s326 = scalar_lea.vmem %s0, %s325
        $region44: #{tpu_custom_call.1} parent=39 // pred_fallthru
          _
      $region40: #{tpu_custom_call.1} parent=5 // pred_fallthru
        _
      %p327 = scmp.le.s32.totalorder 1, %s26
      %p328 = scmp.lt.s32.totalorder %s26, 3
      %p329 = pnand %p327, %p328
      %p330 = pneg %p329
      // Predicated region
      $region45: #{tpu_custom_call.1} parent=5 // pred_check
        _
      $region46: #{tpu_custom_call.1} parent=5 // pred_check_branch
        %332 = sbr.rel (%p329) target = $region48
      $region47: #{tpu_custom_call.1} parent=5 // pred_region
        %s333 = ssub.s32 %s26, 1
        %p334 = scmp.lt.s32.totalorder %s31, 1
        %s335 = scalar_select %p334, %s31, 1
        %s336 = smul.addr %s335, 20
        %s337 = smul.addr %s336, 8
        %s338 = scalar_lea.vmem %s0, %s337
        %p339 = pneg %p52
        %p340 = pneg %p49
        %p341 = pneg %p73
        %p342 = pneg %p70
        %p343 = pneg %p94
        %p344 = pneg %p91
        %p345 = pneg %p115
        %p346 = pneg %p112
        %p347 = pneg %p136
        %p348 = pneg %p133
        %p349 = pneg %p157
        %p350 = pneg %p154
        %p351 = pneg %p178
        %p352 = pneg %p175
        %p353 = pneg %p204
        %p354 = pneg %p201
        %s355 = sand.u32 %s191, 1
        %s356 = scalar_lea.sflag [#allocation7], %s355
        %s357 = sand.u32 %s191, 1
        %s358 = smul.addr %s357, 16
        %s359 = scalar_lea.vmem [#allocation6], %s358
        %p360 = pneg %p230
        %p361 = pneg %p227
        %s362 = sand.u32 %s31, 1
        %s363 = scalar_lea.sflag [#allocation9], %s362
        %s364 = sand.u32 %s217, 1
        %s365 = smul.addr %s364, 8
        %s366 = scalar_lea.vmem [#allocation8], %s365
        %p367 = pneg %p256
        %p368 = pneg %p253
        %s369 = sand.u32 %s31, 1
        %s370 = scalar_lea.sflag [#allocation9], %s369
        %s371 = sand.u32 %s243, 1
        %s372 = smul.addr %s371, 4
        %s373 = scalar_lea.vmem [#allocation10], %s372
        %p374 = pneg %p282
        %p375 = pneg %p279
        %s376 = sand.u32 %s269, 1
        %s377 = scalar_lea.sflag [#allocation12], %s376
        %s378 = sand.u32 %s269, 1
        %s379 = smul.addr %s378, 4
        %s380 = scalar_lea.vmem [#allocation11], %s379
        %p381 = scmp.lt.s32.totalorder %s31, 1
        %s382 = scalar_select %p381, %s31, 1
        %s383 = smul.addr %s382, 20
        %s384 = smul.addr %s383, 8
        %s385 = scalar_lea.vmem %s0, %s384
        %v387 = vld [vmem:[%s385] sm:$0xff]
        %v388 = vld [vmem:[%s385 + $0x8] sm:$0xff]
        %v389 = vld [vmem:[%s385 + $0x10] sm:$0xff]
        %v390 = vld [vmem:[%s385 + $0x18] sm:$0xff]
        %v391 = vld [vmem:[%s385 + $0x20] sm:$0xff]
        %v392 = vld [vmem:[%s385 + $0x28] sm:$0xff]
        %v393 = vld [vmem:[%s385 + $0x30] sm:$0xff]
        %v394 = vld [vmem:[%s385 + $0x38] sm:$0xff]
        %v395 = vld [vmem:[%s385 + $0x40] sm:$0xff]
        %v396 = vld [vmem:[%s385 + $0x48] sm:$0xff]
        %v397 = vld [vmem:[%s385 + $0x50] sm:$0xff]
        %v398 = vld [vmem:[%s385 + $0x58] sm:$0xff]
        %v399 = vld [vmem:[%s385 + $0x60] sm:$0xff]
        %v400 = vld [vmem:[%s385 + $0x68] sm:$0xff]
        %v401 = vld [vmem:[%s385 + $0x70] sm:$0xff]
        %v402 = vld [vmem:[%s385 + $0x78] sm:$0xff]
        %v403 = vld [vmem:[%s385 + $0x80] sm:$0xf]
        %v404 = vld [vmem:[%s385 + $0x88] sm:$0xf]
        %v405 = vld [vmem:[%s385 + $0x90] sm:$0xf]
        %v406 = vld [vmem:[%s385 + $0x98] sm:$0xf]
        %v407 = vpack.c.bf16 %v391, %v387
        %v408 = vpack.c.bf16 %v392, %v388
        %v409 = vpack.c.bf16 %v393, %v389
        %v410 = vpack.c.bf16 %v394, %v390
        %v411 = vpack.c.bf16 %v399, %v395
        %v412 = vpack.c.bf16 %v400, %v396
        %v413 = vpack.c.bf16 %v401, %v397
        %v414 = vpack.c.bf16 %v402, %v398
        %v415 = vpack.c.bf16 %v403, %v403
        %v416 = vpack.c.bf16 %v404, %v404
        %v417 = vpack.c.bf16 %v405, %v405
        %v418 = vpack.c.bf16 %v406, %v406
        %v419 = vld [vmem:[%s1] sm:$0xff]
        %v420 = vld [vmem:[%s1 + $0x8] sm:$0xf]
        %v421 = vld [vmem:[%s1 + $0xc] sm:$0xff]
        %v422 = vld [vmem:[%s1 + $0x14] sm:$0xf]
        %v423 = vld [vmem:[%s1 + $0x18] sm:$0xff]
        %v424 = vld [vmem:[%s1 + $0x20] sm:$0xf]
        %v425 = vld [vmem:[%s1 + $0x24] sm:$0xff]
        %v426 = vld [vmem:[%s1 + $0x2c] sm:$0xf]
        %v427 = vld [vmem:[%s1 + $0x30] sm:$0xff]
        %v428 = vld [vmem:[%s1 + $0x38] sm:$0xf]
        %v429 = vld [vmem:[%s1 + $0x3c] sm:$0xff]
        %v430 = vld [vmem:[%s1 + $0x44] sm:$0xf]
        %v431 = vld [vmem:[%s1 + $0x48] sm:$0xff]
        %v432 = vld [vmem:[%s1 + $0x50] sm:$0xf]
        %v433 = vld [vmem:[%s1 + $0x54] sm:$0xff]
        %v434 = vld [vmem:[%s1 + $0x5c] sm:$0xf]
        %v435 = vld [vmem:[%s1 + $0x60] sm:$0xff]
        %v436 = vld [vmem:[%s1 + $0x68] sm:$0xf]
        %v437 = vld [vmem:[%s1 + $0x6c] sm:$0xff]
        %v438 = vld [vmem:[%s1 + $0x74] sm:$0xf]
        %v439 = vld [vmem:[%s1 + $0x78] sm:$0xff]
        %v440 = vld [vmem:[%s1 + $0x80] sm:$0xf]
        %v441 = vld [vmem:[%s1 + $0x84] sm:$0xff]
        %v442 = vld [vmem:[%s1 + $0x8c] sm:$0xf]
        %v443 = vld [vmem:[%s1 + $0x90] sm:$0xff]
        %v444 = vld [vmem:[%s1 + $0x98] sm:$0xf]
        %v445 = vld [vmem:[%s1 + $0x9c] sm:$0xff]
        %v446 = vld [vmem:[%s1 + $0xa4] sm:$0xf]
        %v447 = vld [vmem:[%s1 + $0xa8] sm:$0xff]
        %v448 = vld [vmem:[%s1 + $0xb0] sm:$0xf]
        %v449 = vld [vmem:[%s1 + $0xb4] sm:$0xff]
        %v450 = vld [vmem:[%s1 + $0xbc] sm:$0xf]
        %v451 = vld [vmem:[%s1 + $0xc0] sm:$0xff]
        %v452 = vld [vmem:[%s1 + $0xc8] sm:$0xf]
        %v453 = vld [vmem:[%s1 + $0xcc] sm:$0xff]
        %v454 = vld [vmem:[%s1 + $0xd4] sm:$0xf]
        %v455 = vld [vmem:[%s1 + $0xd8] sm:$0xff]
        %v456 = vld [vmem:[%s1 + $0xe0] sm:$0xf]
        %v457 = vld [vmem:[%s1 + $0xe4] sm:$0xff]
        %v458 = vld [vmem:[%s1 + $0xec] sm:$0xf]
        %v459 = vld [vmem:[%s1 + $0xf0] sm:$0xff]
        %v460 = vld [vmem:[%s1 + $0xf8] sm:$0xf]
        %v461 = vld [vmem:[%s1 + $0xfc] sm:$0xff]
        %v462 = vld [vmem:[%s1 + $0x104] sm:$0xf]
        %v463 = vld [vmem:[%s1 + $0x108] sm:$0xff]
        %v464 = vld [vmem:[%s1 + $0x110] sm:$0xf]
        %v465 = vld [vmem:[%s1 + $0x114] sm:$0xff]
        %v466 = vld [vmem:[%s1 + $0x11c] sm:$0xf]
        %v467 = vld [vmem:[%s1 + $0x120] sm:$0xff]
        %v468 = vld [vmem:[%s1 + $0x128] sm:$0xf]
        %v469 = vld [vmem:[%s1 + $0x12c] sm:$0xff]
        %v470 = vld [vmem:[%s1 + $0x134] sm:$0xf]
        %v471 = vld [vmem:[%s1 + $0x138] sm:$0xff]
        %v472 = vld [vmem:[%s1 + $0x140] sm:$0xf]
        %v473 = vld [vmem:[%s1 + $0x144] sm:$0xff]
        %v474 = vld [vmem:[%s1 + $0x14c] sm:$0xf]
        %v475 = vld [vmem:[%s1 + $0x150] sm:$0xff]
        %v476 = vld [vmem:[%s1 + $0x158] sm:$0xf]
        %v477 = vld [vmem:[%s1 + $0x15c] sm:$0xff]
        %v478 = vld [vmem:[%s1 + $0x164] sm:$0xf]
        %v479 = vld [vmem:[%s1 + $0x168] sm:$0xff]
        %v480 = vld [vmem:[%s1 + $0x170] sm:$0xf]
        %v481 = vld [vmem:[%s1 + $0x174] sm:$0xff]
        %v482 = vld [vmem:[%s1 + $0x17c] sm:$0xf]
        %v483 = vld [vmem:[%s1 + $0x180] sm:$0xff]
        %v484 = vld [vmem:[%s1 + $0x188] sm:$0xf]
        %v485 = vld [vmem:[%s1 + $0x18c] sm:$0xff]
        %v486 = vld [vmem:[%s1 + $0x194] sm:$0xf]
        %v487 = vld [vmem:[%s1 + $0x198] sm:$0xff]
        %v488 = vld [vmem:[%s1 + $0x1a0] sm:$0xf]
        %v489 = vld [vmem:[%s1 + $0x1a4] sm:$0xff]
        %v490 = vld [vmem:[%s1 + $0x1ac] sm:$0xf]
        %v491 = vld [vmem:[%s1 + $0x1b0] sm:$0xff]
        %v492 = vld [vmem:[%s1 + $0x1b8] sm:$0xf]
        %v493 = vld [vmem:[%s1 + $0x1bc] sm:$0xff]
        %v494 = vld [vmem:[%s1 + $0x1c4] sm:$0xf]
        %v495 = vld [vmem:[%s1 + $0x1c8] sm:$0xff]
        %v496 = vld [vmem:[%s1 + $0x1d0] sm:$0xf]
        %v497 = vld [vmem:[%s1 + $0x1d4] sm:$0xff]
        %v498 = vld [vmem:[%s1 + $0x1dc] sm:$0xf]
        %v499 = vld [vmem:[%s1 + $0x1e0] sm:$0xff]
        %v500 = vld [vmem:[%s1 + $0x1e8] sm:$0xf]
        %v501 = vld [vmem:[%s1 + $0x1ec] sm:$0xff]
        %v502 = vld [vmem:[%s1 + $0x1f4] sm:$0xf]
        %v503 = vld [vmem:[%s1 + $0x1f8] sm:$0xff]
        %v504 = vld [vmem:[%s1 + $0x200] sm:$0xf]
        %v505 = vld [vmem:[%s1 + $0x204] sm:$0xff]
        %v506 = vld [vmem:[%s1 + $0x20c] sm:$0xf]
        %v507 = vld [vmem:[%s1 + $0x210] sm:$0xff]
        %v508 = vld [vmem:[%s1 + $0x218] sm:$0xf]
        %v509 = vld [vmem:[%s1 + $0x21c] sm:$0xff]
        %v510 = vld [vmem:[%s1 + $0x224] sm:$0xf]
        %v511 = vld [vmem:[%s1 + $0x228] sm:$0xff]
        %v512 = vld [vmem:[%s1 + $0x230] sm:$0xf]
        %v513 = vld [vmem:[%s1 + $0x234] sm:$0xff]
        %v514 = vld [vmem:[%s1 + $0x23c] sm:$0xf]
        %v515 = vld [vmem:[%s1 + $0x240] sm:$0xff]
        %v516 = vld [vmem:[%s1 + $0x248] sm:$0xf]
        %v517 = vld [vmem:[%s1 + $0x24c] sm:$0xff]
        %v518 = vld [vmem:[%s1 + $0x254] sm:$0xf]
        %v519 = vld [vmem:[%s1 + $0x258] sm:$0xff]
        %v520 = vld [vmem:[%s1 + $0x260] sm:$0xf]
        %v521 = vld [vmem:[%s1 + $0x264] sm:$0xff]
        %v522 = vld [vmem:[%s1 + $0x26c] sm:$0xf]
        %v523 = vld [vmem:[%s1 + $0x270] sm:$0xff]
        %v524 = vld [vmem:[%s1 + $0x278] sm:$0xf]
        %v525 = vld [vmem:[%s1 + $0x27c] sm:$0xff]
        %v526 = vld [vmem:[%s1 + $0x284] sm:$0xf]
        %v527 = vld [vmem:[%s1 + $0x288] sm:$0xff]
        %v528 = vld [vmem:[%s1 + $0x290] sm:$0xf]
        %v529 = vld [vmem:[%s1 + $0x294] sm:$0xff]
        %v530 = vld [vmem:[%s1 + $0x29c] sm:$0xf]
        %v531 = vld [vmem:[%s2] sm:$0x7]
        %v533 = vperm.slane %v531, 0
        %v534 = vperm.slane %v531, 1
        %v535 = vperm.slane %v531, 2
        %v651 = vunpack.c.l.b16 %v419
        %v652 = vunpack.c.h.b16 %v419
        %v653 = vunpack.c.l.b16 %v420
        %v654 = vunpack.c.l.b16 %v421
        %v655 = vunpack.c.h.b16 %v421
        %v656 = vunpack.c.l.b16 %v422
        %v657 = vunpack.c.l.b16 %v423
        %v658 = vunpack.c.h.b16 %v423
        %v659 = vunpack.c.l.b16 %v424
        %v660 = vunpack.c.l.b16 %v425
        %v661 = vunpack.c.h.b16 %v425
        %v662 = vunpack.c.l.b16 %v426
        %v663 = vunpack.c.l.b16 %v427
        %v664 = vunpack.c.h.b16 %v427
        %v665 = vunpack.c.l.b16 %v428
        %v666 = vunpack.c.l.b16 %v429
        %v667 = vunpack.c.h.b16 %v429
        %v668 = vunpack.c.l.b16 %v430
        %v669 = vunpack.c.l.b16 %v431
        %v670 = vunpack.c.h.b16 %v431
        %v671 = vunpack.c.l.b16 %v432
        %v672 = vunpack.c.l.b16 %v433
        %v673 = vunpack.c.h.b16 %v433
        %v674 = vunpack.c.l.b16 %v434
        %v675 = vunpack.c.l.b16 %v435
        %v676 = vunpack.c.h.b16 %v435
        %v677 = vunpack.c.l.b16 %v436
        %v678 = vunpack.c.l.b16 %v437
        %v679 = vunpack.c.h.b16 %v437
        %v680 = vunpack.c.l.b16 %v438
        %v681 = vunpack.c.l.b16 %v439
        %v682 = vunpack.c.h.b16 %v439
        %v683 = vunpack.c.l.b16 %v440
        %v684 = vunpack.c.l.b16 %v441
        %v685 = vunpack.c.h.b16 %v441
        %v686 = vunpack.c.l.b16 %v442
        %v687 = vunpack.c.l.b16 %v443
        %v688 = vunpack.c.h.b16 %v443
        %v689 = vunpack.c.l.b16 %v444
        %v690 = vunpack.c.l.b16 %v445
        %v691 = vunpack.c.h.b16 %v445
        %v692 = vunpack.c.l.b16 %v446
        %v693 = vunpack.c.l.b16 %v447
        %v694 = vunpack.c.h.b16 %v447
        %v695 = vunpack.c.l.b16 %v448
        %v696 = vunpack.c.l.b16 %v449
        %v697 = vunpack.c.h.b16 %v449
        %v698 = vunpack.c.l.b16 %v450
        %v699 = vunpack.c.l.b16 %v451
        %v700 = vunpack.c.h.b16 %v451
        %v701 = vunpack.c.l.b16 %v452
        %v702 = vunpack.c.l.b16 %v453
        %v703 = vunpack.c.h.b16 %v453
        %v704 = vunpack.c.l.b16 %v454
        %v705 = vunpack.c.l.b16 %v455
        %v706 = vunpack.c.h.b16 %v455
        %v707 = vunpack.c.l.b16 %v456
        %v708 = vunpack.c.l.b16 %v457
        %v709 = vunpack.c.h.b16 %v457
        %v710 = vunpack.c.l.b16 %v458
        %v711 = vunpack.c.l.b16 %v459
        %v712 = vunpack.c.h.b16 %v459
        %v713 = vunpack.c.l.b16 %v460
        %v714 = vunpack.c.l.b16 %v461
        %v715 = vunpack.c.h.b16 %v461
        %v716 = vunpack.c.l.b16 %v462
        %v717 = vunpack.c.l.b16 %v463
        %v718 = vunpack.c.h.b16 %v463
        %v719 = vunpack.c.l.b16 %v464
        %v720 = vunpack.c.l.b16 %v465
        %v721 = vunpack.c.h.b16 %v465
        %v722 = vunpack.c.l.b16 %v466
        %v723 = vunpack.c.l.b16 %v467
        %v724 = vunpack.c.h.b16 %v467
        %v725 = vunpack.c.l.b16 %v468
        %v726 = vunpack.c.l.b16 %v469
        %v727 = vunpack.c.h.b16 %v469
        %v728 = vunpack.c.l.b16 %v470
        %v729 = vunpack.c.l.b16 %v471
        %v730 = vunpack.c.h.b16 %v471
        %v731 = vunpack.c.l.b16 %v472
        %v732 = vunpack.c.l.b16 %v473
        %v733 = vunpack.c.h.b16 %v473
        %v734 = vunpack.c.l.b16 %v474
        %v735 = vunpack.c.l.b16 %v475
        %v736 = vunpack.c.h.b16 %v475
        %v737 = vunpack.c.l.b16 %v476
        %v738 = vunpack.c.l.b16 %v477
        %v739 = vunpack.c.h.b16 %v477
        %v740 = vunpack.c.l.b16 %v478
        %v741 = vunpack.c.l.b16 %v479
        %v742 = vunpack.c.h.b16 %v479
        %v743 = vunpack.c.l.b16 %v480
        %v744 = vunpack.c.l.b16 %v481
        %v745 = vunpack.c.h.b16 %v481
        %v746 = vunpack.c.l.b16 %v482
        %v747 = vunpack.c.l.b16 %v483
        %v748 = vunpack.c.h.b16 %v483
        %v749 = vunpack.c.l.b16 %v484
        %v750 = vunpack.c.l.b16 %v485
        %v751 = vunpack.c.h.b16 %v485
        %v752 = vunpack.c.l.b16 %v486
        %v753 = vunpack.c.l.b16 %v487
        %v754 = vunpack.c.h.b16 %v487
        %v755 = vunpack.c.l.b16 %v488
        %v756 = vunpack.c.l.b16 %v489
        %v757 = vunpack.c.h.b16 %v489
        %v758 = vunpack.c.l.b16 %v490
        %v759 = vunpack.c.l.b16 %v491
        %v760 = vunpack.c.h.b16 %v491
        %v761 = vunpack.c.l.b16 %v492
        %v762 = vunpack.c.l.b16 %v493
        %v763 = vunpack.c.h.b16 %v493
        %v764 = vunpack.c.l.b16 %v494
        %v765 = vunpack.c.l.b16 %v495
        %v766 = vunpack.c.h.b16 %v495
        %v767 = vunpack.c.l.b16 %v496
        %v768 = vunpack.c.l.b16 %v497
        %v769 = vunpack.c.h.b16 %v497
        %v770 = vunpack.c.l.b16 %v498
        %v771 = vunpack.c.l.b16 %v499
        %v772 = vunpack.c.h.b16 %v499
        %v773 = vunpack.c.l.b16 %v500
        %v774 = vunpack.c.l.b16 %v501
        %v775 = vunpack.c.h.b16 %v501
        %v776 = vunpack.c.l.b16 %v502
        %v777 = vunpack.c.l.b16 %v503
        %v778 = vunpack.c.h.b16 %v503
        %v779 = vunpack.c.l.b16 %v504
        %v780 = vunpack.c.l.b16 %v505
        %v781 = vunpack.c.h.b16 %v505
        %v782 = vunpack.c.l.b16 %v506
        %v783 = vunpack.c.l.b16 %v507
        %v784 = vunpack.c.h.b16 %v507
        %v785 = vunpack.c.l.b16 %v508
        %v786 = vunpack.c.l.b16 %v509
        %v787 = vunpack.c.h.b16 %v509
        %v788 = vunpack.c.l.b16 %v510
        %v789 = vunpack.c.l.b16 %v511
        %v790 = vunpack.c.h.b16 %v511
        %v791 = vunpack.c.l.b16 %v512
        %v792 = vunpack.c.l.b16 %v513
        %v793 = vunpack.c.h.b16 %v513
        %v794 = vunpack.c.l.b16 %v514
        %v795 = vunpack.c.l.b16 %v515
        %v796 = vunpack.c.h.b16 %v515
        %v797 = vunpack.c.l.b16 %v516
        %v798 = vunpack.c.l.b16 %v517
        %v799 = vunpack.c.h.b16 %v517
        %v800 = vunpack.c.l.b16 %v518
        %v801 = vunpack.c.l.b16 %v519
        %v802 = vunpack.c.h.b16 %v519
        %v803 = vunpack.c.l.b16 %v520
        %v804 = vunpack.c.l.b16 %v521
        %v805 = vunpack.c.h.b16 %v521
        %v806 = vunpack.c.l.b16 %v522
        %v807 = vunpack.c.l.b16 %v523
        %v808 = vunpack.c.h.b16 %v523
        %v809 = vunpack.c.l.b16 %v524
        %v810 = vunpack.c.l.b16 %v525
        %v811 = vunpack.c.h.b16 %v525
        %v812 = vunpack.c.l.b16 %v526
        %v813 = vunpack.c.l.b16 %v527
        %v814 = vunpack.c.h.b16 %v527
        %v815 = vunpack.c.l.b16 %v528
        %v816 = vunpack.c.l.b16 %v529
        %v817 = vunpack.c.h.b16 %v529
        %v818 = vunpack.c.l.b16 %v530
        %v819 = vpack.c.b16 %v654, %v651
        %v820 = vpack.c.b16 %v655, %v652
        %v821 = vpack.c.b16 %v656, %v653
        %v822 = vpack.c.b16 %v660, %v657
        %v823 = vpack.c.b16 %v661, %v658
        %v824 = vpack.c.b16 %v662, %v659
        %v825 = vpack.c.b16 %v666, %v663
        %v826 = vpack.c.b16 %v667, %v664
        %v827 = vpack.c.b16 %v668, %v665
        %v828 = vpack.c.b16 %v672, %v669
        %v829 = vpack.c.b16 %v673, %v670
        %v830 = vpack.c.b16 %v674, %v671
        %v831 = vpack.c.b16 %v678, %v675
        %v832 = vpack.c.b16 %v679, %v676
        %v833 = vpack.c.b16 %v680, %v677
        %v834 = vpack.c.b16 %v684, %v681
        %v835 = vpack.c.b16 %v685, %v682
        %v836 = vpack.c.b16 %v686, %v683
        %v837 = vpack.c.b16 %v690, %v687
        %v838 = vpack.c.b16 %v691, %v688
        %v839 = vpack.c.b16 %v692, %v689
        %v840 = vpack.c.b16 %v696, %v693
        %v841 = vpack.c.b16 %v697, %v694
        %v842 = vpack.c.b16 %v698, %v695
        %v843 = vpack.c.b16 %v702, %v699
        %v844 = vpack.c.b16 %v703, %v700
        %v845 = vpack.c.b16 %v704, %v701
        %v846 = vpack.c.b16 %v708, %v705
        %v847 = vpack.c.b16 %v709, %v706
        %v848 = vpack.c.b16 %v710, %v707
        %v849 = vpack.c.b16 %v714, %v711
        %v850 = vpack.c.b16 %v715, %v712
        %v851 = vpack.c.b16 %v716, %v713
        %v852 = vpack.c.b16 %v720, %v717
        %v853 = vpack.c.b16 %v721, %v718
        %v854 = vpack.c.b16 %v722, %v719
        %v855 = vpack.c.b16 %v726, %v723
        %v856 = vpack.c.b16 %v727, %v724
        %v857 = vpack.c.b16 %v728, %v725
        %v858 = vpack.c.b16 %v732, %v729
        %v859 = vpack.c.b16 %v733, %v730
        %v860 = vpack.c.b16 %v734, %v731
        %v861 = vpack.c.b16 %v738, %v735
        %v862 = vpack.c.b16 %v739, %v736
        %v863 = vpack.c.b16 %v740, %v737
        %v864 = vpack.c.b16 %v744, %v741
        %v865 = vpack.c.b16 %v745, %v742
        %v866 = vpack.c.b16 %v746, %v743
        %v867 = vpack.c.b16 %v750, %v747
        %v868 = vpack.c.b16 %v751, %v748
        %v869 = vpack.c.b16 %v752, %v749
        %v870 = vpack.c.b16 %v756, %v753
        %v871 = vpack.c.b16 %v757, %v754
        %v872 = vpack.c.b16 %v758, %v755
        %v873 = vpack.c.b16 %v762, %v759
        %v874 = vpack.c.b16 %v763, %v760
        %v875 = vpack.c.b16 %v764, %v761
        %v876 = vpack.c.b16 %v768, %v765
        %v877 = vpack.c.b16 %v769, %v766
        %v878 = vpack.c.b16 %v770, %v767
        %v879 = vpack.c.b16 %v774, %v771
        %v880 = vpack.c.b16 %v775, %v772
        %v881 = vpack.c.b16 %v776, %v773
        %v882 = vpack.c.b16 %v780, %v777
        %v883 = vpack.c.b16 %v781, %v778
        %v884 = vpack.c.b16 %v782, %v779
        %v885 = vpack.c.b16 %v786, %v783
        %v886 = vpack.c.b16 %v787, %v784
        %v887 = vpack.c.b16 %v788, %v785
        %v888 = vpack.c.b16 %v792, %v789
        %v889 = vpack.c.b16 %v793, %v790
        %v890 = vpack.c.b16 %v794, %v791
        %v891 = vpack.c.b16 %v798, %v795
        %v892 = vpack.c.b16 %v799, %v796
        %v893 = vpack.c.b16 %v800, %v797
        %v894 = vpack.c.b16 %v804, %v801
        %v895 = vpack.c.b16 %v805, %v802
        %v896 = vpack.c.b16 %v806, %v803
        %v897 = vpack.c.b16 %v810, %v807
        %v898 = vpack.c.b16 %v811, %v808
        %v899 = vpack.c.b16 %v812, %v809
        %v900 = vpack.c.b16 %v816, %v813
        %v901 = vpack.c.b16 %v817, %v814
        %v902 = vpack.c.b16 %v818, %v815
        %vm987 = vcmask 523264
        %v989 = vsel %vm987, %v410, 0
        %v992 = vsel %vm987, %v414, 0
        %v995 = vsel %vm987, %v418, 0
        %997 = vmatpush.bf16.msra.mxu0 %v840
        %998 = vmatpush.bf16.msra.mxu0 %v837
        %999 = vmatpush.bf16.msra.mxu0 %v834
        %1000 = vmatpush.bf16.msra.mxu0 %v831
        %1001 = vmatpush.bf16.msra.mxu0 %v828
        %1002 = vmatpush.bf16.msra.mxu0 %v825
        %1003 = vmatpush.bf16.msra.mxu0 %v822
        %1004 = vmatpush.bf16.msra.mxu0 %v819
        %1005 = vmatmul.bf16.gmra.mxu0 %v407
        %v1006 = vpop.f32.mrf.mxu0
        %v1007 = vadd.f32 %v533, %v1006
        %v1008 = vpop.f32.mrf.mxu0
        %v1009 = vadd.f32 %v533, %v1008
        %1010 = vmatmul.bf16.gmra.mxu0 %v411
        %v1011 = vpop.f32.mrf.mxu0
        %v1012 = vadd.f32 %v533, %v1011
        %v1013 = vpop.f32.mrf.mxu0
        %v1014 = vadd.f32 %v533, %v1013
        %1015 = vmatmul.bf16.gmra.mxu0 %v415
        %v1016 = vpop.f32.mrf.mxu0
        %v1017 = vadd.f32 %v533, %v1016
        %v1018 = vpop.f32.mrf.mxu0
        %1019 = vdwg.mxu0
        %1020 = vmatpush.bf16.msra.mxu0 %v864
        %1021 = vmatpush.bf16.msra.mxu0 %v861
        %1022 = vmatpush.bf16.msra.mxu0 %v858
        %1023 = vmatpush.bf16.msra.mxu0 %v855
        %1024 = vmatpush.bf16.msra.mxu0 %v852
        %1025 = vmatpush.bf16.msra.mxu0 %v849
        %1026 = vmatpush.bf16.msra.mxu0 %v846
        %1027 = vmatpush.bf16.msra.mxu0 %v843
        %1028 = vmatmul.bf16.gmra.mxu0 %v408
        %v1029 = vpop.f32.mrf.mxu0
        %v1030 = vadd.f32 %v1007, %v1029
        %v1031 = vpop.f32.mrf.mxu0
        %v1032 = vadd.f32 %v1009, %v1031
        %1033 = vmatmul.bf16.gmra.mxu0 %v412
        %v1034 = vpop.f32.mrf.mxu0
        %v1035 = vadd.f32 %v1012, %v1034
        %v1036 = vpop.f32.mrf.mxu0
        %v1037 = vadd.f32 %v1014, %v1036
        %1038 = vmatmul.bf16.gmra.mxu0 %v416
        %v1039 = vpop.f32.mrf.mxu0
        %v1040 = vadd.f32 %v1017, %v1039
        %v1041 = vpop.f32.mrf.mxu0
        %1042 = vdwg.mxu0
        %1043 = vmatpush.bf16.msra.mxu0 %v888
        %1044 = vmatpush.bf16.msra.mxu0 %v885
        %1045 = vmatpush.bf16.msra.mxu0 %v882
        %1046 = vmatpush.bf16.msra.mxu0 %v879
        %1047 = vmatpush.bf16.msra.mxu0 %v876
        %1048 = vmatpush.bf16.msra.mxu0 %v873
        %1049 = vmatpush.bf16.msra.mxu0 %v870
        %1050 = vmatpush.bf16.msra.mxu0 %v867
        %1051 = vmatmul.bf16.gmra.mxu0 %v409
        %v1052 = vpop.f32.mrf.mxu0
        %v1053 = vadd.f32 %v1030, %v1052
        %v1054 = vpop.f32.mrf.mxu0
        %v1055 = vadd.f32 %v1032, %v1054
        %1056 = vmatmul.bf16.gmra.mxu0 %v413
        %v1057 = vpop.f32.mrf.mxu0
        %v1058 = vadd.f32 %v1035, %v1057
        %v1059 = vpop.f32.mrf.mxu0
        %v1060 = vadd.f32 %v1037, %v1059
        %1061 = vmatmul.bf16.gmra.mxu0 %v417
        %v1062 = vpop.f32.mrf.mxu0
        %v1063 = vadd.f32 %v1040, %v1062
        %v1064 = vpop.f32.mrf.mxu0
        %1065 = vdwg.mxu0
        %1066 = vmatpush.bf16.msra.mxu0 0
        %1067 = vmatpush.bf16.msra.mxu0 0
        %1068 = vmatpush.bf16.msra.mxu0 0
        %1069 = vmatpush.bf16.msra.mxu0 0
        %1070 = vmatpush.bf16.msra.mxu0 %v900
        %1071 = vmatpush.bf16.msra.mxu0 %v897
        %1072 = vmatpush.bf16.msra.mxu0 %v894
        %1073 = vmatpush.bf16.msra.mxu0 %v891
        %1074 = vmatmul.bf16.gmra.mxu0 %v989
        %v1075 = vpop.f32.mrf.mxu0
        %v1076 = vadd.f32 %v1053, %v1075
        %v1077 = vpop.f32.mrf.mxu0
        %v1078 = vadd.f32 %v1055, %v1077
        %1079 = vmatmul.bf16.gmra.mxu0 %v992
        %v1080 = vpop.f32.mrf.mxu0
        %v1081 = vadd.f32 %v1058, %v1080
        %v1082 = vpop.f32.mrf.mxu0
        %v1083 = vadd.f32 %v1060, %v1082
        %1084 = vmatmul.bf16.gmra.mxu0 %v995
        %v1085 = vpop.f32.mrf.mxu0
        %v1086 = vadd.f32 %v1063, %v1085
        %v1087 = vpop.f32.mrf.mxu0
        %1088 = vdwg.mxu0
        %1089 = vmatpush.bf16.msra.mxu0 %v841
        %1090 = vmatpush.bf16.msra.mxu0 %v838
        %1091 = vmatpush.bf16.msra.mxu0 %v835
        %1092 = vmatpush.bf16.msra.mxu0 %v832
        %1093 = vmatpush.bf16.msra.mxu0 %v829
        %1094 = vmatpush.bf16.msra.mxu0 %v826
        %1095 = vmatpush.bf16.msra.mxu0 %v823
        %1096 = vmatpush.bf16.msra.mxu0 %v820
        %1097 = vmatmul.bf16.gmra.mxu0 %v407
        %v1098 = vpop.f32.mrf.mxu0
        %v1099 = vadd.f32 %v534, %v1098
        %v1100 = vpop.f32.mrf.mxu0
        %v1101 = vadd.f32 %v534, %v1100
        %1102 = vmatmul.bf16.gmra.mxu0 %v411
        %v1103 = vpop.f32.mrf.mxu0
        %v1104 = vadd.f32 %v534, %v1103
        %v1105 = vpop.f32.mrf.mxu0
        %v1106 = vadd.f32 %v534, %v1105
        %1107 = vmatmul.bf16.gmra.mxu0 %v415
        %v1108 = vpop.f32.mrf.mxu0
        %v1109 = vadd.f32 %v534, %v1108
        %v1110 = vpop.f32.mrf.mxu0
        %1111 = vdwg.mxu0
        %1112 = vmatpush.bf16.msra.mxu0 %v865
        %1113 = vmatpush.bf16.msra.mxu0 %v862
        %1114 = vmatpush.bf16.msra.mxu0 %v859
        %1115 = vmatpush.bf16.msra.mxu0 %v856
        %1116 = vmatpush.bf16.msra.mxu0 %v853
        %1117 = vmatpush.bf16.msra.mxu0 %v850
        %1118 = vmatpush.bf16.msra.mxu0 %v847
        %1119 = vmatpush.bf16.msra.mxu0 %v844
        %1120 = vmatmul.bf16.gmra.mxu0 %v408
        %v1121 = vpop.f32.mrf.mxu0
        %v1122 = vadd.f32 %v1099, %v1121
        %v1123 = vpop.f32.mrf.mxu0
        %v1124 = vadd.f32 %v1101, %v1123
        %1125 = vmatmul.bf16.gmra.mxu0 %v412
        %v1126 = vpop.f32.mrf.mxu0
        %v1127 = vadd.f32 %v1104, %v1126
        %v1128 = vpop.f32.mrf.mxu0
        %v1129 = vadd.f32 %v1106, %v1128
        %1130 = vmatmul.bf16.gmra.mxu0 %v416
        %v1131 = vpop.f32.mrf.mxu0
        %v1132 = vadd.f32 %v1109, %v1131
        %v1133 = vpop.f32.mrf.mxu0
        %1134 = vdwg.mxu0
        %1135 = vmatpush.bf16.msra.mxu0 %v889
        %1136 = vmatpush.bf16.msra.mxu0 %v886
        %1137 = vmatpush.bf16.msra.mxu0 %v883
        %1138 = vmatpush.bf16.msra.mxu0 %v880
        %1139 = vmatpush.bf16.msra.mxu0 %v877
        %1140 = vmatpush.bf16.msra.mxu0 %v874
        %1141 = vmatpush.bf16.msra.mxu0 %v871
        %1142 = vmatpush.bf16.msra.mxu0 %v868
        %1143 = vmatmul.bf16.gmra.mxu0 %v409
        %v1144 = vpop.f32.mrf.mxu0
        %v1145 = vadd.f32 %v1122, %v1144
        %v1146 = vpop.f32.mrf.mxu0
        %v1147 = vadd.f32 %v1124, %v1146
        %1148 = vmatmul.bf16.gmra.mxu0 %v413
        %v1149 = vpop.f32.mrf.mxu0
        %v1150 = vadd.f32 %v1127, %v1149
        %v1151 = vpop.f32.mrf.mxu0
        %v1152 = vadd.f32 %v1129, %v1151
        %1153 = vmatmul.bf16.gmra.mxu0 %v417
        %v1154 = vpop.f32.mrf.mxu0
        %v1155 = vadd.f32 %v1132, %v1154
        %v1156 = vpop.f32.mrf.mxu0
        %1157 = vdwg.mxu0
        %1158 = vmatpush.bf16.msra.mxu0 0
        %1159 = vmatpush.bf16.msra.mxu0 0
        %1160 = vmatpush.bf16.msra.mxu0 0
        %1161 = vmatpush.bf16.msra.mxu0 0
        %1162 = vmatpush.bf16.msra.mxu0 %v901
        %1163 = vmatpush.bf16.msra.mxu0 %v898
        %1164 = vmatpush.bf16.msra.mxu0 %v895
        %1165 = vmatpush.bf16.msra.mxu0 %v892
        %1166 = vmatmul.bf16.gmra.mxu0 %v989
        %v1167 = vpop.f32.mrf.mxu0
        %v1168 = vadd.f32 %v1145, %v1167
        %v1169 = vpop.f32.mrf.mxu0
        %v1170 = vadd.f32 %v1147, %v1169
        %1171 = vmatmul.bf16.gmra.mxu0 %v992
        %v1172 = vpop.f32.mrf.mxu0
        %v1173 = vadd.f32 %v1150, %v1172
        %v1174 = vpop.f32.mrf.mxu0
        %v1175 = vadd.f32 %v1152, %v1174
        %1176 = vmatmul.bf16.gmra.mxu0 %v995
        %v1177 = vpop.f32.mrf.mxu0
        %v1178 = vadd.f32 %v1155, %v1177
        %v1179 = vpop.f32.mrf.mxu0
        %1180 = vdwg.mxu0
        %1181 = vmatpush.bf16.msra.mxu0 %v842
        %1182 = vmatpush.bf16.msra.mxu0 %v839
        %1183 = vmatpush.bf16.msra.mxu0 %v836
        %1184 = vmatpush.bf16.msra.mxu0 %v833
        %1185 = vmatpush.bf16.msra.mxu0 %v830
        %1186 = vmatpush.bf16.msra.mxu0 %v827
        %1187 = vmatpush.bf16.msra.mxu0 %v824
        %1188 = vmatpush.bf16.msra.mxu0 %v821
        %1189 = vmatmul.bf16.gmra.mxu0 %v407
        %v1190 = vpop.f32.mrf.mxu0
        %v1191 = vadd.f32 %v535, %v1190
        %v1192 = vpop.f32.mrf.mxu0
        %v1193 = vadd.f32 %v535, %v1192
        %1194 = vmatmul.bf16.gmra.mxu0 %v411
        %v1195 = vpop.f32.mrf.mxu0
        %v1196 = vadd.f32 %v535, %v1195
        %v1197 = vpop.f32.mrf.mxu0
        %v1198 = vadd.f32 %v535, %v1197
        %1199 = vmatmul.bf16.gmra.mxu0 %v415
        %v1200 = vpop.f32.mrf.mxu0
        %v1201 = vadd.f32 %v535, %v1200
        %v1202 = vpop.f32.mrf.mxu0
        %1203 = vdwg.mxu0
        %1204 = vmatpush.bf16.msra.mxu0 %v866
        %1205 = vmatpush.bf16.msra.mxu0 %v863
        %1206 = vmatpush.bf16.msra.mxu0 %v860
        %1207 = vmatpush.bf16.msra.mxu0 %v857
        %1208 = vmatpush.bf16.msra.mxu0 %v854
        %1209 = vmatpush.bf16.msra.mxu0 %v851
        %1210 = vmatpush.bf16.msra.mxu0 %v848
        %1211 = vmatpush.bf16.msra.mxu0 %v845
        %1212 = vmatmul.bf16.gmra.mxu0 %v408
        %v1213 = vpop.f32.mrf.mxu0
        %v1214 = vadd.f32 %v1191, %v1213
        %v1215 = vpop.f32.mrf.mxu0
        %v1216 = vadd.f32 %v1193, %v1215
        %1217 = vmatmul.bf16.gmra.mxu0 %v412
        %v1218 = vpop.f32.mrf.mxu0
        %v1219 = vadd.f32 %v1196, %v1218
        %v1220 = vpop.f32.mrf.mxu0
        %v1221 = vadd.f32 %v1198, %v1220
        %1222 = vmatmul.bf16.gmra.mxu0 %v416
        %v1223 = vpop.f32.mrf.mxu0
        %v1224 = vadd.f32 %v1201, %v1223
        %v1225 = vpop.f32.mrf.mxu0
        %1226 = vdwg.mxu0
        %1227 = vmatpush.bf16.msra.mxu0 %v890
        %1228 = vmatpush.bf16.msra.mxu0 %v887
        %1229 = vmatpush.bf16.msra.mxu0 %v884
        %1230 = vmatpush.bf16.msra.mxu0 %v881
        %1231 = vmatpush.bf16.msra.mxu0 %v878
        %1232 = vmatpush.bf16.msra.mxu0 %v875
        %1233 = vmatpush.bf16.msra.mxu0 %v872
        %1234 = vmatpush.bf16.msra.mxu0 %v869
        %1235 = vmatmul.bf16.gmra.mxu0 %v409
        %v1236 = vpop.f32.mrf.mxu0
        %v1237 = vadd.f32 %v1214, %v1236
        %v1238 = vpop.f32.mrf.mxu0
        %v1239 = vadd.f32 %v1216, %v1238
        %1240 = vmatmul.bf16.gmra.mxu0 %v413
        %v1241 = vpop.f32.mrf.mxu0
        %v1242 = vadd.f32 %v1219, %v1241
        %v1243 = vpop.f32.mrf.mxu0
        %v1244 = vadd.f32 %v1221, %v1243
        %1245 = vmatmul.bf16.gmra.mxu0 %v417
        %v1246 = vpop.f32.mrf.mxu0
        %v1247 = vadd.f32 %v1224, %v1246
        %v1248 = vpop.f32.mrf.mxu0
        %1249 = vdwg.mxu0
        %1250 = vmatpush.bf16.msra.mxu0 0
        %1251 = vmatpush.bf16.msra.mxu0 0
        %1252 = vmatpush.bf16.msra.mxu0 0
        %1253 = vmatpush.bf16.msra.mxu0 0
        %1254 = vmatpush.bf16.msra.mxu0 %v902
        %1255 = vmatpush.bf16.msra.mxu0 %v899
        %1256 = vmatpush.bf16.msra.mxu0 %v896
        %1257 = vmatpush.bf16.msra.mxu0 %v893
        %1258 = vmatmul.bf16.gmra.mxu0 %v989
        %v1259 = vpop.f32.mrf.mxu0
        %v1260 = vadd.f32 %v1237, %v1259
        %v1261 = vpop.f32.mrf.mxu0
        %v1262 = vadd.f32 %v1239, %v1261
        %1263 = vmatmul.bf16.gmra.mxu0 %v992
        %v1264 = vpop.f32.mrf.mxu0
        %v1265 = vadd.f32 %v1242, %v1264
        %v1266 = vpop.f32.mrf.mxu0
        %v1267 = vadd.f32 %v1244, %v1266
        %1268 = vmatmul.bf16.gmra.mxu0 %v995
        %v1269 = vpop.f32.mrf.mxu0
        %v1270 = vadd.f32 %v1247, %v1269
        %v1271 = vpop.f32.mrf.mxu0
        %1272 = vdwg.mxu0
        %v1273 = vpack.c.bf16 %v1168, %v1076
        %v1274 = vpack.c.bf16 %v1260, %v1260
        %v1275 = vpack.c.bf16 %v1170, %v1078
        %v1276 = vpack.c.bf16 %v1262, %v1262
        %v1277 = vpack.c.bf16 %v1173, %v1081
        %v1278 = vpack.c.bf16 %v1265, %v1265
        %v1279 = vpack.c.bf16 %v1175, %v1083
        %v1280 = vpack.c.bf16 %v1267, %v1267
        %v1281 = vpack.c.bf16 %v1178, %v1086
        %v1282 = vpack.c.bf16 %v1270, %v1270
        %1283 = vst [vmem:[#allocation2] sm:$0xff] %v1273
        %1284 = vst [vmem:[#allocation2 + $0x8] sm:$0xf] %v1274
        %1285 = vst [vmem:[#allocation2 + $0xc] sm:$0xff] %v1275
        %1286 = vst [vmem:[#allocation2 + $0x14] sm:$0xf] %v1276
        %1287 = vst [vmem:[#allocation2 + $0x18] sm:$0xff] %v1277
        %1288 = vst [vmem:[#allocation2 + $0x20] sm:$0xf] %v1278
        %1289 = vst [vmem:[#allocation2 + $0x24] sm:$0xff] %v1279
        %1290 = vst [vmem:[#allocation2 + $0x2c] sm:$0xf] %v1280
        %1291 = vst [vmem:[#allocation2 + $0x30] sm:$0x33] %v1281
        %1292 = vst [vmem:[#allocation2 + $0x38] sm:$0x3] %v1282
        %v1293 = vld [vmem:[#allocation2] sm:$0xff]
        %v1294 = vld [vmem:[#allocation2 + $0x8] sm:$0xf]
        %v1295 = vld [vmem:[#allocation2 + $0xc] sm:$0xff]
        %v1296 = vld [vmem:[#allocation2 + $0x14] sm:$0xf]
        %v1297 = vld [vmem:[#allocation2 + $0x18] sm:$0x77]
        %v1298 = vld [vmem:[#allocation2 + $0x20] sm:$0x7]
        %v1299 = vld [vmem:[%s3] sm:$0xff]
        %v1300 = vld [vmem:[%s3 + $0x8] sm:$0xff]
        %v1301 = vld [vmem:[%s3 + $0x10] sm:$0xff]
        %v1302 = vld [vmem:[%s3 + $0x18] sm:$0xff]
        %v1303 = vld [vmem:[%s3 + $0x20] sm:$0xff]
        %v1304 = vld [vmem:[%s3 + $0x28] sm:$0xff]
        %v1305 = vld [vmem:[%s3 + $0x30] sm:$0xff]
        %v1306 = vld [vmem:[%s3 + $0x38] sm:$0xff]
        %v1307 = vld [vmem:[%s3 + $0x40] sm:$0xff]
        %v1308 = vld [vmem:[%s3 + $0x48] sm:$0xff]
        %v1309 = vld [vmem:[%s3 + $0x50] sm:$0xff]
        %v1310 = vld [vmem:[%s3 + $0x58] sm:$0xff]
        %v1311 = vld [vmem:[%s3 + $0x60] sm:$0xff]
        %v1312 = vld [vmem:[%s3 + $0x68] sm:$0xff]
        %v1313 = vld [vmem:[%s3 + $0x70] sm:$0xff]
        %v1314 = vld [vmem:[%s3 + $0x78] sm:$0xff]
        %v1315 = vld [vmem:[%s3 + $0x80] sm:$0xff]
        %v1316 = vld [vmem:[%s3 + $0x88] sm:$0xff]
        %v1317 = vld [vmem:[%s3 + $0x90] sm:$0xff]
        %v1318 = vld [vmem:[%s3 + $0x98] sm:$0xff]
        %v1319 = vld [vmem:[%s3 + $0xa0] sm:$0xff]
        %v1320 = vld [vmem:[%s3 + $0xa8] sm:$0xff]
        %v1321 = vld [vmem:[%s3 + $0xb0] sm:$0xff]
        %v1322 = vld [vmem:[%s3 + $0xb8] sm:$0xff]
        %v1323 = vld [vmem:[%s3 + $0xc0] sm:$0xff]
        %v1324 = vld [vmem:[%s3 + $0xc8] sm:$0xff]
        %v1325 = vld [vmem:[%s3 + $0xd0] sm:$0xff]
        %v1326 = vld [vmem:[%s3 + $0xd8] sm:$0xff]
        %v1327 = vld [vmem:[%s3 + $0xe0] sm:$0xff]
        %v1328 = vld [vmem:[%s3 + $0xe8] sm:$0xff]
        %v1329 = vld [vmem:[%s3 + $0xf0] sm:$0xff]
        %v1330 = vld [vmem:[%s3 + $0xf8] sm:$0xff]
        %v1331 = vld [vmem:[%s3 + $0x100] sm:$0xff]
        %v1332 = vld [vmem:[%s3 + $0x108] sm:$0xff]
        %v1333 = vld [vmem:[%s3 + $0x110] sm:$0xff]
        %v1334 = vld [vmem:[%s3 + $0x118] sm:$0xff]
        %v1335 = vld [vmem:[%s3 + $0x120] sm:$0xff]
        %v1336 = vld [vmem:[%s3 + $0x128] sm:$0xff]
        %v1337 = vld [vmem:[%s3 + $0x130] sm:$0xff]
        %v1338 = vld [vmem:[%s3 + $0x138] sm:$0xff]
        %v1339 = vld [vmem:[%s3 + $0x140] sm:$0xff]
        %v1340 = vld [vmem:[%s3 + $0x148] sm:$0xff]
        %v1341 = vld [vmem:[%s3 + $0x150] sm:$0xff]
        %v1342 = vld [vmem:[%s3 + $0x158] sm:$0xff]
        %v1343 = vld [vmem:[%s3 + $0x160] sm:$0xff]
        %v1344 = vld [vmem:[%s3 + $0x168] sm:$0xff]
        %v1345 = vld [vmem:[%s3 + $0x170] sm:$0xff]
        %v1346 = vld [vmem:[%s3 + $0x178] sm:$0xff]
        %v1347 = vld [vmem:[%s3 + $0x180] sm:$0xff]
        %v1348 = vld [vmem:[%s3 + $0x188] sm:$0xff]
        %v1349 = vld [vmem:[%s3 + $0x190] sm:$0xff]
        %v1350 = vld [vmem:[%s3 + $0x198] sm:$0xff]
        %v1351 = vld [vmem:[%s3 + $0x1a0] sm:$0xff]
        %v1352 = vld [vmem:[%s3 + $0x1a8] sm:$0xff]
        %v1353 = vld [vmem:[%s3 + $0x1b0] sm:$0xff]
        %v1354 = vld [vmem:[%s3 + $0x1b8] sm:$0xff]
        %v1355 = vld [vmem:[%s3 + $0x1c0] sm:$0xff]
        %v1356 = vld [vmem:[%s3 + $0x1c8] sm:$0xff]
        %v1357 = vld [vmem:[%s3 + $0x1d0] sm:$0xff]
        %v1358 = vld [vmem:[%s3 + $0x1d8] sm:$0xff]
        %v1359 = vld [vmem:[%s3 + $0x1e0] sm:$0xff]
        %v1360 = vld [vmem:[%s3 + $0x1e8] sm:$0xff]
        %v1361 = vld [vmem:[%s3 + $0x1f0] sm:$0xff]
        %v1362 = vld [vmem:[%s3 + $0x1f8] sm:$0xff]
        %v1363 = vld [vmem:[%s3 + $0x200] sm:$0xff]
        %v1364 = vld [vmem:[%s3 + $0x208] sm:$0xff]
        %v1365 = vld [vmem:[%s3 + $0x210] sm:$0xff]
        %v1366 = vld [vmem:[%s3 + $0x218] sm:$0xff]
        %v1367 = vld [vmem:[%s3 + $0x220] sm:$0xff]
        %v1368 = vld [vmem:[%s3 + $0x228] sm:$0xff]
        %v1369 = vld [vmem:[%s3 + $0x230] sm:$0xff]
        %v1370 = vld [vmem:[%s3 + $0x238] sm:$0xff]
        %v1371 = vld [vmem:[%s3 + $0x240] sm:$0xff]
        %v1372 = vld [vmem:[%s3 + $0x248] sm:$0xff]
        %v1373 = vld [vmem:[%s3 + $0x250] sm:$0xff]
        %v1374 = vld [vmem:[%s3 + $0x258] sm:$0xff]
        %v1375 = vld [vmem:[%s3 + $0x260] sm:$0xff]
        %v1376 = vld [vmem:[%s3 + $0x268] sm:$0xff]
        %v1377 = vld [vmem:[%s3 + $0x270] sm:$0xff]
        %v1378 = vld [vmem:[%s3 + $0x278] sm:$0xff]
        %v1379 = vld [vmem:[%s3 + $0x280] sm:$0xff]
        %v1380 = vld [vmem:[%s3 + $0x288] sm:$0xff]
        %v1381 = vld [vmem:[%s3 + $0x290] sm:$0xff]
        %v1382 = vld [vmem:[%s3 + $0x298] sm:$0xff]
        %v1383 = vld [vmem:[%s3 + $0x2a0] sm:$0xff]
        %v1384 = vld [vmem:[%s3 + $0x2a8] sm:$0xff]
        %v1385 = vld [vmem:[%s3 + $0x2b0] sm:$0xff]
        %v1386 = vld [vmem:[%s3 + $0x2b8] sm:$0xff]
        %v1387 = vld [vmem:[%s3 + $0x2c0] sm:$0xff]
        %v1388 = vld [vmem:[%s3 + $0x2c8] sm:$0xff]
        %v1389 = vld [vmem:[%s3 + $0x2d0] sm:$0xff]
        %v1390 = vld [vmem:[%s3 + $0x2d8] sm:$0xff]
        %v1391 = vld [vmem:[%s3 + $0x2e0] sm:$0xff]
        %v1392 = vld [vmem:[%s3 + $0x2e8] sm:$0xff]
        %v1393 = vld [vmem:[%s3 + $0x2f0] sm:$0xff]
        %v1394 = vld [vmem:[%s3 + $0x2f8] sm:$0xff]
        %v1395 = vld [vmem:[#allocation2 + $0x18] sm:$0xff]
        %v1396 = vld [vmem:[#allocation2 + $0x20] sm:$0xf]
        %s1397 = scalar_lea.vmem %s3, 768
        %v1398 = vld [vmem:[%s1397] sm:$0xff]
        %v1399 = vld [vmem:[%s1397 + $0x8] sm:$0xff]
        %v1400 = vld [vmem:[%s1397 + $0x10] sm:$0xff]
        %v1401 = vld [vmem:[%s1397 + $0x18] sm:$0xff]
        %v1402 = vld [vmem:[%s1397 + $0x20] sm:$0xff]
        %v1403 = vld [vmem:[%s1397 + $0x28] sm:$0xff]
        %v1404 = vld [vmem:[%s1397 + $0x30] sm:$0xff]
        %v1405 = vld [vmem:[%s1397 + $0x38] sm:$0xff]
        %v1406 = vld [vmem:[%s1397 + $0x40] sm:$0xff]
        %v1407 = vld [vmem:[%s1397 + $0x48] sm:$0xff]
        %v1408 = vld [vmem:[%s1397 + $0x50] sm:$0xff]
        %v1409 = vld [vmem:[%s1397 + $0x58] sm:$0xff]
        %v1410 = vld [vmem:[%s1397 + $0x60] sm:$0xff]
        %v1411 = vld [vmem:[%s1397 + $0x68] sm:$0xff]
        %v1412 = vld [vmem:[%s1397 + $0x70] sm:$0xff]
        %v1413 = vld [vmem:[%s1397 + $0x78] sm:$0xff]
        %v1414 = vld [vmem:[%s1397 + $0x80] sm:$0xff]
        %v1415 = vld [vmem:[%s1397 + $0x88] sm:$0xff]
        %v1416 = vld [vmem:[%s1397 + $0x90] sm:$0xff]
        %v1417 = vld [vmem:[%s1397 + $0x98] sm:$0xff]
        %v1418 = vld [vmem:[%s1397 + $0xa0] sm:$0xff]
        %v1419 = vld [vmem:[%s1397 + $0xa8] sm:$0xff]
        %v1420 = vld [vmem:[%s1397 + $0xb0] sm:$0xff]
        %v1421 = vld [vmem:[%s1397 + $0xb8] sm:$0xff]
        %v1422 = vld [vmem:[%s1397 + $0xc0] sm:$0xff]
        %v1423 = vld [vmem:[%s1397 + $0xc8] sm:$0xff]
        %v1424 = vld [vmem:[%s1397 + $0xd0] sm:$0xff]
        %v1425 = vld [vmem:[%s1397 + $0xd8] sm:$0xff]
        %v1426 = vld [vmem:[%s1397 + $0xe0] sm:$0xff]
        %v1427 = vld [vmem:[%s1397 + $0xe8] sm:$0xff]
        %v1428 = vld [vmem:[%s1397 + $0xf0] sm:$0xff]
        %v1429 = vld [vmem:[%s1397 + $0xf8] sm:$0xff]
        %v1430 = vld [vmem:[%s1397 + $0x100] sm:$0xff]
        %v1431 = vld [vmem:[%s1397 + $0x108] sm:$0xff]
        %v1432 = vld [vmem:[%s1397 + $0x110] sm:$0xff]
        %v1433 = vld [vmem:[%s1397 + $0x118] sm:$0xff]
        %v1434 = vld [vmem:[%s1397 + $0x120] sm:$0xff]
        %v1435 = vld [vmem:[%s1397 + $0x128] sm:$0xff]
        %v1436 = vld [vmem:[%s1397 + $0x130] sm:$0xff]
        %v1437 = vld [vmem:[%s1397 + $0x138] sm:$0xff]
        %v1438 = vld [vmem:[%s1397 + $0x140] sm:$0xff]
        %v1439 = vld [vmem:[%s1397 + $0x148] sm:$0xff]
        %v1440 = vld [vmem:[%s1397 + $0x150] sm:$0xff]
        %v1441 = vld [vmem:[%s1397 + $0x158] sm:$0xff]
        %v1442 = vld [vmem:[%s1397 + $0x160] sm:$0xff]
        %v1443 = vld [vmem:[%s1397 + $0x168] sm:$0xff]
        %v1444 = vld [vmem:[%s1397 + $0x170] sm:$0xff]
        %v1445 = vld [vmem:[%s1397 + $0x178] sm:$0xff]
        %v1446 = vld [vmem:[%s1397 + $0x180] sm:$0xff]
        %v1447 = vld [vmem:[%s1397 + $0x188] sm:$0xff]
        %v1448 = vld [vmem:[%s1397 + $0x190] sm:$0xff]
        %v1449 = vld [vmem:[%s1397 + $0x198] sm:$0xff]
        %v1450 = vld [vmem:[%s1397 + $0x1a0] sm:$0xff]
        %v1451 = vld [vmem:[%s1397 + $0x1a8] sm:$0xff]
        %v1452 = vld [vmem:[%s1397 + $0x1b0] sm:$0xff]
        %v1453 = vld [vmem:[%s1397 + $0x1b8] sm:$0xff]
        %v1454 = vld [vmem:[%s1397 + $0x1c0] sm:$0xff]
        %v1455 = vld [vmem:[%s1397 + $0x1c8] sm:$0xff]
        %v1456 = vld [vmem:[%s1397 + $0x1d0] sm:$0xff]
        %v1457 = vld [vmem:[%s1397 + $0x1d8] sm:$0xff]
        %v1458 = vld [vmem:[%s1397 + $0x1e0] sm:$0xff]
        %v1459 = vld [vmem:[%s1397 + $0x1e8] sm:$0xff]
        %v1460 = vld [vmem:[%s1397 + $0x1f0] sm:$0xff]
        %v1461 = vld [vmem:[%s1397 + $0x1f8] sm:$0xff]
        %v1462 = vld [vmem:[%s1397 + $0x200] sm:$0xff]
        %v1463 = vld [vmem:[%s1397 + $0x208] sm:$0xff]
        %v1464 = vld [vmem:[%s1397 + $0x210] sm:$0xff]
        %v1465 = vld [vmem:[%s1397 + $0x218] sm:$0xff]
        %v1466 = vld [vmem:[%s1397 + $0x220] sm:$0xff]
        %v1467 = vld [vmem:[%s1397 + $0x228] sm:$0xff]
        %v1468 = vld [vmem:[%s1397 + $0x230] sm:$0xff]
        %v1469 = vld [vmem:[%s1397 + $0x238] sm:$0xff]
        %v1470 = vld [vmem:[%s1397 + $0x240] sm:$0xff]
        %v1471 = vld [vmem:[%s1397 + $0x248] sm:$0xff]
        %v1472 = vld [vmem:[%s1397 + $0x250] sm:$0xff]
        %v1473 = vld [vmem:[%s1397 + $0x258] sm:$0xff]
        %v1474 = vld [vmem:[%s1397 + $0x260] sm:$0xff]
        %v1475 = vld [vmem:[%s1397 + $0x268] sm:$0xff]
        %v1476 = vld [vmem:[%s1397 + $0x270] sm:$0xff]
        %v1477 = vld [vmem:[%s1397 + $0x278] sm:$0xff]
        %v1478 = vld [vmem:[%s1397 + $0x280] sm:$0xff]
        %v1479 = vld [vmem:[%s1397 + $0x288] sm:$0xff]
        %v1480 = vld [vmem:[%s1397 + $0x290] sm:$0xff]
        %v1481 = vld [vmem:[%s1397 + $0x298] sm:$0xff]
        %v1482 = vld [vmem:[%s1397 + $0x2a0] sm:$0xff]
        %v1483 = vld [vmem:[%s1397 + $0x2a8] sm:$0xff]
        %v1484 = vld [vmem:[%s1397 + $0x2b0] sm:$0xff]
        %v1485 = vld [vmem:[%s1397 + $0x2b8] sm:$0xff]
        %v1486 = vld [vmem:[%s1397 + $0x2c0] sm:$0xff]
        %v1487 = vld [vmem:[%s1397 + $0x2c8] sm:$0xff]
        %v1488 = vld [vmem:[%s1397 + $0x2d0] sm:$0xff]
        %v1489 = vld [vmem:[%s1397 + $0x2d8] sm:$0xff]
        %v1490 = vld [vmem:[%s1397 + $0x2e0] sm:$0xff]
        %v1491 = vld [vmem:[%s1397 + $0x2e8] sm:$0xff]
        %v1492 = vld [vmem:[%s1397 + $0x2f0] sm:$0xff]
        %v1493 = vld [vmem:[%s1397 + $0x2f8] sm:$0xff]
        %v1500 = vunpack.c.l.b16 %v1293
        %v1501 = vunpack.c.h.b16 %v1293
        %v1502 = vunpack.c.l.b16 %v1294
        %v1503 = vunpack.c.l.b16 %v1295
        %v1504 = vunpack.c.h.b16 %v1295
        %v1505 = vunpack.c.l.b16 %v1296
        %v1506 = vunpack.c.l.b16 %v1395
        %v1507 = vunpack.c.h.b16 %v1395
        %v1508 = vunpack.c.l.b16 %v1396
        %v1509 = vpack.c.b16 %v1503, %v1500
        %v1510 = vpack.c.b16 %v1504, %v1501
        %v1511 = vpack.c.b16 %v1505, %v1502
        %v1512 = vpack.c.b16 %v1506, %v1506
        %v1513 = vpack.c.b16 %v1507, %v1507
        %v1514 = vpack.c.b16 %v1508, %v1508
        %vm1515 = vsmask.f32 7424
        %v1517 = vshrl.u32 %v1509, 16
        %v1519 = vshll.u32 %v1509, 16
        %v1521 = vrot.slane %v1519, 1
        %v1522 = vor.u32 %v1517, %v1521
        %v1524 = vshll.u32 %v1512, 16
        %v1526 = vrot.slane %v1524, 1
        %v1527 = vsel %vm1515, %v1522, %v1526
        %v1529 = vshrl.u32 %v1510, 16
        %v1531 = vshll.u32 %v1510, 16
        %v1533 = vrot.slane %v1531, 1
        %v1534 = vor.u32 %v1529, %v1533
        %v1536 = vshll.u32 %v1513, 16
        %v1538 = vrot.slane %v1536, 1
        %v1539 = vsel %vm1515, %v1534, %v1538
        %v1541 = vshrl.u32 %v1511, 16
        %v1543 = vshll.u32 %v1511, 16
        %v1545 = vrot.slane %v1543, 1
        %v1546 = vor.u32 %v1541, %v1545
        %v1548 = vshll.u32 %v1514, 16
        %v1550 = vrot.slane %v1548, 1
        %v1551 = vsel %vm1515, %v1546, %v1550
        %v1552 = vshrl.u32 %v1512, 16
        %v1554 = vor.u32 %v1552, %v1526
        %v1555 = vshrl.u32 %v1513, 16
        %v1557 = vor.u32 %v1555, %v1538
        %v1558 = vshrl.u32 %v1514, 16
        %v1560 = vor.u32 %v1558, %v1550
        %v1663 = vunpack.c.l.b16 %v1398
        %v1664 = vunpack.c.h.b16 %v1398
        %v1665 = vunpack.c.l.b16 %v1399
        %v1666 = vunpack.c.h.b16 %v1399
        %v1667 = vunpack.c.l.b16 %v1400
        %v1668 = vunpack.c.h.b16 %v1400
        %v1669 = vunpack.c.l.b16 %v1401
        %v1670 = vunpack.c.h.b16 %v1401
        %v1671 = vunpack.c.l.b16 %v1402
        %v1672 = vunpack.c.h.b16 %v1402
        %v1673 = vunpack.c.l.b16 %v1403
        %v1674 = vunpack.c.h.b16 %v1403
        %v1675 = vunpack.c.l.b16 %v1404
        %v1676 = vunpack.c.h.b16 %v1404
        %v1677 = vunpack.c.l.b16 %v1405
        %v1678 = vunpack.c.h.b16 %v1405
        %v1679 = vunpack.c.l.b16 %v1406
        %v1680 = vunpack.c.h.b16 %v1406
        %v1681 = vunpack.c.l.b16 %v1407
        %v1682 = vunpack.c.h.b16 %v1407
        %v1683 = vunpack.c.l.b16 %v1408
        %v1684 = vunpack.c.h.b16 %v1408
        %v1685 = vunpack.c.l.b16 %v1409
        %v1686 = vunpack.c.h.b16 %v1409
        %v1687 = vunpack.c.l.b16 %v1410
        %v1688 = vunpack.c.h.b16 %v1410
        %v1689 = vunpack.c.l.b16 %v1411
        %v1690 = vunpack.c.h.b16 %v1411
        %v1691 = vunpack.c.l.b16 %v1412
        %v1692 = vunpack.c.h.b16 %v1412
        %v1693 = vunpack.c.l.b16 %v1413
        %v1694 = vunpack.c.h.b16 %v1413
        %v1695 = vunpack.c.l.b16 %v1414
        %v1696 = vunpack.c.h.b16 %v1414
        %v1697 = vunpack.c.l.b16 %v1415
        %v1698 = vunpack.c.h.b16 %v1415
        %v1699 = vunpack.c.l.b16 %v1416
        %v1700 = vunpack.c.h.b16 %v1416
        %v1701 = vunpack.c.l.b16 %v1417
        %v1702 = vunpack.c.h.b16 %v1417
        %v1703 = vunpack.c.l.b16 %v1418
        %v1704 = vunpack.c.h.b16 %v1418
        %v1705 = vunpack.c.l.b16 %v1419
        %v1706 = vunpack.c.h.b16 %v1419
        %v1707 = vunpack.c.l.b16 %v1420
        %v1708 = vunpack.c.h.b16 %v1420
        %v1709 = vunpack.c.l.b16 %v1421
        %v1710 = vunpack.c.h.b16 %v1421
        %v1711 = vunpack.c.l.b16 %v1422
        %v1712 = vunpack.c.h.b16 %v1422
        %v1713 = vunpack.c.l.b16 %v1423
        %v1714 = vunpack.c.h.b16 %v1423
        %v1715 = vunpack.c.l.b16 %v1424
        %v1716 = vunpack.c.h.b16 %v1424
        %v1717 = vunpack.c.l.b16 %v1425
        %v1718 = vunpack.c.h.b16 %v1425
        %v1719 = vunpack.c.l.b16 %v1426
        %v1720 = vunpack.c.h.b16 %v1426
        %v1721 = vunpack.c.l.b16 %v1427
        %v1722 = vunpack.c.h.b16 %v1427
        %v1723 = vunpack.c.l.b16 %v1428
        %v1724 = vunpack.c.h.b16 %v1428
        %v1725 = vunpack.c.l.b16 %v1429
        %v1726 = vunpack.c.h.b16 %v1429
        %v1727 = vunpack.c.l.b16 %v1430
        %v1728 = vunpack.c.h.b16 %v1430
        %v1729 = vunpack.c.l.b16 %v1431
        %v1730 = vunpack.c.h.b16 %v1431
        %v1731 = vunpack.c.l.b16 %v1432
        %v1732 = vunpack.c.h.b16 %v1432
        %v1733 = vunpack.c.l.b16 %v1433
        %v1734 = vunpack.c.h.b16 %v1433
        %v1735 = vunpack.c.l.b16 %v1434
        %v1736 = vunpack.c.h.b16 %v1434
        %v1737 = vunpack.c.l.b16 %v1435
        %v1738 = vunpack.c.h.b16 %v1435
        %v1739 = vunpack.c.l.b16 %v1436
        %v1740 = vunpack.c.h.b16 %v1436
        %v1741 = vunpack.c.l.b16 %v1437
        %v1742 = vunpack.c.h.b16 %v1437
        %v1743 = vunpack.c.l.b16 %v1438
        %v1744 = vunpack.c.h.b16 %v1438
        %v1745 = vunpack.c.l.b16 %v1439
        %v1746 = vunpack.c.h.b16 %v1439
        %v1747 = vunpack.c.l.b16 %v1440
        %v1748 = vunpack.c.h.b16 %v1440
        %v1749 = vunpack.c.l.b16 %v1441
        %v1750 = vunpack.c.h.b16 %v1441
        %v1751 = vunpack.c.l.b16 %v1442
        %v1752 = vunpack.c.h.b16 %v1442
        %v1753 = vunpack.c.l.b16 %v1443
        %v1754 = vunpack.c.h.b16 %v1443
        %v1755 = vunpack.c.l.b16 %v1444
        %v1756 = vunpack.c.h.b16 %v1444
        %v1757 = vunpack.c.l.b16 %v1445
        %v1758 = vunpack.c.h.b16 %v1445
        %v1759 = vunpack.c.l.b16 %v1446
        %v1760 = vunpack.c.h.b16 %v1446
        %v1761 = vunpack.c.l.b16 %v1447
        %v1762 = vunpack.c.h.b16 %v1447
        %v1763 = vunpack.c.l.b16 %v1448
        %v1764 = vunpack.c.h.b16 %v1448
        %v1765 = vunpack.c.l.b16 %v1449
        %v1766 = vunpack.c.h.b16 %v1449
        %v1767 = vunpack.c.l.b16 %v1450
        %v1768 = vunpack.c.h.b16 %v1450
        %v1769 = vunpack.c.l.b16 %v1451
        %v1770 = vunpack.c.h.b16 %v1451
        %v1771 = vunpack.c.l.b16 %v1452
        %v1772 = vunpack.c.h.b16 %v1452
        %v1773 = vunpack.c.l.b16 %v1453
        %v1774 = vunpack.c.h.b16 %v1453
        %v1775 = vunpack.c.l.b16 %v1454
        %v1776 = vunpack.c.h.b16 %v1454
        %v1777 = vunpack.c.l.b16 %v1455
        %v1778 = vunpack.c.h.b16 %v1455
        %v1779 = vunpack.c.l.b16 %v1456
        %v1780 = vunpack.c.h.b16 %v1456
        %v1781 = vunpack.c.l.b16 %v1457
        %v1782 = vunpack.c.h.b16 %v1457
        %v1783 = vunpack.c.l.b16 %v1458
        %v1784 = vunpack.c.h.b16 %v1458
        %v1785 = vunpack.c.l.b16 %v1459
        %v1786 = vunpack.c.h.b16 %v1459
        %v1787 = vunpack.c.l.b16 %v1460
        %v1788 = vunpack.c.h.b16 %v1460
        %v1789 = vunpack.c.l.b16 %v1461
        %v1790 = vunpack.c.h.b16 %v1461
        %v1791 = vunpack.c.l.b16 %v1462
        %v1792 = vunpack.c.h.b16 %v1462
        %v1793 = vunpack.c.l.b16 %v1463
        %v1794 = vunpack.c.h.b16 %v1463
        %v1795 = vunpack.c.l.b16 %v1464
        %v1796 = vunpack.c.h.b16 %v1464
        %v1797 = vunpack.c.l.b16 %v1465
        %v1798 = vunpack.c.h.b16 %v1465
        %v1799 = vunpack.c.l.b16 %v1466
        %v1800 = vunpack.c.h.b16 %v1466
        %v1801 = vunpack.c.l.b16 %v1467
        %v1802 = vunpack.c.h.b16 %v1467
        %v1803 = vunpack.c.l.b16 %v1468
        %v1804 = vunpack.c.h.b16 %v1468
        %v1805 = vunpack.c.l.b16 %v1469
        %v1806 = vunpack.c.h.b16 %v1469
        %v1807 = vunpack.c.l.b16 %v1470
        %v1808 = vunpack.c.h.b16 %v1470
        %v1809 = vunpack.c.l.b16 %v1471
        %v1810 = vunpack.c.h.b16 %v1471
        %v1811 = vunpack.c.l.b16 %v1472
        %v1812 = vunpack.c.h.b16 %v1472
        %v1813 = vunpack.c.l.b16 %v1473
        %v1814 = vunpack.c.h.b16 %v1473
        %v1815 = vunpack.c.l.b16 %v1474
        %v1816 = vunpack.c.h.b16 %v1474
        %v1817 = vunpack.c.l.b16 %v1475
        %v1818 = vunpack.c.h.b16 %v1475
        %v1819 = vunpack.c.l.b16 %v1476
        %v1820 = vunpack.c.h.b16 %v1476
        %v1821 = vunpack.c.l.b16 %v1477
        %v1822 = vunpack.c.h.b16 %v1477
        %v1823 = vunpack.c.l.b16 %v1478
        %v1824 = vunpack.c.h.b16 %v1478
        %v1825 = vunpack.c.l.b16 %v1479
        %v1826 = vunpack.c.h.b16 %v1479
        %v1827 = vunpack.c.l.b16 %v1480
        %v1828 = vunpack.c.h.b16 %v1480
        %v1829 = vunpack.c.l.b16 %v1481
        %v1830 = vunpack.c.h.b16 %v1481
        %v1831 = vunpack.c.l.b16 %v1482
        %v1832 = vunpack.c.h.b16 %v1482
        %v1833 = vunpack.c.l.b16 %v1483
        %v1834 = vunpack.c.h.b16 %v1483
        %v1835 = vunpack.c.l.b16 %v1484
        %v1836 = vunpack.c.h.b16 %v1484
        %v1837 = vunpack.c.l.b16 %v1485
        %v1838 = vunpack.c.h.b16 %v1485
        %v1839 = vunpack.c.l.b16 %v1486
        %v1840 = vunpack.c.h.b16 %v1486
        %v1841 = vunpack.c.l.b16 %v1487
        %v1842 = vunpack.c.h.b16 %v1487
        %v1843 = vunpack.c.l.b16 %v1488
        %v1844 = vunpack.c.h.b16 %v1488
        %v1845 = vunpack.c.l.b16 %v1489
        %v1846 = vunpack.c.h.b16 %v1489
        %v1847 = vunpack.c.l.b16 %v1490
        %v1848 = vunpack.c.h.b16 %v1490
        %v1849 = vunpack.c.l.b16 %v1491
        %v1850 = vunpack.c.h.b16 %v1491
        %v1851 = vunpack.c.l.b16 %v1492
        %v1852 = vunpack.c.h.b16 %v1492
        %v1853 = vunpack.c.l.b16 %v1493
        %v1854 = vunpack.c.h.b16 %v1493
        %v1855 = vpack.c.b16 %v1667, %v1663
        %v1856 = vpack.c.b16 %v1668, %v1664
        %v1857 = vpack.c.b16 %v1669, %v1665
        %v1858 = vpack.c.b16 %v1670, %v1666
        %v1859 = vpack.c.b16 %v1675, %v1671
        %v1860 = vpack.c.b16 %v1676, %v1672
        %v1861 = vpack.c.b16 %v1677, %v1673
        %v1862 = vpack.c.b16 %v1678, %v1674
        %v1863 = vpack.c.b16 %v1683, %v1679
        %v1864 = vpack.c.b16 %v1684, %v1680
        %v1865 = vpack.c.b16 %v1685, %v1681
        %v1866 = vpack.c.b16 %v1686, %v1682
        %v1867 = vpack.c.b16 %v1691, %v1687
        %v1868 = vpack.c.b16 %v1692, %v1688
        %v1869 = vpack.c.b16 %v1693, %v1689
        %v1870 = vpack.c.b16 %v1694, %v1690
        %v1871 = vpack.c.b16 %v1699, %v1695
        %v1872 = vpack.c.b16 %v1700, %v1696
        %v1873 = vpack.c.b16 %v1701, %v1697
        %v1874 = vpack.c.b16 %v1702, %v1698
        %v1875 = vpack.c.b16 %v1707, %v1703
        %v1876 = vpack.c.b16 %v1708, %v1704
        %v1877 = vpack.c.b16 %v1709, %v1705
        %v1878 = vpack.c.b16 %v1710, %v1706
        %v1879 = vpack.c.b16 %v1715, %v1711
        %v1880 = vpack.c.b16 %v1716, %v1712
        %v1881 = vpack.c.b16 %v1717, %v1713
        %v1882 = vpack.c.b16 %v1718, %v1714
        %v1883 = vpack.c.b16 %v1723, %v1719
        %v1884 = vpack.c.b16 %v1724, %v1720
        %v1885 = vpack.c.b16 %v1725, %v1721
        %v1886 = vpack.c.b16 %v1726, %v1722
        %v1887 = vpack.c.b16 %v1731, %v1727
        %v1888 = vpack.c.b16 %v1732, %v1728
        %v1889 = vpack.c.b16 %v1733, %v1729
        %v1890 = vpack.c.b16 %v1734, %v1730
        %v1891 = vpack.c.b16 %v1739, %v1735
        %v1892 = vpack.c.b16 %v1740, %v1736
        %v1893 = vpack.c.b16 %v1741, %v1737
        %v1894 = vpack.c.b16 %v1742, %v1738
        %v1895 = vpack.c.b16 %v1747, %v1743
        %v1896 = vpack.c.b16 %v1748, %v1744
        %v1897 = vpack.c.b16 %v1749, %v1745
        %v1898 = vpack.c.b16 %v1750, %v1746
        %v1899 = vpack.c.b16 %v1755, %v1751
        %v1900 = vpack.c.b16 %v1756, %v1752
        %v1901 = vpack.c.b16 %v1757, %v1753
        %v1902 = vpack.c.b16 %v1758, %v1754
        %v1903 = vpack.c.b16 %v1763, %v1759
        %v1904 = vpack.c.b16 %v1764, %v1760
        %v1905 = vpack.c.b16 %v1765, %v1761
        %v1906 = vpack.c.b16 %v1766, %v1762
        %v1907 = vpack.c.b16 %v1771, %v1767
        %v1908 = vpack.c.b16 %v1772, %v1768
        %v1909 = vpack.c.b16 %v1773, %v1769
        %v1910 = vpack.c.b16 %v1774, %v1770
        %v1911 = vpack.c.b16 %v1779, %v1775
        %v1912 = vpack.c.b16 %v1780, %v1776
        %v1913 = vpack.c.b16 %v1781, %v1777
        %v1914 = vpack.c.b16 %v1782, %v1778
        %v1915 = vpack.c.b16 %v1787, %v1783
        %v1916 = vpack.c.b16 %v1788, %v1784
        %v1917 = vpack.c.b16 %v1789, %v1785
        %v1918 = vpack.c.b16 %v1790, %v1786
        %v1919 = vpack.c.b16 %v1795, %v1791
        %v1920 = vpack.c.b16 %v1796, %v1792
        %v1921 = vpack.c.b16 %v1797, %v1793
        %v1922 = vpack.c.b16 %v1798, %v1794
        %v1923 = vpack.c.b16 %v1803, %v1799
        %v1924 = vpack.c.b16 %v1804, %v1800
        %v1925 = vpack.c.b16 %v1805, %v1801
        %v1926 = vpack.c.b16 %v1806, %v1802
        %v1927 = vpack.c.b16 %v1811, %v1807
        %v1928 = vpack.c.b16 %v1812, %v1808
        %v1929 = vpack.c.b16 %v1813, %v1809
        %v1930 = vpack.c.b16 %v1814, %v1810
        %v1931 = vpack.c.b16 %v1819, %v1815
        %v1932 = vpack.c.b16 %v1820, %v1816
        %v1933 = vpack.c.b16 %v1821, %v1817
        %v1934 = vpack.c.b16 %v1822, %v1818
        %v1935 = vpack.c.b16 %v1827, %v1823
        %v1936 = vpack.c.b16 %v1828, %v1824
        %v1937 = vpack.c.b16 %v1829, %v1825
        %v1938 = vpack.c.b16 %v1830, %v1826
        %v1939 = vpack.c.b16 %v1835, %v1831
        %v1940 = vpack.c.b16 %v1836, %v1832
        %v1941 = vpack.c.b16 %v1837, %v1833
        %v1942 = vpack.c.b16 %v1838, %v1834
        %v1943 = vpack.c.b16 %v1843, %v1839
        %v1944 = vpack.c.b16 %v1844, %v1840
        %v1945 = vpack.c.b16 %v1845, %v1841
        %v1946 = vpack.c.b16 %v1846, %v1842
        %v1947 = vpack.c.b16 %v1851, %v1847
        %v1948 = vpack.c.b16 %v1852, %v1848
        %v1949 = vpack.c.b16 %v1853, %v1849
        %v1950 = vpack.c.b16 %v1854, %v1850
        %2047 = vmatpush.bf16.msra.mxu0 %v1883
        %2048 = vmatpush.bf16.msra.mxu0 %v1879
        %2049 = vmatpush.bf16.msra.mxu0 %v1875
        %2050 = vmatpush.bf16.msra.mxu0 %v1871
        %2051 = vmatpush.bf16.msra.mxu0 %v1867
        %2052 = vmatpush.bf16.msra.mxu0 %v1863
        %2053 = vmatpush.bf16.msra.mxu0 %v1859
        %2054 = vmatpush.bf16.msra.mxu0 %v1855
        %2055 = vmatmul.bf16.gmra.mxu0 %v1527
        %v2056 = vpop.f32.mrf.mxu0
        %v2057 = vadd.f32 0.0, %v2056
        %v2058 = vpop.f32.mrf.mxu0
        %v2059 = vadd.f32 0.0, %v2058
        %2060 = vmatmul.bf16.gmra.mxu0 %v1554
        %v2061 = vpop.f32.mrf.mxu0
        %v2062 = vadd.f32 0.0, %v2061
        %v2063 = vpop.f32.mrf.mxu0
        %2064 = vdwg.mxu0
        %2065 = vmatpush.bf16.msra.mxu0 %v1915
        %2066 = vmatpush.bf16.msra.mxu0 %v1911
        %2067 = vmatpush.bf16.msra.mxu0 %v1907
        %2068 = vmatpush.bf16.msra.mxu0 %v1903
        %2069 = vmatpush.bf16.msra.mxu0 %v1899
        %2070 = vmatpush.bf16.msra.mxu0 %v1895
        %2071 = vmatpush.bf16.msra.mxu0 %v1891
        %2072 = vmatpush.bf16.msra.mxu0 %v1887
        %2073 = vmatmul.bf16.gmra.mxu0 %v1539
        %v2074 = vpop.f32.mrf.mxu0
        %v2075 = vadd.f32 %v2057, %v2074
        %v2076 = vpop.f32.mrf.mxu0
        %v2077 = vadd.f32 %v2059, %v2076
        %2078 = vmatmul.bf16.gmra.mxu0 %v1557
        %v2079 = vpop.f32.mrf.mxu0
        %v2080 = vadd.f32 %v2062, %v2079
        %v2081 = vpop.f32.mrf.mxu0
        %2082 = vdwg.mxu0
        %2083 = vmatpush.bf16.msra.mxu0 %v1947
        %2084 = vmatpush.bf16.msra.mxu0 %v1943
        %2085 = vmatpush.bf16.msra.mxu0 %v1939
        %2086 = vmatpush.bf16.msra.mxu0 %v1935
        %2087 = vmatpush.bf16.msra.mxu0 %v1931
        %2088 = vmatpush.bf16.msra.mxu0 %v1927
        %2089 = vmatpush.bf16.msra.mxu0 %v1923
        %2090 = vmatpush.bf16.msra.mxu0 %v1919
        %2091 = vmatmul.bf16.gmra.mxu0 %v1551
        %v2092 = vpop.f32.mrf.mxu0
        %v2093 = vadd.f32 %v2075, %v2092
        %v2094 = vpop.f32.mrf.mxu0
        %v2095 = vadd.f32 %v2077, %v2094
        %2096 = vmatmul.bf16.gmra.mxu0 %v1560
        %v2097 = vpop.f32.mrf.mxu0
        %v2098 = vadd.f32 %v2080, %v2097
        %v2099 = vpop.f32.mrf.mxu0
        %2100 = vdwg.mxu0
        %2101 = vmatpush.bf16.msra.mxu0 %v1884
        %2102 = vmatpush.bf16.msra.mxu0 %v1880
        %2103 = vmatpush.bf16.msra.mxu0 %v1876
        %2104 = vmatpush.bf16.msra.mxu0 %v1872
        %2105 = vmatpush.bf16.msra.mxu0 %v1868
        %2106 = vmatpush.bf16.msra.mxu0 %v1864
        %2107 = vmatpush.bf16.msra.mxu0 %v1860
        %2108 = vmatpush.bf16.msra.mxu0 %v1856
        %2109 = vmatmul.bf16.gmra.mxu0 %v1527
        %v2110 = vpop.f32.mrf.mxu0
        %v2111 = vadd.f32 0.0, %v2110
        %v2112 = vpop.f32.mrf.mxu0
        %v2113 = vadd.f32 0.0, %v2112
        %2114 = vmatmul.bf16.gmra.mxu0 %v1554
        %v2115 = vpop.f32.mrf.mxu0
        %v2116 = vadd.f32 0.0, %v2115
        %v2117 = vpop.f32.mrf.mxu0
        %2118 = vdwg.mxu0
        %2119 = vmatpush.bf16.msra.mxu0 %v1916
        %2120 = vmatpush.bf16.msra.mxu0 %v1912
        %2121 = vmatpush.bf16.msra.mxu0 %v1908
        %2122 = vmatpush.bf16.msra.mxu0 %v1904
        %2123 = vmatpush.bf16.msra.mxu0 %v1900
        %2124 = vmatpush.bf16.msra.mxu0 %v1896
        %2125 = vmatpush.bf16.msra.mxu0 %v1892
        %2126 = vmatpush.bf16.msra.mxu0 %v1888
        %2127 = vmatmul.bf16.gmra.mxu0 %v1539
        %v2128 = vpop.f32.mrf.mxu0
        %v2129 = vadd.f32 %v2111, %v2128
        %v2130 = vpop.f32.mrf.mxu0
        %v2131 = vadd.f32 %v2113, %v2130
        %2132 = vmatmul.bf16.gmra.mxu0 %v1557
        %v2133 = vpop.f32.mrf.mxu0
        %v2134 = vadd.f32 %v2116, %v2133
        %v2135 = vpop.f32.mrf.mxu0
        %2136 = vdwg.mxu0
        %2137 = vmatpush.bf16.msra.mxu0 %v1948
        %2138 = vmatpush.bf16.msra.mxu0 %v1944
        %2139 = vmatpush.bf16.msra.mxu0 %v1940
        %2140 = vmatpush.bf16.msra.mxu0 %v1936
        %2141 = vmatpush.bf16.msra.mxu0 %v1932
        %2142 = vmatpush.bf16.msra.mxu0 %v1928
        %2143 = vmatpush.bf16.msra.mxu0 %v1924
        %2144 = vmatpush.bf16.msra.mxu0 %v1920
        %2145 = vmatmul.bf16.gmra.mxu0 %v1551
        %v2146 = vpop.f32.mrf.mxu0
        %v2147 = vadd.f32 %v2129, %v2146
        %v2148 = vpop.f32.mrf.mxu0
        %v2149 = vadd.f32 %v2131, %v2148
        %2150 = vmatmul.bf16.gmra.mxu0 %v1560
        %v2151 = vpop.f32.mrf.mxu0
        %v2152 = vadd.f32 %v2134, %v2151
        %v2153 = vpop.f32.mrf.mxu0
        %2154 = vdwg.mxu0
        %2155 = vmatpush.bf16.msra.mxu0 %v1885
        %2156 = vmatpush.bf16.msra.mxu0 %v1881
        %2157 = vmatpush.bf16.msra.mxu0 %v1877
        %2158 = vmatpush.bf16.msra.mxu0 %v1873
        %2159 = vmatpush.bf16.msra.mxu0 %v1869
        %2160 = vmatpush.bf16.msra.mxu0 %v1865
        %2161 = vmatpush.bf16.msra.mxu0 %v1861
        %2162 = vmatpush.bf16.msra.mxu0 %v1857
        %2163 = vmatmul.bf16.gmra.mxu0 %v1527
        %v2164 = vpop.f32.mrf.mxu0
        %v2165 = vadd.f32 0.0, %v2164
        %v2166 = vpop.f32.mrf.mxu0
        %v2167 = vadd.f32 0.0, %v2166
        %2168 = vmatmul.bf16.gmra.mxu0 %v1554
        %v2169 = vpop.f32.mrf.mxu0
        %v2170 = vadd.f32 0.0, %v2169
        %v2171 = vpop.f32.mrf.mxu0
        %2172 = vdwg.mxu0
        %2173 = vmatpush.bf16.msra.mxu0 %v1917
        %2174 = vmatpush.bf16.msra.mxu0 %v1913
        %2175 = vmatpush.bf16.msra.mxu0 %v1909
        %2176 = vmatpush.bf16.msra.mxu0 %v1905
        %2177 = vmatpush.bf16.msra.mxu0 %v1901
        %2178 = vmatpush.bf16.msra.mxu0 %v1897
        %2179 = vmatpush.bf16.msra.mxu0 %v1893
        %2180 = vmatpush.bf16.msra.mxu0 %v1889
        %2181 = vmatmul.bf16.gmra.mxu0 %v1539
        %v2182 = vpop.f32.mrf.mxu0
        %v2183 = vadd.f32 %v2165, %v2182
        %v2184 = vpop.f32.mrf.mxu0
        %v2185 = vadd.f32 %v2167, %v2184
        %2186 = vmatmul.bf16.gmra.mxu0 %v1557
        %v2187 = vpop.f32.mrf.mxu0
        %v2188 = vadd.f32 %v2170, %v2187
        %v2189 = vpop.f32.mrf.mxu0
        %2190 = vdwg.mxu0
        %2191 = vmatpush.bf16.msra.mxu0 %v1949
        %2192 = vmatpush.bf16.msra.mxu0 %v1945
        %2193 = vmatpush.bf16.msra.mxu0 %v1941
        %2194 = vmatpush.bf16.msra.mxu0 %v1937
        %2195 = vmatpush.bf16.msra.mxu0 %v1933
        %2196 = vmatpush.bf16.msra.mxu0 %v1929
        %2197 = vmatpush.bf16.msra.mxu0 %v1925
        %2198 = vmatpush.bf16.msra.mxu0 %v1921
        %2199 = vmatmul.bf16.gmra.mxu0 %v1551
        %v2200 = vpop.f32.mrf.mxu0
        %v2201 = vadd.f32 %v2183, %v2200
        %v2202 = vpop.f32.mrf.mxu0
        %v2203 = vadd.f32 %v2185, %v2202
        %2204 = vmatmul.bf16.gmra.mxu0 %v1560
        %v2205 = vpop.f32.mrf.mxu0
        %v2206 = vadd.f32 %v2188, %v2205
        %v2207 = vpop.f32.mrf.mxu0
        %2208 = vdwg.mxu0
        %2209 = vmatpush.bf16.msra.mxu0 %v1886
        %2210 = vmatpush.bf16.msra.mxu0 %v1882
        %2211 = vmatpush.bf16.msra.mxu0 %v1878
        %2212 = vmatpush.bf16.msra.mxu0 %v1874
        %2213 = vmatpush.bf16.msra.mxu0 %v1870
        %2214 = vmatpush.bf16.msra.mxu0 %v1866
        %2215 = vmatpush.bf16.msra.mxu0 %v1862
        %2216 = vmatpush.bf16.msra.mxu0 %v1858
        %2217 = vmatmul.bf16.gmra.mxu0 %v1527
        %v2218 = vpop.f32.mrf.mxu0
        %v2219 = vadd.f32 0.0, %v2218
        %v2220 = vpop.f32.mrf.mxu0
        %v2221 = vadd.f32 0.0, %v2220
        %2222 = vmatmul.bf16.gmra.mxu0 %v1554
        %v2223 = vpop.f32.mrf.mxu0
        %v2224 = vadd.f32 0.0, %v2223
        %v2225 = vpop.f32.mrf.mxu0
        %2226 = vdwg.mxu0
        %2227 = vmatpush.bf16.msra.mxu0 %v1918
        %2228 = vmatpush.bf16.msra.mxu0 %v1914
        %2229 = vmatpush.bf16.msra.mxu0 %v1910
        %2230 = vmatpush.bf16.msra.mxu0 %v1906
        %2231 = vmatpush.bf16.msra.mxu0 %v1902
        %2232 = vmatpush.bf16.msra.mxu0 %v1898
        %2233 = vmatpush.bf16.msra.mxu0 %v1894
        %2234 = vmatpush.bf16.msra.mxu0 %v1890
        %2235 = vmatmul.bf16.gmra.mxu0 %v1539
        %v2236 = vpop.f32.mrf.mxu0
        %v2237 = vadd.f32 %v2219, %v2236
        %v2238 = vpop.f32.mrf.mxu0
        %v2239 = vadd.f32 %v2221, %v2238
        %2240 = vmatmul.bf16.gmra.mxu0 %v1557
        %v2241 = vpop.f32.mrf.mxu0
        %v2242 = vadd.f32 %v2224, %v2241
        %v2243 = vpop.f32.mrf.mxu0
        %2244 = vdwg.mxu0
        %2245 = vmatpush.bf16.msra.mxu0 %v1950
        %2246 = vmatpush.bf16.msra.mxu0 %v1946
        %2247 = vmatpush.bf16.msra.mxu0 %v1942
        %2248 = vmatpush.bf16.msra.mxu0 %v1938
        %2249 = vmatpush.bf16.msra.mxu0 %v1934
        %2250 = vmatpush.bf16.msra.mxu0 %v1930
        %2251 = vmatpush.bf16.msra.mxu0 %v1926
        %2252 = vmatpush.bf16.msra.mxu0 %v1922
        %2253 = vmatmul.bf16.gmra.mxu0 %v1551
        %v2254 = vpop.f32.mrf.mxu0
        %v2255 = vadd.f32 %v2237, %v2254
        %v2256 = vpop.f32.mrf.mxu0
        %v2257 = vadd.f32 %v2239, %v2256
        %2258 = vmatmul.bf16.gmra.mxu0 %v1560
        %v2259 = vpop.f32.mrf.mxu0
        %v2260 = vadd.f32 %v2242, %v2259
        %v2261 = vpop.f32.mrf.mxu0
        %2262 = vdwg.mxu0
        %v2265 = vunpack.c.l.b16 %v1297
        %v2266 = vunpack.c.h.b16 %v1297
        %v2267 = vunpack.c.l.b16 %v1298
        %v2268 = vpack.c.b16 %v2265, %v2265
        %v2269 = vpack.c.b16 %v2266, %v2266
        %v2270 = vpack.c.b16 %v2267, %v2267
        %v2373 = vunpack.c.l.b16 %v1299
        %v2374 = vunpack.c.h.b16 %v1299
        %v2375 = vunpack.c.l.b16 %v1300
        %v2376 = vunpack.c.h.b16 %v1300
        %v2377 = vunpack.c.l.b16 %v1301
        %v2378 = vunpack.c.h.b16 %v1301
        %v2379 = vunpack.c.l.b16 %v1302
        %v2380 = vunpack.c.h.b16 %v1302
        %v2381 = vunpack.c.l.b16 %v1303
        %v2382 = vunpack.c.h.b16 %v1303
        %v2383 = vunpack.c.l.b16 %v1304
        %v2384 = vunpack.c.h.b16 %v1304
        %v2385 = vunpack.c.l.b16 %v1305
        %v2386 = vunpack.c.h.b16 %v1305
        %v2387 = vunpack.c.l.b16 %v1306
        %v2388 = vunpack.c.h.b16 %v1306
        %v2389 = vunpack.c.l.b16 %v1307
        %v2390 = vunpack.c.h.b16 %v1307
        %v2391 = vunpack.c.l.b16 %v1308
        %v2392 = vunpack.c.h.b16 %v1308
        %v2393 = vunpack.c.l.b16 %v1309
        %v2394 = vunpack.c.h.b16 %v1309
        %v2395 = vunpack.c.l.b16 %v1310
        %v2396 = vunpack.c.h.b16 %v1310
        %v2397 = vunpack.c.l.b16 %v1311
        %v2398 = vunpack.c.h.b16 %v1311
        %v2399 = vunpack.c.l.b16 %v1312
        %v2400 = vunpack.c.h.b16 %v1312
        %v2401 = vunpack.c.l.b16 %v1313
        %v2402 = vunpack.c.h.b16 %v1313
        %v2403 = vunpack.c.l.b16 %v1314
        %v2404 = vunpack.c.h.b16 %v1314
        %v2405 = vunpack.c.l.b16 %v1315
        %v2406 = vunpack.c.h.b16 %v1315
        %v2407 = vunpack.c.l.b16 %v1316
        %v2408 = vunpack.c.h.b16 %v1316
        %v2409 = vunpack.c.l.b16 %v1317
        %v2410 = vunpack.c.h.b16 %v1317
        %v2411 = vunpack.c.l.b16 %v1318
        %v2412 = vunpack.c.h.b16 %v1318
        %v2413 = vunpack.c.l.b16 %v1319
        %v2414 = vunpack.c.h.b16 %v1319
        %v2415 = vunpack.c.l.b16 %v1320
        %v2416 = vunpack.c.h.b16 %v1320
        %v2417 = vunpack.c.l.b16 %v1321
        %v2418 = vunpack.c.h.b16 %v1321
        %v2419 = vunpack.c.l.b16 %v1322
        %v2420 = vunpack.c.h.b16 %v1322
        %v2421 = vunpack.c.l.b16 %v1323
        %v2422 = vunpack.c.h.b16 %v1323
        %v2423 = vunpack.c.l.b16 %v1324
        %v2424 = vunpack.c.h.b16 %v1324
        %v2425 = vunpack.c.l.b16 %v1325
        %v2426 = vunpack.c.h.b16 %v1325
        %v2427 = vunpack.c.l.b16 %v1326
        %v2428 = vunpack.c.h.b16 %v1326
        %v2429 = vunpack.c.l.b16 %v1327
        %v2430 = vunpack.c.h.b16 %v1327
        %v2431 = vunpack.c.l.b16 %v1328
        %v2432 = vunpack.c.h.b16 %v1328
        %v2433 = vunpack.c.l.b16 %v1329
        %v2434 = vunpack.c.h.b16 %v1329
        %v2435 = vunpack.c.l.b16 %v1330
        %v2436 = vunpack.c.h.b16 %v1330
        %v2437 = vunpack.c.l.b16 %v1331
        %v2438 = vunpack.c.h.b16 %v1331
        %v2439 = vunpack.c.l.b16 %v1332
        %v2440 = vunpack.c.h.b16 %v1332
        %v2441 = vunpack.c.l.b16 %v1333
        %v2442 = vunpack.c.h.b16 %v1333
        %v2443 = vunpack.c.l.b16 %v1334
        %v2444 = vunpack.c.h.b16 %v1334
        %v2445 = vunpack.c.l.b16 %v1335
        %v2446 = vunpack.c.h.b16 %v1335
        %v2447 = vunpack.c.l.b16 %v1336
        %v2448 = vunpack.c.h.b16 %v1336
        %v2449 = vunpack.c.l.b16 %v1337
        %v2450 = vunpack.c.h.b16 %v1337
        %v2451 = vunpack.c.l.b16 %v1338
        %v2452 = vunpack.c.h.b16 %v1338
        %v2453 = vunpack.c.l.b16 %v1339
        %v2454 = vunpack.c.h.b16 %v1339
        %v2455 = vunpack.c.l.b16 %v1340
        %v2456 = vunpack.c.h.b16 %v1340
        %v2457 = vunpack.c.l.b16 %v1341
        %v2458 = vunpack.c.h.b16 %v1341
        %v2459 = vunpack.c.l.b16 %v1342
        %v2460 = vunpack.c.h.b16 %v1342
        %v2461 = vunpack.c.l.b16 %v1343
        %v2462 = vunpack.c.h.b16 %v1343
        %v2463 = vunpack.c.l.b16 %v1344
        %v2464 = vunpack.c.h.b16 %v1344
        %v2465 = vunpack.c.l.b16 %v1345
        %v2466 = vunpack.c.h.b16 %v1345
        %v2467 = vunpack.c.l.b16 %v1346
        %v2468 = vunpack.c.h.b16 %v1346
        %v2469 = vunpack.c.l.b16 %v1347
        %v2470 = vunpack.c.h.b16 %v1347
        %v2471 = vunpack.c.l.b16 %v1348
        %v2472 = vunpack.c.h.b16 %v1348
        %v2473 = vunpack.c.l.b16 %v1349
        %v2474 = vunpack.c.h.b16 %v1349
        %v2475 = vunpack.c.l.b16 %v1350
        %v2476 = vunpack.c.h.b16 %v1350
        %v2477 = vunpack.c.l.b16 %v1351
        %v2478 = vunpack.c.h.b16 %v1351
        %v2479 = vunpack.c.l.b16 %v1352
        %v2480 = vunpack.c.h.b16 %v1352
        %v2481 = vunpack.c.l.b16 %v1353
        %v2482 = vunpack.c.h.b16 %v1353
        %v2483 = vunpack.c.l.b16 %v1354
        %v2484 = vunpack.c.h.b16 %v1354
        %v2485 = vunpack.c.l.b16 %v1355
        %v2486 = vunpack.c.h.b16 %v1355
        %v2487 = vunpack.c.l.b16 %v1356
        %v2488 = vunpack.c.h.b16 %v1356
        %v2489 = vunpack.c.l.b16 %v1357
        %v2490 = vunpack.c.h.b16 %v1357
        %v2491 = vunpack.c.l.b16 %v1358
        %v2492 = vunpack.c.h.b16 %v1358
        %v2493 = vunpack.c.l.b16 %v1359
        %v2494 = vunpack.c.h.b16 %v1359
        %v2495 = vunpack.c.l.b16 %v1360
        %v2496 = vunpack.c.h.b16 %v1360
        %v2497 = vunpack.c.l.b16 %v1361
        %v2498 = vunpack.c.h.b16 %v1361
        %v2499 = vunpack.c.l.b16 %v1362
        %v2500 = vunpack.c.h.b16 %v1362
        %v2501 = vunpack.c.l.b16 %v1363
        %v2502 = vunpack.c.h.b16 %v1363
        %v2503 = vunpack.c.l.b16 %v1364
        %v2504 = vunpack.c.h.b16 %v1364
        %v2505 = vunpack.c.l.b16 %v1365
        %v2506 = vunpack.c.h.b16 %v1365
        %v2507 = vunpack.c.l.b16 %v1366
        %v2508 = vunpack.c.h.b16 %v1366
        %v2509 = vunpack.c.l.b16 %v1367
        %v2510 = vunpack.c.h.b16 %v1367
        %v2511 = vunpack.c.l.b16 %v1368
        %v2512 = vunpack.c.h.b16 %v1368
        %v2513 = vunpack.c.l.b16 %v1369
        %v2514 = vunpack.c.h.b16 %v1369
        %v2515 = vunpack.c.l.b16 %v1370
        %v2516 = vunpack.c.h.b16 %v1370
        %v2517 = vunpack.c.l.b16 %v1371
        %v2518 = vunpack.c.h.b16 %v1371
        %v2519 = vunpack.c.l.b16 %v1372
        %v2520 = vunpack.c.h.b16 %v1372
        %v2521 = vunpack.c.l.b16 %v1373
        %v2522 = vunpack.c.h.b16 %v1373
        %v2523 = vunpack.c.l.b16 %v1374
        %v2524 = vunpack.c.h.b16 %v1374
        %v2525 = vunpack.c.l.b16 %v1375
        %v2526 = vunpack.c.h.b16 %v1375
        %v2527 = vunpack.c.l.b16 %v1376
        %v2528 = vunpack.c.h.b16 %v1376
        %v2529 = vunpack.c.l.b16 %v1377
        %v2530 = vunpack.c.h.b16 %v1377
        %v2531 = vunpack.c.l.b16 %v1378
        %v2532 = vunpack.c.h.b16 %v1378
        %v2533 = vunpack.c.l.b16 %v1379
        %v2534 = vunpack.c.h.b16 %v1379
        %v2535 = vunpack.c.l.b16 %v1380
        %v2536 = vunpack.c.h.b16 %v1380
        %v2537 = vunpack.c.l.b16 %v1381
        %v2538 = vunpack.c.h.b16 %v1381
        %v2539 = vunpack.c.l.b16 %v1382
        %v2540 = vunpack.c.h.b16 %v1382
        %v2541 = vunpack.c.l.b16 %v1383
        %v2542 = vunpack.c.h.b16 %v1383
        %v2543 = vunpack.c.l.b16 %v1384
        %v2544 = vunpack.c.h.b16 %v1384
        %v2545 = vunpack.c.l.b16 %v1385
        %v2546 = vunpack.c.h.b16 %v1385
        %v2547 = vunpack.c.l.b16 %v1386
        %v2548 = vunpack.c.h.b16 %v1386
        %v2549 = vunpack.c.l.b16 %v1387
        %v2550 = vunpack.c.h.b16 %v1387
        %v2551 = vunpack.c.l.b16 %v1388
        %v2552 = vunpack.c.h.b16 %v1388
        %v2553 = vunpack.c.l.b16 %v1389
        %v2554 = vunpack.c.h.b16 %v1389
        %v2555 = vunpack.c.l.b16 %v1390
        %v2556 = vunpack.c.h.b16 %v1390
        %v2557 = vunpack.c.l.b16 %v1391
        %v2558 = vunpack.c.h.b16 %v1391
        %v2559 = vunpack.c.l.b16 %v1392
        %v2560 = vunpack.c.h.b16 %v1392
        %v2561 = vunpack.c.l.b16 %v1393
        %v2562 = vunpack.c.h.b16 %v1393
        %v2563 = vunpack.c.l.b16 %v1394
        %v2564 = vunpack.c.h.b16 %v1394
        %v2565 = vpack.c.b16 %v2377, %v2373
        %v2566 = vpack.c.b16 %v2378, %v2374
        %v2567 = vpack.c.b16 %v2379, %v2375
        %v2568 = vpack.c.b16 %v2380, %v2376
        %v2569 = vpack.c.b16 %v2385, %v2381
        %v2570 = vpack.c.b16 %v2386, %v2382
        %v2571 = vpack.c.b16 %v2387, %v2383
        %v2572 = vpack.c.b16 %v2388, %v2384
        %v2573 = vpack.c.b16 %v2393, %v2389
        %v2574 = vpack.c.b16 %v2394, %v2390
        %v2575 = vpack.c.b16 %v2395, %v2391
        %v2576 = vpack.c.b16 %v2396, %v2392
        %v2577 = vpack.c.b16 %v2401, %v2397
        %v2578 = vpack.c.b16 %v2402, %v2398
        %v2579 = vpack.c.b16 %v2403, %v2399
        %v2580 = vpack.c.b16 %v2404, %v2400
        %v2581 = vpack.c.b16 %v2409, %v2405
        %v2582 = vpack.c.b16 %v2410, %v2406
        %v2583 = vpack.c.b16 %v2411, %v2407
        %v2584 = vpack.c.b16 %v2412, %v2408
        %v2585 = vpack.c.b16 %v2417, %v2413
        %v2586 = vpack.c.b16 %v2418, %v2414
        %v2587 = vpack.c.b16 %v2419, %v2415
        %v2588 = vpack.c.b16 %v2420, %v2416
        %v2589 = vpack.c.b16 %v2425, %v2421
        %v2590 = vpack.c.b16 %v2426, %v2422
        %v2591 = vpack.c.b16 %v2427, %v2423
        %v2592 = vpack.c.b16 %v2428, %v2424
        %v2593 = vpack.c.b16 %v2433, %v2429
        %v2594 = vpack.c.b16 %v2434, %v2430
        %v2595 = vpack.c.b16 %v2435, %v2431
        %v2596 = vpack.c.b16 %v2436, %v2432
        %v2597 = vpack.c.b16 %v2441, %v2437
        %v2598 = vpack.c.b16 %v2442, %v2438
        %v2599 = vpack.c.b16 %v2443, %v2439
        %v2600 = vpack.c.b16 %v2444, %v2440
        %v2601 = vpack.c.b16 %v2449, %v2445
        %v2602 = vpack.c.b16 %v2450, %v2446
        %v2603 = vpack.c.b16 %v2451, %v2447
        %v2604 = vpack.c.b16 %v2452, %v2448
        %v2605 = vpack.c.b16 %v2457, %v2453
        %v2606 = vpack.c.b16 %v2458, %v2454
        %v2607 = vpack.c.b16 %v2459, %v2455
        %v2608 = vpack.c.b16 %v2460, %v2456
        %v2609 = vpack.c.b16 %v2465, %v2461
        %v2610 = vpack.c.b16 %v2466, %v2462
        %v2611 = vpack.c.b16 %v2467, %v2463
        %v2612 = vpack.c.b16 %v2468, %v2464
        %v2613 = vpack.c.b16 %v2473, %v2469
        %v2614 = vpack.c.b16 %v2474, %v2470
        %v2615 = vpack.c.b16 %v2475, %v2471
        %v2616 = vpack.c.b16 %v2476, %v2472
        %v2617 = vpack.c.b16 %v2481, %v2477
        %v2618 = vpack.c.b16 %v2482, %v2478
        %v2619 = vpack.c.b16 %v2483, %v2479
        %v2620 = vpack.c.b16 %v2484, %v2480
        %v2621 = vpack.c.b16 %v2489, %v2485
        %v2622 = vpack.c.b16 %v2490, %v2486
        %v2623 = vpack.c.b16 %v2491, %v2487
        %v2624 = vpack.c.b16 %v2492, %v2488
        %v2625 = vpack.c.b16 %v2497, %v2493
        %v2626 = vpack.c.b16 %v2498, %v2494
        %v2627 = vpack.c.b16 %v2499, %v2495
        %v2628 = vpack.c.b16 %v2500, %v2496
        %v2629 = vpack.c.b16 %v2505, %v2501
        %v2630 = vpack.c.b16 %v2506, %v2502
        %v2631 = vpack.c.b16 %v2507, %v2503
        %v2632 = vpack.c.b16 %v2508, %v2504
        %v2633 = vpack.c.b16 %v2513, %v2509
        %v2634 = vpack.c.b16 %v2514, %v2510
        %v2635 = vpack.c.b16 %v2515, %v2511
        %v2636 = vpack.c.b16 %v2516, %v2512
        %v2637 = vpack.c.b16 %v2521, %v2517
        %v2638 = vpack.c.b16 %v2522, %v2518
        %v2639 = vpack.c.b16 %v2523, %v2519
        %v2640 = vpack.c.b16 %v2524, %v2520
        %v2641 = vpack.c.b16 %v2529, %v2525
        %v2642 = vpack.c.b16 %v2530, %v2526
        %v2643 = vpack.c.b16 %v2531, %v2527
        %v2644 = vpack.c.b16 %v2532, %v2528
        %v2645 = vpack.c.b16 %v2537, %v2533
        %v2646 = vpack.c.b16 %v2538, %v2534
        %v2647 = vpack.c.b16 %v2539, %v2535
        %v2648 = vpack.c.b16 %v2540, %v2536
        %v2649 = vpack.c.b16 %v2545, %v2541
        %v2650 = vpack.c.b16 %v2546, %v2542
        %v2651 = vpack.c.b16 %v2547, %v2543
        %v2652 = vpack.c.b16 %v2548, %v2544
        %v2653 = vpack.c.b16 %v2553, %v2549
        %v2654 = vpack.c.b16 %v2554, %v2550
        %v2655 = vpack.c.b16 %v2555, %v2551
        %v2656 = vpack.c.b16 %v2556, %v2552
        %v2657 = vpack.c.b16 %v2561, %v2557
        %v2658 = vpack.c.b16 %v2562, %v2558
        %v2659 = vpack.c.b16 %v2563, %v2559
        %v2660 = vpack.c.b16 %v2564, %v2560
        %2757 = vmatpush.bf16.msra.mxu0 %v2593
        %2758 = vmatpush.bf16.msra.mxu0 %v2589
        %2759 = vmatpush.bf16.msra.mxu0 %v2585
        %2760 = vmatpush.bf16.msra.mxu0 %v2581
        %2761 = vmatpush.bf16.msra.mxu0 %v2577
        %2762 = vmatpush.bf16.msra.mxu0 %v2573
        %2763 = vmatpush.bf16.msra.mxu0 %v2569
        %2764 = vmatpush.bf16.msra.mxu0 %v2565
        %2765 = vmatmul.bf16.gmra.mxu0 %v1509
        %v2766 = vpop.f32.mrf.mxu0
        %v2767 = vadd.f32 %v2093, %v2766
        %v2768 = vpop.f32.mrf.mxu0
        %v2769 = vadd.f32 %v2095, %v2768
        %2770 = vmatmul.bf16.gmra.mxu0 %v2268
        %v2771 = vpop.f32.mrf.mxu0
        %v2772 = vadd.f32 %v2098, %v2771
        %v2773 = vpop.f32.mrf.mxu0
        %2774 = vdwg.mxu0
        %2775 = vmatpush.bf16.msra.mxu0 %v2625
        %2776 = vmatpush.bf16.msra.mxu0 %v2621
        %2777 = vmatpush.bf16.msra.mxu0 %v2617
        %2778 = vmatpush.bf16.msra.mxu0 %v2613
        %2779 = vmatpush.bf16.msra.mxu0 %v2609
        %2780 = vmatpush.bf16.msra.mxu0 %v2605
        %2781 = vmatpush.bf16.msra.mxu0 %v2601
        %2782 = vmatpush.bf16.msra.mxu0 %v2597
        %2783 = vmatmul.bf16.gmra.mxu0 %v1510
        %v2784 = vpop.f32.mrf.mxu0
        %v2785 = vadd.f32 %v2767, %v2784
        %v2786 = vpop.f32.mrf.mxu0
        %v2787 = vadd.f32 %v2769, %v2786
        %2788 = vmatmul.bf16.gmra.mxu0 %v2269
        %v2789 = vpop.f32.mrf.mxu0
        %v2790 = vadd.f32 %v2772, %v2789
        %v2791 = vpop.f32.mrf.mxu0
        %2792 = vdwg.mxu0
        %2793 = vmatpush.bf16.msra.mxu0 %v2657
        %2794 = vmatpush.bf16.msra.mxu0 %v2653
        %2795 = vmatpush.bf16.msra.mxu0 %v2649
        %2796 = vmatpush.bf16.msra.mxu0 %v2645
        %2797 = vmatpush.bf16.msra.mxu0 %v2641
        %2798 = vmatpush.bf16.msra.mxu0 %v2637
        %2799 = vmatpush.bf16.msra.mxu0 %v2633
        %2800 = vmatpush.bf16.msra.mxu0 %v2629
        %2801 = vmatmul.bf16.gmra.mxu0 %v1511
        %v2802 = vpop.f32.mrf.mxu0
        %v2803 = vadd.f32 %v2785, %v2802
        %v2804 = vpop.f32.mrf.mxu0
        %v2805 = vadd.f32 %v2787, %v2804
        %2806 = vmatmul.bf16.gmra.mxu0 %v2270
        %v2807 = vpop.f32.mrf.mxu0
        %v2808 = vadd.f32 %v2790, %v2807
        %v2809 = vpop.f32.mrf.mxu0
        %2810 = vdwg.mxu0
        %2811 = vmatpush.bf16.msra.mxu0 %v2594
        %2812 = vmatpush.bf16.msra.mxu0 %v2590
        %2813 = vmatpush.bf16.msra.mxu0 %v2586
        %2814 = vmatpush.bf16.msra.mxu0 %v2582
        %2815 = vmatpush.bf16.msra.mxu0 %v2578
        %2816 = vmatpush.bf16.msra.mxu0 %v2574
        %2817 = vmatpush.bf16.msra.mxu0 %v2570
        %2818 = vmatpush.bf16.msra.mxu0 %v2566
        %2819 = vmatmul.bf16.gmra.mxu0 %v1509
        %v2820 = vpop.f32.mrf.mxu0
        %v2821 = vadd.f32 %v2147, %v2820
        %v2822 = vpop.f32.mrf.mxu0
        %v2823 = vadd.f32 %v2149, %v2822
        %2824 = vmatmul.bf16.gmra.mxu0 %v2268
        %v2825 = vpop.f32.mrf.mxu0
        %v2826 = vadd.f32 %v2152, %v2825
        %v2827 = vpop.f32.mrf.mxu0
        %2828 = vdwg.mxu0
        %2829 = vmatpush.bf16.msra.mxu0 %v2626
        %2830 = vmatpush.bf16.msra.mxu0 %v2622
        %2831 = vmatpush.bf16.msra.mxu0 %v2618
        %2832 = vmatpush.bf16.msra.mxu0 %v2614
        %2833 = vmatpush.bf16.msra.mxu0 %v2610
        %2834 = vmatpush.bf16.msra.mxu0 %v2606
        %2835 = vmatpush.bf16.msra.mxu0 %v2602
        %2836 = vmatpush.bf16.msra.mxu0 %v2598
        %2837 = vmatmul.bf16.gmra.mxu0 %v1510
        %v2838 = vpop.f32.mrf.mxu0
        %v2839 = vadd.f32 %v2821, %v2838
        %v2840 = vpop.f32.mrf.mxu0
        %v2841 = vadd.f32 %v2823, %v2840
        %2842 = vmatmul.bf16.gmra.mxu0 %v2269
        %v2843 = vpop.f32.mrf.mxu0
        %v2844 = vadd.f32 %v2826, %v2843
        %v2845 = vpop.f32.mrf.mxu0
        %2846 = vdwg.mxu0
        %2847 = vmatpush.bf16.msra.mxu0 %v2658
        %2848 = vmatpush.bf16.msra.mxu0 %v2654
        %2849 = vmatpush.bf16.msra.mxu0 %v2650
        %2850 = vmatpush.bf16.msra.mxu0 %v2646
        %2851 = vmatpush.bf16.msra.mxu0 %v2642
        %2852 = vmatpush.bf16.msra.mxu0 %v2638
        %2853 = vmatpush.bf16.msra.mxu0 %v2634
        %2854 = vmatpush.bf16.msra.mxu0 %v2630
        %2855 = vmatmul.bf16.gmra.mxu0 %v1511
        %v2856 = vpop.f32.mrf.mxu0
        %v2857 = vadd.f32 %v2839, %v2856
        %v2858 = vpop.f32.mrf.mxu0
        %v2859 = vadd.f32 %v2841, %v2858
        %2860 = vmatmul.bf16.gmra.mxu0 %v2270
        %v2861 = vpop.f32.mrf.mxu0
        %v2862 = vadd.f32 %v2844, %v2861
        %v2863 = vpop.f32.mrf.mxu0
        %2864 = vdwg.mxu0
        %2865 = vmatpush.bf16.msra.mxu0 %v2595
        %2866 = vmatpush.bf16.msra.mxu0 %v2591
        %2867 = vmatpush.bf16.msra.mxu0 %v2587
        %2868 = vmatpush.bf16.msra.mxu0 %v2583
        %2869 = vmatpush.bf16.msra.mxu0 %v2579
        %2870 = vmatpush.bf16.msra.mxu0 %v2575
        %2871 = vmatpush.bf16.msra.mxu0 %v2571
        %2872 = vmatpush.bf16.msra.mxu0 %v2567
        %2873 = vmatmul.bf16.gmra.mxu0 %v1509
        %v2874 = vpop.f32.mrf.mxu0
        %v2875 = vadd.f32 %v2201, %v2874
        %v2876 = vpop.f32.mrf.mxu0
        %v2877 = vadd.f32 %v2203, %v2876
        %2878 = vmatmul.bf16.gmra.mxu0 %v2268
        %v2879 = vpop.f32.mrf.mxu0
        %v2880 = vadd.f32 %v2206, %v2879
        %v2881 = vpop.f32.mrf.mxu0
        %2882 = vdwg.mxu0
        %2883 = vmatpush.bf16.msra.mxu0 %v2627
        %2884 = vmatpush.bf16.msra.mxu0 %v2623
        %2885 = vmatpush.bf16.msra.mxu0 %v2619
        %2886 = vmatpush.bf16.msra.mxu0 %v2615
        %2887 = vmatpush.bf16.msra.mxu0 %v2611
        %2888 = vmatpush.bf16.msra.mxu0 %v2607
        %2889 = vmatpush.bf16.msra.mxu0 %v2603
        %2890 = vmatpush.bf16.msra.mxu0 %v2599
        %2891 = vmatmul.bf16.gmra.mxu0 %v1510
        %v2892 = vpop.f32.mrf.mxu0
        %v2893 = vadd.f32 %v2875, %v2892
        %v2894 = vpop.f32.mrf.mxu0
        %v2895 = vadd.f32 %v2877, %v2894
        %2896 = vmatmul.bf16.gmra.mxu0 %v2269
        %v2897 = vpop.f32.mrf.mxu0
        %v2898 = vadd.f32 %v2880, %v2897
        %v2899 = vpop.f32.mrf.mxu0
        %2900 = vdwg.mxu0
        %2901 = vmatpush.bf16.msra.mxu0 %v2659
        %2902 = vmatpush.bf16.msra.mxu0 %v2655
        %2903 = vmatpush.bf16.msra.mxu0 %v2651
        %2904 = vmatpush.bf16.msra.mxu0 %v2647
        %2905 = vmatpush.bf16.msra.mxu0 %v2643
        %2906 = vmatpush.bf16.msra.mxu0 %v2639
        %2907 = vmatpush.bf16.msra.mxu0 %v2635
        %2908 = vmatpush.bf16.msra.mxu0 %v2631
        %2909 = vmatmul.bf16.gmra.mxu0 %v1511
        %v2910 = vpop.f32.mrf.mxu0
        %v2911 = vadd.f32 %v2893, %v2910
        %v2912 = vpop.f32.mrf.mxu0
        %v2913 = vadd.f32 %v2895, %v2912
        %2914 = vmatmul.bf16.gmra.mxu0 %v2270
        %v2915 = vpop.f32.mrf.mxu0
        %v2916 = vadd.f32 %v2898, %v2915
        %v2917 = vpop.f32.mrf.mxu0
        %2918 = vdwg.mxu0
        %2919 = vmatpush.bf16.msra.mxu0 %v2596
        %2920 = vmatpush.bf16.msra.mxu0 %v2592
        %2921 = vmatpush.bf16.msra.mxu0 %v2588
        %2922 = vmatpush.bf16.msra.mxu0 %v2584
        %2923 = vmatpush.bf16.msra.mxu0 %v2580
        %2924 = vmatpush.bf16.msra.mxu0 %v2576
        %2925 = vmatpush.bf16.msra.mxu0 %v2572
        %2926 = vmatpush.bf16.msra.mxu0 %v2568
        %2927 = vmatmul.bf16.gmra.mxu0 %v1509
        %v2928 = vpop.f32.mrf.mxu0
        %v2929 = vadd.f32 %v2255, %v2928
        %v2930 = vpop.f32.mrf.mxu0
        %v2931 = vadd.f32 %v2257, %v2930
        %2932 = vmatmul.bf16.gmra.mxu0 %v2268
        %v2933 = vpop.f32.mrf.mxu0
        %v2934 = vadd.f32 %v2260, %v2933
        %v2935 = vpop.f32.mrf.mxu0
        %2936 = vdwg.mxu0
        %2937 = vmatpush.bf16.msra.mxu0 %v2628
        %2938 = vmatpush.bf16.msra.mxu0 %v2624
        %2939 = vmatpush.bf16.msra.mxu0 %v2620
        %2940 = vmatpush.bf16.msra.mxu0 %v2616
        %2941 = vmatpush.bf16.msra.mxu0 %v2612
        %2942 = vmatpush.bf16.msra.mxu0 %v2608
        %2943 = vmatpush.bf16.msra.mxu0 %v2604
        %2944 = vmatpush.bf16.msra.mxu0 %v2600
        %2945 = vmatmul.bf16.gmra.mxu0 %v1510
        %v2946 = vpop.f32.mrf.mxu0
        %v2947 = vadd.f32 %v2929, %v2946
        %v2948 = vpop.f32.mrf.mxu0
        %v2949 = vadd.f32 %v2931, %v2948
        %2950 = vmatmul.bf16.gmra.mxu0 %v2269
        %v2951 = vpop.f32.mrf.mxu0
        %v2952 = vadd.f32 %v2934, %v2951
        %v2953 = vpop.f32.mrf.mxu0
        %2954 = vdwg.mxu0
        %2955 = vmatpush.bf16.msra.mxu0 %v2660
        %2956 = vmatpush.bf16.msra.mxu0 %v2656
        %2957 = vmatpush.bf16.msra.mxu0 %v2652
        %2958 = vmatpush.bf16.msra.mxu0 %v2648
        %2959 = vmatpush.bf16.msra.mxu0 %v2644
        %2960 = vmatpush.bf16.msra.mxu0 %v2640
        %2961 = vmatpush.bf16.msra.mxu0 %v2636
        %2962 = vmatpush.bf16.msra.mxu0 %v2632
        %2963 = vmatmul.bf16.gmra.mxu0 %v1511
        %v2964 = vpop.f32.mrf.mxu0
        %v2965 = vadd.f32 %v2947, %v2964
        %v2966 = vpop.f32.mrf.mxu0
        %v2967 = vadd.f32 %v2949, %v2966
        %2968 = vmatmul.bf16.gmra.mxu0 %v2270
        %v2969 = vpop.f32.mrf.mxu0
        %v2970 = vadd.f32 %v2952, %v2969
        %v2971 = vpop.f32.mrf.mxu0
        %2972 = vdwg.mxu0
        %v2973 = vld [vmem:[#allocation2] sm:$0xee]
        %v2974 = vld [vmem:[#allocation2 + $0x8] sm:$0xe]
        %s2975 = scalar_lea.vmem %s3, 1536
        %v2976 = vld [vmem:[%s2975] sm:$0xff]
        %v2977 = vld [vmem:[%s2975 + $0x8] sm:$0xff]
        %v2978 = vld [vmem:[%s2975 + $0x10] sm:$0xff]
        %v2979 = vld [vmem:[%s2975 + $0x18] sm:$0xff]
        %v2980 = vld [vmem:[%s2975 + $0x20] sm:$0xff]
        %v2981 = vld [vmem:[%s2975 + $0x28] sm:$0xff]
        %v2982 = vld [vmem:[%s2975 + $0x30] sm:$0xff]
        %v2983 = vld [vmem:[%s2975 + $0x38] sm:$0xff]
        %v2984 = vld [vmem:[%s2975 + $0x40] sm:$0xff]
        %v2985 = vld [vmem:[%s2975 + $0x48] sm:$0xff]
        %v2986 = vld [vmem:[%s2975 + $0x50] sm:$0xff]
        %v2987 = vld [vmem:[%s2975 + $0x58] sm:$0xff]
        %v2988 = vld [vmem:[%s2975 + $0x60] sm:$0xff]
        %v2989 = vld [vmem:[%s2975 + $0x68] sm:$0xff]
        %v2990 = vld [vmem:[%s2975 + $0x70] sm:$0xff]
        %v2991 = vld [vmem:[%s2975 + $0x78] sm:$0xff]
        %v2992 = vld [vmem:[%s2975 + $0x80] sm:$0xff]
        %v2993 = vld [vmem:[%s2975 + $0x88] sm:$0xff]
        %v2994 = vld [vmem:[%s2975 + $0x90] sm:$0xff]
        %v2995 = vld [vmem:[%s2975 + $0x98] sm:$0xff]
        %v2996 = vld [vmem:[%s2975 + $0xa0] sm:$0xff]
        %v2997 = vld [vmem:[%s2975 + $0xa8] sm:$0xff]
        %v2998 = vld [vmem:[%s2975 + $0xb0] sm:$0xff]
        %v2999 = vld [vmem:[%s2975 + $0xb8] sm:$0xff]
        %v3000 = vld [vmem:[%s2975 + $0xc0] sm:$0xff]
        %v3001 = vld [vmem:[%s2975 + $0xc8] sm:$0xff]
        %v3002 = vld [vmem:[%s2975 + $0xd0] sm:$0xff]
        %v3003 = vld [vmem:[%s2975 + $0xd8] sm:$0xff]
        %v3004 = vld [vmem:[%s2975 + $0xe0] sm:$0xff]
        %v3005 = vld [vmem:[%s2975 + $0xe8] sm:$0xff]
        %v3006 = vld [vmem:[%s2975 + $0xf0] sm:$0xff]
        %v3007 = vld [vmem:[%s2975 + $0xf8] sm:$0xff]
        %v3008 = vld [vmem:[%s2975 + $0x100] sm:$0xff]
        %v3009 = vld [vmem:[%s2975 + $0x108] sm:$0xff]
        %v3010 = vld [vmem:[%s2975 + $0x110] sm:$0xff]
        %v3011 = vld [vmem:[%s2975 + $0x118] sm:$0xff]
        %v3012 = vld [vmem:[%s2975 + $0x120] sm:$0xff]
        %v3013 = vld [vmem:[%s2975 + $0x128] sm:$0xff]
        %v3014 = vld [vmem:[%s2975 + $0x130] sm:$0xff]
        %v3015 = vld [vmem:[%s2975 + $0x138] sm:$0xff]
        %v3016 = vld [vmem:[%s2975 + $0x140] sm:$0xff]
        %v3017 = vld [vmem:[%s2975 + $0x148] sm:$0xff]
        %v3018 = vld [vmem:[%s2975 + $0x150] sm:$0xff]
        %v3019 = vld [vmem:[%s2975 + $0x158] sm:$0xff]
        %v3020 = vld [vmem:[%s2975 + $0x160] sm:$0xff]
        %v3021 = vld [vmem:[%s2975 + $0x168] sm:$0xff]
        %v3022 = vld [vmem:[%s2975 + $0x170] sm:$0xff]
        %v3023 = vld [vmem:[%s2975 + $0x178] sm:$0xff]
        %v3024 = vld [vmem:[%s2975 + $0x180] sm:$0xff]
        %v3025 = vld [vmem:[%s2975 + $0x188] sm:$0xff]
        %v3026 = vld [vmem:[%s2975 + $0x190] sm:$0xff]
        %v3027 = vld [vmem:[%s2975 + $0x198] sm:$0xff]
        %v3028 = vld [vmem:[%s2975 + $0x1a0] sm:$0xff]
        %v3029 = vld [vmem:[%s2975 + $0x1a8] sm:$0xff]
        %v3030 = vld [vmem:[%s2975 + $0x1b0] sm:$0xff]
        %v3031 = vld [vmem:[%s2975 + $0x1b8] sm:$0xff]
        %v3032 = vld [vmem:[%s2975 + $0x1c0] sm:$0xff]
        %v3033 = vld [vmem:[%s2975 + $0x1c8] sm:$0xff]
        %v3034 = vld [vmem:[%s2975 + $0x1d0] sm:$0xff]
        %v3035 = vld [vmem:[%s2975 + $0x1d8] sm:$0xff]
        %v3036 = vld [vmem:[%s2975 + $0x1e0] sm:$0xff]
        %v3037 = vld [vmem:[%s2975 + $0x1e8] sm:$0xff]
        %v3038 = vld [vmem:[%s2975 + $0x1f0] sm:$0xff]
        %v3039 = vld [vmem:[%s2975 + $0x1f8] sm:$0xff]
        %v3040 = vld [vmem:[%s2975 + $0x200] sm:$0xff]
        %v3041 = vld [vmem:[%s2975 + $0x208] sm:$0xff]
        %v3042 = vld [vmem:[%s2975 + $0x210] sm:$0xff]
        %v3043 = vld [vmem:[%s2975 + $0x218] sm:$0xff]
        %v3044 = vld [vmem:[%s2975 + $0x220] sm:$0xff]
        %v3045 = vld [vmem:[%s2975 + $0x228] sm:$0xff]
        %v3046 = vld [vmem:[%s2975 + $0x230] sm:$0xff]
        %v3047 = vld [vmem:[%s2975 + $0x238] sm:$0xff]
        %v3048 = vld [vmem:[%s2975 + $0x240] sm:$0xff]
        %v3049 = vld [vmem:[%s2975 + $0x248] sm:$0xff]
        %v3050 = vld [vmem:[%s2975 + $0x250] sm:$0xff]
        %v3051 = vld [vmem:[%s2975 + $0x258] sm:$0xff]
        %v3052 = vld [vmem:[%s2975 + $0x260] sm:$0xff]
        %v3053 = vld [vmem:[%s2975 + $0x268] sm:$0xff]
        %v3054 = vld [vmem:[%s2975 + $0x270] sm:$0xff]
        %v3055 = vld [vmem:[%s2975 + $0x278] sm:$0xff]
        %v3056 = vld [vmem:[%s2975 + $0x280] sm:$0xff]
        %v3057 = vld [vmem:[%s2975 + $0x288] sm:$0xff]
        %v3058 = vld [vmem:[%s2975 + $0x290] sm:$0xff]
        %v3059 = vld [vmem:[%s2975 + $0x298] sm:$0xff]
        %v3060 = vld [vmem:[%s2975 + $0x2a0] sm:$0xff]
        %v3061 = vld [vmem:[%s2975 + $0x2a8] sm:$0xff]
        %v3062 = vld [vmem:[%s2975 + $0x2b0] sm:$0xff]
        %v3063 = vld [vmem:[%s2975 + $0x2b8] sm:$0xff]
        %v3064 = vld [vmem:[%s2975 + $0x2c0] sm:$0xff]
        %v3065 = vld [vmem:[%s2975 + $0x2c8] sm:$0xff]
        %v3066 = vld [vmem:[%s2975 + $0x2d0] sm:$0xff]
        %v3067 = vld [vmem:[%s2975 + $0x2d8] sm:$0xff]
        %v3068 = vld [vmem:[%s2975 + $0x2e0] sm:$0xff]
        %v3069 = vld [vmem:[%s2975 + $0x2e8] sm:$0xff]
        %v3070 = vld [vmem:[%s2975 + $0x2f0] sm:$0xff]
        %v3071 = vld [vmem:[%s2975 + $0x2f8] sm:$0xff]
        %v3074 = vunpack.c.l.b16 %v2973
        %v3075 = vunpack.c.h.b16 %v2973
        %v3076 = vunpack.c.l.b16 %v2974
        %v3077 = vpack.c.b16 %v1503, %v3074
        %v3078 = vpack.c.b16 %v1504, %v3075
        %v3079 = vpack.c.b16 %v1505, %v3076
        %vm3080 = vcmask 1046528
        %v3081 = vrot.slane %v3077, 1
        %v3082 = vrot.slane %v1512, 1
        %v3083 = vsel %vm3080, %v3081, %v3082
        %v3084 = vrot.slane %v3078, 1
        %v3085 = vrot.slane %v1513, 1
        %v3086 = vsel %vm3080, %v3084, %v3085
        %v3087 = vrot.slane %v3079, 1
        %v3088 = vrot.slane %v1514, 1
        %v3089 = vsel %vm3080, %v3087, %v3088
        %v3192 = vunpack.c.l.b16 %v2976
        %v3193 = vunpack.c.h.b16 %v2976
        %v3194 = vunpack.c.l.b16 %v2977
        %v3195 = vunpack.c.h.b16 %v2977
        %v3196 = vunpack.c.l.b16 %v2978
        %v3197 = vunpack.c.h.b16 %v2978
        %v3198 = vunpack.c.l.b16 %v2979
        %v3199 = vunpack.c.h.b16 %v2979
        %v3200 = vunpack.c.l.b16 %v2980
        %v3201 = vunpack.c.h.b16 %v2980
        %v3202 = vunpack.c.l.b16 %v2981
        %v3203 = vunpack.c.h.b16 %v2981
        %v3204 = vunpack.c.l.b16 %v2982
        %v3205 = vunpack.c.h.b16 %v2982
        %v3206 = vunpack.c.l.b16 %v2983
        %v3207 = vunpack.c.h.b16 %v2983
        %v3208 = vunpack.c.l.b16 %v2984
        %v3209 = vunpack.c.h.b16 %v2984
        %v3210 = vunpack.c.l.b16 %v2985
        %v3211 = vunpack.c.h.b16 %v2985
        %v3212 = vunpack.c.l.b16 %v2986
        %v3213 = vunpack.c.h.b16 %v2986
        %v3214 = vunpack.c.l.b16 %v2987
        %v3215 = vunpack.c.h.b16 %v2987
        %v3216 = vunpack.c.l.b16 %v2988
        %v3217 = vunpack.c.h.b16 %v2988
        %v3218 = vunpack.c.l.b16 %v2989
        %v3219 = vunpack.c.h.b16 %v2989
        %v3220 = vunpack.c.l.b16 %v2990
        %v3221 = vunpack.c.h.b16 %v2990
        %v3222 = vunpack.c.l.b16 %v2991
        %v3223 = vunpack.c.h.b16 %v2991
        %v3224 = vunpack.c.l.b16 %v2992
        %v3225 = vunpack.c.h.b16 %v2992
        %v3226 = vunpack.c.l.b16 %v2993
        %v3227 = vunpack.c.h.b16 %v2993
        %v3228 = vunpack.c.l.b16 %v2994
        %v3229 = vunpack.c.h.b16 %v2994
        %v3230 = vunpack.c.l.b16 %v2995
        %v3231 = vunpack.c.h.b16 %v2995
        %v3232 = vunpack.c.l.b16 %v2996
        %v3233 = vunpack.c.h.b16 %v2996
        %v3234 = vunpack.c.l.b16 %v2997
        %v3235 = vunpack.c.h.b16 %v2997
        %v3236 = vunpack.c.l.b16 %v2998
        %v3237 = vunpack.c.h.b16 %v2998
        %v3238 = vunpack.c.l.b16 %v2999
        %v3239 = vunpack.c.h.b16 %v2999
        %v3240 = vunpack.c.l.b16 %v3000
        %v3241 = vunpack.c.h.b16 %v3000
        %v3242 = vunpack.c.l.b16 %v3001
        %v3243 = vunpack.c.h.b16 %v3001
        %v3244 = vunpack.c.l.b16 %v3002
        %v3245 = vunpack.c.h.b16 %v3002
        %v3246 = vunpack.c.l.b16 %v3003
        %v3247 = vunpack.c.h.b16 %v3003
        %v3248 = vunpack.c.l.b16 %v3004
        %v3249 = vunpack.c.h.b16 %v3004
        %v3250 = vunpack.c.l.b16 %v3005
        %v3251 = vunpack.c.h.b16 %v3005
        %v3252 = vunpack.c.l.b16 %v3006
        %v3253 = vunpack.c.h.b16 %v3006
        %v3254 = vunpack.c.l.b16 %v3007
        %v3255 = vunpack.c.h.b16 %v3007
        %v3256 = vunpack.c.l.b16 %v3008
        %v3257 = vunpack.c.h.b16 %v3008
        %v3258 = vunpack.c.l.b16 %v3009
        %v3259 = vunpack.c.h.b16 %v3009
        %v3260 = vunpack.c.l.b16 %v3010
        %v3261 = vunpack.c.h.b16 %v3010
        %v3262 = vunpack.c.l.b16 %v3011
        %v3263 = vunpack.c.h.b16 %v3011
        %v3264 = vunpack.c.l.b16 %v3012
        %v3265 = vunpack.c.h.b16 %v3012
        %v3266 = vunpack.c.l.b16 %v3013
        %v3267 = vunpack.c.h.b16 %v3013
        %v3268 = vunpack.c.l.b16 %v3014
        %v3269 = vunpack.c.h.b16 %v3014
        %v3270 = vunpack.c.l.b16 %v3015
        %v3271 = vunpack.c.h.b16 %v3015
        %v3272 = vunpack.c.l.b16 %v3016
        %v3273 = vunpack.c.h.b16 %v3016
        %v3274 = vunpack.c.l.b16 %v3017
        %v3275 = vunpack.c.h.b16 %v3017
        %v3276 = vunpack.c.l.b16 %v3018
        %v3277 = vunpack.c.h.b16 %v3018
        %v3278 = vunpack.c.l.b16 %v3019
        %v3279 = vunpack.c.h.b16 %v3019
        %v3280 = vunpack.c.l.b16 %v3020
        %v3281 = vunpack.c.h.b16 %v3020
        %v3282 = vunpack.c.l.b16 %v3021
        %v3283 = vunpack.c.h.b16 %v3021
        %v3284 = vunpack.c.l.b16 %v3022
        %v3285 = vunpack.c.h.b16 %v3022
        %v3286 = vunpack.c.l.b16 %v3023
        %v3287 = vunpack.c.h.b16 %v3023
        %v3288 = vunpack.c.l.b16 %v3024
        %v3289 = vunpack.c.h.b16 %v3024
        %v3290 = vunpack.c.l.b16 %v3025
        %v3291 = vunpack.c.h.b16 %v3025
        %v3292 = vunpack.c.l.b16 %v3026
        %v3293 = vunpack.c.h.b16 %v3026
        %v3294 = vunpack.c.l.b16 %v3027
        %v3295 = vunpack.c.h.b16 %v3027
        %v3296 = vunpack.c.l.b16 %v3028
        %v3297 = vunpack.c.h.b16 %v3028
        %v3298 = vunpack.c.l.b16 %v3029
        %v3299 = vunpack.c.h.b16 %v3029
        %v3300 = vunpack.c.l.b16 %v3030
        %v3301 = vunpack.c.h.b16 %v3030
        %v3302 = vunpack.c.l.b16 %v3031
        %v3303 = vunpack.c.h.b16 %v3031
        %v3304 = vunpack.c.l.b16 %v3032
        %v3305 = vunpack.c.h.b16 %v3032
        %v3306 = vunpack.c.l.b16 %v3033
        %v3307 = vunpack.c.h.b16 %v3033
        %v3308 = vunpack.c.l.b16 %v3034
        %v3309 = vunpack.c.h.b16 %v3034
        %v3310 = vunpack.c.l.b16 %v3035
        %v3311 = vunpack.c.h.b16 %v3035
        %v3312 = vunpack.c.l.b16 %v3036
        %v3313 = vunpack.c.h.b16 %v3036
        %v3314 = vunpack.c.l.b16 %v3037
        %v3315 = vunpack.c.h.b16 %v3037
        %v3316 = vunpack.c.l.b16 %v3038
        %v3317 = vunpack.c.h.b16 %v3038
        %v3318 = vunpack.c.l.b16 %v3039
        %v3319 = vunpack.c.h.b16 %v3039
        %v3320 = vunpack.c.l.b16 %v3040
        %v3321 = vunpack.c.h.b16 %v3040
        %v3322 = vunpack.c.l.b16 %v3041
        %v3323 = vunpack.c.h.b16 %v3041
        %v3324 = vunpack.c.l.b16 %v3042
        %v3325 = vunpack.c.h.b16 %v3042
        %v3326 = vunpack.c.l.b16 %v3043
        %v3327 = vunpack.c.h.b16 %v3043
        %v3328 = vunpack.c.l.b16 %v3044
        %v3329 = vunpack.c.h.b16 %v3044
        %v3330 = vunpack.c.l.b16 %v3045
        %v3331 = vunpack.c.h.b16 %v3045
        %v3332 = vunpack.c.l.b16 %v3046
        %v3333 = vunpack.c.h.b16 %v3046
        %v3334 = vunpack.c.l.b16 %v3047
        %v3335 = vunpack.c.h.b16 %v3047
        %v3336 = vunpack.c.l.b16 %v3048
        %v3337 = vunpack.c.h.b16 %v3048
        %v3338 = vunpack.c.l.b16 %v3049
        %v3339 = vunpack.c.h.b16 %v3049
        %v3340 = vunpack.c.l.b16 %v3050
        %v3341 = vunpack.c.h.b16 %v3050
        %v3342 = vunpack.c.l.b16 %v3051
        %v3343 = vunpack.c.h.b16 %v3051
        %v3344 = vunpack.c.l.b16 %v3052
        %v3345 = vunpack.c.h.b16 %v3052
        %v3346 = vunpack.c.l.b16 %v3053
        %v3347 = vunpack.c.h.b16 %v3053
        %v3348 = vunpack.c.l.b16 %v3054
        %v3349 = vunpack.c.h.b16 %v3054
        %v3350 = vunpack.c.l.b16 %v3055
        %v3351 = vunpack.c.h.b16 %v3055
        %v3352 = vunpack.c.l.b16 %v3056
        %v3353 = vunpack.c.h.b16 %v3056
        %v3354 = vunpack.c.l.b16 %v3057
        %v3355 = vunpack.c.h.b16 %v3057
        %v3356 = vunpack.c.l.b16 %v3058
        %v3357 = vunpack.c.h.b16 %v3058
        %v3358 = vunpack.c.l.b16 %v3059
        %v3359 = vunpack.c.h.b16 %v3059
        %v3360 = vunpack.c.l.b16 %v3060
        %v3361 = vunpack.c.h.b16 %v3060
        %v3362 = vunpack.c.l.b16 %v3061
        %v3363 = vunpack.c.h.b16 %v3061
        %v3364 = vunpack.c.l.b16 %v3062
        %v3365 = vunpack.c.h.b16 %v3062
        %v3366 = vunpack.c.l.b16 %v3063
        %v3367 = vunpack.c.h.b16 %v3063
        %v3368 = vunpack.c.l.b16 %v3064
        %v3369 = vunpack.c.h.b16 %v3064
        %v3370 = vunpack.c.l.b16 %v3065
        %v3371 = vunpack.c.h.b16 %v3065
        %v3372 = vunpack.c.l.b16 %v3066
        %v3373 = vunpack.c.h.b16 %v3066
        %v3374 = vunpack.c.l.b16 %v3067
        %v3375 = vunpack.c.h.b16 %v3067
        %v3376 = vunpack.c.l.b16 %v3068
        %v3377 = vunpack.c.h.b16 %v3068
        %v3378 = vunpack.c.l.b16 %v3069
        %v3379 = vunpack.c.h.b16 %v3069
        %v3380 = vunpack.c.l.b16 %v3070
        %v3381 = vunpack.c.h.b16 %v3070
        %v3382 = vunpack.c.l.b16 %v3071
        %v3383 = vunpack.c.h.b16 %v3071
        %v3384 = vpack.c.b16 %v3196, %v3192
        %v3385 = vpack.c.b16 %v3197, %v3193
        %v3386 = vpack.c.b16 %v3198, %v3194
        %v3387 = vpack.c.b16 %v3199, %v3195
        %v3388 = vpack.c.b16 %v3204, %v3200
        %v3389 = vpack.c.b16 %v3205, %v3201
        %v3390 = vpack.c.b16 %v3206, %v3202
        %v3391 = vpack.c.b16 %v3207, %v3203
        %v3392 = vpack.c.b16 %v3212, %v3208
        %v3393 = vpack.c.b16 %v3213, %v3209
        %v3394 = vpack.c.b16 %v3214, %v3210
        %v3395 = vpack.c.b16 %v3215, %v3211
        %v3396 = vpack.c.b16 %v3220, %v3216
        %v3397 = vpack.c.b16 %v3221, %v3217
        %v3398 = vpack.c.b16 %v3222, %v3218
        %v3399 = vpack.c.b16 %v3223, %v3219
        %v3400 = vpack.c.b16 %v3228, %v3224
        %v3401 = vpack.c.b16 %v3229, %v3225
        %v3402 = vpack.c.b16 %v3230, %v3226
        %v3403 = vpack.c.b16 %v3231, %v3227
        %v3404 = vpack.c.b16 %v3236, %v3232
        %v3405 = vpack.c.b16 %v3237, %v3233
        %v3406 = vpack.c.b16 %v3238, %v3234
        %v3407 = vpack.c.b16 %v3239, %v3235
        %v3408 = vpack.c.b16 %v3244, %v3240
        %v3409 = vpack.c.b16 %v3245, %v3241
        %v3410 = vpack.c.b16 %v3246, %v3242
        %v3411 = vpack.c.b16 %v3247, %v3243
        %v3412 = vpack.c.b16 %v3252, %v3248
        %v3413 = vpack.c.b16 %v3253, %v3249
        %v3414 = vpack.c.b16 %v3254, %v3250
        %v3415 = vpack.c.b16 %v3255, %v3251
        %v3416 = vpack.c.b16 %v3260, %v3256
        %v3417 = vpack.c.b16 %v3261, %v3257
        %v3418 = vpack.c.b16 %v3262, %v3258
        %v3419 = vpack.c.b16 %v3263, %v3259
        %v3420 = vpack.c.b16 %v3268, %v3264
        %v3421 = vpack.c.b16 %v3269, %v3265
        %v3422 = vpack.c.b16 %v3270, %v3266
        %v3423 = vpack.c.b16 %v3271, %v3267
        %v3424 = vpack.c.b16 %v3276, %v3272
        %v3425 = vpack.c.b16 %v3277, %v3273
        %v3426 = vpack.c.b16 %v3278, %v3274
        %v3427 = vpack.c.b16 %v3279, %v3275
        %v3428 = vpack.c.b16 %v3284, %v3280
        %v3429 = vpack.c.b16 %v3285, %v3281
        %v3430 = vpack.c.b16 %v3286, %v3282
        %v3431 = vpack.c.b16 %v3287, %v3283
        %v3432 = vpack.c.b16 %v3292, %v3288
        %v3433 = vpack.c.b16 %v3293, %v3289
        %v3434 = vpack.c.b16 %v3294, %v3290
        %v3435 = vpack.c.b16 %v3295, %v3291
        %v3436 = vpack.c.b16 %v3300, %v3296
        %v3437 = vpack.c.b16 %v3301, %v3297
        %v3438 = vpack.c.b16 %v3302, %v3298
        %v3439 = vpack.c.b16 %v3303, %v3299
        %v3440 = vpack.c.b16 %v3308, %v3304
        %v3441 = vpack.c.b16 %v3309, %v3305
        %v3442 = vpack.c.b16 %v3310, %v3306
        %v3443 = vpack.c.b16 %v3311, %v3307
        %v3444 = vpack.c.b16 %v3316, %v3312
        %v3445 = vpack.c.b16 %v3317, %v3313
        %v3446 = vpack.c.b16 %v3318, %v3314
        %v3447 = vpack.c.b16 %v3319, %v3315
        %v3448 = vpack.c.b16 %v3324, %v3320
        %v3449 = vpack.c.b16 %v3325, %v3321
        %v3450 = vpack.c.b16 %v3326, %v3322
        %v3451 = vpack.c.b16 %v3327, %v3323
        %v3452 = vpack.c.b16 %v3332, %v3328
        %v3453 = vpack.c.b16 %v3333, %v3329
        %v3454 = vpack.c.b16 %v3334, %v3330
        %v3455 = vpack.c.b16 %v3335, %v3331
        %v3456 = vpack.c.b16 %v3340, %v3336
        %v3457 = vpack.c.b16 %v3341, %v3337
        %v3458 = vpack.c.b16 %v3342, %v3338
        %v3459 = vpack.c.b16 %v3343, %v3339
        %v3460 = vpack.c.b16 %v3348, %v3344
        %v3461 = vpack.c.b16 %v3349, %v3345
        %v3462 = vpack.c.b16 %v3350, %v3346
        %v3463 = vpack.c.b16 %v3351, %v3347
        %v3464 = vpack.c.b16 %v3356, %v3352
        %v3465 = vpack.c.b16 %v3357, %v3353
        %v3466 = vpack.c.b16 %v3358, %v3354
        %v3467 = vpack.c.b16 %v3359, %v3355
        %v3468 = vpack.c.b16 %v3364, %v3360
        %v3469 = vpack.c.b16 %v3365, %v3361
        %v3470 = vpack.c.b16 %v3366, %v3362
        %v3471 = vpack.c.b16 %v3367, %v3363
        %v3472 = vpack.c.b16 %v3372, %v3368
        %v3473 = vpack.c.b16 %v3373, %v3369
        %v3474 = vpack.c.b16 %v3374, %v3370
        %v3475 = vpack.c.b16 %v3375, %v3371
        %v3476 = vpack.c.b16 %v3380, %v3376
        %v3477 = vpack.c.b16 %v3381, %v3377
        %v3478 = vpack.c.b16 %v3382, %v3378
        %v3479 = vpack.c.b16 %v3383, %v3379
        %3576 = vmatpush.bf16.msra.mxu0 %v3412
        %3577 = vmatpush.bf16.msra.mxu0 %v3408
        %3578 = vmatpush.bf16.msra.mxu0 %v3404
        %3579 = vmatpush.bf16.msra.mxu0 %v3400
        %3580 = vmatpush.bf16.msra.mxu0 %v3396
        %3581 = vmatpush.bf16.msra.mxu0 %v3392
        %3582 = vmatpush.bf16.msra.mxu0 %v3388
        %3583 = vmatpush.bf16.msra.mxu0 %v3384
        %3584 = vmatmul.bf16.gmra.mxu0 %v3083
        %v3585 = vpop.f32.mrf.mxu0
        %v3586 = vadd.f32 0.0, %v3585
        %v3587 = vpop.f32.mrf.mxu0
        %v3588 = vadd.f32 0.0, %v3587
        %3589 = vmatmul.bf16.gmra.mxu0 %v3082
        %v3590 = vpop.f32.mrf.mxu0
        %v3591 = vadd.f32 0.0, %v3590
        %v3592 = vpop.f32.mrf.mxu0
        %3593 = vdwg.mxu0
        %3594 = vmatpush.bf16.msra.mxu0 %v3444
        %3595 = vmatpush.bf16.msra.mxu0 %v3440
        %3596 = vmatpush.bf16.msra.mxu0 %v3436
        %3597 = vmatpush.bf16.msra.mxu0 %v3432
        %3598 = vmatpush.bf16.msra.mxu0 %v3428
        %3599 = vmatpush.bf16.msra.mxu0 %v3424
        %3600 = vmatpush.bf16.msra.mxu0 %v3420
        %3601 = vmatpush.bf16.msra.mxu0 %v3416
        %3602 = vmatmul.bf16.gmra.mxu0 %v3086
        %v3603 = vpop.f32.mrf.mxu0
        %v3604 = vadd.f32 %v3586, %v3603
        %v3605 = vpop.f32.mrf.mxu0
        %v3606 = vadd.f32 %v3588, %v3605
        %3607 = vmatmul.bf16.gmra.mxu0 %v3085
        %v3608 = vpop.f32.mrf.mxu0
        %v3609 = vadd.f32 %v3591, %v3608
        %v3610 = vpop.f32.mrf.mxu0
        %3611 = vdwg.mxu0
        %3612 = vmatpush.bf16.msra.mxu0 %v3476
        %3613 = vmatpush.bf16.msra.mxu0 %v3472
        %3614 = vmatpush.bf16.msra.mxu0 %v3468
        %3615 = vmatpush.bf16.msra.mxu0 %v3464
        %3616 = vmatpush.bf16.msra.mxu0 %v3460
        %3617 = vmatpush.bf16.msra.mxu0 %v3456
        %3618 = vmatpush.bf16.msra.mxu0 %v3452
        %3619 = vmatpush.bf16.msra.mxu0 %v3448
        %3620 = vmatmul.bf16.gmra.mxu0 %v3089
        %v3621 = vpop.f32.mrf.mxu0
        %v3622 = vadd.f32 %v3604, %v3621
        %v3623 = vpop.f32.mrf.mxu0
        %v3624 = vadd.f32 %v3606, %v3623
        %3625 = vmatmul.bf16.gmra.mxu0 %v3088
        %v3626 = vpop.f32.mrf.mxu0
        %v3627 = vadd.f32 %v3609, %v3626
        %v3628 = vpop.f32.mrf.mxu0
        %3629 = vdwg.mxu0
        %3630 = vmatpush.bf16.msra.mxu0 %v3413
        %3631 = vmatpush.bf16.msra.mxu0 %v3409
        %3632 = vmatpush.bf16.msra.mxu0 %v3405
        %3633 = vmatpush.bf16.msra.mxu0 %v3401
        %3634 = vmatpush.bf16.msra.mxu0 %v3397
        %3635 = vmatpush.bf16.msra.mxu0 %v3393
        %3636 = vmatpush.bf16.msra.mxu0 %v3389
        %3637 = vmatpush.bf16.msra.mxu0 %v3385
        %3638 = vmatmul.bf16.gmra.mxu0 %v3083
        %v3639 = vpop.f32.mrf.mxu0
        %v3640 = vadd.f32 0.0, %v3639
        %v3641 = vpop.f32.mrf.mxu0
        %v3642 = vadd.f32 0.0, %v3641
        %3643 = vmatmul.bf16.gmra.mxu0 %v3082
        %v3644 = vpop.f32.mrf.mxu0
        %v3645 = vadd.f32 0.0, %v3644
        %v3646 = vpop.f32.mrf.mxu0
        %3647 = vdwg.mxu0
        %3648 = vmatpush.bf16.msra.mxu0 %v3445
        %3649 = vmatpush.bf16.msra.mxu0 %v3441
        %3650 = vmatpush.bf16.msra.mxu0 %v3437
        %3651 = vmatpush.bf16.msra.mxu0 %v3433
        %3652 = vmatpush.bf16.msra.mxu0 %v3429
        %3653 = vmatpush.bf16.msra.mxu0 %v3425
        %3654 = vmatpush.bf16.msra.mxu0 %v3421
        %3655 = vmatpush.bf16.msra.mxu0 %v3417
        %3656 = vmatmul.bf16.gmra.mxu0 %v3086
        %v3657 = vpop.f32.mrf.mxu0
        %v3658 = vadd.f32 %v3640, %v3657
        %v3659 = vpop.f32.mrf.mxu0
        %v3660 = vadd.f32 %v3642, %v3659
        %3661 = vmatmul.bf16.gmra.mxu0 %v3085
        %v3662 = vpop.f32.mrf.mxu0
        %v3663 = vadd.f32 %v3645, %v3662
        %v3664 = vpop.f32.mrf.mxu0
        %3665 = vdwg.mxu0
        %3666 = vmatpush.bf16.msra.mxu0 %v3477
        %3667 = vmatpush.bf16.msra.mxu0 %v3473
        %3668 = vmatpush.bf16.msra.mxu0 %v3469
        %3669 = vmatpush.bf16.msra.mxu0 %v3465
        %3670 = vmatpush.bf16.msra.mxu0 %v3461
        %3671 = vmatpush.bf16.msra.mxu0 %v3457
        %3672 = vmatpush.bf16.msra.mxu0 %v3453
        %3673 = vmatpush.bf16.msra.mxu0 %v3449
        %3674 = vmatmul.bf16.gmra.mxu0 %v3089
        %v3675 = vpop.f32.mrf.mxu0
        %v3676 = vadd.f32 %v3658, %v3675
        %v3677 = vpop.f32.mrf.mxu0
        %v3678 = vadd.f32 %v3660, %v3677
        %3679 = vmatmul.bf16.gmra.mxu0 %v3088
        %v3680 = vpop.f32.mrf.mxu0
        %v3681 = vadd.f32 %v3663, %v3680
        %v3682 = vpop.f32.mrf.mxu0
        %3683 = vdwg.mxu0
        %3684 = vmatpush.bf16.msra.mxu0 %v3414
        %3685 = vmatpush.bf16.msra.mxu0 %v3410
        %3686 = vmatpush.bf16.msra.mxu0 %v3406
        %3687 = vmatpush.bf16.msra.mxu0 %v3402
        %3688 = vmatpush.bf16.msra.mxu0 %v3398
        %3689 = vmatpush.bf16.msra.mxu0 %v3394
        %3690 = vmatpush.bf16.msra.mxu0 %v3390
        %3691 = vmatpush.bf16.msra.mxu0 %v3386
        %3692 = vmatmul.bf16.gmra.mxu0 %v3083
        %v3693 = vpop.f32.mrf.mxu0
        %v3694 = vadd.f32 0.0, %v3693
        %v3695 = vpop.f32.mrf.mxu0
        %v3696 = vadd.f32 0.0, %v3695
        %3697 = vmatmul.bf16.gmra.mxu0 %v3082
        %v3698 = vpop.f32.mrf.mxu0
        %v3699 = vadd.f32 0.0, %v3698
        %v3700 = vpop.f32.mrf.mxu0
        %3701 = vdwg.mxu0
        %3702 = vmatpush.bf16.msra.mxu0 %v3446
        %3703 = vmatpush.bf16.msra.mxu0 %v3442
        %3704 = vmatpush.bf16.msra.mxu0 %v3438
        %3705 = vmatpush.bf16.msra.mxu0 %v3434
        %3706 = vmatpush.bf16.msra.mxu0 %v3430
        %3707 = vmatpush.bf16.msra.mxu0 %v3426
        %3708 = vmatpush.bf16.msra.mxu0 %v3422
        %3709 = vmatpush.bf16.msra.mxu0 %v3418
        %3710 = vmatmul.bf16.gmra.mxu0 %v3086
        %v3711 = vpop.f32.mrf.mxu0
        %v3712 = vadd.f32 %v3694, %v3711
        %v3713 = vpop.f32.mrf.mxu0
        %v3714 = vadd.f32 %v3696, %v3713
        %3715 = vmatmul.bf16.gmra.mxu0 %v3085
        %v3716 = vpop.f32.mrf.mxu0
        %v3717 = vadd.f32 %v3699, %v3716
        %v3718 = vpop.f32.mrf.mxu0
        %3719 = vdwg.mxu0
        %3720 = vmatpush.bf16.msra.mxu0 %v3478
        %3721 = vmatpush.bf16.msra.mxu0 %v3474
        %3722 = vmatpush.bf16.msra.mxu0 %v3470
        %3723 = vmatpush.bf16.msra.mxu0 %v3466
        %3724 = vmatpush.bf16.msra.mxu0 %v3462
        %3725 = vmatpush.bf16.msra.mxu0 %v3458
        %3726 = vmatpush.bf16.msra.mxu0 %v3454
        %3727 = vmatpush.bf16.msra.mxu0 %v3450
        %3728 = vmatmul.bf16.gmra.mxu0 %v3089
        %v3729 = vpop.f32.mrf.mxu0
        %v3730 = vadd.f32 %v3712, %v3729
        %v3731 = vpop.f32.mrf.mxu0
        %v3732 = vadd.f32 %v3714, %v3731
        %3733 = vmatmul.bf16.gmra.mxu0 %v3088
        %v3734 = vpop.f32.mrf.mxu0
        %v3735 = vadd.f32 %v3717, %v3734
        %v3736 = vpop.f32.mrf.mxu0
        %3737 = vdwg.mxu0
        %3738 = vmatpush.bf16.msra.mxu0 %v3415
        %3739 = vmatpush.bf16.msra.mxu0 %v3411
        %3740 = vmatpush.bf16.msra.mxu0 %v3407
        %3741 = vmatpush.bf16.msra.mxu0 %v3403
        %3742 = vmatpush.bf16.msra.mxu0 %v3399
        %3743 = vmatpush.bf16.msra.mxu0 %v3395
        %3744 = vmatpush.bf16.msra.mxu0 %v3391
        %3745 = vmatpush.bf16.msra.mxu0 %v3387
        %3746 = vmatmul.bf16.gmra.mxu0 %v3083
        %v3747 = vpop.f32.mrf.mxu0
        %v3748 = vadd.f32 0.0, %v3747
        %v3749 = vpop.f32.mrf.mxu0
        %v3750 = vadd.f32 0.0, %v3749
        %3751 = vmatmul.bf16.gmra.mxu0 %v3082
        %v3752 = vpop.f32.mrf.mxu0
        %v3753 = vadd.f32 0.0, %v3752
        %v3754 = vpop.f32.mrf.mxu0
        %3755 = vdwg.mxu0
        %3756 = vmatpush.bf16.msra.mxu0 %v3447
        %3757 = vmatpush.bf16.msra.mxu0 %v3443
        %3758 = vmatpush.bf16.msra.mxu0 %v3439
        %3759 = vmatpush.bf16.msra.mxu0 %v3435
        %3760 = vmatpush.bf16.msra.mxu0 %v3431
        %3761 = vmatpush.bf16.msra.mxu0 %v3427
        %3762 = vmatpush.bf16.msra.mxu0 %v3423
        %3763 = vmatpush.bf16.msra.mxu0 %v3419
        %3764 = vmatmul.bf16.gmra.mxu0 %v3086
        %v3765 = vpop.f32.mrf.mxu0
        %v3766 = vadd.f32 %v3748, %v3765
        %v3767 = vpop.f32.mrf.mxu0
        %v3768 = vadd.f32 %v3750, %v3767
        %3769 = vmatmul.bf16.gmra.mxu0 %v3085
        %v3770 = vpop.f32.mrf.mxu0
        %v3771 = vadd.f32 %v3753, %v3770
        %v3772 = vpop.f32.mrf.mxu0
        %3773 = vdwg.mxu0
        %3774 = vmatpush.bf16.msra.mxu0 %v3479
        %3775 = vmatpush.bf16.msra.mxu0 %v3475
        %3776 = vmatpush.bf16.msra.mxu0 %v3471
        %3777 = vmatpush.bf16.msra.mxu0 %v3467
        %3778 = vmatpush.bf16.msra.mxu0 %v3463
        %3779 = vmatpush.bf16.msra.mxu0 %v3459
        %3780 = vmatpush.bf16.msra.mxu0 %v3455
        %3781 = vmatpush.bf16.msra.mxu0 %v3451
        %3782 = vmatmul.bf16.gmra.mxu0 %v3089
        %v3783 = vpop.f32.mrf.mxu0
        %v3784 = vadd.f32 %v3766, %v3783
        %v3785 = vpop.f32.mrf.mxu0
        %v3786 = vadd.f32 %v3768, %v3785
        %3787 = vmatmul.bf16.gmra.mxu0 %v3088
        %v3788 = vpop.f32.mrf.mxu0
        %v3789 = vadd.f32 %v3771, %v3788
        %v3790 = vpop.f32.mrf.mxu0
        %3791 = vdwg.mxu0
        %v3792 = vadd.f32 %v2803, %v3622
        %v3793 = vadd.f32 %v2857, %v3676
        %v3794 = vadd.f32 %v2911, %v3730
        %v3795 = vadd.f32 %v2965, %v3784
        %v3796 = vadd.f32 %v2805, %v3624
        %v3797 = vadd.f32 %v2859, %v3678
        %v3798 = vadd.f32 %v2913, %v3732
        %v3799 = vadd.f32 %v2967, %v3786
        %v3800 = vadd.f32 %v2808, %v3627
        %v3801 = vadd.f32 %v2862, %v3681
        %v3802 = vadd.f32 %v2916, %v3735
        %v3803 = vadd.f32 %v2970, %v3789
        %v3804 = vld [vmem:[#allocation2] sm:$0x88]
        %v3805 = vld [vmem:[#allocation2 + $0x8] sm:$0x8]
        %v3806 = vld [vmem:[#allocation2 + $0xc] sm:$0xff]
        %v3807 = vld [vmem:[#allocation2 + $0x14] sm:$0xf]
        %v3808 = vld [vmem:[#allocation2 + $0x18] sm:$0xff]
        %v3809 = vld [vmem:[#allocation2 + $0x20] sm:$0xf]
        %v3810 = vld [vmem:[#allocation2 + $0x24] sm:$0x33]
        %v3811 = vld [vmem:[#allocation2 + $0x2c] sm:$0x3]
        %s3812 = scalar_lea.vmem %s3, 2304
        %v3813 = vld [vmem:[%s3812] sm:$0xff]
        %v3814 = vld [vmem:[%s3812 + $0x8] sm:$0xff]
        %v3815 = vld [vmem:[%s3812 + $0x10] sm:$0xff]
        %v3816 = vld [vmem:[%s3812 + $0x18] sm:$0xff]
        %v3817 = vld [vmem:[%s3812 + $0x20] sm:$0xff]
        %v3818 = vld [vmem:[%s3812 + $0x28] sm:$0xff]
        %v3819 = vld [vmem:[%s3812 + $0x30] sm:$0xff]
        %v3820 = vld [vmem:[%s3812 + $0x38] sm:$0xff]
        %v3821 = vld [vmem:[%s3812 + $0x40] sm:$0xff]
        %v3822 = vld [vmem:[%s3812 + $0x48] sm:$0xff]
        %v3823 = vld [vmem:[%s3812 + $0x50] sm:$0xff]
        %v3824 = vld [vmem:[%s3812 + $0x58] sm:$0xff]
        %v3825 = vld [vmem:[%s3812 + $0x60] sm:$0xff]
        %v3826 = vld [vmem:[%s3812 + $0x68] sm:$0xff]
        %v3827 = vld [vmem:[%s3812 + $0x70] sm:$0xff]
        %v3828 = vld [vmem:[%s3812 + $0x78] sm:$0xff]
        %v3829 = vld [vmem:[%s3812 + $0x80] sm:$0xff]
        %v3830 = vld [vmem:[%s3812 + $0x88] sm:$0xff]
        %v3831 = vld [vmem:[%s3812 + $0x90] sm:$0xff]
        %v3832 = vld [vmem:[%s3812 + $0x98] sm:$0xff]
        %v3833 = vld [vmem:[%s3812 + $0xa0] sm:$0xff]
        %v3834 = vld [vmem:[%s3812 + $0xa8] sm:$0xff]
        %v3835 = vld [vmem:[%s3812 + $0xb0] sm:$0xff]
        %v3836 = vld [vmem:[%s3812 + $0xb8] sm:$0xff]
        %v3837 = vld [vmem:[%s3812 + $0xc0] sm:$0xff]
        %v3838 = vld [vmem:[%s3812 + $0xc8] sm:$0xff]
        %v3839 = vld [vmem:[%s3812 + $0xd0] sm:$0xff]
        %v3840 = vld [vmem:[%s3812 + $0xd8] sm:$0xff]
        %v3841 = vld [vmem:[%s3812 + $0xe0] sm:$0xff]
        %v3842 = vld [vmem:[%s3812 + $0xe8] sm:$0xff]
        %v3843 = vld [vmem:[%s3812 + $0xf0] sm:$0xff]
        %v3844 = vld [vmem:[%s3812 + $0xf8] sm:$0xff]
        %v3845 = vld [vmem:[%s3812 + $0x100] sm:$0xff]
        %v3846 = vld [vmem:[%s3812 + $0x108] sm:$0xff]
        %v3847 = vld [vmem:[%s3812 + $0x110] sm:$0xff]
        %v3848 = vld [vmem:[%s3812 + $0x118] sm:$0xff]
        %v3849 = vld [vmem:[%s3812 + $0x120] sm:$0xff]
        %v3850 = vld [vmem:[%s3812 + $0x128] sm:$0xff]
        %v3851 = vld [vmem:[%s3812 + $0x130] sm:$0xff]
        %v3852 = vld [vmem:[%s3812 + $0x138] sm:$0xff]
        %v3853 = vld [vmem:[%s3812 + $0x140] sm:$0xff]
        %v3854 = vld [vmem:[%s3812 + $0x148] sm:$0xff]
        %v3855 = vld [vmem:[%s3812 + $0x150] sm:$0xff]
        %v3856 = vld [vmem:[%s3812 + $0x158] sm:$0xff]
        %v3857 = vld [vmem:[%s3812 + $0x160] sm:$0xff]
        %v3858 = vld [vmem:[%s3812 + $0x168] sm:$0xff]
        %v3859 = vld [vmem:[%s3812 + $0x170] sm:$0xff]
        %v3860 = vld [vmem:[%s3812 + $0x178] sm:$0xff]
        %v3861 = vld [vmem:[%s3812 + $0x180] sm:$0xff]
        %v3862 = vld [vmem:[%s3812 + $0x188] sm:$0xff]
        %v3863 = vld [vmem:[%s3812 + $0x190] sm:$0xff]
        %v3864 = vld [vmem:[%s3812 + $0x198] sm:$0xff]
        %v3865 = vld [vmem:[%s3812 + $0x1a0] sm:$0xff]
        %v3866 = vld [vmem:[%s3812 + $0x1a8] sm:$0xff]
        %v3867 = vld [vmem:[%s3812 + $0x1b0] sm:$0xff]
        %v3868 = vld [vmem:[%s3812 + $0x1b8] sm:$0xff]
        %v3869 = vld [vmem:[%s3812 + $0x1c0] sm:$0xff]
        %v3870 = vld [vmem:[%s3812 + $0x1c8] sm:$0xff]
        %v3871 = vld [vmem:[%s3812 + $0x1d0] sm:$0xff]
        %v3872 = vld [vmem:[%s3812 + $0x1d8] sm:$0xff]
        %v3873 = vld [vmem:[%s3812 + $0x1e0] sm:$0xff]
        %v3874 = vld [vmem:[%s3812 + $0x1e8] sm:$0xff]
        %v3875 = vld [vmem:[%s3812 + $0x1f0] sm:$0xff]
        %v3876 = vld [vmem:[%s3812 + $0x1f8] sm:$0xff]
        %v3877 = vld [vmem:[%s3812 + $0x200] sm:$0xff]
        %v3878 = vld [vmem:[%s3812 + $0x208] sm:$0xff]
        %v3879 = vld [vmem:[%s3812 + $0x210] sm:$0xff]
        %v3880 = vld [vmem:[%s3812 + $0x218] sm:$0xff]
        %v3881 = vld [vmem:[%s3812 + $0x220] sm:$0xff]
        %v3882 = vld [vmem:[%s3812 + $0x228] sm:$0xff]
        %v3883 = vld [vmem:[%s3812 + $0x230] sm:$0xff]
        %v3884 = vld [vmem:[%s3812 + $0x238] sm:$0xff]
        %v3885 = vld [vmem:[%s3812 + $0x240] sm:$0xff]
        %v3886 = vld [vmem:[%s3812 + $0x248] sm:$0xff]
        %v3887 = vld [vmem:[%s3812 + $0x250] sm:$0xff]
        %v3888 = vld [vmem:[%s3812 + $0x258] sm:$0xff]
        %v3889 = vld [vmem:[%s3812 + $0x260] sm:$0xff]
        %v3890 = vld [vmem:[%s3812 + $0x268] sm:$0xff]
        %v3891 = vld [vmem:[%s3812 + $0x270] sm:$0xff]
        %v3892 = vld [vmem:[%s3812 + $0x278] sm:$0xff]
        %v3893 = vld [vmem:[%s3812 + $0x280] sm:$0xff]
        %v3894 = vld [vmem:[%s3812 + $0x288] sm:$0xff]
        %v3895 = vld [vmem:[%s3812 + $0x290] sm:$0xff]
        %v3896 = vld [vmem:[%s3812 + $0x298] sm:$0xff]
        %v3897 = vld [vmem:[%s3812 + $0x2a0] sm:$0xff]
        %v3898 = vld [vmem:[%s3812 + $0x2a8] sm:$0xff]
        %v3899 = vld [vmem:[%s3812 + $0x2b0] sm:$0xff]
        %v3900 = vld [vmem:[%s3812 + $0x2b8] sm:$0xff]
        %v3901 = vld [vmem:[%s3812 + $0x2c0] sm:$0xff]
        %v3902 = vld [vmem:[%s3812 + $0x2c8] sm:$0xff]
        %v3903 = vld [vmem:[%s3812 + $0x2d0] sm:$0xff]
        %v3904 = vld [vmem:[%s3812 + $0x2d8] sm:$0xff]
        %v3905 = vld [vmem:[%s3812 + $0x2e0] sm:$0xff]
        %v3906 = vld [vmem:[%s3812 + $0x2e8] sm:$0xff]
        %v3907 = vld [vmem:[%s3812 + $0x2f0] sm:$0xff]
        %v3908 = vld [vmem:[%s3812 + $0x2f8] sm:$0xff]
        %v3917 = vunpack.c.l.b16 %v3804
        %v3918 = vunpack.c.h.b16 %v3804
        %v3919 = vunpack.c.l.b16 %v3805
        %v3920 = vunpack.c.l.b16 %v3806
        %v3921 = vunpack.c.h.b16 %v3806
        %v3922 = vunpack.c.l.b16 %v3807
        %v3923 = vunpack.c.l.b16 %v3808
        %v3924 = vunpack.c.h.b16 %v3808
        %v3925 = vunpack.c.l.b16 %v3809
        %v3926 = vunpack.c.l.b16 %v3810
        %v3927 = vunpack.c.h.b16 %v3810
        %v3928 = vunpack.c.l.b16 %v3811
        %v3929 = vpack.c.b16 %v3920, %v3917
        %v3930 = vpack.c.b16 %v3921, %v3918
        %v3931 = vpack.c.b16 %v3922, %v3919
        %v3932 = vpack.c.b16 %v3926, %v3923
        %v3933 = vpack.c.b16 %v3927, %v3924
        %v3934 = vpack.c.b16 %v3928, %v3925
        %vm3935 = vcmask 1044480
        %v3936 = vrot.slane %v3929, 3
        %v3937 = vrot.slane %v3932, 3
        %v3938 = vsel %vm3935, %v3936, %v3937
        %v3939 = vrot.slane %v3930, 3
        %v3940 = vrot.slane %v3933, 3
        %v3941 = vsel %vm3935, %v3939, %v3940
        %v3942 = vrot.slane %v3931, 3
        %v3943 = vrot.slane %v3934, 3
        %v3944 = vsel %vm3935, %v3942, %v3943
        %v4047 = vunpack.c.l.b16 %v3813
        %v4048 = vunpack.c.h.b16 %v3813
        %v4049 = vunpack.c.l.b16 %v3814
        %v4050 = vunpack.c.h.b16 %v3814
        %v4051 = vunpack.c.l.b16 %v3815
        %v4052 = vunpack.c.h.b16 %v3815
        %v4053 = vunpack.c.l.b16 %v3816
        %v4054 = vunpack.c.h.b16 %v3816
        %v4055 = vunpack.c.l.b16 %v3817
        %v4056 = vunpack.c.h.b16 %v3817
        %v4057 = vunpack.c.l.b16 %v3818
        %v4058 = vunpack.c.h.b16 %v3818
        %v4059 = vunpack.c.l.b16 %v3819
        %v4060 = vunpack.c.h.b16 %v3819
        %v4061 = vunpack.c.l.b16 %v3820
        %v4062 = vunpack.c.h.b16 %v3820
        %v4063 = vunpack.c.l.b16 %v3821
        %v4064 = vunpack.c.h.b16 %v3821
        %v4065 = vunpack.c.l.b16 %v3822
        %v4066 = vunpack.c.h.b16 %v3822
        %v4067 = vunpack.c.l.b16 %v3823
        %v4068 = vunpack.c.h.b16 %v3823
        %v4069 = vunpack.c.l.b16 %v3824
        %v4070 = vunpack.c.h.b16 %v3824
        %v4071 = vunpack.c.l.b16 %v3825
        %v4072 = vunpack.c.h.b16 %v3825
        %v4073 = vunpack.c.l.b16 %v3826
        %v4074 = vunpack.c.h.b16 %v3826
        %v4075 = vunpack.c.l.b16 %v3827
        %v4076 = vunpack.c.h.b16 %v3827
        %v4077 = vunpack.c.l.b16 %v3828
        %v4078 = vunpack.c.h.b16 %v3828
        %v4079 = vunpack.c.l.b16 %v3829
        %v4080 = vunpack.c.h.b16 %v3829
        %v4081 = vunpack.c.l.b16 %v3830
        %v4082 = vunpack.c.h.b16 %v3830
        %v4083 = vunpack.c.l.b16 %v3831
        %v4084 = vunpack.c.h.b16 %v3831
        %v4085 = vunpack.c.l.b16 %v3832
        %v4086 = vunpack.c.h.b16 %v3832
        %v4087 = vunpack.c.l.b16 %v3833
        %v4088 = vunpack.c.h.b16 %v3833
        %v4089 = vunpack.c.l.b16 %v3834
        %v4090 = vunpack.c.h.b16 %v3834
        %v4091 = vunpack.c.l.b16 %v3835
        %v4092 = vunpack.c.h.b16 %v3835
        %v4093 = vunpack.c.l.b16 %v3836
        %v4094 = vunpack.c.h.b16 %v3836
        %v4095 = vunpack.c.l.b16 %v3837
        %v4096 = vunpack.c.h.b16 %v3837
        %v4097 = vunpack.c.l.b16 %v3838
        %v4098 = vunpack.c.h.b16 %v3838
        %v4099 = vunpack.c.l.b16 %v3839
        %v4100 = vunpack.c.h.b16 %v3839
        %v4101 = vunpack.c.l.b16 %v3840
        %v4102 = vunpack.c.h.b16 %v3840
        %v4103 = vunpack.c.l.b16 %v3841
        %v4104 = vunpack.c.h.b16 %v3841
        %v4105 = vunpack.c.l.b16 %v3842
        %v4106 = vunpack.c.h.b16 %v3842
        %v4107 = vunpack.c.l.b16 %v3843
        %v4108 = vunpack.c.h.b16 %v3843
        %v4109 = vunpack.c.l.b16 %v3844
        %v4110 = vunpack.c.h.b16 %v3844
        %v4111 = vunpack.c.l.b16 %v3845
        %v4112 = vunpack.c.h.b16 %v3845
        %v4113 = vunpack.c.l.b16 %v3846
        %v4114 = vunpack.c.h.b16 %v3846
        %v4115 = vunpack.c.l.b16 %v3847
        %v4116 = vunpack.c.h.b16 %v3847
        %v4117 = vunpack.c.l.b16 %v3848
        %v4118 = vunpack.c.h.b16 %v3848
        %v4119 = vunpack.c.l.b16 %v3849
        %v4120 = vunpack.c.h.b16 %v3849
        %v4121 = vunpack.c.l.b16 %v3850
        %v4122 = vunpack.c.h.b16 %v3850
        %v4123 = vunpack.c.l.b16 %v3851
        %v4124 = vunpack.c.h.b16 %v3851
        %v4125 = vunpack.c.l.b16 %v3852
        %v4126 = vunpack.c.h.b16 %v3852
        %v4127 = vunpack.c.l.b16 %v3853
        %v4128 = vunpack.c.h.b16 %v3853
        %v4129 = vunpack.c.l.b16 %v3854
        %v4130 = vunpack.c.h.b16 %v3854
        %v4131 = vunpack.c.l.b16 %v3855
        %v4132 = vunpack.c.h.b16 %v3855
        %v4133 = vunpack.c.l.b16 %v3856
        %v4134 = vunpack.c.h.b16 %v3856
        %v4135 = vunpack.c.l.b16 %v3857
        %v4136 = vunpack.c.h.b16 %v3857
        %v4137 = vunpack.c.l.b16 %v3858
        %v4138 = vunpack.c.h.b16 %v3858
        %v4139 = vunpack.c.l.b16 %v3859
        %v4140 = vunpack.c.h.b16 %v3859
        %v4141 = vunpack.c.l.b16 %v3860
        %v4142 = vunpack.c.h.b16 %v3860
        %v4143 = vunpack.c.l.b16 %v3861
        %v4144 = vunpack.c.h.b16 %v3861
        %v4145 = vunpack.c.l.b16 %v3862
        %v4146 = vunpack.c.h.b16 %v3862
        %v4147 = vunpack.c.l.b16 %v3863
        %v4148 = vunpack.c.h.b16 %v3863
        %v4149 = vunpack.c.l.b16 %v3864
        %v4150 = vunpack.c.h.b16 %v3864
        %v4151 = vunpack.c.l.b16 %v3865
        %v4152 = vunpack.c.h.b16 %v3865
        %v4153 = vunpack.c.l.b16 %v3866
        %v4154 = vunpack.c.h.b16 %v3866
        %v4155 = vunpack.c.l.b16 %v3867
        %v4156 = vunpack.c.h.b16 %v3867
        %v4157 = vunpack.c.l.b16 %v3868
        %v4158 = vunpack.c.h.b16 %v3868
        %v4159 = vunpack.c.l.b16 %v3869
        %v4160 = vunpack.c.h.b16 %v3869
        %v4161 = vunpack.c.l.b16 %v3870
        %v4162 = vunpack.c.h.b16 %v3870
        %v4163 = vunpack.c.l.b16 %v3871
        %v4164 = vunpack.c.h.b16 %v3871
        %v4165 = vunpack.c.l.b16 %v3872
        %v4166 = vunpack.c.h.b16 %v3872
        %v4167 = vunpack.c.l.b16 %v3873
        %v4168 = vunpack.c.h.b16 %v3873
        %v4169 = vunpack.c.l.b16 %v3874
        %v4170 = vunpack.c.h.b16 %v3874
        %v4171 = vunpack.c.l.b16 %v3875
        %v4172 = vunpack.c.h.b16 %v3875
        %v4173 = vunpack.c.l.b16 %v3876
        %v4174 = vunpack.c.h.b16 %v3876
        %v4175 = vunpack.c.l.b16 %v3877
        %v4176 = vunpack.c.h.b16 %v3877
        %v4177 = vunpack.c.l.b16 %v3878
        %v4178 = vunpack.c.h.b16 %v3878
        %v4179 = vunpack.c.l.b16 %v3879
        %v4180 = vunpack.c.h.b16 %v3879
        %v4181 = vunpack.c.l.b16 %v3880
        %v4182 = vunpack.c.h.b16 %v3880
        %v4183 = vunpack.c.l.b16 %v3881
        %v4184 = vunpack.c.h.b16 %v3881
        %v4185 = vunpack.c.l.b16 %v3882
        %v4186 = vunpack.c.h.b16 %v3882
        %v4187 = vunpack.c.l.b16 %v3883
        %v4188 = vunpack.c.h.b16 %v3883
        %v4189 = vunpack.c.l.b16 %v3884
        %v4190 = vunpack.c.h.b16 %v3884
        %v4191 = vunpack.c.l.b16 %v3885
        %v4192 = vunpack.c.h.b16 %v3885
        %v4193 = vunpack.c.l.b16 %v3886
        %v4194 = vunpack.c.h.b16 %v3886
        %v4195 = vunpack.c.l.b16 %v3887
        %v4196 = vunpack.c.h.b16 %v3887
        %v4197 = vunpack.c.l.b16 %v3888
        %v4198 = vunpack.c.h.b16 %v3888
        %v4199 = vunpack.c.l.b16 %v3889
        %v4200 = vunpack.c.h.b16 %v3889
        %v4201 = vunpack.c.l.b16 %v3890
        %v4202 = vunpack.c.h.b16 %v3890
        %v4203 = vunpack.c.l.b16 %v3891
        %v4204 = vunpack.c.h.b16 %v3891
        %v4205 = vunpack.c.l.b16 %v3892
        %v4206 = vunpack.c.h.b16 %v3892
        %v4207 = vunpack.c.l.b16 %v3893
        %v4208 = vunpack.c.h.b16 %v3893
        %v4209 = vunpack.c.l.b16 %v3894
        %v4210 = vunpack.c.h.b16 %v3894
        %v4211 = vunpack.c.l.b16 %v3895
        %v4212 = vunpack.c.h.b16 %v3895
        %v4213 = vunpack.c.l.b16 %v3896
        %v4214 = vunpack.c.h.b16 %v3896
        %v4215 = vunpack.c.l.b16 %v3897
        %v4216 = vunpack.c.h.b16 %v3897
        %v4217 = vunpack.c.l.b16 %v3898
        %v4218 = vunpack.c.h.b16 %v3898
        %v4219 = vunpack.c.l.b16 %v3899
        %v4220 = vunpack.c.h.b16 %v3899
        %v4221 = vunpack.c.l.b16 %v3900
        %v4222 = vunpack.c.h.b16 %v3900
        %v4223 = vunpack.c.l.b16 %v3901
        %v4224 = vunpack.c.h.b16 %v3901
        %v4225 = vunpack.c.l.b16 %v3902
        %v4226 = vunpack.c.h.b16 %v3902
        %v4227 = vunpack.c.l.b16 %v3903
        %v4228 = vunpack.c.h.b16 %v3903
        %v4229 = vunpack.c.l.b16 %v3904
        %v4230 = vunpack.c.h.b16 %v3904
        %v4231 = vunpack.c.l.b16 %v3905
        %v4232 = vunpack.c.h.b16 %v3905
        %v4233 = vunpack.c.l.b16 %v3906
        %v4234 = vunpack.c.h.b16 %v3906
        %v4235 = vunpack.c.l.b16 %v3907
        %v4236 = vunpack.c.h.b16 %v3907
        %v4237 = vunpack.c.l.b16 %v3908
        %v4238 = vunpack.c.h.b16 %v3908
        %v4239 = vpack.c.b16 %v4051, %v4047
        %v4240 = vpack.c.b16 %v4052, %v4048
        %v4241 = vpack.c.b16 %v4053, %v4049
        %v4242 = vpack.c.b16 %v4054, %v4050
        %v4243 = vpack.c.b16 %v4059, %v4055
        %v4244 = vpack.c.b16 %v4060, %v4056
        %v4245 = vpack.c.b16 %v4061, %v4057
        %v4246 = vpack.c.b16 %v4062, %v4058
        %v4247 = vpack.c.b16 %v4067, %v4063
        %v4248 = vpack.c.b16 %v4068, %v4064
        %v4249 = vpack.c.b16 %v4069, %v4065
        %v4250 = vpack.c.b16 %v4070, %v4066
        %v4251 = vpack.c.b16 %v4075, %v4071
        %v4252 = vpack.c.b16 %v4076, %v4072
        %v4253 = vpack.c.b16 %v4077, %v4073
        %v4254 = vpack.c.b16 %v4078, %v4074
        %v4255 = vpack.c.b16 %v4083, %v4079
        %v4256 = vpack.c.b16 %v4084, %v4080
        %v4257 = vpack.c.b16 %v4085, %v4081
        %v4258 = vpack.c.b16 %v4086, %v4082
        %v4259 = vpack.c.b16 %v4091, %v4087
        %v4260 = vpack.c.b16 %v4092, %v4088
        %v4261 = vpack.c.b16 %v4093, %v4089
        %v4262 = vpack.c.b16 %v4094, %v4090
        %v4263 = vpack.c.b16 %v4099, %v4095
        %v4264 = vpack.c.b16 %v4100, %v4096
        %v4265 = vpack.c.b16 %v4101, %v4097
        %v4266 = vpack.c.b16 %v4102, %v4098
        %v4267 = vpack.c.b16 %v4107, %v4103
        %v4268 = vpack.c.b16 %v4108, %v4104
        %v4269 = vpack.c.b16 %v4109, %v4105
        %v4270 = vpack.c.b16 %v4110, %v4106
        %v4271 = vpack.c.b16 %v4115, %v4111
        %v4272 = vpack.c.b16 %v4116, %v4112
        %v4273 = vpack.c.b16 %v4117, %v4113
        %v4274 = vpack.c.b16 %v4118, %v4114
        %v4275 = vpack.c.b16 %v4123, %v4119
        %v4276 = vpack.c.b16 %v4124, %v4120
        %v4277 = vpack.c.b16 %v4125, %v4121
        %v4278 = vpack.c.b16 %v4126, %v4122
        %v4279 = vpack.c.b16 %v4131, %v4127
        %v4280 = vpack.c.b16 %v4132, %v4128
        %v4281 = vpack.c.b16 %v4133, %v4129
        %v4282 = vpack.c.b16 %v4134, %v4130
        %v4283 = vpack.c.b16 %v4139, %v4135
        %v4284 = vpack.c.b16 %v4140, %v4136
        %v4285 = vpack.c.b16 %v4141, %v4137
        %v4286 = vpack.c.b16 %v4142, %v4138
        %v4287 = vpack.c.b16 %v4147, %v4143
        %v4288 = vpack.c.b16 %v4148, %v4144
        %v4289 = vpack.c.b16 %v4149, %v4145
        %v4290 = vpack.c.b16 %v4150, %v4146
        %v4291 = vpack.c.b16 %v4155, %v4151
        %v4292 = vpack.c.b16 %v4156, %v4152
        %v4293 = vpack.c.b16 %v4157, %v4153
        %v4294 = vpack.c.b16 %v4158, %v4154
        %v4295 = vpack.c.b16 %v4163, %v4159
        %v4296 = vpack.c.b16 %v4164, %v4160
        %v4297 = vpack.c.b16 %v4165, %v4161
        %v4298 = vpack.c.b16 %v4166, %v4162
        %v4299 = vpack.c.b16 %v4171, %v4167
        %v4300 = vpack.c.b16 %v4172, %v4168
        %v4301 = vpack.c.b16 %v4173, %v4169
        %v4302 = vpack.c.b16 %v4174, %v4170
        %v4303 = vpack.c.b16 %v4179, %v4175
        %v4304 = vpack.c.b16 %v4180, %v4176
        %v4305 = vpack.c.b16 %v4181, %v4177
        %v4306 = vpack.c.b16 %v4182, %v4178
        %v4307 = vpack.c.b16 %v4187, %v4183
        %v4308 = vpack.c.b16 %v4188, %v4184
        %v4309 = vpack.c.b16 %v4189, %v4185
        %v4310 = vpack.c.b16 %v4190, %v4186
        %v4311 = vpack.c.b16 %v4195, %v4191
        %v4312 = vpack.c.b16 %v4196, %v4192
        %v4313 = vpack.c.b16 %v4197, %v4193
        %v4314 = vpack.c.b16 %v4198, %v4194
        %v4315 = vpack.c.b16 %v4203, %v4199
        %v4316 = vpack.c.b16 %v4204, %v4200
        %v4317 = vpack.c.b16 %v4205, %v4201
        %v4318 = vpack.c.b16 %v4206, %v4202
        %v4319 = vpack.c.b16 %v4211, %v4207
        %v4320 = vpack.c.b16 %v4212, %v4208
        %v4321 = vpack.c.b16 %v4213, %v4209
        %v4322 = vpack.c.b16 %v4214, %v4210
        %v4323 = vpack.c.b16 %v4219, %v4215
        %v4324 = vpack.c.b16 %v4220, %v4216
        %v4325 = vpack.c.b16 %v4221, %v4217
        %v4326 = vpack.c.b16 %v4222, %v4218
        %v4327 = vpack.c.b16 %v4227, %v4223
        %v4328 = vpack.c.b16 %v4228, %v4224
        %v4329 = vpack.c.b16 %v4229, %v4225
        %v4330 = vpack.c.b16 %v4230, %v4226
        %v4331 = vpack.c.b16 %v4235, %v4231
        %v4332 = vpack.c.b16 %v4236, %v4232
        %v4333 = vpack.c.b16 %v4237, %v4233
        %v4334 = vpack.c.b16 %v4238, %v4234
        %4431 = vmatpush.bf16.msra.mxu0 %v4267
        %4432 = vmatpush.bf16.msra.mxu0 %v4263
        %4433 = vmatpush.bf16.msra.mxu0 %v4259
        %4434 = vmatpush.bf16.msra.mxu0 %v4255
        %4435 = vmatpush.bf16.msra.mxu0 %v4251
        %4436 = vmatpush.bf16.msra.mxu0 %v4247
        %4437 = vmatpush.bf16.msra.mxu0 %v4243
        %4438 = vmatpush.bf16.msra.mxu0 %v4239
        %4439 = vmatmul.bf16.gmra.mxu0 %v3938
        %v4440 = vpop.f32.mrf.mxu0
        %v4441 = vadd.f32 0.0, %v4440
        %v4442 = vpop.f32.mrf.mxu0
        %v4443 = vadd.f32 0.0, %v4442
        %4444 = vmatmul.bf16.gmra.mxu0 %v3937
        %v4445 = vpop.f32.mrf.mxu0
        %v4446 = vadd.f32 0.0, %v4445
        %v4447 = vpop.f32.mrf.mxu0
        %4448 = vdwg.mxu0
        %4449 = vmatpush.bf16.msra.mxu0 %v4299
        %4450 = vmatpush.bf16.msra.mxu0 %v4295
        %4451 = vmatpush.bf16.msra.mxu0 %v4291
        %4452 = vmatpush.bf16.msra.mxu0 %v4287
        %4453 = vmatpush.bf16.msra.mxu0 %v4283
        %4454 = vmatpush.bf16.msra.mxu0 %v4279
        %4455 = vmatpush.bf16.msra.mxu0 %v4275
        %4456 = vmatpush.bf16.msra.mxu0 %v4271
        %4457 = vmatmul.bf16.gmra.mxu0 %v3941
        %v4458 = vpop.f32.mrf.mxu0
        %v4459 = vadd.f32 %v4441, %v4458
        %v4460 = vpop.f32.mrf.mxu0
        %v4461 = vadd.f32 %v4443, %v4460
        %4462 = vmatmul.bf16.gmra.mxu0 %v3940
        %v4463 = vpop.f32.mrf.mxu0
        %v4464 = vadd.f32 %v4446, %v4463
        %v4465 = vpop.f32.mrf.mxu0
        %4466 = vdwg.mxu0
        %4467 = vmatpush.bf16.msra.mxu0 %v4331
        %4468 = vmatpush.bf16.msra.mxu0 %v4327
        %4469 = vmatpush.bf16.msra.mxu0 %v4323
        %4470 = vmatpush.bf16.msra.mxu0 %v4319
        %4471 = vmatpush.bf16.msra.mxu0 %v4315
        %4472 = vmatpush.bf16.msra.mxu0 %v4311
        %4473 = vmatpush.bf16.msra.mxu0 %v4307
        %4474 = vmatpush.bf16.msra.mxu0 %v4303
        %4475 = vmatmul.bf16.gmra.mxu0 %v3944
        %v4476 = vpop.f32.mrf.mxu0
        %v4477 = vadd.f32 %v4459, %v4476
        %v4478 = vpop.f32.mrf.mxu0
        %v4479 = vadd.f32 %v4461, %v4478
        %4480 = vmatmul.bf16.gmra.mxu0 %v3943
        %v4481 = vpop.f32.mrf.mxu0
        %v4482 = vadd.f32 %v4464, %v4481
        %v4483 = vpop.f32.mrf.mxu0
        %4484 = vdwg.mxu0
        %4485 = vmatpush.bf16.msra.mxu0 %v4268
        %4486 = vmatpush.bf16.msra.mxu0 %v4264
        %4487 = vmatpush.bf16.msra.mxu0 %v4260
        %4488 = vmatpush.bf16.msra.mxu0 %v4256
        %4489 = vmatpush.bf16.msra.mxu0 %v4252
        %4490 = vmatpush.bf16.msra.mxu0 %v4248
        %4491 = vmatpush.bf16.msra.mxu0 %v4244
        %4492 = vmatpush.bf16.msra.mxu0 %v4240
        %4493 = vmatmul.bf16.gmra.mxu0 %v3938
        %v4494 = vpop.f32.mrf.mxu0
        %v4495 = vadd.f32 0.0, %v4494
        %v4496 = vpop.f32.mrf.mxu0
        %v4497 = vadd.f32 0.0, %v4496
        %4498 = vmatmul.bf16.gmra.mxu0 %v3937
        %v4499 = vpop.f32.mrf.mxu0
        %v4500 = vadd.f32 0.0, %v4499
        %v4501 = vpop.f32.mrf.mxu0
        %4502 = vdwg.mxu0
        %4503 = vmatpush.bf16.msra.mxu0 %v4300
        %4504 = vmatpush.bf16.msra.mxu0 %v4296
        %4505 = vmatpush.bf16.msra.mxu0 %v4292
        %4506 = vmatpush.bf16.msra.mxu0 %v4288
        %4507 = vmatpush.bf16.msra.mxu0 %v4284
        %4508 = vmatpush.bf16.msra.mxu0 %v4280
        %4509 = vmatpush.bf16.msra.mxu0 %v4276
        %4510 = vmatpush.bf16.msra.mxu0 %v4272
        %4511 = vmatmul.bf16.gmra.mxu0 %v3941
        %v4512 = vpop.f32.mrf.mxu0
        %v4513 = vadd.f32 %v4495, %v4512
        %v4514 = vpop.f32.mrf.mxu0
        %v4515 = vadd.f32 %v4497, %v4514
        %4516 = vmatmul.bf16.gmra.mxu0 %v3940
        %v4517 = vpop.f32.mrf.mxu0
        %v4518 = vadd.f32 %v4500, %v4517
        %v4519 = vpop.f32.mrf.mxu0
        %4520 = vdwg.mxu0
        %4521 = vmatpush.bf16.msra.mxu0 %v4332
        %4522 = vmatpush.bf16.msra.mxu0 %v4328
        %4523 = vmatpush.bf16.msra.mxu0 %v4324
        %4524 = vmatpush.bf16.msra.mxu0 %v4320
        %4525 = vmatpush.bf16.msra.mxu0 %v4316
        %4526 = vmatpush.bf16.msra.mxu0 %v4312
        %4527 = vmatpush.bf16.msra.mxu0 %v4308
        %4528 = vmatpush.bf16.msra.mxu0 %v4304
        %4529 = vmatmul.bf16.gmra.mxu0 %v3944
        %v4530 = vpop.f32.mrf.mxu0
        %v4531 = vadd.f32 %v4513, %v4530
        %v4532 = vpop.f32.mrf.mxu0
        %v4533 = vadd.f32 %v4515, %v4532
        %4534 = vmatmul.bf16.gmra.mxu0 %v3943
        %v4535 = vpop.f32.mrf.mxu0
        %v4536 = vadd.f32 %v4518, %v4535
        %v4537 = vpop.f32.mrf.mxu0
        %4538 = vdwg.mxu0
        %4539 = vmatpush.bf16.msra.mxu0 %v4269
        %4540 = vmatpush.bf16.msra.mxu0 %v4265
        %4541 = vmatpush.bf16.msra.mxu0 %v4261
        %4542 = vmatpush.bf16.msra.mxu0 %v4257
        %4543 = vmatpush.bf16.msra.mxu0 %v4253
        %4544 = vmatpush.bf16.msra.mxu0 %v4249
        %4545 = vmatpush.bf16.msra.mxu0 %v4245
        %4546 = vmatpush.bf16.msra.mxu0 %v4241
        %4547 = vmatmul.bf16.gmra.mxu0 %v3938
        %v4548 = vpop.f32.mrf.mxu0
        %v4549 = vadd.f32 0.0, %v4548
        %v4550 = vpop.f32.mrf.mxu0
        %v4551 = vadd.f32 0.0, %v4550
        %4552 = vmatmul.bf16.gmra.mxu0 %v3937
        %v4553 = vpop.f32.mrf.mxu0
        %v4554 = vadd.f32 0.0, %v4553
        %v4555 = vpop.f32.mrf.mxu0
        %4556 = vdwg.mxu0
        %4557 = vmatpush.bf16.msra.mxu0 %v4301
        %4558 = vmatpush.bf16.msra.mxu0 %v4297
        %4559 = vmatpush.bf16.msra.mxu0 %v4293
        %4560 = vmatpush.bf16.msra.mxu0 %v4289
        %4561 = vmatpush.bf16.msra.mxu0 %v4285
        %4562 = vmatpush.bf16.msra.mxu0 %v4281
        %4563 = vmatpush.bf16.msra.mxu0 %v4277
        %4564 = vmatpush.bf16.msra.mxu0 %v4273
        %4565 = vmatmul.bf16.gmra.mxu0 %v3941
        %v4566 = vpop.f32.mrf.mxu0
        %v4567 = vadd.f32 %v4549, %v4566
        %v4568 = vpop.f32.mrf.mxu0
        %v4569 = vadd.f32 %v4551, %v4568
        %4570 = vmatmul.bf16.gmra.mxu0 %v3940
        %v4571 = vpop.f32.mrf.mxu0
        %v4572 = vadd.f32 %v4554, %v4571
        %v4573 = vpop.f32.mrf.mxu0
        %4574 = vdwg.mxu0
        %4575 = vmatpush.bf16.msra.mxu0 %v4333
        %4576 = vmatpush.bf16.msra.mxu0 %v4329
        %4577 = vmatpush.bf16.msra.mxu0 %v4325
        %4578 = vmatpush.bf16.msra.mxu0 %v4321
        %4579 = vmatpush.bf16.msra.mxu0 %v4317
        %4580 = vmatpush.bf16.msra.mxu0 %v4313
        %4581 = vmatpush.bf16.msra.mxu0 %v4309
        %4582 = vmatpush.bf16.msra.mxu0 %v4305
        %4583 = vmatmul.bf16.gmra.mxu0 %v3944
        %v4584 = vpop.f32.mrf.mxu0
        %v4585 = vadd.f32 %v4567, %v4584
        %v4586 = vpop.f32.mrf.mxu0
        %v4587 = vadd.f32 %v4569, %v4586
        %4588 = vmatmul.bf16.gmra.mxu0 %v3943
        %v4589 = vpop.f32.mrf.mxu0
        %v4590 = vadd.f32 %v4572, %v4589
        %v4591 = vpop.f32.mrf.mxu0
        %4592 = vdwg.mxu0
        %4593 = vmatpush.bf16.msra.mxu0 %v4270
        %4594 = vmatpush.bf16.msra.mxu0 %v4266
        %4595 = vmatpush.bf16.msra.mxu0 %v4262
        %4596 = vmatpush.bf16.msra.mxu0 %v4258
        %4597 = vmatpush.bf16.msra.mxu0 %v4254
        %4598 = vmatpush.bf16.msra.mxu0 %v4250
        %4599 = vmatpush.bf16.msra.mxu0 %v4246
        %4600 = vmatpush.bf16.msra.mxu0 %v4242
        %4601 = vmatmul.bf16.gmra.mxu0 %v3938
        %v4602 = vpop.f32.mrf.mxu0
        %v4603 = vadd.f32 0.0, %v4602
        %v4604 = vpop.f32.mrf.mxu0
        %v4605 = vadd.f32 0.0, %v4604
        %4606 = vmatmul.bf16.gmra.mxu0 %v3937
        %v4607 = vpop.f32.mrf.mxu0
        %v4608 = vadd.f32 0.0, %v4607
        %v4609 = vpop.f32.mrf.mxu0
        %4610 = vdwg.mxu0
        %4611 = vmatpush.bf16.msra.mxu0 %v4302
        %4612 = vmatpush.bf16.msra.mxu0 %v4298
        %4613 = vmatpush.bf16.msra.mxu0 %v4294
        %4614 = vmatpush.bf16.msra.mxu0 %v4290
        %4615 = vmatpush.bf16.msra.mxu0 %v4286
        %4616 = vmatpush.bf16.msra.mxu0 %v4282
        %4617 = vmatpush.bf16.msra.mxu0 %v4278
        %4618 = vmatpush.bf16.msra.mxu0 %v4274
        %4619 = vmatmul.bf16.gmra.mxu0 %v3941
        %v4620 = vpop.f32.mrf.mxu0
        %v4621 = vadd.f32 %v4603, %v4620
        %v4622 = vpop.f32.mrf.mxu0
        %v4623 = vadd.f32 %v4605, %v4622
        %4624 = vmatmul.bf16.gmra.mxu0 %v3940
        %v4625 = vpop.f32.mrf.mxu0
        %v4626 = vadd.f32 %v4608, %v4625
        %v4627 = vpop.f32.mrf.mxu0
        %4628 = vdwg.mxu0
        %4629 = vmatpush.bf16.msra.mxu0 %v4334
        %4630 = vmatpush.bf16.msra.mxu0 %v4330
        %4631 = vmatpush.bf16.msra.mxu0 %v4326
        %4632 = vmatpush.bf16.msra.mxu0 %v4322
        %4633 = vmatpush.bf16.msra.mxu0 %v4318
        %4634 = vmatpush.bf16.msra.mxu0 %v4314
        %4635 = vmatpush.bf16.msra.mxu0 %v4310
        %4636 = vmatpush.bf16.msra.mxu0 %v4306
        %4637 = vmatmul.bf16.gmra.mxu0 %v3944
        %v4638 = vpop.f32.mrf.mxu0
        %v4639 = vadd.f32 %v4621, %v4638
        %v4640 = vpop.f32.mrf.mxu0
        %v4641 = vadd.f32 %v4623, %v4640
        %4642 = vmatmul.bf16.gmra.mxu0 %v3943
        %v4643 = vpop.f32.mrf.mxu0
        %v4644 = vadd.f32 %v4626, %v4643
        %v4645 = vpop.f32.mrf.mxu0
        %4646 = vdwg.mxu0
        %v4647 = vadd.f32 %v3792, %v4477
        %v4648 = vadd.f32 %v3793, %v4531
        %v4649 = vadd.f32 %v3794, %v4585
        %v4650 = vadd.f32 %v3795, %v4639
        %v4651 = vadd.f32 %v3796, %v4479
        %v4652 = vadd.f32 %v3797, %v4533
        %v4653 = vadd.f32 %v3798, %v4587
        %v4654 = vadd.f32 %v3799, %v4641
        %v4655 = vadd.f32 %v3800, %v4482
        %v4656 = vadd.f32 %v3801, %v4536
        %v4657 = vadd.f32 %v3802, %v4590
        %v4658 = vadd.f32 %v3803, %v4644
        %v4659 = vld [vmem:[#allocation2 + $0x24] sm:$0x77]
        %v4660 = vld [vmem:[#allocation2 + $0x2c] sm:$0x7]
        %s4661 = scalar_lea.vmem %s3, 3072
        %v4662 = vld [vmem:[%s4661] sm:$0xff]
        %v4663 = vld [vmem:[%s4661 + $0x8] sm:$0xff]
        %v4664 = vld [vmem:[%s4661 + $0x10] sm:$0xff]
        %v4665 = vld [vmem:[%s4661 + $0x18] sm:$0xff]
        %v4666 = vld [vmem:[%s4661 + $0x20] sm:$0xff]
        %v4667 = vld [vmem:[%s4661 + $0x28] sm:$0xff]
        %v4668 = vld [vmem:[%s4661 + $0x30] sm:$0xff]
        %v4669 = vld [vmem:[%s4661 + $0x38] sm:$0xff]
        %v4670 = vld [vmem:[%s4661 + $0x40] sm:$0xff]
        %v4671 = vld [vmem:[%s4661 + $0x48] sm:$0xff]
        %v4672 = vld [vmem:[%s4661 + $0x50] sm:$0xff]
        %v4673 = vld [vmem:[%s4661 + $0x58] sm:$0xff]
        %v4674 = vld [vmem:[%s4661 + $0x60] sm:$0xff]
        %v4675 = vld [vmem:[%s4661 + $0x68] sm:$0xff]
        %v4676 = vld [vmem:[%s4661 + $0x70] sm:$0xff]
        %v4677 = vld [vmem:[%s4661 + $0x78] sm:$0xff]
        %v4678 = vld [vmem:[%s4661 + $0x80] sm:$0xff]
        %v4679 = vld [vmem:[%s4661 + $0x88] sm:$0xff]
        %v4680 = vld [vmem:[%s4661 + $0x90] sm:$0xff]
        %v4681 = vld [vmem:[%s4661 + $0x98] sm:$0xff]
        %v4682 = vld [vmem:[%s4661 + $0xa0] sm:$0xff]
        %v4683 = vld [vmem:[%s4661 + $0xa8] sm:$0xff]
        %v4684 = vld [vmem:[%s4661 + $0xb0] sm:$0xff]
        %v4685 = vld [vmem:[%s4661 + $0xb8] sm:$0xff]
        %v4686 = vld [vmem:[%s4661 + $0xc0] sm:$0xff]
        %v4687 = vld [vmem:[%s4661 + $0xc8] sm:$0xff]
        %v4688 = vld [vmem:[%s4661 + $0xd0] sm:$0xff]
        %v4689 = vld [vmem:[%s4661 + $0xd8] sm:$0xff]
        %v4690 = vld [vmem:[%s4661 + $0xe0] sm:$0xff]
        %v4691 = vld [vmem:[%s4661 + $0xe8] sm:$0xff]
        %v4692 = vld [vmem:[%s4661 + $0xf0] sm:$0xff]
        %v4693 = vld [vmem:[%s4661 + $0xf8] sm:$0xff]
        %v4694 = vld [vmem:[%s4661 + $0x100] sm:$0xff]
        %v4695 = vld [vmem:[%s4661 + $0x108] sm:$0xff]
        %v4696 = vld [vmem:[%s4661 + $0x110] sm:$0xff]
        %v4697 = vld [vmem:[%s4661 + $0x118] sm:$0xff]
        %v4698 = vld [vmem:[%s4661 + $0x120] sm:$0xff]
        %v4699 = vld [vmem:[%s4661 + $0x128] sm:$0xff]
        %v4700 = vld [vmem:[%s4661 + $0x130] sm:$0xff]
        %v4701 = vld [vmem:[%s4661 + $0x138] sm:$0xff]
        %v4702 = vld [vmem:[%s4661 + $0x140] sm:$0xff]
        %v4703 = vld [vmem:[%s4661 + $0x148] sm:$0xff]
        %v4704 = vld [vmem:[%s4661 + $0x150] sm:$0xff]
        %v4705 = vld [vmem:[%s4661 + $0x158] sm:$0xff]
        %v4706 = vld [vmem:[%s4661 + $0x160] sm:$0xff]
        %v4707 = vld [vmem:[%s4661 + $0x168] sm:$0xff]
        %v4708 = vld [vmem:[%s4661 + $0x170] sm:$0xff]
        %v4709 = vld [vmem:[%s4661 + $0x178] sm:$0xff]
        %v4710 = vld [vmem:[%s4661 + $0x180] sm:$0xff]
        %v4711 = vld [vmem:[%s4661 + $0x188] sm:$0xff]
        %v4712 = vld [vmem:[%s4661 + $0x190] sm:$0xff]
        %v4713 = vld [vmem:[%s4661 + $0x198] sm:$0xff]
        %v4714 = vld [vmem:[%s4661 + $0x1a0] sm:$0xff]
        %v4715 = vld [vmem:[%s4661 + $0x1a8] sm:$0xff]
        %v4716 = vld [vmem:[%s4661 + $0x1b0] sm:$0xff]
        %v4717 = vld [vmem:[%s4661 + $0x1b8] sm:$0xff]
        %v4718 = vld [vmem:[%s4661 + $0x1c0] sm:$0xff]
        %v4719 = vld [vmem:[%s4661 + $0x1c8] sm:$0xff]
        %v4720 = vld [vmem:[%s4661 + $0x1d0] sm:$0xff]
        %v4721 = vld [vmem:[%s4661 + $0x1d8] sm:$0xff]
        %v4722 = vld [vmem:[%s4661 + $0x1e0] sm:$0xff]
        %v4723 = vld [vmem:[%s4661 + $0x1e8] sm:$0xff]
        %v4724 = vld [vmem:[%s4661 + $0x1f0] sm:$0xff]
        %v4725 = vld [vmem:[%s4661 + $0x1f8] sm:$0xff]
        %v4726 = vld [vmem:[%s4661 + $0x200] sm:$0xff]
        %v4727 = vld [vmem:[%s4661 + $0x208] sm:$0xff]
        %v4728 = vld [vmem:[%s4661 + $0x210] sm:$0xff]
        %v4729 = vld [vmem:[%s4661 + $0x218] sm:$0xff]
        %v4730 = vld [vmem:[%s4661 + $0x220] sm:$0xff]
        %v4731 = vld [vmem:[%s4661 + $0x228] sm:$0xff]
        %v4732 = vld [vmem:[%s4661 + $0x230] sm:$0xff]
        %v4733 = vld [vmem:[%s4661 + $0x238] sm:$0xff]
        %v4734 = vld [vmem:[%s4661 + $0x240] sm:$0xff]
        %v4735 = vld [vmem:[%s4661 + $0x248] sm:$0xff]
        %v4736 = vld [vmem:[%s4661 + $0x250] sm:$0xff]
        %v4737 = vld [vmem:[%s4661 + $0x258] sm:$0xff]
        %v4738 = vld [vmem:[%s4661 + $0x260] sm:$0xff]
        %v4739 = vld [vmem:[%s4661 + $0x268] sm:$0xff]
        %v4740 = vld [vmem:[%s4661 + $0x270] sm:$0xff]
        %v4741 = vld [vmem:[%s4661 + $0x278] sm:$0xff]
        %v4742 = vld [vmem:[%s4661 + $0x280] sm:$0xff]
        %v4743 = vld [vmem:[%s4661 + $0x288] sm:$0xff]
        %v4744 = vld [vmem:[%s4661 + $0x290] sm:$0xff]
        %v4745 = vld [vmem:[%s4661 + $0x298] sm:$0xff]
        %v4746 = vld [vmem:[%s4661 + $0x2a0] sm:$0xff]
        %v4747 = vld [vmem:[%s4661 + $0x2a8] sm:$0xff]
        %v4748 = vld [vmem:[%s4661 + $0x2b0] sm:$0xff]
        %v4749 = vld [vmem:[%s4661 + $0x2b8] sm:$0xff]
        %v4750 = vld [vmem:[%s4661 + $0x2c0] sm:$0xff]
        %v4751 = vld [vmem:[%s4661 + $0x2c8] sm:$0xff]
        %v4752 = vld [vmem:[%s4661 + $0x2d0] sm:$0xff]
        %v4753 = vld [vmem:[%s4661 + $0x2d8] sm:$0xff]
        %v4754 = vld [vmem:[%s4661 + $0x2e0] sm:$0xff]
        %v4755 = vld [vmem:[%s4661 + $0x2e8] sm:$0xff]
        %v4756 = vld [vmem:[%s4661 + $0x2f0] sm:$0xff]
        %v4757 = vld [vmem:[%s4661 + $0x2f8] sm:$0xff]
        %v4760 = vunpack.c.l.b16 %v4659
        %v4761 = vunpack.c.h.b16 %v4659
        %v4762 = vunpack.c.l.b16 %v4660
        %v4763 = vpack.c.b16 %v4760, %v3923
        %v4764 = vpack.c.b16 %v4761, %v3924
        %v4765 = vpack.c.b16 %v4762, %v3925
        %vm4766 = vsmask.f32 4352
        %v4768 = vshrl.u32 %v3929, 16
        %v4770 = vrot.slane %v4768, 3
        %v4771 = vshll.u32 %v3929, 16
        %v4773 = vrot.slane %v4771, 4
        %v4774 = vor.u32 %v4770, %v4773
        %v4776 = vshrl.u32 %v4763, 16
        %v4778 = vrot.slane %v4776, 3
        %v4779 = vshll.u32 %v4763, 16
        %v4781 = vrot.slane %v4779, 4
        %v4782 = vor.u32 %v4778, %v4781
        %v4783 = vsel %vm4766, %v4774, %v4782
        %v4785 = vshrl.u32 %v3930, 16
        %v4787 = vrot.slane %v4785, 3
        %v4788 = vshll.u32 %v3930, 16
        %v4790 = vrot.slane %v4788, 4
        %v4791 = vor.u32 %v4787, %v4790
        %v4793 = vshrl.u32 %v4764, 16
        %v4795 = vrot.slane %v4793, 3
        %v4796 = vshll.u32 %v4764, 16
        %v4798 = vrot.slane %v4796, 4
        %v4799 = vor.u32 %v4795, %v4798
        %v4800 = vsel %vm4766, %v4791, %v4799
        %v4802 = vshrl.u32 %v3931, 16
        %v4804 = vrot.slane %v4802, 3
        %v4805 = vshll.u32 %v3931, 16
        %v4807 = vrot.slane %v4805, 4
        %v4808 = vor.u32 %v4804, %v4807
        %v4810 = vshrl.u32 %v4765, 16
        %v4812 = vrot.slane %v4810, 3
        %v4813 = vshll.u32 %v4765, 16
        %v4815 = vrot.slane %v4813, 4
        %v4816 = vor.u32 %v4812, %v4815
        %v4817 = vsel %vm4766, %v4808, %v4816
        %v4920 = vunpack.c.l.b16 %v4662
        %v4921 = vunpack.c.h.b16 %v4662
        %v4922 = vunpack.c.l.b16 %v4663
        %v4923 = vunpack.c.h.b16 %v4663
        %v4924 = vunpack.c.l.b16 %v4664
        %v4925 = vunpack.c.h.b16 %v4664
        %v4926 = vunpack.c.l.b16 %v4665
        %v4927 = vunpack.c.h.b16 %v4665
        %v4928 = vunpack.c.l.b16 %v4666
        %v4929 = vunpack.c.h.b16 %v4666
        %v4930 = vunpack.c.l.b16 %v4667
        %v4931 = vunpack.c.h.b16 %v4667
        %v4932 = vunpack.c.l.b16 %v4668
        %v4933 = vunpack.c.h.b16 %v4668
        %v4934 = vunpack.c.l.b16 %v4669
        %v4935 = vunpack.c.h.b16 %v4669
        %v4936 = vunpack.c.l.b16 %v4670
        %v4937 = vunpack.c.h.b16 %v4670
        %v4938 = vunpack.c.l.b16 %v4671
        %v4939 = vunpack.c.h.b16 %v4671
        %v4940 = vunpack.c.l.b16 %v4672
        %v4941 = vunpack.c.h.b16 %v4672
        %v4942 = vunpack.c.l.b16 %v4673
        %v4943 = vunpack.c.h.b16 %v4673
        %v4944 = vunpack.c.l.b16 %v4674
        %v4945 = vunpack.c.h.b16 %v4674
        %v4946 = vunpack.c.l.b16 %v4675
        %v4947 = vunpack.c.h.b16 %v4675
        %v4948 = vunpack.c.l.b16 %v4676
        %v4949 = vunpack.c.h.b16 %v4676
        %v4950 = vunpack.c.l.b16 %v4677
        %v4951 = vunpack.c.h.b16 %v4677
        %v4952 = vunpack.c.l.b16 %v4678
        %v4953 = vunpack.c.h.b16 %v4678
        %v4954 = vunpack.c.l.b16 %v4679
        %v4955 = vunpack.c.h.b16 %v4679
        %v4956 = vunpack.c.l.b16 %v4680
        %v4957 = vunpack.c.h.b16 %v4680
        %v4958 = vunpack.c.l.b16 %v4681
        %v4959 = vunpack.c.h.b16 %v4681
        %v4960 = vunpack.c.l.b16 %v4682
        %v4961 = vunpack.c.h.b16 %v4682
        %v4962 = vunpack.c.l.b16 %v4683
        %v4963 = vunpack.c.h.b16 %v4683
        %v4964 = vunpack.c.l.b16 %v4684
        %v4965 = vunpack.c.h.b16 %v4684
        %v4966 = vunpack.c.l.b16 %v4685
        %v4967 = vunpack.c.h.b16 %v4685
        %v4968 = vunpack.c.l.b16 %v4686
        %v4969 = vunpack.c.h.b16 %v4686
        %v4970 = vunpack.c.l.b16 %v4687
        %v4971 = vunpack.c.h.b16 %v4687
        %v4972 = vunpack.c.l.b16 %v4688
        %v4973 = vunpack.c.h.b16 %v4688
        %v4974 = vunpack.c.l.b16 %v4689
        %v4975 = vunpack.c.h.b16 %v4689
        %v4976 = vunpack.c.l.b16 %v4690
        %v4977 = vunpack.c.h.b16 %v4690
        %v4978 = vunpack.c.l.b16 %v4691
        %v4979 = vunpack.c.h.b16 %v4691
        %v4980 = vunpack.c.l.b16 %v4692
        %v4981 = vunpack.c.h.b16 %v4692
        %v4982 = vunpack.c.l.b16 %v4693
        %v4983 = vunpack.c.h.b16 %v4693
        %v4984 = vunpack.c.l.b16 %v4694
        %v4985 = vunpack.c.h.b16 %v4694
        %v4986 = vunpack.c.l.b16 %v4695
        %v4987 = vunpack.c.h.b16 %v4695
        %v4988 = vunpack.c.l.b16 %v4696
        %v4989 = vunpack.c.h.b16 %v4696
        %v4990 = vunpack.c.l.b16 %v4697
        %v4991 = vunpack.c.h.b16 %v4697
        %v4992 = vunpack.c.l.b16 %v4698
        %v4993 = vunpack.c.h.b16 %v4698
        %v4994 = vunpack.c.l.b16 %v4699
        %v4995 = vunpack.c.h.b16 %v4699
        %v4996 = vunpack.c.l.b16 %v4700
        %v4997 = vunpack.c.h.b16 %v4700
        %v4998 = vunpack.c.l.b16 %v4701
        %v4999 = vunpack.c.h.b16 %v4701
        %v5000 = vunpack.c.l.b16 %v4702
        %v5001 = vunpack.c.h.b16 %v4702
        %v5002 = vunpack.c.l.b16 %v4703
        %v5003 = vunpack.c.h.b16 %v4703
        %v5004 = vunpack.c.l.b16 %v4704
        %v5005 = vunpack.c.h.b16 %v4704
        %v5006 = vunpack.c.l.b16 %v4705
        %v5007 = vunpack.c.h.b16 %v4705
        %v5008 = vunpack.c.l.b16 %v4706
        %v5009 = vunpack.c.h.b16 %v4706
        %v5010 = vunpack.c.l.b16 %v4707
        %v5011 = vunpack.c.h.b16 %v4707
        %v5012 = vunpack.c.l.b16 %v4708
        %v5013 = vunpack.c.h.b16 %v4708
        %v5014 = vunpack.c.l.b16 %v4709
        %v5015 = vunpack.c.h.b16 %v4709
        %v5016 = vunpack.c.l.b16 %v4710
        %v5017 = vunpack.c.h.b16 %v4710
        %v5018 = vunpack.c.l.b16 %v4711
        %v5019 = vunpack.c.h.b16 %v4711
        %v5020 = vunpack.c.l.b16 %v4712
        %v5021 = vunpack.c.h.b16 %v4712
        %v5022 = vunpack.c.l.b16 %v4713
        %v5023 = vunpack.c.h.b16 %v4713
        %v5024 = vunpack.c.l.b16 %v4714
        %v5025 = vunpack.c.h.b16 %v4714
        %v5026 = vunpack.c.l.b16 %v4715
        %v5027 = vunpack.c.h.b16 %v4715
        %v5028 = vunpack.c.l.b16 %v4716
        %v5029 = vunpack.c.h.b16 %v4716
        %v5030 = vunpack.c.l.b16 %v4717
        %v5031 = vunpack.c.h.b16 %v4717
        %v5032 = vunpack.c.l.b16 %v4718
        %v5033 = vunpack.c.h.b16 %v4718
        %v5034 = vunpack.c.l.b16 %v4719
        %v5035 = vunpack.c.h.b16 %v4719
        %v5036 = vunpack.c.l.b16 %v4720
        %v5037 = vunpack.c.h.b16 %v4720
        %v5038 = vunpack.c.l.b16 %v4721
        %v5039 = vunpack.c.h.b16 %v4721
        %v5040 = vunpack.c.l.b16 %v4722
        %v5041 = vunpack.c.h.b16 %v4722
        %v5042 = vunpack.c.l.b16 %v4723
        %v5043 = vunpack.c.h.b16 %v4723
        %v5044 = vunpack.c.l.b16 %v4724
        %v5045 = vunpack.c.h.b16 %v4724
        %v5046 = vunpack.c.l.b16 %v4725
        %v5047 = vunpack.c.h.b16 %v4725
        %v5048 = vunpack.c.l.b16 %v4726
        %v5049 = vunpack.c.h.b16 %v4726
        %v5050 = vunpack.c.l.b16 %v4727
        %v5051 = vunpack.c.h.b16 %v4727
        %v5052 = vunpack.c.l.b16 %v4728
        %v5053 = vunpack.c.h.b16 %v4728
        %v5054 = vunpack.c.l.b16 %v4729
        %v5055 = vunpack.c.h.b16 %v4729
        %v5056 = vunpack.c.l.b16 %v4730
        %v5057 = vunpack.c.h.b16 %v4730
        %v5058 = vunpack.c.l.b16 %v4731
        %v5059 = vunpack.c.h.b16 %v4731
        %v5060 = vunpack.c.l.b16 %v4732
        %v5061 = vunpack.c.h.b16 %v4732
        %v5062 = vunpack.c.l.b16 %v4733
        %v5063 = vunpack.c.h.b16 %v4733
        %v5064 = vunpack.c.l.b16 %v4734
        %v5065 = vunpack.c.h.b16 %v4734
        %v5066 = vunpack.c.l.b16 %v4735
        %v5067 = vunpack.c.h.b16 %v4735
        %v5068 = vunpack.c.l.b16 %v4736
        %v5069 = vunpack.c.h.b16 %v4736
        %v5070 = vunpack.c.l.b16 %v4737
        %v5071 = vunpack.c.h.b16 %v4737
        %v5072 = vunpack.c.l.b16 %v4738
        %v5073 = vunpack.c.h.b16 %v4738
        %v5074 = vunpack.c.l.b16 %v4739
        %v5075 = vunpack.c.h.b16 %v4739
        %v5076 = vunpack.c.l.b16 %v4740
        %v5077 = vunpack.c.h.b16 %v4740
        %v5078 = vunpack.c.l.b16 %v4741
        %v5079 = vunpack.c.h.b16 %v4741
        %v5080 = vunpack.c.l.b16 %v4742
        %v5081 = vunpack.c.h.b16 %v4742
        %v5082 = vunpack.c.l.b16 %v4743
        %v5083 = vunpack.c.h.b16 %v4743
        %v5084 = vunpack.c.l.b16 %v4744
        %v5085 = vunpack.c.h.b16 %v4744
        %v5086 = vunpack.c.l.b16 %v4745
        %v5087 = vunpack.c.h.b16 %v4745
        %v5088 = vunpack.c.l.b16 %v4746
        %v5089 = vunpack.c.h.b16 %v4746
        %v5090 = vunpack.c.l.b16 %v4747
        %v5091 = vunpack.c.h.b16 %v4747
        %v5092 = vunpack.c.l.b16 %v4748
        %v5093 = vunpack.c.h.b16 %v4748
        %v5094 = vunpack.c.l.b16 %v4749
        %v5095 = vunpack.c.h.b16 %v4749
        %v5096 = vunpack.c.l.b16 %v4750
        %v5097 = vunpack.c.h.b16 %v4750
        %v5098 = vunpack.c.l.b16 %v4751
        %v5099 = vunpack.c.h.b16 %v4751
        %v5100 = vunpack.c.l.b16 %v4752
        %v5101 = vunpack.c.h.b16 %v4752
        %v5102 = vunpack.c.l.b16 %v4753
        %v5103 = vunpack.c.h.b16 %v4753
        %v5104 = vunpack.c.l.b16 %v4754
        %v5105 = vunpack.c.h.b16 %v4754
        %v5106 = vunpack.c.l.b16 %v4755
        %v5107 = vunpack.c.h.b16 %v4755
        %v5108 = vunpack.c.l.b16 %v4756
        %v5109 = vunpack.c.h.b16 %v4756
        %v5110 = vunpack.c.l.b16 %v4757
        %v5111 = vunpack.c.h.b16 %v4757
        %v5112 = vpack.c.b16 %v4924, %v4920
        %v5113 = vpack.c.b16 %v4925, %v4921
        %v5114 = vpack.c.b16 %v4926, %v4922
        %v5115 = vpack.c.b16 %v4927, %v4923
        %v5116 = vpack.c.b16 %v4932, %v4928
        %v5117 = vpack.c.b16 %v4933, %v4929
        %v5118 = vpack.c.b16 %v4934, %v4930
        %v5119 = vpack.c.b16 %v4935, %v4931
        %v5120 = vpack.c.b16 %v4940, %v4936
        %v5121 = vpack.c.b16 %v4941, %v4937
        %v5122 = vpack.c.b16 %v4942, %v4938
        %v5123 = vpack.c.b16 %v4943, %v4939
        %v5124 = vpack.c.b16 %v4948, %v4944
        %v5125 = vpack.c.b16 %v4949, %v4945
        %v5126 = vpack.c.b16 %v4950, %v4946
        %v5127 = vpack.c.b16 %v4951, %v4947
        %v5128 = vpack.c.b16 %v4956, %v4952
        %v5129 = vpack.c.b16 %v4957, %v4953
        %v5130 = vpack.c.b16 %v4958, %v4954
        %v5131 = vpack.c.b16 %v4959, %v4955
        %v5132 = vpack.c.b16 %v4964, %v4960
        %v5133 = vpack.c.b16 %v4965, %v4961
        %v5134 = vpack.c.b16 %v4966, %v4962
        %v5135 = vpack.c.b16 %v4967, %v4963
        %v5136 = vpack.c.b16 %v4972, %v4968
        %v5137 = vpack.c.b16 %v4973, %v4969
        %v5138 = vpack.c.b16 %v4974, %v4970
        %v5139 = vpack.c.b16 %v4975, %v4971
        %v5140 = vpack.c.b16 %v4980, %v4976
        %v5141 = vpack.c.b16 %v4981, %v4977
        %v5142 = vpack.c.b16 %v4982, %v4978
        %v5143 = vpack.c.b16 %v4983, %v4979
        %v5144 = vpack.c.b16 %v4988, %v4984
        %v5145 = vpack.c.b16 %v4989, %v4985
        %v5146 = vpack.c.b16 %v4990, %v4986
        %v5147 = vpack.c.b16 %v4991, %v4987
        %v5148 = vpack.c.b16 %v4996, %v4992
        %v5149 = vpack.c.b16 %v4997, %v4993
        %v5150 = vpack.c.b16 %v4998, %v4994
        %v5151 = vpack.c.b16 %v4999, %v4995
        %v5152 = vpack.c.b16 %v5004, %v5000
        %v5153 = vpack.c.b16 %v5005, %v5001
        %v5154 = vpack.c.b16 %v5006, %v5002
        %v5155 = vpack.c.b16 %v5007, %v5003
        %v5156 = vpack.c.b16 %v5012, %v5008
        %v5157 = vpack.c.b16 %v5013, %v5009
        %v5158 = vpack.c.b16 %v5014, %v5010
        %v5159 = vpack.c.b16 %v5015, %v5011
        %v5160 = vpack.c.b16 %v5020, %v5016
        %v5161 = vpack.c.b16 %v5021, %v5017
        %v5162 = vpack.c.b16 %v5022, %v5018
        %v5163 = vpack.c.b16 %v5023, %v5019
        %v5164 = vpack.c.b16 %v5028, %v5024
        %v5165 = vpack.c.b16 %v5029, %v5025
        %v5166 = vpack.c.b16 %v5030, %v5026
        %v5167 = vpack.c.b16 %v5031, %v5027
        %v5168 = vpack.c.b16 %v5036, %v5032
        %v5169 = vpack.c.b16 %v5037, %v5033
        %v5170 = vpack.c.b16 %v5038, %v5034
        %v5171 = vpack.c.b16 %v5039, %v5035
        %v5172 = vpack.c.b16 %v5044, %v5040
        %v5173 = vpack.c.b16 %v5045, %v5041
        %v5174 = vpack.c.b16 %v5046, %v5042
        %v5175 = vpack.c.b16 %v5047, %v5043
        %v5176 = vpack.c.b16 %v5052, %v5048
        %v5177 = vpack.c.b16 %v5053, %v5049
        %v5178 = vpack.c.b16 %v5054, %v5050
        %v5179 = vpack.c.b16 %v5055, %v5051
        %v5180 = vpack.c.b16 %v5060, %v5056
        %v5181 = vpack.c.b16 %v5061, %v5057
        %v5182 = vpack.c.b16 %v5062, %v5058
        %v5183 = vpack.c.b16 %v5063, %v5059
        %v5184 = vpack.c.b16 %v5068, %v5064
        %v5185 = vpack.c.b16 %v5069, %v5065
        %v5186 = vpack.c.b16 %v5070, %v5066
        %v5187 = vpack.c.b16 %v5071, %v5067
        %v5188 = vpack.c.b16 %v5076, %v5072
        %v5189 = vpack.c.b16 %v5077, %v5073
        %v5190 = vpack.c.b16 %v5078, %v5074
        %v5191 = vpack.c.b16 %v5079, %v5075
        %v5192 = vpack.c.b16 %v5084, %v5080
        %v5193 = vpack.c.b16 %v5085, %v5081
        %v5194 = vpack.c.b16 %v5086, %v5082
        %v5195 = vpack.c.b16 %v5087, %v5083
        %v5196 = vpack.c.b16 %v5092, %v5088
        %v5197 = vpack.c.b16 %v5093, %v5089
        %v5198 = vpack.c.b16 %v5094, %v5090
        %v5199 = vpack.c.b16 %v5095, %v5091
        %v5200 = vpack.c.b16 %v5100, %v5096
        %v5201 = vpack.c.b16 %v5101, %v5097
        %v5202 = vpack.c.b16 %v5102, %v5098
        %v5203 = vpack.c.b16 %v5103, %v5099
        %v5204 = vpack.c.b16 %v5108, %v5104
        %v5205 = vpack.c.b16 %v5109, %v5105
        %v5206 = vpack.c.b16 %v5110, %v5106
        %v5207 = vpack.c.b16 %v5111, %v5107
        %5304 = vmatpush.bf16.msra.mxu0 %v5140
        %5305 = vmatpush.bf16.msra.mxu0 %v5136
        %5306 = vmatpush.bf16.msra.mxu0 %v5132
        %5307 = vmatpush.bf16.msra.mxu0 %v5128
        %5308 = vmatpush.bf16.msra.mxu0 %v5124
        %5309 = vmatpush.bf16.msra.mxu0 %v5120
        %5310 = vmatpush.bf16.msra.mxu0 %v5116
        %5311 = vmatpush.bf16.msra.mxu0 %v5112
        %5312 = vmatmul.bf16.gmra.mxu0 %v4783
        %v5313 = vpop.f32.mrf.mxu0
        %v5314 = vadd.f32 0.0, %v5313
        %v5315 = vpop.f32.mrf.mxu0
        %v5316 = vadd.f32 0.0, %v5315
        %5317 = vmatmul.bf16.gmra.mxu0 %v4782
        %v5318 = vpop.f32.mrf.mxu0
        %v5319 = vadd.f32 0.0, %v5318
        %v5320 = vpop.f32.mrf.mxu0
        %5321 = vdwg.mxu0
        %5322 = vmatpush.bf16.msra.mxu0 %v5172
        %5323 = vmatpush.bf16.msra.mxu0 %v5168
        %5324 = vmatpush.bf16.msra.mxu0 %v5164
        %5325 = vmatpush.bf16.msra.mxu0 %v5160
        %5326 = vmatpush.bf16.msra.mxu0 %v5156
        %5327 = vmatpush.bf16.msra.mxu0 %v5152
        %5328 = vmatpush.bf16.msra.mxu0 %v5148
        %5329 = vmatpush.bf16.msra.mxu0 %v5144
        %5330 = vmatmul.bf16.gmra.mxu0 %v4800
        %v5331 = vpop.f32.mrf.mxu0
        %v5332 = vadd.f32 %v5314, %v5331
        %v5333 = vpop.f32.mrf.mxu0
        %v5334 = vadd.f32 %v5316, %v5333
        %5335 = vmatmul.bf16.gmra.mxu0 %v4799
        %v5336 = vpop.f32.mrf.mxu0
        %v5337 = vadd.f32 %v5319, %v5336
        %v5338 = vpop.f32.mrf.mxu0
        %5339 = vdwg.mxu0
        %5340 = vmatpush.bf16.msra.mxu0 %v5204
        %5341 = vmatpush.bf16.msra.mxu0 %v5200
        %5342 = vmatpush.bf16.msra.mxu0 %v5196
        %5343 = vmatpush.bf16.msra.mxu0 %v5192
        %5344 = vmatpush.bf16.msra.mxu0 %v5188
        %5345 = vmatpush.bf16.msra.mxu0 %v5184
        %5346 = vmatpush.bf16.msra.mxu0 %v5180
        %5347 = vmatpush.bf16.msra.mxu0 %v5176
        %5348 = vmatmul.bf16.gmra.mxu0 %v4817
        %v5349 = vpop.f32.mrf.mxu0
        %v5350 = vadd.f32 %v5332, %v5349
        %v5351 = vpop.f32.mrf.mxu0
        %v5352 = vadd.f32 %v5334, %v5351
        %5353 = vmatmul.bf16.gmra.mxu0 %v4816
        %v5354 = vpop.f32.mrf.mxu0
        %v5355 = vadd.f32 %v5337, %v5354
        %v5356 = vpop.f32.mrf.mxu0
        %5357 = vdwg.mxu0
        %5358 = vmatpush.bf16.msra.mxu0 %v5141
        %5359 = vmatpush.bf16.msra.mxu0 %v5137
        %5360 = vmatpush.bf16.msra.mxu0 %v5133
        %5361 = vmatpush.bf16.msra.mxu0 %v5129
        %5362 = vmatpush.bf16.msra.mxu0 %v5125
        %5363 = vmatpush.bf16.msra.mxu0 %v5121
        %5364 = vmatpush.bf16.msra.mxu0 %v5117
        %5365 = vmatpush.bf16.msra.mxu0 %v5113
        %5366 = vmatmul.bf16.gmra.mxu0 %v4783
        %v5367 = vpop.f32.mrf.mxu0
        %v5368 = vadd.f32 0.0, %v5367
        %v5369 = vpop.f32.mrf.mxu0
        %v5370 = vadd.f32 0.0, %v5369
        %5371 = vmatmul.bf16.gmra.mxu0 %v4782
        %v5372 = vpop.f32.mrf.mxu0
        %v5373 = vadd.f32 0.0, %v5372
        %v5374 = vpop.f32.mrf.mxu0
        %5375 = vdwg.mxu0
        %5376 = vmatpush.bf16.msra.mxu0 %v5173
        %5377 = vmatpush.bf16.msra.mxu0 %v5169
        %5378 = vmatpush.bf16.msra.mxu0 %v5165
        %5379 = vmatpush.bf16.msra.mxu0 %v5161
        %5380 = vmatpush.bf16.msra.mxu0 %v5157
        %5381 = vmatpush.bf16.msra.mxu0 %v5153
        %5382 = vmatpush.bf16.msra.mxu0 %v5149
        %5383 = vmatpush.bf16.msra.mxu0 %v5145
        %5384 = vmatmul.bf16.gmra.mxu0 %v4800
        %v5385 = vpop.f32.mrf.mxu0
        %v5386 = vadd.f32 %v5368, %v5385
        %v5387 = vpop.f32.mrf.mxu0
        %v5388 = vadd.f32 %v5370, %v5387
        %5389 = vmatmul.bf16.gmra.mxu0 %v4799
        %v5390 = vpop.f32.mrf.mxu0
        %v5391 = vadd.f32 %v5373, %v5390
        %v5392 = vpop.f32.mrf.mxu0
        %5393 = vdwg.mxu0
        %5394 = vmatpush.bf16.msra.mxu0 %v5205
        %5395 = vmatpush.bf16.msra.mxu0 %v5201
        %5396 = vmatpush.bf16.msra.mxu0 %v5197
        %5397 = vmatpush.bf16.msra.mxu0 %v5193
        %5398 = vmatpush.bf16.msra.mxu0 %v5189
        %5399 = vmatpush.bf16.msra.mxu0 %v5185
        %5400 = vmatpush.bf16.msra.mxu0 %v5181
        %5401 = vmatpush.bf16.msra.mxu0 %v5177
        %5402 = vmatmul.bf16.gmra.mxu0 %v4817
        %v5403 = vpop.f32.mrf.mxu0
        %v5404 = vadd.f32 %v5386, %v5403
        %v5405 = vpop.f32.mrf.mxu0
        %v5406 = vadd.f32 %v5388, %v5405
        %5407 = vmatmul.bf16.gmra.mxu0 %v4816
        %v5408 = vpop.f32.mrf.mxu0
        %v5409 = vadd.f32 %v5391, %v5408
        %v5410 = vpop.f32.mrf.mxu0
        %5411 = vdwg.mxu0
        %5412 = vmatpush.bf16.msra.mxu0 %v5142
        %5413 = vmatpush.bf16.msra.mxu0 %v5138
        %5414 = vmatpush.bf16.msra.mxu0 %v5134
        %5415 = vmatpush.bf16.msra.mxu0 %v5130
        %5416 = vmatpush.bf16.msra.mxu0 %v5126
        %5417 = vmatpush.bf16.msra.mxu0 %v5122
        %5418 = vmatpush.bf16.msra.mxu0 %v5118
        %5419 = vmatpush.bf16.msra.mxu0 %v5114
        %5420 = vmatmul.bf16.gmra.mxu0 %v4783
        %v5421 = vpop.f32.mrf.mxu0
        %v5422 = vadd.f32 0.0, %v5421
        %v5423 = vpop.f32.mrf.mxu0
        %v5424 = vadd.f32 0.0, %v5423
        %5425 = vmatmul.bf16.gmra.mxu0 %v4782
        %v5426 = vpop.f32.mrf.mxu0
        %v5427 = vadd.f32 0.0, %v5426
        %v5428 = vpop.f32.mrf.mxu0
        %5429 = vdwg.mxu0
        %5430 = vmatpush.bf16.msra.mxu0 %v5174
        %5431 = vmatpush.bf16.msra.mxu0 %v5170
        %5432 = vmatpush.bf16.msra.mxu0 %v5166
        %5433 = vmatpush.bf16.msra.mxu0 %v5162
        %5434 = vmatpush.bf16.msra.mxu0 %v5158
        %5435 = vmatpush.bf16.msra.mxu0 %v5154
        %5436 = vmatpush.bf16.msra.mxu0 %v5150
        %5437 = vmatpush.bf16.msra.mxu0 %v5146
        %5438 = vmatmul.bf16.gmra.mxu0 %v4800
        %v5439 = vpop.f32.mrf.mxu0
        %v5440 = vadd.f32 %v5422, %v5439
        %v5441 = vpop.f32.mrf.mxu0
        %v5442 = vadd.f32 %v5424, %v5441
        %5443 = vmatmul.bf16.gmra.mxu0 %v4799
        %v5444 = vpop.f32.mrf.mxu0
        %v5445 = vadd.f32 %v5427, %v5444
        %v5446 = vpop.f32.mrf.mxu0
        %5447 = vdwg.mxu0
        %5448 = vmatpush.bf16.msra.mxu0 %v5206
        %5449 = vmatpush.bf16.msra.mxu0 %v5202
        %5450 = vmatpush.bf16.msra.mxu0 %v5198
        %5451 = vmatpush.bf16.msra.mxu0 %v5194
        %5452 = vmatpush.bf16.msra.mxu0 %v5190
        %5453 = vmatpush.bf16.msra.mxu0 %v5186
        %5454 = vmatpush.bf16.msra.mxu0 %v5182
        %5455 = vmatpush.bf16.msra.mxu0 %v5178
        %5456 = vmatmul.bf16.gmra.mxu0 %v4817
        %v5457 = vpop.f32.mrf.mxu0
        %v5458 = vadd.f32 %v5440, %v5457
        %v5459 = vpop.f32.mrf.mxu0
        %v5460 = vadd.f32 %v5442, %v5459
        %5461 = vmatmul.bf16.gmra.mxu0 %v4816
        %v5462 = vpop.f32.mrf.mxu0
        %v5463 = vadd.f32 %v5445, %v5462
        %v5464 = vpop.f32.mrf.mxu0
        %5465 = vdwg.mxu0
        %5466 = vmatpush.bf16.msra.mxu0 %v5143
        %5467 = vmatpush.bf16.msra.mxu0 %v5139
        %5468 = vmatpush.bf16.msra.mxu0 %v5135
        %5469 = vmatpush.bf16.msra.mxu0 %v5131
        %5470 = vmatpush.bf16.msra.mxu0 %v5127
        %5471 = vmatpush.bf16.msra.mxu0 %v5123
        %5472 = vmatpush.bf16.msra.mxu0 %v5119
        %5473 = vmatpush.bf16.msra.mxu0 %v5115
        %5474 = vmatmul.bf16.gmra.mxu0 %v4783
        %v5475 = vpop.f32.mrf.mxu0
        %v5476 = vadd.f32 0.0, %v5475
        %v5477 = vpop.f32.mrf.mxu0
        %v5478 = vadd.f32 0.0, %v5477
        %5479 = vmatmul.bf16.gmra.mxu0 %v4782
        %v5480 = vpop.f32.mrf.mxu0
        %v5481 = vadd.f32 0.0, %v5480
        %v5482 = vpop.f32.mrf.mxu0
        %5483 = vdwg.mxu0
        %5484 = vmatpush.bf16.msra.mxu0 %v5175
        %5485 = vmatpush.bf16.msra.mxu0 %v5171
        %5486 = vmatpush.bf16.msra.mxu0 %v5167
        %5487 = vmatpush.bf16.msra.mxu0 %v5163
        %5488 = vmatpush.bf16.msra.mxu0 %v5159
        %5489 = vmatpush.bf16.msra.mxu0 %v5155
        %5490 = vmatpush.bf16.msra.mxu0 %v5151
        %5491 = vmatpush.bf16.msra.mxu0 %v5147
        %5492 = vmatmul.bf16.gmra.mxu0 %v4800
        %v5493 = vpop.f32.mrf.mxu0
        %v5494 = vadd.f32 %v5476, %v5493
        %v5495 = vpop.f32.mrf.mxu0
        %v5496 = vadd.f32 %v5478, %v5495
        %5497 = vmatmul.bf16.gmra.mxu0 %v4799
        %v5498 = vpop.f32.mrf.mxu0
        %v5499 = vadd.f32 %v5481, %v5498
        %v5500 = vpop.f32.mrf.mxu0
        %5501 = vdwg.mxu0
        %5502 = vmatpush.bf16.msra.mxu0 %v5207
        %5503 = vmatpush.bf16.msra.mxu0 %v5203
        %5504 = vmatpush.bf16.msra.mxu0 %v5199
        %5505 = vmatpush.bf16.msra.mxu0 %v5195
        %5506 = vmatpush.bf16.msra.mxu0 %v5191
        %5507 = vmatpush.bf16.msra.mxu0 %v5187
        %5508 = vmatpush.bf16.msra.mxu0 %v5183
        %5509 = vmatpush.bf16.msra.mxu0 %v5179
        %5510 = vmatmul.bf16.gmra.mxu0 %v4817
        %v5511 = vpop.f32.mrf.mxu0
        %v5512 = vadd.f32 %v5494, %v5511
        %v5513 = vpop.f32.mrf.mxu0
        %v5514 = vadd.f32 %v5496, %v5513
        %5515 = vmatmul.bf16.gmra.mxu0 %v4816
        %v5516 = vpop.f32.mrf.mxu0
        %v5517 = vadd.f32 %v5499, %v5516
        %v5518 = vpop.f32.mrf.mxu0
        %5519 = vdwg.mxu0
        %v5520 = vadd.f32 %v4647, %v5350
        %v5521 = vadd.f32 %v4648, %v5404
        %v5522 = vadd.f32 %v4649, %v5458
        %v5523 = vadd.f32 %v4650, %v5512
        %v5524 = vadd.f32 %v4651, %v5352
        %v5525 = vadd.f32 %v4652, %v5406
        %v5526 = vadd.f32 %v4653, %v5460
        %v5527 = vadd.f32 %v4654, %v5514
        %v5528 = vadd.f32 %v4655, %v5355
        %v5529 = vadd.f32 %v4656, %v5409
        %v5530 = vadd.f32 %v4657, %v5463
        %v5531 = vadd.f32 %v4658, %v5517
        %s5532 = scalar_lea.vmem %s3, 3840
        %v5533 = vld [vmem:[%s5532] sm:$0xff]
        %v5534 = vld [vmem:[%s5532 + $0x8] sm:$0xff]
        %v5535 = vld [vmem:[%s5532 + $0x10] sm:$0xff]
        %v5536 = vld [vmem:[%s5532 + $0x18] sm:$0xff]
        %v5537 = vld [vmem:[%s5532 + $0x20] sm:$0xff]
        %v5538 = vld [vmem:[%s5532 + $0x28] sm:$0xff]
        %v5539 = vld [vmem:[%s5532 + $0x30] sm:$0xff]
        %v5540 = vld [vmem:[%s5532 + $0x38] sm:$0xff]
        %v5541 = vld [vmem:[%s5532 + $0x40] sm:$0xff]
        %v5542 = vld [vmem:[%s5532 + $0x48] sm:$0xff]
        %v5543 = vld [vmem:[%s5532 + $0x50] sm:$0xff]
        %v5544 = vld [vmem:[%s5532 + $0x58] sm:$0xff]
        %v5545 = vld [vmem:[%s5532 + $0x60] sm:$0xff]
        %v5546 = vld [vmem:[%s5532 + $0x68] sm:$0xff]
        %v5547 = vld [vmem:[%s5532 + $0x70] sm:$0xff]
        %v5548 = vld [vmem:[%s5532 + $0x78] sm:$0xff]
        %v5549 = vld [vmem:[%s5532 + $0x80] sm:$0xff]
        %v5550 = vld [vmem:[%s5532 + $0x88] sm:$0xff]
        %v5551 = vld [vmem:[%s5532 + $0x90] sm:$0xff]
        %v5552 = vld [vmem:[%s5532 + $0x98] sm:$0xff]
        %v5553 = vld [vmem:[%s5532 + $0xa0] sm:$0xff]
        %v5554 = vld [vmem:[%s5532 + $0xa8] sm:$0xff]
        %v5555 = vld [vmem:[%s5532 + $0xb0] sm:$0xff]
        %v5556 = vld [vmem:[%s5532 + $0xb8] sm:$0xff]
        %v5557 = vld [vmem:[%s5532 + $0xc0] sm:$0xff]
        %v5558 = vld [vmem:[%s5532 + $0xc8] sm:$0xff]
        %v5559 = vld [vmem:[%s5532 + $0xd0] sm:$0xff]
        %v5560 = vld [vmem:[%s5532 + $0xd8] sm:$0xff]
        %v5561 = vld [vmem:[%s5532 + $0xe0] sm:$0xff]
        %v5562 = vld [vmem:[%s5532 + $0xe8] sm:$0xff]
        %v5563 = vld [vmem:[%s5532 + $0xf0] sm:$0xff]
        %v5564 = vld [vmem:[%s5532 + $0xf8] sm:$0xff]
        %v5565 = vld [vmem:[%s5532 + $0x100] sm:$0xff]
        %v5566 = vld [vmem:[%s5532 + $0x108] sm:$0xff]
        %v5567 = vld [vmem:[%s5532 + $0x110] sm:$0xff]
        %v5568 = vld [vmem:[%s5532 + $0x118] sm:$0xff]
        %v5569 = vld [vmem:[%s5532 + $0x120] sm:$0xff]
        %v5570 = vld [vmem:[%s5532 + $0x128] sm:$0xff]
        %v5571 = vld [vmem:[%s5532 + $0x130] sm:$0xff]
        %v5572 = vld [vmem:[%s5532 + $0x138] sm:$0xff]
        %v5573 = vld [vmem:[%s5532 + $0x140] sm:$0xff]
        %v5574 = vld [vmem:[%s5532 + $0x148] sm:$0xff]
        %v5575 = vld [vmem:[%s5532 + $0x150] sm:$0xff]
        %v5576 = vld [vmem:[%s5532 + $0x158] sm:$0xff]
        %v5577 = vld [vmem:[%s5532 + $0x160] sm:$0xff]
        %v5578 = vld [vmem:[%s5532 + $0x168] sm:$0xff]
        %v5579 = vld [vmem:[%s5532 + $0x170] sm:$0xff]
        %v5580 = vld [vmem:[%s5532 + $0x178] sm:$0xff]
        %v5581 = vld [vmem:[%s5532 + $0x180] sm:$0xff]
        %v5582 = vld [vmem:[%s5532 + $0x188] sm:$0xff]
        %v5583 = vld [vmem:[%s5532 + $0x190] sm:$0xff]
        %v5584 = vld [vmem:[%s5532 + $0x198] sm:$0xff]
        %v5585 = vld [vmem:[%s5532 + $0x1a0] sm:$0xff]
        %v5586 = vld [vmem:[%s5532 + $0x1a8] sm:$0xff]
        %v5587 = vld [vmem:[%s5532 + $0x1b0] sm:$0xff]
        %v5588 = vld [vmem:[%s5532 + $0x1b8] sm:$0xff]
        %v5589 = vld [vmem:[%s5532 + $0x1c0] sm:$0xff]
        %v5590 = vld [vmem:[%s5532 + $0x1c8] sm:$0xff]
        %v5591 = vld [vmem:[%s5532 + $0x1d0] sm:$0xff]
        %v5592 = vld [vmem:[%s5532 + $0x1d8] sm:$0xff]
        %v5593 = vld [vmem:[%s5532 + $0x1e0] sm:$0xff]
        %v5594 = vld [vmem:[%s5532 + $0x1e8] sm:$0xff]
        %v5595 = vld [vmem:[%s5532 + $0x1f0] sm:$0xff]
        %v5596 = vld [vmem:[%s5532 + $0x1f8] sm:$0xff]
        %v5597 = vld [vmem:[%s5532 + $0x200] sm:$0xff]
        %v5598 = vld [vmem:[%s5532 + $0x208] sm:$0xff]
        %v5599 = vld [vmem:[%s5532 + $0x210] sm:$0xff]
        %v5600 = vld [vmem:[%s5532 + $0x218] sm:$0xff]
        %v5601 = vld [vmem:[%s5532 + $0x220] sm:$0xff]
        %v5602 = vld [vmem:[%s5532 + $0x228] sm:$0xff]
        %v5603 = vld [vmem:[%s5532 + $0x230] sm:$0xff]
        %v5604 = vld [vmem:[%s5532 + $0x238] sm:$0xff]
        %v5605 = vld [vmem:[%s5532 + $0x240] sm:$0xff]
        %v5606 = vld [vmem:[%s5532 + $0x248] sm:$0xff]
        %v5607 = vld [vmem:[%s5532 + $0x250] sm:$0xff]
        %v5608 = vld [vmem:[%s5532 + $0x258] sm:$0xff]
        %v5609 = vld [vmem:[%s5532 + $0x260] sm:$0xff]
        %v5610 = vld [vmem:[%s5532 + $0x268] sm:$0xff]
        %v5611 = vld [vmem:[%s5532 + $0x270] sm:$0xff]
        %v5612 = vld [vmem:[%s5532 + $0x278] sm:$0xff]
        %v5613 = vld [vmem:[%s5532 + $0x280] sm:$0xff]
        %v5614 = vld [vmem:[%s5532 + $0x288] sm:$0xff]
        %v5615 = vld [vmem:[%s5532 + $0x290] sm:$0xff]
        %v5616 = vld [vmem:[%s5532 + $0x298] sm:$0xff]
        %v5617 = vld [vmem:[%s5532 + $0x2a0] sm:$0xff]
        %v5618 = vld [vmem:[%s5532 + $0x2a8] sm:$0xff]
        %v5619 = vld [vmem:[%s5532 + $0x2b0] sm:$0xff]
        %v5620 = vld [vmem:[%s5532 + $0x2b8] sm:$0xff]
        %v5621 = vld [vmem:[%s5532 + $0x2c0] sm:$0xff]
        %v5622 = vld [vmem:[%s5532 + $0x2c8] sm:$0xff]
        %v5623 = vld [vmem:[%s5532 + $0x2d0] sm:$0xff]
        %v5624 = vld [vmem:[%s5532 + $0x2d8] sm:$0xff]
        %v5625 = vld [vmem:[%s5532 + $0x2e0] sm:$0xff]
        %v5626 = vld [vmem:[%s5532 + $0x2e8] sm:$0xff]
        %v5627 = vld [vmem:[%s5532 + $0x2f0] sm:$0xff]
        %v5628 = vld [vmem:[%s5532 + $0x2f8] sm:$0xff]
        %v5629 = vpack.c.b16 %v3923, %v3920
        %v5630 = vpack.c.b16 %v3924, %v3921
        %v5631 = vpack.c.b16 %v3925, %v3922
        %v5632 = vpack.c.b16 %v4760, %v4760
        %v5633 = vpack.c.b16 %v4761, %v4761
        %v5634 = vpack.c.b16 %v4762, %v4762
        %v5737 = vunpack.c.l.b16 %v5533
        %v5738 = vunpack.c.h.b16 %v5533
        %v5739 = vunpack.c.l.b16 %v5534
        %v5740 = vunpack.c.h.b16 %v5534
        %v5741 = vunpack.c.l.b16 %v5535
        %v5742 = vunpack.c.h.b16 %v5535
        %v5743 = vunpack.c.l.b16 %v5536
        %v5744 = vunpack.c.h.b16 %v5536
        %v5745 = vunpack.c.l.b16 %v5537
        %v5746 = vunpack.c.h.b16 %v5537
        %v5747 = vunpack.c.l.b16 %v5538
        %v5748 = vunpack.c.h.b16 %v5538
        %v5749 = vunpack.c.l.b16 %v5539
        %v5750 = vunpack.c.h.b16 %v5539
        %v5751 = vunpack.c.l.b16 %v5540
        %v5752 = vunpack.c.h.b16 %v5540
        %v5753 = vunpack.c.l.b16 %v5541
        %v5754 = vunpack.c.h.b16 %v5541
        %v5755 = vunpack.c.l.b16 %v5542
        %v5756 = vunpack.c.h.b16 %v5542
        %v5757 = vunpack.c.l.b16 %v5543
        %v5758 = vunpack.c.h.b16 %v5543
        %v5759 = vunpack.c.l.b16 %v5544
        %v5760 = vunpack.c.h.b16 %v5544
        %v5761 = vunpack.c.l.b16 %v5545
        %v5762 = vunpack.c.h.b16 %v5545
        %v5763 = vunpack.c.l.b16 %v5546
        %v5764 = vunpack.c.h.b16 %v5546
        %v5765 = vunpack.c.l.b16 %v5547
        %v5766 = vunpack.c.h.b16 %v5547
        %v5767 = vunpack.c.l.b16 %v5548
        %v5768 = vunpack.c.h.b16 %v5548
        %v5769 = vunpack.c.l.b16 %v5549
        %v5770 = vunpack.c.h.b16 %v5549
        %v5771 = vunpack.c.l.b16 %v5550
        %v5772 = vunpack.c.h.b16 %v5550
        %v5773 = vunpack.c.l.b16 %v5551
        %v5774 = vunpack.c.h.b16 %v5551
        %v5775 = vunpack.c.l.b16 %v5552
        %v5776 = vunpack.c.h.b16 %v5552
        %v5777 = vunpack.c.l.b16 %v5553
        %v5778 = vunpack.c.h.b16 %v5553
        %v5779 = vunpack.c.l.b16 %v5554
        %v5780 = vunpack.c.h.b16 %v5554
        %v5781 = vunpack.c.l.b16 %v5555
        %v5782 = vunpack.c.h.b16 %v5555
        %v5783 = vunpack.c.l.b16 %v5556
        %v5784 = vunpack.c.h.b16 %v5556
        %v5785 = vunpack.c.l.b16 %v5557
        %v5786 = vunpack.c.h.b16 %v5557
        %v5787 = vunpack.c.l.b16 %v5558
        %v5788 = vunpack.c.h.b16 %v5558
        %v5789 = vunpack.c.l.b16 %v5559
        %v5790 = vunpack.c.h.b16 %v5559
        %v5791 = vunpack.c.l.b16 %v5560
        %v5792 = vunpack.c.h.b16 %v5560
        %v5793 = vunpack.c.l.b16 %v5561
        %v5794 = vunpack.c.h.b16 %v5561
        %v5795 = vunpack.c.l.b16 %v5562
        %v5796 = vunpack.c.h.b16 %v5562
        %v5797 = vunpack.c.l.b16 %v5563
        %v5798 = vunpack.c.h.b16 %v5563
        %v5799 = vunpack.c.l.b16 %v5564
        %v5800 = vunpack.c.h.b16 %v5564
        %v5801 = vunpack.c.l.b16 %v5565
        %v5802 = vunpack.c.h.b16 %v5565
        %v5803 = vunpack.c.l.b16 %v5566
        %v5804 = vunpack.c.h.b16 %v5566
        %v5805 = vunpack.c.l.b16 %v5567
        %v5806 = vunpack.c.h.b16 %v5567
        %v5807 = vunpack.c.l.b16 %v5568
        %v5808 = vunpack.c.h.b16 %v5568
        %v5809 = vunpack.c.l.b16 %v5569
        %v5810 = vunpack.c.h.b16 %v5569
        %v5811 = vunpack.c.l.b16 %v5570
        %v5812 = vunpack.c.h.b16 %v5570
        %v5813 = vunpack.c.l.b16 %v5571
        %v5814 = vunpack.c.h.b16 %v5571
        %v5815 = vunpack.c.l.b16 %v5572
        %v5816 = vunpack.c.h.b16 %v5572
        %v5817 = vunpack.c.l.b16 %v5573
        %v5818 = vunpack.c.h.b16 %v5573
        %v5819 = vunpack.c.l.b16 %v5574
        %v5820 = vunpack.c.h.b16 %v5574
        %v5821 = vunpack.c.l.b16 %v5575
        %v5822 = vunpack.c.h.b16 %v5575
        %v5823 = vunpack.c.l.b16 %v5576
        %v5824 = vunpack.c.h.b16 %v5576
        %v5825 = vunpack.c.l.b16 %v5577
        %v5826 = vunpack.c.h.b16 %v5577
        %v5827 = vunpack.c.l.b16 %v5578
        %v5828 = vunpack.c.h.b16 %v5578
        %v5829 = vunpack.c.l.b16 %v5579
        %v5830 = vunpack.c.h.b16 %v5579
        %v5831 = vunpack.c.l.b16 %v5580
        %v5832 = vunpack.c.h.b16 %v5580
        %v5833 = vunpack.c.l.b16 %v5581
        %v5834 = vunpack.c.h.b16 %v5581
        %v5835 = vunpack.c.l.b16 %v5582
        %v5836 = vunpack.c.h.b16 %v5582
        %v5837 = vunpack.c.l.b16 %v5583
        %v5838 = vunpack.c.h.b16 %v5583
        %v5839 = vunpack.c.l.b16 %v5584
        %v5840 = vunpack.c.h.b16 %v5584
        %v5841 = vunpack.c.l.b16 %v5585
        %v5842 = vunpack.c.h.b16 %v5585
        %v5843 = vunpack.c.l.b16 %v5586
        %v5844 = vunpack.c.h.b16 %v5586
        %v5845 = vunpack.c.l.b16 %v5587
        %v5846 = vunpack.c.h.b16 %v5587
        %v5847 = vunpack.c.l.b16 %v5588
        %v5848 = vunpack.c.h.b16 %v5588
        %v5849 = vunpack.c.l.b16 %v5589
        %v5850 = vunpack.c.h.b16 %v5589
        %v5851 = vunpack.c.l.b16 %v5590
        %v5852 = vunpack.c.h.b16 %v5590
        %v5853 = vunpack.c.l.b16 %v5591
        %v5854 = vunpack.c.h.b16 %v5591
        %v5855 = vunpack.c.l.b16 %v5592
        %v5856 = vunpack.c.h.b16 %v5592
        %v5857 = vunpack.c.l.b16 %v5593
        %v5858 = vunpack.c.h.b16 %v5593
        %v5859 = vunpack.c.l.b16 %v5594
        %v5860 = vunpack.c.h.b16 %v5594
        %v5861 = vunpack.c.l.b16 %v5595
        %v5862 = vunpack.c.h.b16 %v5595
        %v5863 = vunpack.c.l.b16 %v5596
        %v5864 = vunpack.c.h.b16 %v5596
        %v5865 = vunpack.c.l.b16 %v5597
        %v5866 = vunpack.c.h.b16 %v5597
        %v5867 = vunpack.c.l.b16 %v5598
        %v5868 = vunpack.c.h.b16 %v5598
        %v5869 = vunpack.c.l.b16 %v5599
        %v5870 = vunpack.c.h.b16 %v5599
        %v5871 = vunpack.c.l.b16 %v5600
        %v5872 = vunpack.c.h.b16 %v5600
        %v5873 = vunpack.c.l.b16 %v5601
        %v5874 = vunpack.c.h.b16 %v5601
        %v5875 = vunpack.c.l.b16 %v5602
        %v5876 = vunpack.c.h.b16 %v5602
        %v5877 = vunpack.c.l.b16 %v5603
        %v5878 = vunpack.c.h.b16 %v5603
        %v5879 = vunpack.c.l.b16 %v5604
        %v5880 = vunpack.c.h.b16 %v5604
        %v5881 = vunpack.c.l.b16 %v5605
        %v5882 = vunpack.c.h.b16 %v5605
        %v5883 = vunpack.c.l.b16 %v5606
        %v5884 = vunpack.c.h.b16 %v5606
        %v5885 = vunpack.c.l.b16 %v5607
        %v5886 = vunpack.c.h.b16 %v5607
        %v5887 = vunpack.c.l.b16 %v5608
        %v5888 = vunpack.c.h.b16 %v5608
        %v5889 = vunpack.c.l.b16 %v5609
        %v5890 = vunpack.c.h.b16 %v5609
        %v5891 = vunpack.c.l.b16 %v5610
        %v5892 = vunpack.c.h.b16 %v5610
        %v5893 = vunpack.c.l.b16 %v5611
        %v5894 = vunpack.c.h.b16 %v5611
        %v5895 = vunpack.c.l.b16 %v5612
        %v5896 = vunpack.c.h.b16 %v5612
        %v5897 = vunpack.c.l.b16 %v5613
        %v5898 = vunpack.c.h.b16 %v5613
        %v5899 = vunpack.c.l.b16 %v5614
        %v5900 = vunpack.c.h.b16 %v5614
        %v5901 = vunpack.c.l.b16 %v5615
        %v5902 = vunpack.c.h.b16 %v5615
        %v5903 = vunpack.c.l.b16 %v5616
        %v5904 = vunpack.c.h.b16 %v5616
        %v5905 = vunpack.c.l.b16 %v5617
        %v5906 = vunpack.c.h.b16 %v5617
        %v5907 = vunpack.c.l.b16 %v5618
        %v5908 = vunpack.c.h.b16 %v5618
        %v5909 = vunpack.c.l.b16 %v5619
        %v5910 = vunpack.c.h.b16 %v5619
        %v5911 = vunpack.c.l.b16 %v5620
        %v5912 = vunpack.c.h.b16 %v5620
        %v5913 = vunpack.c.l.b16 %v5621
        %v5914 = vunpack.c.h.b16 %v5621
        %v5915 = vunpack.c.l.b16 %v5622
        %v5916 = vunpack.c.h.b16 %v5622
        %v5917 = vunpack.c.l.b16 %v5623
        %v5918 = vunpack.c.h.b16 %v5623
        %v5919 = vunpack.c.l.b16 %v5624
        %v5920 = vunpack.c.h.b16 %v5624
        %v5921 = vunpack.c.l.b16 %v5625
        %v5922 = vunpack.c.h.b16 %v5625
        %v5923 = vunpack.c.l.b16 %v5626
        %v5924 = vunpack.c.h.b16 %v5626
        %v5925 = vunpack.c.l.b16 %v5627
        %v5926 = vunpack.c.h.b16 %v5627
        %v5927 = vunpack.c.l.b16 %v5628
        %v5928 = vunpack.c.h.b16 %v5628
        %v5929 = vpack.c.b16 %v5741, %v5737
        %v5930 = vpack.c.b16 %v5742, %v5738
        %v5931 = vpack.c.b16 %v5743, %v5739
        %v5932 = vpack.c.b16 %v5744, %v5740
        %v5933 = vpack.c.b16 %v5749, %v5745
        %v5934 = vpack.c.b16 %v5750, %v5746
        %v5935 = vpack.c.b16 %v5751, %v5747
        %v5936 = vpack.c.b16 %v5752, %v5748
        %v5937 = vpack.c.b16 %v5757, %v5753
        %v5938 = vpack.c.b16 %v5758, %v5754
        %v5939 = vpack.c.b16 %v5759, %v5755
        %v5940 = vpack.c.b16 %v5760, %v5756
        %v5941 = vpack.c.b16 %v5765, %v5761
        %v5942 = vpack.c.b16 %v5766, %v5762
        %v5943 = vpack.c.b16 %v5767, %v5763
        %v5944 = vpack.c.b16 %v5768, %v5764
        %v5945 = vpack.c.b16 %v5773, %v5769
        %v5946 = vpack.c.b16 %v5774, %v5770
        %v5947 = vpack.c.b16 %v5775, %v5771
        %v5948 = vpack.c.b16 %v5776, %v5772
        %v5949 = vpack.c.b16 %v5781, %v5777
        %v5950 = vpack.c.b16 %v5782, %v5778
        %v5951 = vpack.c.b16 %v5783, %v5779
        %v5952 = vpack.c.b16 %v5784, %v5780
        %v5953 = vpack.c.b16 %v5789, %v5785
        %v5954 = vpack.c.b16 %v5790, %v5786
        %v5955 = vpack.c.b16 %v5791, %v5787
        %v5956 = vpack.c.b16 %v5792, %v5788
        %v5957 = vpack.c.b16 %v5797, %v5793
        %v5958 = vpack.c.b16 %v5798, %v5794
        %v5959 = vpack.c.b16 %v5799, %v5795
        %v5960 = vpack.c.b16 %v5800, %v5796
        %v5961 = vpack.c.b16 %v5805, %v5801
        %v5962 = vpack.c.b16 %v5806, %v5802
        %v5963 = vpack.c.b16 %v5807, %v5803
        %v5964 = vpack.c.b16 %v5808, %v5804
        %v5965 = vpack.c.b16 %v5813, %v5809
        %v5966 = vpack.c.b16 %v5814, %v5810
        %v5967 = vpack.c.b16 %v5815, %v5811
        %v5968 = vpack.c.b16 %v5816, %v5812
        %v5969 = vpack.c.b16 %v5821, %v5817
        %v5970 = vpack.c.b16 %v5822, %v5818
        %v5971 = vpack.c.b16 %v5823, %v5819
        %v5972 = vpack.c.b16 %v5824, %v5820
        %v5973 = vpack.c.b16 %v5829, %v5825
        %v5974 = vpack.c.b16 %v5830, %v5826
        %v5975 = vpack.c.b16 %v5831, %v5827
        %v5976 = vpack.c.b16 %v5832, %v5828
        %v5977 = vpack.c.b16 %v5837, %v5833
        %v5978 = vpack.c.b16 %v5838, %v5834
        %v5979 = vpack.c.b16 %v5839, %v5835
        %v5980 = vpack.c.b16 %v5840, %v5836
        %v5981 = vpack.c.b16 %v5845, %v5841
        %v5982 = vpack.c.b16 %v5846, %v5842
        %v5983 = vpack.c.b16 %v5847, %v5843
        %v5984 = vpack.c.b16 %v5848, %v5844
        %v5985 = vpack.c.b16 %v5853, %v5849
        %v5986 = vpack.c.b16 %v5854, %v5850
        %v5987 = vpack.c.b16 %v5855, %v5851
        %v5988 = vpack.c.b16 %v5856, %v5852
        %v5989 = vpack.c.b16 %v5861, %v5857
        %v5990 = vpack.c.b16 %v5862, %v5858
        %v5991 = vpack.c.b16 %v5863, %v5859
        %v5992 = vpack.c.b16 %v5864, %v5860
        %v5993 = vpack.c.b16 %v5869, %v5865
        %v5994 = vpack.c.b16 %v5870, %v5866
        %v5995 = vpack.c.b16 %v5871, %v5867
        %v5996 = vpack.c.b16 %v5872, %v5868
        %v5997 = vpack.c.b16 %v5877, %v5873
        %v5998 = vpack.c.b16 %v5878, %v5874
        %v5999 = vpack.c.b16 %v5879, %v5875
        %v6000 = vpack.c.b16 %v5880, %v5876
        %v6001 = vpack.c.b16 %v5885, %v5881
        %v6002 = vpack.c.b16 %v5886, %v5882
        %v6003 = vpack.c.b16 %v5887, %v5883
        %v6004 = vpack.c.b16 %v5888, %v5884
        %v6005 = vpack.c.b16 %v5893, %v5889
        %v6006 = vpack.c.b16 %v5894, %v5890
        %v6007 = vpack.c.b16 %v5895, %v5891
        %v6008 = vpack.c.b16 %v5896, %v5892
        %v6009 = vpack.c.b16 %v5901, %v5897
        %v6010 = vpack.c.b16 %v5902, %v5898
        %v6011 = vpack.c.b16 %v5903, %v5899
        %v6012 = vpack.c.b16 %v5904, %v5900
        %v6013 = vpack.c.b16 %v5909, %v5905
        %v6014 = vpack.c.b16 %v5910, %v5906
        %v6015 = vpack.c.b16 %v5911, %v5907
        %v6016 = vpack.c.b16 %v5912, %v5908
        %v6017 = vpack.c.b16 %v5917, %v5913
        %v6018 = vpack.c.b16 %v5918, %v5914
        %v6019 = vpack.c.b16 %v5919, %v5915
        %v6020 = vpack.c.b16 %v5920, %v5916
        %v6021 = vpack.c.b16 %v5925, %v5921
        %v6022 = vpack.c.b16 %v5926, %v5922
        %v6023 = vpack.c.b16 %v5927, %v5923
        %v6024 = vpack.c.b16 %v5928, %v5924
        %6121 = vmatpush.bf16.msra.mxu0 %v5957
        %6122 = vmatpush.bf16.msra.mxu0 %v5953
        %6123 = vmatpush.bf16.msra.mxu0 %v5949
        %6124 = vmatpush.bf16.msra.mxu0 %v5945
        %6125 = vmatpush.bf16.msra.mxu0 %v5941
        %6126 = vmatpush.bf16.msra.mxu0 %v5937
        %6127 = vmatpush.bf16.msra.mxu0 %v5933
        %6128 = vmatpush.bf16.msra.mxu0 %v5929
        %6129 = vmatmul.bf16.gmra.mxu0 %v5629
        %v6130 = vpop.f32.mrf.mxu0
        %v6131 = vadd.f32 0.0, %v6130
        %v6132 = vpop.f32.mrf.mxu0
        %v6133 = vadd.f32 0.0, %v6132
        %6134 = vmatmul.bf16.gmra.mxu0 %v5632
        %v6135 = vpop.f32.mrf.mxu0
        %v6136 = vadd.f32 0.0, %v6135
        %v6137 = vpop.f32.mrf.mxu0
        %6138 = vdwg.mxu0
        %6139 = vmatpush.bf16.msra.mxu0 %v5989
        %6140 = vmatpush.bf16.msra.mxu0 %v5985
        %6141 = vmatpush.bf16.msra.mxu0 %v5981
        %6142 = vmatpush.bf16.msra.mxu0 %v5977
        %6143 = vmatpush.bf16.msra.mxu0 %v5973
        %6144 = vmatpush.bf16.msra.mxu0 %v5969
        %6145 = vmatpush.bf16.msra.mxu0 %v5965
        %6146 = vmatpush.bf16.msra.mxu0 %v5961
        %6147 = vmatmul.bf16.gmra.mxu0 %v5630
        %v6148 = vpop.f32.mrf.mxu0
        %v6149 = vadd.f32 %v6131, %v6148
        %v6150 = vpop.f32.mrf.mxu0
        %v6151 = vadd.f32 %v6133, %v6150
        %6152 = vmatmul.bf16.gmra.mxu0 %v5633
        %v6153 = vpop.f32.mrf.mxu0
        %v6154 = vadd.f32 %v6136, %v6153
        %v6155 = vpop.f32.mrf.mxu0
        %6156 = vdwg.mxu0
        %6157 = vmatpush.bf16.msra.mxu0 %v6021
        %6158 = vmatpush.bf16.msra.mxu0 %v6017
        %6159 = vmatpush.bf16.msra.mxu0 %v6013
        %6160 = vmatpush.bf16.msra.mxu0 %v6009
        %6161 = vmatpush.bf16.msra.mxu0 %v6005
        %6162 = vmatpush.bf16.msra.mxu0 %v6001
        %6163 = vmatpush.bf16.msra.mxu0 %v5997
        %6164 = vmatpush.bf16.msra.mxu0 %v5993
        %6165 = vmatmul.bf16.gmra.mxu0 %v5631
        %v6166 = vpop.f32.mrf.mxu0
        %v6167 = vadd.f32 %v6149, %v6166
        %v6168 = vpop.f32.mrf.mxu0
        %v6169 = vadd.f32 %v6151, %v6168
        %6170 = vmatmul.bf16.gmra.mxu0 %v5634
        %v6171 = vpop.f32.mrf.mxu0
        %v6172 = vadd.f32 %v6154, %v6171
        %v6173 = vpop.f32.mrf.mxu0
        %6174 = vdwg.mxu0
        %6175 = vmatpush.bf16.msra.mxu0 %v5958
        %6176 = vmatpush.bf16.msra.mxu0 %v5954
        %6177 = vmatpush.bf16.msra.mxu0 %v5950
        %6178 = vmatpush.bf16.msra.mxu0 %v5946
        %6179 = vmatpush.bf16.msra.mxu0 %v5942
        %6180 = vmatpush.bf16.msra.mxu0 %v5938
        %6181 = vmatpush.bf16.msra.mxu0 %v5934
        %6182 = vmatpush.bf16.msra.mxu0 %v5930
        %6183 = vmatmul.bf16.gmra.mxu0 %v5629
        %v6184 = vpop.f32.mrf.mxu0
        %v6185 = vadd.f32 0.0, %v6184
        %v6186 = vpop.f32.mrf.mxu0
        %v6187 = vadd.f32 0.0, %v6186
        %6188 = vmatmul.bf16.gmra.mxu0 %v5632
        %v6189 = vpop.f32.mrf.mxu0
        %v6190 = vadd.f32 0.0, %v6189
        %v6191 = vpop.f32.mrf.mxu0
        %6192 = vdwg.mxu0
        %6193 = vmatpush.bf16.msra.mxu0 %v5990
        %6194 = vmatpush.bf16.msra.mxu0 %v5986
        %6195 = vmatpush.bf16.msra.mxu0 %v5982
        %6196 = vmatpush.bf16.msra.mxu0 %v5978
        %6197 = vmatpush.bf16.msra.mxu0 %v5974
        %6198 = vmatpush.bf16.msra.mxu0 %v5970
        %6199 = vmatpush.bf16.msra.mxu0 %v5966
        %6200 = vmatpush.bf16.msra.mxu0 %v5962
        %6201 = vmatmul.bf16.gmra.mxu0 %v5630
        %v6202 = vpop.f32.mrf.mxu0
        %v6203 = vadd.f32 %v6185, %v6202
        %v6204 = vpop.f32.mrf.mxu0
        %v6205 = vadd.f32 %v6187, %v6204
        %6206 = vmatmul.bf16.gmra.mxu0 %v5633
        %v6207 = vpop.f32.mrf.mxu0
        %v6208 = vadd.f32 %v6190, %v6207
        %v6209 = vpop.f32.mrf.mxu0
        %6210 = vdwg.mxu0
        %6211 = vmatpush.bf16.msra.mxu0 %v6022
        %6212 = vmatpush.bf16.msra.mxu0 %v6018
        %6213 = vmatpush.bf16.msra.mxu0 %v6014
        %6214 = vmatpush.bf16.msra.mxu0 %v6010
        %6215 = vmatpush.bf16.msra.mxu0 %v6006
        %6216 = vmatpush.bf16.msra.mxu0 %v6002
        %6217 = vmatpush.bf16.msra.mxu0 %v5998
        %6218 = vmatpush.bf16.msra.mxu0 %v5994
        %6219 = vmatmul.bf16.gmra.mxu0 %v5631
        %v6220 = vpop.f32.mrf.mxu0
        %v6221 = vadd.f32 %v6203, %v6220
        %v6222 = vpop.f32.mrf.mxu0
        %v6223 = vadd.f32 %v6205, %v6222
        %6224 = vmatmul.bf16.gmra.mxu0 %v5634
        %v6225 = vpop.f32.mrf.mxu0
        %v6226 = vadd.f32 %v6208, %v6225
        %v6227 = vpop.f32.mrf.mxu0
        %6228 = vdwg.mxu0
        %6229 = vmatpush.bf16.msra.mxu0 %v5959
        %6230 = vmatpush.bf16.msra.mxu0 %v5955
        %6231 = vmatpush.bf16.msra.mxu0 %v5951
        %6232 = vmatpush.bf16.msra.mxu0 %v5947
        %6233 = vmatpush.bf16.msra.mxu0 %v5943
        %6234 = vmatpush.bf16.msra.mxu0 %v5939
        %6235 = vmatpush.bf16.msra.mxu0 %v5935
        %6236 = vmatpush.bf16.msra.mxu0 %v5931
        %6237 = vmatmul.bf16.gmra.mxu0 %v5629
        %v6238 = vpop.f32.mrf.mxu0
        %v6239 = vadd.f32 0.0, %v6238
        %v6240 = vpop.f32.mrf.mxu0
        %v6241 = vadd.f32 0.0, %v6240
        %6242 = vmatmul.bf16.gmra.mxu0 %v5632
        %v6243 = vpop.f32.mrf.mxu0
        %v6244 = vadd.f32 0.0, %v6243
        %v6245 = vpop.f32.mrf.mxu0
        %6246 = vdwg.mxu0
        %6247 = vmatpush.bf16.msra.mxu0 %v5991
        %6248 = vmatpush.bf16.msra.mxu0 %v5987
        %6249 = vmatpush.bf16.msra.mxu0 %v5983
        %6250 = vmatpush.bf16.msra.mxu0 %v5979
        %6251 = vmatpush.bf16.msra.mxu0 %v5975
        %6252 = vmatpush.bf16.msra.mxu0 %v5971
        %6253 = vmatpush.bf16.msra.mxu0 %v5967
        %6254 = vmatpush.bf16.msra.mxu0 %v5963
        %6255 = vmatmul.bf16.gmra.mxu0 %v5630
        %v6256 = vpop.f32.mrf.mxu0
        %v6257 = vadd.f32 %v6239, %v6256
        %v6258 = vpop.f32.mrf.mxu0
        %v6259 = vadd.f32 %v6241, %v6258
        %6260 = vmatmul.bf16.gmra.mxu0 %v5633
        %v6261 = vpop.f32.mrf.mxu0
        %v6262 = vadd.f32 %v6244, %v6261
        %v6263 = vpop.f32.mrf.mxu0
        %6264 = vdwg.mxu0
        %6265 = vmatpush.bf16.msra.mxu0 %v6023
        %6266 = vmatpush.bf16.msra.mxu0 %v6019
        %6267 = vmatpush.bf16.msra.mxu0 %v6015
        %6268 = vmatpush.bf16.msra.mxu0 %v6011
        %6269 = vmatpush.bf16.msra.mxu0 %v6007
        %6270 = vmatpush.bf16.msra.mxu0 %v6003
        %6271 = vmatpush.bf16.msra.mxu0 %v5999
        %6272 = vmatpush.bf16.msra.mxu0 %v5995
        %6273 = vmatmul.bf16.gmra.mxu0 %v5631
        %v6274 = vpop.f32.mrf.mxu0
        %v6275 = vadd.f32 %v6257, %v6274
        %v6276 = vpop.f32.mrf.mxu0
        %v6277 = vadd.f32 %v6259, %v6276
        %6278 = vmatmul.bf16.gmra.mxu0 %v5634
        %v6279 = vpop.f32.mrf.mxu0
        %v6280 = vadd.f32 %v6262, %v6279
        %v6281 = vpop.f32.mrf.mxu0
        %6282 = vdwg.mxu0
        %6283 = vmatpush.bf16.msra.mxu0 %v5960
        %6284 = vmatpush.bf16.msra.mxu0 %v5956
        %6285 = vmatpush.bf16.msra.mxu0 %v5952
        %6286 = vmatpush.bf16.msra.mxu0 %v5948
        %6287 = vmatpush.bf16.msra.mxu0 %v5944
        %6288 = vmatpush.bf16.msra.mxu0 %v5940
        %6289 = vmatpush.bf16.msra.mxu0 %v5936
        %6290 = vmatpush.bf16.msra.mxu0 %v5932
        %6291 = vmatmul.bf16.gmra.mxu0 %v5629
        %v6292 = vpop.f32.mrf.mxu0
        %v6293 = vadd.f32 0.0, %v6292
        %v6294 = vpop.f32.mrf.mxu0
        %v6295 = vadd.f32 0.0, %v6294
        %6296 = vmatmul.bf16.gmra.mxu0 %v5632
        %v6297 = vpop.f32.mrf.mxu0
        %v6298 = vadd.f32 0.0, %v6297
        %v6299 = vpop.f32.mrf.mxu0
        %6300 = vdwg.mxu0
        %6301 = vmatpush.bf16.msra.mxu0 %v5992
        %6302 = vmatpush.bf16.msra.mxu0 %v5988
        %6303 = vmatpush.bf16.msra.mxu0 %v5984
        %6304 = vmatpush.bf16.msra.mxu0 %v5980
        %6305 = vmatpush.bf16.msra.mxu0 %v5976
        %6306 = vmatpush.bf16.msra.mxu0 %v5972
        %6307 = vmatpush.bf16.msra.mxu0 %v5968
        %6308 = vmatpush.bf16.msra.mxu0 %v5964
        %6309 = vmatmul.bf16.gmra.mxu0 %v5630
        %v6310 = vpop.f32.mrf.mxu0
        %v6311 = vadd.f32 %v6293, %v6310
        %v6312 = vpop.f32.mrf.mxu0
        %v6313 = vadd.f32 %v6295, %v6312
        %6314 = vmatmul.bf16.gmra.mxu0 %v5633
        %v6315 = vpop.f32.mrf.mxu0
        %v6316 = vadd.f32 %v6298, %v6315
        %v6317 = vpop.f32.mrf.mxu0
        %6318 = vdwg.mxu0
        %6319 = vmatpush.bf16.msra.mxu0 %v6024
        %6320 = vmatpush.bf16.msra.mxu0 %v6020
        %6321 = vmatpush.bf16.msra.mxu0 %v6016
        %6322 = vmatpush.bf16.msra.mxu0 %v6012
        %6323 = vmatpush.bf16.msra.mxu0 %v6008
        %6324 = vmatpush.bf16.msra.mxu0 %v6004
        %6325 = vmatpush.bf16.msra.mxu0 %v6000
        %6326 = vmatpush.bf16.msra.mxu0 %v5996
        %6327 = vmatmul.bf16.gmra.mxu0 %v5631
        %v6328 = vpop.f32.mrf.mxu0
        %v6329 = vadd.f32 %v6311, %v6328
        %v6330 = vpop.f32.mrf.mxu0
        %v6331 = vadd.f32 %v6313, %v6330
        %6332 = vmatmul.bf16.gmra.mxu0 %v5634
        %v6333 = vpop.f32.mrf.mxu0
        %v6334 = vadd.f32 %v6316, %v6333
        %v6335 = vpop.f32.mrf.mxu0
        %6336 = vdwg.mxu0
        %v6337 = vadd.f32 %v5520, %v6167
        %v6338 = vadd.f32 %v5521, %v6221
        %v6339 = vadd.f32 %v5522, %v6275
        %v6340 = vadd.f32 %v5523, %v6329
        %v6341 = vadd.f32 %v5524, %v6169
        %v6342 = vadd.f32 %v5525, %v6223
        %v6343 = vadd.f32 %v5526, %v6277
        %v6344 = vadd.f32 %v5527, %v6331
        %v6345 = vadd.f32 %v5528, %v6172
        %v6346 = vadd.f32 %v5529, %v6226
        %v6347 = vadd.f32 %v5530, %v6280
        %v6348 = vadd.f32 %v5531, %v6334
        %v6349 = vld [vmem:[#allocation2 + $0xc] sm:$0xcc]
        %v6350 = vld [vmem:[#allocation2 + $0x14] sm:$0xc]
        %v6351 = vld [vmem:[#allocation2 + $0x18] sm:$0xff]
        %v6352 = vld [vmem:[#allocation2 + $0x20] sm:$0xf]
        %v6353 = vld [vmem:[#allocation2 + $0x24] sm:$0xff]
        %v6354 = vld [vmem:[#allocation2 + $0x2c] sm:$0xf]
        %v6355 = vld [vmem:[#allocation2 + $0x30] sm:$0x11]
        %v6356 = vld [vmem:[#allocation2 + $0x38] sm:$0x1]
        %s6357 = scalar_lea.vmem %s3, 4608
        %v6358 = vld [vmem:[%s6357] sm:$0xff]
        %v6359 = vld [vmem:[%s6357 + $0x8] sm:$0xff]
        %v6360 = vld [vmem:[%s6357 + $0x10] sm:$0xff]
        %v6361 = vld [vmem:[%s6357 + $0x18] sm:$0xff]
        %v6362 = vld [vmem:[%s6357 + $0x20] sm:$0xff]
        %v6363 = vld [vmem:[%s6357 + $0x28] sm:$0xff]
        %v6364 = vld [vmem:[%s6357 + $0x30] sm:$0xff]
        %v6365 = vld [vmem:[%s6357 + $0x38] sm:$0xff]
        %v6366 = vld [vmem:[%s6357 + $0x40] sm:$0xff]
        %v6367 = vld [vmem:[%s6357 + $0x48] sm:$0xff]
        %v6368 = vld [vmem:[%s6357 + $0x50] sm:$0xff]
        %v6369 = vld [vmem:[%s6357 + $0x58] sm:$0xff]
        %v6370 = vld [vmem:[%s6357 + $0x60] sm:$0xff]
        %v6371 = vld [vmem:[%s6357 + $0x68] sm:$0xff]
        %v6372 = vld [vmem:[%s6357 + $0x70] sm:$0xff]
        %v6373 = vld [vmem:[%s6357 + $0x78] sm:$0xff]
        %v6374 = vld [vmem:[%s6357 + $0x80] sm:$0xff]
        %v6375 = vld [vmem:[%s6357 + $0x88] sm:$0xff]
        %v6376 = vld [vmem:[%s6357 + $0x90] sm:$0xff]
        %v6377 = vld [vmem:[%s6357 + $0x98] sm:$0xff]
        %v6378 = vld [vmem:[%s6357 + $0xa0] sm:$0xff]
        %v6379 = vld [vmem:[%s6357 + $0xa8] sm:$0xff]
        %v6380 = vld [vmem:[%s6357 + $0xb0] sm:$0xff]
        %v6381 = vld [vmem:[%s6357 + $0xb8] sm:$0xff]
        %v6382 = vld [vmem:[%s6357 + $0xc0] sm:$0xff]
        %v6383 = vld [vmem:[%s6357 + $0xc8] sm:$0xff]
        %v6384 = vld [vmem:[%s6357 + $0xd0] sm:$0xff]
        %v6385 = vld [vmem:[%s6357 + $0xd8] sm:$0xff]
        %v6386 = vld [vmem:[%s6357 + $0xe0] sm:$0xff]
        %v6387 = vld [vmem:[%s6357 + $0xe8] sm:$0xff]
        %v6388 = vld [vmem:[%s6357 + $0xf0] sm:$0xff]
        %v6389 = vld [vmem:[%s6357 + $0xf8] sm:$0xff]
        %v6390 = vld [vmem:[%s6357 + $0x100] sm:$0xff]
        %v6391 = vld [vmem:[%s6357 + $0x108] sm:$0xff]
        %v6392 = vld [vmem:[%s6357 + $0x110] sm:$0xff]
        %v6393 = vld [vmem:[%s6357 + $0x118] sm:$0xff]
        %v6394 = vld [vmem:[%s6357 + $0x120] sm:$0xff]
        %v6395 = vld [vmem:[%s6357 + $0x128] sm:$0xff]
        %v6396 = vld [vmem:[%s6357 + $0x130] sm:$0xff]
        %v6397 = vld [vmem:[%s6357 + $0x138] sm:$0xff]
        %v6398 = vld [vmem:[%s6357 + $0x140] sm:$0xff]
        %v6399 = vld [vmem:[%s6357 + $0x148] sm:$0xff]
        %v6400 = vld [vmem:[%s6357 + $0x150] sm:$0xff]
        %v6401 = vld [vmem:[%s6357 + $0x158] sm:$0xff]
        %v6402 = vld [vmem:[%s6357 + $0x160] sm:$0xff]
        %v6403 = vld [vmem:[%s6357 + $0x168] sm:$0xff]
        %v6404 = vld [vmem:[%s6357 + $0x170] sm:$0xff]
        %v6405 = vld [vmem:[%s6357 + $0x178] sm:$0xff]
        %v6406 = vld [vmem:[%s6357 + $0x180] sm:$0xff]
        %v6407 = vld [vmem:[%s6357 + $0x188] sm:$0xff]
        %v6408 = vld [vmem:[%s6357 + $0x190] sm:$0xff]
        %v6409 = vld [vmem:[%s6357 + $0x198] sm:$0xff]
        %v6410 = vld [vmem:[%s6357 + $0x1a0] sm:$0xff]
        %v6411 = vld [vmem:[%s6357 + $0x1a8] sm:$0xff]
        %v6412 = vld [vmem:[%s6357 + $0x1b0] sm:$0xff]
        %v6413 = vld [vmem:[%s6357 + $0x1b8] sm:$0xff]
        %v6414 = vld [vmem:[%s6357 + $0x1c0] sm:$0xff]
        %v6415 = vld [vmem:[%s6357 + $0x1c8] sm:$0xff]
        %v6416 = vld [vmem:[%s6357 + $0x1d0] sm:$0xff]
        %v6417 = vld [vmem:[%s6357 + $0x1d8] sm:$0xff]
        %v6418 = vld [vmem:[%s6357 + $0x1e0] sm:$0xff]
        %v6419 = vld [vmem:[%s6357 + $0x1e8] sm:$0xff]
        %v6420 = vld [vmem:[%s6357 + $0x1f0] sm:$0xff]
        %v6421 = vld [vmem:[%s6357 + $0x1f8] sm:$0xff]
        %v6422 = vld [vmem:[%s6357 + $0x200] sm:$0xff]
        %v6423 = vld [vmem:[%s6357 + $0x208] sm:$0xff]
        %v6424 = vld [vmem:[%s6357 + $0x210] sm:$0xff]
        %v6425 = vld [vmem:[%s6357 + $0x218] sm:$0xff]
        %v6426 = vld [vmem:[%s6357 + $0x220] sm:$0xff]
        %v6427 = vld [vmem:[%s6357 + $0x228] sm:$0xff]
        %v6428 = vld [vmem:[%s6357 + $0x230] sm:$0xff]
        %v6429 = vld [vmem:[%s6357 + $0x238] sm:$0xff]
        %v6430 = vld [vmem:[%s6357 + $0x240] sm:$0xff]
        %v6431 = vld [vmem:[%s6357 + $0x248] sm:$0xff]
        %v6432 = vld [vmem:[%s6357 + $0x250] sm:$0xff]
        %v6433 = vld [vmem:[%s6357 + $0x258] sm:$0xff]
        %v6434 = vld [vmem:[%s6357 + $0x260] sm:$0xff]
        %v6435 = vld [vmem:[%s6357 + $0x268] sm:$0xff]
        %v6436 = vld [vmem:[%s6357 + $0x270] sm:$0xff]
        %v6437 = vld [vmem:[%s6357 + $0x278] sm:$0xff]
        %v6438 = vld [vmem:[%s6357 + $0x280] sm:$0xff]
        %v6439 = vld [vmem:[%s6357 + $0x288] sm:$0xff]
        %v6440 = vld [vmem:[%s6357 + $0x290] sm:$0xff]
        %v6441 = vld [vmem:[%s6357 + $0x298] sm:$0xff]
        %v6442 = vld [vmem:[%s6357 + $0x2a0] sm:$0xff]
        %v6443 = vld [vmem:[%s6357 + $0x2a8] sm:$0xff]
        %v6444 = vld [vmem:[%s6357 + $0x2b0] sm:$0xff]
        %v6445 = vld [vmem:[%s6357 + $0x2b8] sm:$0xff]
        %v6446 = vld [vmem:[%s6357 + $0x2c0] sm:$0xff]
        %v6447 = vld [vmem:[%s6357 + $0x2c8] sm:$0xff]
        %v6448 = vld [vmem:[%s6357 + $0x2d0] sm:$0xff]
        %v6449 = vld [vmem:[%s6357 + $0x2d8] sm:$0xff]
        %v6450 = vld [vmem:[%s6357 + $0x2e0] sm:$0xff]
        %v6451 = vld [vmem:[%s6357 + $0x2e8] sm:$0xff]
        %v6452 = vld [vmem:[%s6357 + $0x2f0] sm:$0xff]
        %v6453 = vld [vmem:[%s6357 + $0x2f8] sm:$0xff]
        %v6462 = vunpack.c.l.b16 %v6349
        %v6463 = vunpack.c.h.b16 %v6349
        %v6464 = vunpack.c.l.b16 %v6350
        %v6465 = vunpack.c.l.b16 %v6351
        %v6466 = vunpack.c.h.b16 %v6351
        %v6467 = vunpack.c.l.b16 %v6352
        %v6468 = vunpack.c.l.b16 %v6353
        %v6469 = vunpack.c.h.b16 %v6353
        %v6470 = vunpack.c.l.b16 %v6354
        %v6471 = vunpack.c.l.b16 %v6355
        %v6472 = vunpack.c.h.b16 %v6355
        %v6473 = vunpack.c.l.b16 %v6356
        %v6474 = vpack.c.b16 %v6465, %v6462
        %v6475 = vpack.c.b16 %v6466, %v6463
        %v6476 = vpack.c.b16 %v6467, %v6464
        %v6477 = vpack.c.b16 %v6471, %v6468
        %v6478 = vpack.c.b16 %v6472, %v6469
        %v6479 = vpack.c.b16 %v6473, %v6470
        %vm6480 = vcmask 1045504
        %v6481 = vrot.slane %v6474, 2
        %v6482 = vrot.slane %v6477, 2
        %v6483 = vsel %vm6480, %v6481, %v6482
        %v6484 = vrot.slane %v6475, 2
        %v6485 = vrot.slane %v6478, 2
        %v6486 = vsel %vm6480, %v6484, %v6485
        %v6487 = vrot.slane %v6476, 2
        %v6488 = vrot.slane %v6479, 2
        %v6489 = vsel %vm6480, %v6487, %v6488
        %v6592 = vunpack.c.l.b16 %v6358
        %v6593 = vunpack.c.h.b16 %v6358
        %v6594 = vunpack.c.l.b16 %v6359
        %v6595 = vunpack.c.h.b16 %v6359
        %v6596 = vunpack.c.l.b16 %v6360
        %v6597 = vunpack.c.h.b16 %v6360
        %v6598 = vunpack.c.l.b16 %v6361
        %v6599 = vunpack.c.h.b16 %v6361
        %v6600 = vunpack.c.l.b16 %v6362
        %v6601 = vunpack.c.h.b16 %v6362
        %v6602 = vunpack.c.l.b16 %v6363
        %v6603 = vunpack.c.h.b16 %v6363
        %v6604 = vunpack.c.l.b16 %v6364
        %v6605 = vunpack.c.h.b16 %v6364
        %v6606 = vunpack.c.l.b16 %v6365
        %v6607 = vunpack.c.h.b16 %v6365
        %v6608 = vunpack.c.l.b16 %v6366
        %v6609 = vunpack.c.h.b16 %v6366
        %v6610 = vunpack.c.l.b16 %v6367
        %v6611 = vunpack.c.h.b16 %v6367
        %v6612 = vunpack.c.l.b16 %v6368
        %v6613 = vunpack.c.h.b16 %v6368
        %v6614 = vunpack.c.l.b16 %v6369
        %v6615 = vunpack.c.h.b16 %v6369
        %v6616 = vunpack.c.l.b16 %v6370
        %v6617 = vunpack.c.h.b16 %v6370
        %v6618 = vunpack.c.l.b16 %v6371
        %v6619 = vunpack.c.h.b16 %v6371
        %v6620 = vunpack.c.l.b16 %v6372
        %v6621 = vunpack.c.h.b16 %v6372
        %v6622 = vunpack.c.l.b16 %v6373
        %v6623 = vunpack.c.h.b16 %v6373
        %v6624 = vunpack.c.l.b16 %v6374
        %v6625 = vunpack.c.h.b16 %v6374
        %v6626 = vunpack.c.l.b16 %v6375
        %v6627 = vunpack.c.h.b16 %v6375
        %v6628 = vunpack.c.l.b16 %v6376
        %v6629 = vunpack.c.h.b16 %v6376
        %v6630 = vunpack.c.l.b16 %v6377
        %v6631 = vunpack.c.h.b16 %v6377
        %v6632 = vunpack.c.l.b16 %v6378
        %v6633 = vunpack.c.h.b16 %v6378
        %v6634 = vunpack.c.l.b16 %v6379
        %v6635 = vunpack.c.h.b16 %v6379
        %v6636 = vunpack.c.l.b16 %v6380
        %v6637 = vunpack.c.h.b16 %v6380
        %v6638 = vunpack.c.l.b16 %v6381
        %v6639 = vunpack.c.h.b16 %v6381
        %v6640 = vunpack.c.l.b16 %v6382
        %v6641 = vunpack.c.h.b16 %v6382
        %v6642 = vunpack.c.l.b16 %v6383
        %v6643 = vunpack.c.h.b16 %v6383
        %v6644 = vunpack.c.l.b16 %v6384
        %v6645 = vunpack.c.h.b16 %v6384
        %v6646 = vunpack.c.l.b16 %v6385
        %v6647 = vunpack.c.h.b16 %v6385
        %v6648 = vunpack.c.l.b16 %v6386
        %v6649 = vunpack.c.h.b16 %v6386
        %v6650 = vunpack.c.l.b16 %v6387
        %v6651 = vunpack.c.h.b16 %v6387
        %v6652 = vunpack.c.l.b16 %v6388
        %v6653 = vunpack.c.h.b16 %v6388
        %v6654 = vunpack.c.l.b16 %v6389
        %v6655 = vunpack.c.h.b16 %v6389
        %v6656 = vunpack.c.l.b16 %v6390
        %v6657 = vunpack.c.h.b16 %v6390
        %v6658 = vunpack.c.l.b16 %v6391
        %v6659 = vunpack.c.h.b16 %v6391
        %v6660 = vunpack.c.l.b16 %v6392
        %v6661 = vunpack.c.h.b16 %v6392
        %v6662 = vunpack.c.l.b16 %v6393
        %v6663 = vunpack.c.h.b16 %v6393
        %v6664 = vunpack.c.l.b16 %v6394
        %v6665 = vunpack.c.h.b16 %v6394
        %v6666 = vunpack.c.l.b16 %v6395
        %v6667 = vunpack.c.h.b16 %v6395
        %v6668 = vunpack.c.l.b16 %v6396
        %v6669 = vunpack.c.h.b16 %v6396
        %v6670 = vunpack.c.l.b16 %v6397
        %v6671 = vunpack.c.h.b16 %v6397
        %v6672 = vunpack.c.l.b16 %v6398
        %v6673 = vunpack.c.h.b16 %v6398
        %v6674 = vunpack.c.l.b16 %v6399
        %v6675 = vunpack.c.h.b16 %v6399
        %v6676 = vunpack.c.l.b16 %v6400
        %v6677 = vunpack.c.h.b16 %v6400
        %v6678 = vunpack.c.l.b16 %v6401
        %v6679 = vunpack.c.h.b16 %v6401
        %v6680 = vunpack.c.l.b16 %v6402
        %v6681 = vunpack.c.h.b16 %v6402
        %v6682 = vunpack.c.l.b16 %v6403
        %v6683 = vunpack.c.h.b16 %v6403
        %v6684 = vunpack.c.l.b16 %v6404
        %v6685 = vunpack.c.h.b16 %v6404
        %v6686 = vunpack.c.l.b16 %v6405
        %v6687 = vunpack.c.h.b16 %v6405
        %v6688 = vunpack.c.l.b16 %v6406
        %v6689 = vunpack.c.h.b16 %v6406
        %v6690 = vunpack.c.l.b16 %v6407
        %v6691 = vunpack.c.h.b16 %v6407
        %v6692 = vunpack.c.l.b16 %v6408
        %v6693 = vunpack.c.h.b16 %v6408
        %v6694 = vunpack.c.l.b16 %v6409
        %v6695 = vunpack.c.h.b16 %v6409
        %v6696 = vunpack.c.l.b16 %v6410
        %v6697 = vunpack.c.h.b16 %v6410
        %v6698 = vunpack.c.l.b16 %v6411
        %v6699 = vunpack.c.h.b16 %v6411
        %v6700 = vunpack.c.l.b16 %v6412
        %v6701 = vunpack.c.h.b16 %v6412
        %v6702 = vunpack.c.l.b16 %v6413
        %v6703 = vunpack.c.h.b16 %v6413
        %v6704 = vunpack.c.l.b16 %v6414
        %v6705 = vunpack.c.h.b16 %v6414
        %v6706 = vunpack.c.l.b16 %v6415
        %v6707 = vunpack.c.h.b16 %v6415
        %v6708 = vunpack.c.l.b16 %v6416
        %v6709 = vunpack.c.h.b16 %v6416
        %v6710 = vunpack.c.l.b16 %v6417
        %v6711 = vunpack.c.h.b16 %v6417
        %v6712 = vunpack.c.l.b16 %v6418
        %v6713 = vunpack.c.h.b16 %v6418
        %v6714 = vunpack.c.l.b16 %v6419
        %v6715 = vunpack.c.h.b16 %v6419
        %v6716 = vunpack.c.l.b16 %v6420
        %v6717 = vunpack.c.h.b16 %v6420
        %v6718 = vunpack.c.l.b16 %v6421
        %v6719 = vunpack.c.h.b16 %v6421
        %v6720 = vunpack.c.l.b16 %v6422
        %v6721 = vunpack.c.h.b16 %v6422
        %v6722 = vunpack.c.l.b16 %v6423
        %v6723 = vunpack.c.h.b16 %v6423
        %v6724 = vunpack.c.l.b16 %v6424
        %v6725 = vunpack.c.h.b16 %v6424
        %v6726 = vunpack.c.l.b16 %v6425
        %v6727 = vunpack.c.h.b16 %v6425
        %v6728 = vunpack.c.l.b16 %v6426
        %v6729 = vunpack.c.h.b16 %v6426
        %v6730 = vunpack.c.l.b16 %v6427
        %v6731 = vunpack.c.h.b16 %v6427
        %v6732 = vunpack.c.l.b16 %v6428
        %v6733 = vunpack.c.h.b16 %v6428
        %v6734 = vunpack.c.l.b16 %v6429
        %v6735 = vunpack.c.h.b16 %v6429
        %v6736 = vunpack.c.l.b16 %v6430
        %v6737 = vunpack.c.h.b16 %v6430
        %v6738 = vunpack.c.l.b16 %v6431
        %v6739 = vunpack.c.h.b16 %v6431
        %v6740 = vunpack.c.l.b16 %v6432
        %v6741 = vunpack.c.h.b16 %v6432
        %v6742 = vunpack.c.l.b16 %v6433
        %v6743 = vunpack.c.h.b16 %v6433
        %v6744 = vunpack.c.l.b16 %v6434
        %v6745 = vunpack.c.h.b16 %v6434
        %v6746 = vunpack.c.l.b16 %v6435
        %v6747 = vunpack.c.h.b16 %v6435
        %v6748 = vunpack.c.l.b16 %v6436
        %v6749 = vunpack.c.h.b16 %v6436
        %v6750 = vunpack.c.l.b16 %v6437
        %v6751 = vunpack.c.h.b16 %v6437
        %v6752 = vunpack.c.l.b16 %v6438
        %v6753 = vunpack.c.h.b16 %v6438
        %v6754 = vunpack.c.l.b16 %v6439
        %v6755 = vunpack.c.h.b16 %v6439
        %v6756 = vunpack.c.l.b16 %v6440
        %v6757 = vunpack.c.h.b16 %v6440
        %v6758 = vunpack.c.l.b16 %v6441
        %v6759 = vunpack.c.h.b16 %v6441
        %v6760 = vunpack.c.l.b16 %v6442
        %v6761 = vunpack.c.h.b16 %v6442
        %v6762 = vunpack.c.l.b16 %v6443
        %v6763 = vunpack.c.h.b16 %v6443
        %v6764 = vunpack.c.l.b16 %v6444
        %v6765 = vunpack.c.h.b16 %v6444
        %v6766 = vunpack.c.l.b16 %v6445
        %v6767 = vunpack.c.h.b16 %v6445
        %v6768 = vunpack.c.l.b16 %v6446
        %v6769 = vunpack.c.h.b16 %v6446
        %v6770 = vunpack.c.l.b16 %v6447
        %v6771 = vunpack.c.h.b16 %v6447
        %v6772 = vunpack.c.l.b16 %v6448
        %v6773 = vunpack.c.h.b16 %v6448
        %v6774 = vunpack.c.l.b16 %v6449
        %v6775 = vunpack.c.h.b16 %v6449
        %v6776 = vunpack.c.l.b16 %v6450
        %v6777 = vunpack.c.h.b16 %v6450
        %v6778 = vunpack.c.l.b16 %v6451
        %v6779 = vunpack.c.h.b16 %v6451
        %v6780 = vunpack.c.l.b16 %v6452
        %v6781 = vunpack.c.h.b16 %v6452
        %v6782 = vunpack.c.l.b16 %v6453
        %v6783 = vunpack.c.h.b16 %v6453
        %v6784 = vpack.c.b16 %v6596, %v6592
        %v6785 = vpack.c.b16 %v6597, %v6593
        %v6786 = vpack.c.b16 %v6598, %v6594
        %v6787 = vpack.c.b16 %v6599, %v6595
        %v6788 = vpack.c.b16 %v6604, %v6600
        %v6789 = vpack.c.b16 %v6605, %v6601
        %v6790 = vpack.c.b16 %v6606, %v6602
        %v6791 = vpack.c.b16 %v6607, %v6603
        %v6792 = vpack.c.b16 %v6612, %v6608
        %v6793 = vpack.c.b16 %v6613, %v6609
        %v6794 = vpack.c.b16 %v6614, %v6610
        %v6795 = vpack.c.b16 %v6615, %v6611
        %v6796 = vpack.c.b16 %v6620, %v6616
        %v6797 = vpack.c.b16 %v6621, %v6617
        %v6798 = vpack.c.b16 %v6622, %v6618
        %v6799 = vpack.c.b16 %v6623, %v6619
        %v6800 = vpack.c.b16 %v6628, %v6624
        %v6801 = vpack.c.b16 %v6629, %v6625
        %v6802 = vpack.c.b16 %v6630, %v6626
        %v6803 = vpack.c.b16 %v6631, %v6627
        %v6804 = vpack.c.b16 %v6636, %v6632
        %v6805 = vpack.c.b16 %v6637, %v6633
        %v6806 = vpack.c.b16 %v6638, %v6634
        %v6807 = vpack.c.b16 %v6639, %v6635
        %v6808 = vpack.c.b16 %v6644, %v6640
        %v6809 = vpack.c.b16 %v6645, %v6641
        %v6810 = vpack.c.b16 %v6646, %v6642
        %v6811 = vpack.c.b16 %v6647, %v6643
        %v6812 = vpack.c.b16 %v6652, %v6648
        %v6813 = vpack.c.b16 %v6653, %v6649
        %v6814 = vpack.c.b16 %v6654, %v6650
        %v6815 = vpack.c.b16 %v6655, %v6651
        %v6816 = vpack.c.b16 %v6660, %v6656
        %v6817 = vpack.c.b16 %v6661, %v6657
        %v6818 = vpack.c.b16 %v6662, %v6658
        %v6819 = vpack.c.b16 %v6663, %v6659
        %v6820 = vpack.c.b16 %v6668, %v6664
        %v6821 = vpack.c.b16 %v6669, %v6665
        %v6822 = vpack.c.b16 %v6670, %v6666
        %v6823 = vpack.c.b16 %v6671, %v6667
        %v6824 = vpack.c.b16 %v6676, %v6672
        %v6825 = vpack.c.b16 %v6677, %v6673
        %v6826 = vpack.c.b16 %v6678, %v6674
        %v6827 = vpack.c.b16 %v6679, %v6675
        %v6828 = vpack.c.b16 %v6684, %v6680
        %v6829 = vpack.c.b16 %v6685, %v6681
        %v6830 = vpack.c.b16 %v6686, %v6682
        %v6831 = vpack.c.b16 %v6687, %v6683
        %v6832 = vpack.c.b16 %v6692, %v6688
        %v6833 = vpack.c.b16 %v6693, %v6689
        %v6834 = vpack.c.b16 %v6694, %v6690
        %v6835 = vpack.c.b16 %v6695, %v6691
        %v6836 = vpack.c.b16 %v6700, %v6696
        %v6837 = vpack.c.b16 %v6701, %v6697
        %v6838 = vpack.c.b16 %v6702, %v6698
        %v6839 = vpack.c.b16 %v6703, %v6699
        %v6840 = vpack.c.b16 %v6708, %v6704
        %v6841 = vpack.c.b16 %v6709, %v6705
        %v6842 = vpack.c.b16 %v6710, %v6706
        %v6843 = vpack.c.b16 %v6711, %v6707
        %v6844 = vpack.c.b16 %v6716, %v6712
        %v6845 = vpack.c.b16 %v6717, %v6713
        %v6846 = vpack.c.b16 %v6718, %v6714
        %v6847 = vpack.c.b16 %v6719, %v6715
        %v6848 = vpack.c.b16 %v6724, %v6720
        %v6849 = vpack.c.b16 %v6725, %v6721
        %v6850 = vpack.c.b16 %v6726, %v6722
        %v6851 = vpack.c.b16 %v6727, %v6723
        %v6852 = vpack.c.b16 %v6732, %v6728
        %v6853 = vpack.c.b16 %v6733, %v6729
        %v6854 = vpack.c.b16 %v6734, %v6730
        %v6855 = vpack.c.b16 %v6735, %v6731
        %v6856 = vpack.c.b16 %v6740, %v6736
        %v6857 = vpack.c.b16 %v6741, %v6737
        %v6858 = vpack.c.b16 %v6742, %v6738
        %v6859 = vpack.c.b16 %v6743, %v6739
        %v6860 = vpack.c.b16 %v6748, %v6744
        %v6861 = vpack.c.b16 %v6749, %v6745
        %v6862 = vpack.c.b16 %v6750, %v6746
        %v6863 = vpack.c.b16 %v6751, %v6747
        %v6864 = vpack.c.b16 %v6756, %v6752
        %v6865 = vpack.c.b16 %v6757, %v6753
        %v6866 = vpack.c.b16 %v6758, %v6754
        %v6867 = vpack.c.b16 %v6759, %v6755
        %v6868 = vpack.c.b16 %v6764, %v6760
        %v6869 = vpack.c.b16 %v6765, %v6761
        %v6870 = vpack.c.b16 %v6766, %v6762
        %v6871 = vpack.c.b16 %v6767, %v6763
        %v6872 = vpack.c.b16 %v6772, %v6768
        %v6873 = vpack.c.b16 %v6773, %v6769
        %v6874 = vpack.c.b16 %v6774, %v6770
        %v6875 = vpack.c.b16 %v6775, %v6771
        %v6876 = vpack.c.b16 %v6780, %v6776
        %v6877 = vpack.c.b16 %v6781, %v6777
        %v6878 = vpack.c.b16 %v6782, %v6778
        %v6879 = vpack.c.b16 %v6783, %v6779
        %6976 = vmatpush.bf16.msra.mxu0 %v6812
        %6977 = vmatpush.bf16.msra.mxu0 %v6808
        %6978 = vmatpush.bf16.msra.mxu0 %v6804
        %6979 = vmatpush.bf16.msra.mxu0 %v6800
        %6980 = vmatpush.bf16.msra.mxu0 %v6796
        %6981 = vmatpush.bf16.msra.mxu0 %v6792
        %6982 = vmatpush.bf16.msra.mxu0 %v6788
        %6983 = vmatpush.bf16.msra.mxu0 %v6784
        %6984 = vmatmul.bf16.gmra.mxu0 %v6483
        %v6985 = vpop.f32.mrf.mxu0
        %v6986 = vadd.f32 0.0, %v6985
        %v6987 = vpop.f32.mrf.mxu0
        %v6988 = vadd.f32 0.0, %v6987
        %6989 = vmatmul.bf16.gmra.mxu0 %v6482
        %v6990 = vpop.f32.mrf.mxu0
        %v6991 = vadd.f32 0.0, %v6990
        %v6992 = vpop.f32.mrf.mxu0
        %6993 = vdwg.mxu0
        %6994 = vmatpush.bf16.msra.mxu0 %v6844
        %6995 = vmatpush.bf16.msra.mxu0 %v6840
        %6996 = vmatpush.bf16.msra.mxu0 %v6836
        %6997 = vmatpush.bf16.msra.mxu0 %v6832
        %6998 = vmatpush.bf16.msra.mxu0 %v6828
        %6999 = vmatpush.bf16.msra.mxu0 %v6824
        %7000 = vmatpush.bf16.msra.mxu0 %v6820
        %7001 = vmatpush.bf16.msra.mxu0 %v6816
        %7002 = vmatmul.bf16.gmra.mxu0 %v6486
        %v7003 = vpop.f32.mrf.mxu0
        %v7004 = vadd.f32 %v6986, %v7003
        %v7005 = vpop.f32.mrf.mxu0
        %v7006 = vadd.f32 %v6988, %v7005
        %7007 = vmatmul.bf16.gmra.mxu0 %v6485
        %v7008 = vpop.f32.mrf.mxu0
        %v7009 = vadd.f32 %v6991, %v7008
        %v7010 = vpop.f32.mrf.mxu0
        %7011 = vdwg.mxu0
        %7012 = vmatpush.bf16.msra.mxu0 %v6876
        %7013 = vmatpush.bf16.msra.mxu0 %v6872
        %7014 = vmatpush.bf16.msra.mxu0 %v6868
        %7015 = vmatpush.bf16.msra.mxu0 %v6864
        %7016 = vmatpush.bf16.msra.mxu0 %v6860
        %7017 = vmatpush.bf16.msra.mxu0 %v6856
        %7018 = vmatpush.bf16.msra.mxu0 %v6852
        %7019 = vmatpush.bf16.msra.mxu0 %v6848
        %7020 = vmatmul.bf16.gmra.mxu0 %v6489
        %v7021 = vpop.f32.mrf.mxu0
        %v7022 = vadd.f32 %v7004, %v7021
        %v7023 = vpop.f32.mrf.mxu0
        %v7024 = vadd.f32 %v7006, %v7023
        %7025 = vmatmul.bf16.gmra.mxu0 %v6488
        %v7026 = vpop.f32.mrf.mxu0
        %v7027 = vadd.f32 %v7009, %v7026
        %v7028 = vpop.f32.mrf.mxu0
        %7029 = vdwg.mxu0
        %7030 = vmatpush.bf16.msra.mxu0 %v6813
        %7031 = vmatpush.bf16.msra.mxu0 %v6809
        %7032 = vmatpush.bf16.msra.mxu0 %v6805
        %7033 = vmatpush.bf16.msra.mxu0 %v6801
        %7034 = vmatpush.bf16.msra.mxu0 %v6797
        %7035 = vmatpush.bf16.msra.mxu0 %v6793
        %7036 = vmatpush.bf16.msra.mxu0 %v6789
        %7037 = vmatpush.bf16.msra.mxu0 %v6785
        %7038 = vmatmul.bf16.gmra.mxu0 %v6483
        %v7039 = vpop.f32.mrf.mxu0
        %v7040 = vadd.f32 0.0, %v7039
        %v7041 = vpop.f32.mrf.mxu0
        %v7042 = vadd.f32 0.0, %v7041
        %7043 = vmatmul.bf16.gmra.mxu0 %v6482
        %v7044 = vpop.f32.mrf.mxu0
        %v7045 = vadd.f32 0.0, %v7044
        %v7046 = vpop.f32.mrf.mxu0
        %7047 = vdwg.mxu0
        %7048 = vmatpush.bf16.msra.mxu0 %v6845
        %7049 = vmatpush.bf16.msra.mxu0 %v6841
        %7050 = vmatpush.bf16.msra.mxu0 %v6837
        %7051 = vmatpush.bf16.msra.mxu0 %v6833
        %7052 = vmatpush.bf16.msra.mxu0 %v6829
        %7053 = vmatpush.bf16.msra.mxu0 %v6825
        %7054 = vmatpush.bf16.msra.mxu0 %v6821
        %7055 = vmatpush.bf16.msra.mxu0 %v6817
        %7056 = vmatmul.bf16.gmra.mxu0 %v6486
        %v7057 = vpop.f32.mrf.mxu0
        %v7058 = vadd.f32 %v7040, %v7057
        %v7059 = vpop.f32.mrf.mxu0
        %v7060 = vadd.f32 %v7042, %v7059
        %7061 = vmatmul.bf16.gmra.mxu0 %v6485
        %v7062 = vpop.f32.mrf.mxu0
        %v7063 = vadd.f32 %v7045, %v7062
        %v7064 = vpop.f32.mrf.mxu0
        %7065 = vdwg.mxu0
        %7066 = vmatpush.bf16.msra.mxu0 %v6877
        %7067 = vmatpush.bf16.msra.mxu0 %v6873
        %7068 = vmatpush.bf16.msra.mxu0 %v6869
        %7069 = vmatpush.bf16.msra.mxu0 %v6865
        %7070 = vmatpush.bf16.msra.mxu0 %v6861
        %7071 = vmatpush.bf16.msra.mxu0 %v6857
        %7072 = vmatpush.bf16.msra.mxu0 %v6853
        %7073 = vmatpush.bf16.msra.mxu0 %v6849
        %7074 = vmatmul.bf16.gmra.mxu0 %v6489
        %v7075 = vpop.f32.mrf.mxu0
        %v7076 = vadd.f32 %v7058, %v7075
        %v7077 = vpop.f32.mrf.mxu0
        %v7078 = vadd.f32 %v7060, %v7077
        %7079 = vmatmul.bf16.gmra.mxu0 %v6488
        %v7080 = vpop.f32.mrf.mxu0
        %v7081 = vadd.f32 %v7063, %v7080
        %v7082 = vpop.f32.mrf.mxu0
        %7083 = vdwg.mxu0
        %7084 = vmatpush.bf16.msra.mxu0 %v6814
        %7085 = vmatpush.bf16.msra.mxu0 %v6810
        %7086 = vmatpush.bf16.msra.mxu0 %v6806
        %7087 = vmatpush.bf16.msra.mxu0 %v6802
        %7088 = vmatpush.bf16.msra.mxu0 %v6798
        %7089 = vmatpush.bf16.msra.mxu0 %v6794
        %7090 = vmatpush.bf16.msra.mxu0 %v6790
        %7091 = vmatpush.bf16.msra.mxu0 %v6786
        %7092 = vmatmul.bf16.gmra.mxu0 %v6483
        %v7093 = vpop.f32.mrf.mxu0
        %v7094 = vadd.f32 0.0, %v7093
        %v7095 = vpop.f32.mrf.mxu0
        %v7096 = vadd.f32 0.0, %v7095
        %7097 = vmatmul.bf16.gmra.mxu0 %v6482
        %v7098 = vpop.f32.mrf.mxu0
        %v7099 = vadd.f32 0.0, %v7098
        %v7100 = vpop.f32.mrf.mxu0
        %7101 = vdwg.mxu0
        %7102 = vmatpush.bf16.msra.mxu0 %v6846
        %7103 = vmatpush.bf16.msra.mxu0 %v6842
        %7104 = vmatpush.bf16.msra.mxu0 %v6838
        %7105 = vmatpush.bf16.msra.mxu0 %v6834
        %7106 = vmatpush.bf16.msra.mxu0 %v6830
        %7107 = vmatpush.bf16.msra.mxu0 %v6826
        %7108 = vmatpush.bf16.msra.mxu0 %v6822
        %7109 = vmatpush.bf16.msra.mxu0 %v6818
        %7110 = vmatmul.bf16.gmra.mxu0 %v6486
        %v7111 = vpop.f32.mrf.mxu0
        %v7112 = vadd.f32 %v7094, %v7111
        %v7113 = vpop.f32.mrf.mxu0
        %v7114 = vadd.f32 %v7096, %v7113
        %7115 = vmatmul.bf16.gmra.mxu0 %v6485
        %v7116 = vpop.f32.mrf.mxu0
        %v7117 = vadd.f32 %v7099, %v7116
        %v7118 = vpop.f32.mrf.mxu0
        %7119 = vdwg.mxu0
        %7120 = vmatpush.bf16.msra.mxu0 %v6878
        %7121 = vmatpush.bf16.msra.mxu0 %v6874
        %7122 = vmatpush.bf16.msra.mxu0 %v6870
        %7123 = vmatpush.bf16.msra.mxu0 %v6866
        %7124 = vmatpush.bf16.msra.mxu0 %v6862
        %7125 = vmatpush.bf16.msra.mxu0 %v6858
        %7126 = vmatpush.bf16.msra.mxu0 %v6854
        %7127 = vmatpush.bf16.msra.mxu0 %v6850
        %7128 = vmatmul.bf16.gmra.mxu0 %v6489
        %v7129 = vpop.f32.mrf.mxu0
        %v7130 = vadd.f32 %v7112, %v7129
        %v7131 = vpop.f32.mrf.mxu0
        %v7132 = vadd.f32 %v7114, %v7131
        %7133 = vmatmul.bf16.gmra.mxu0 %v6488
        %v7134 = vpop.f32.mrf.mxu0
        %v7135 = vadd.f32 %v7117, %v7134
        %v7136 = vpop.f32.mrf.mxu0
        %7137 = vdwg.mxu0
        %7138 = vmatpush.bf16.msra.mxu0 %v6815
        %7139 = vmatpush.bf16.msra.mxu0 %v6811
        %7140 = vmatpush.bf16.msra.mxu0 %v6807
        %7141 = vmatpush.bf16.msra.mxu0 %v6803
        %7142 = vmatpush.bf16.msra.mxu0 %v6799
        %7143 = vmatpush.bf16.msra.mxu0 %v6795
        %7144 = vmatpush.bf16.msra.mxu0 %v6791
        %7145 = vmatpush.bf16.msra.mxu0 %v6787
        %7146 = vmatmul.bf16.gmra.mxu0 %v6483
        %v7147 = vpop.f32.mrf.mxu0
        %v7148 = vadd.f32 0.0, %v7147
        %v7149 = vpop.f32.mrf.mxu0
        %v7150 = vadd.f32 0.0, %v7149
        %7151 = vmatmul.bf16.gmra.mxu0 %v6482
        %v7152 = vpop.f32.mrf.mxu0
        %v7153 = vadd.f32 0.0, %v7152
        %v7154 = vpop.f32.mrf.mxu0
        %7155 = vdwg.mxu0
        %7156 = vmatpush.bf16.msra.mxu0 %v6847
        %7157 = vmatpush.bf16.msra.mxu0 %v6843
        %7158 = vmatpush.bf16.msra.mxu0 %v6839
        %7159 = vmatpush.bf16.msra.mxu0 %v6835
        %7160 = vmatpush.bf16.msra.mxu0 %v6831
        %7161 = vmatpush.bf16.msra.mxu0 %v6827
        %7162 = vmatpush.bf16.msra.mxu0 %v6823
        %7163 = vmatpush.bf16.msra.mxu0 %v6819
        %7164 = vmatmul.bf16.gmra.mxu0 %v6486
        %v7165 = vpop.f32.mrf.mxu0
        %v7166 = vadd.f32 %v7148, %v7165
        %v7167 = vpop.f32.mrf.mxu0
        %v7168 = vadd.f32 %v7150, %v7167
        %7169 = vmatmul.bf16.gmra.mxu0 %v6485
        %v7170 = vpop.f32.mrf.mxu0
        %v7171 = vadd.f32 %v7153, %v7170
        %v7172 = vpop.f32.mrf.mxu0
        %7173 = vdwg.mxu0
        %7174 = vmatpush.bf16.msra.mxu0 %v6879
        %7175 = vmatpush.bf16.msra.mxu0 %v6875
        %7176 = vmatpush.bf16.msra.mxu0 %v6871
        %7177 = vmatpush.bf16.msra.mxu0 %v6867
        %7178 = vmatpush.bf16.msra.mxu0 %v6863
        %7179 = vmatpush.bf16.msra.mxu0 %v6859
        %7180 = vmatpush.bf16.msra.mxu0 %v6855
        %7181 = vmatpush.bf16.msra.mxu0 %v6851
        %7182 = vmatmul.bf16.gmra.mxu0 %v6489
        %v7183 = vpop.f32.mrf.mxu0
        %v7184 = vadd.f32 %v7166, %v7183
        %v7185 = vpop.f32.mrf.mxu0
        %v7186 = vadd.f32 %v7168, %v7185
        %7187 = vmatmul.bf16.gmra.mxu0 %v6488
        %v7188 = vpop.f32.mrf.mxu0
        %v7189 = vadd.f32 %v7171, %v7188
        %v7190 = vpop.f32.mrf.mxu0
        %7191 = vdwg.mxu0
        %v7192 = vadd.f32 %v6337, %v7022
        %v7193 = vadd.f32 %v6338, %v7076
        %v7194 = vadd.f32 %v6339, %v7130
        %v7195 = vadd.f32 %v6340, %v7184
        %v7196 = vadd.f32 %v6341, %v7024
        %v7197 = vadd.f32 %v6342, %v7078
        %v7198 = vadd.f32 %v6343, %v7132
        %v7199 = vadd.f32 %v6344, %v7186
        %v7200 = vadd.f32 %v6345, %v7027
        %v7201 = vadd.f32 %v6346, %v7081
        %v7202 = vadd.f32 %v6347, %v7135
        %v7203 = vadd.f32 %v6348, %v7189
        %v7204 = vld [vmem:[#allocation2 + $0x30] sm:$0x33]
        %v7205 = vld [vmem:[#allocation2 + $0x38] sm:$0x3]
        %s7206 = scalar_lea.vmem %s3, 5376
        %v7207 = vld [vmem:[%s7206] sm:$0xff]
        %v7208 = vld [vmem:[%s7206 + $0x8] sm:$0xff]
        %v7209 = vld [vmem:[%s7206 + $0x10] sm:$0xff]
        %v7210 = vld [vmem:[%s7206 + $0x18] sm:$0xff]
        %v7211 = vld [vmem:[%s7206 + $0x20] sm:$0xff]
        %v7212 = vld [vmem:[%s7206 + $0x28] sm:$0xff]
        %v7213 = vld [vmem:[%s7206 + $0x30] sm:$0xff]
        %v7214 = vld [vmem:[%s7206 + $0x38] sm:$0xff]
        %v7215 = vld [vmem:[%s7206 + $0x40] sm:$0xff]
        %v7216 = vld [vmem:[%s7206 + $0x48] sm:$0xff]
        %v7217 = vld [vmem:[%s7206 + $0x50] sm:$0xff]
        %v7218 = vld [vmem:[%s7206 + $0x58] sm:$0xff]
        %v7219 = vld [vmem:[%s7206 + $0x60] sm:$0xff]
        %v7220 = vld [vmem:[%s7206 + $0x68] sm:$0xff]
        %v7221 = vld [vmem:[%s7206 + $0x70] sm:$0xff]
        %v7222 = vld [vmem:[%s7206 + $0x78] sm:$0xff]
        %v7223 = vld [vmem:[%s7206 + $0x80] sm:$0xff]
        %v7224 = vld [vmem:[%s7206 + $0x88] sm:$0xff]
        %v7225 = vld [vmem:[%s7206 + $0x90] sm:$0xff]
        %v7226 = vld [vmem:[%s7206 + $0x98] sm:$0xff]
        %v7227 = vld [vmem:[%s7206 + $0xa0] sm:$0xff]
        %v7228 = vld [vmem:[%s7206 + $0xa8] sm:$0xff]
        %v7229 = vld [vmem:[%s7206 + $0xb0] sm:$0xff]
        %v7230 = vld [vmem:[%s7206 + $0xb8] sm:$0xff]
        %v7231 = vld [vmem:[%s7206 + $0xc0] sm:$0xff]
        %v7232 = vld [vmem:[%s7206 + $0xc8] sm:$0xff]
        %v7233 = vld [vmem:[%s7206 + $0xd0] sm:$0xff]
        %v7234 = vld [vmem:[%s7206 + $0xd8] sm:$0xff]
        %v7235 = vld [vmem:[%s7206 + $0xe0] sm:$0xff]
        %v7236 = vld [vmem:[%s7206 + $0xe8] sm:$0xff]
        %v7237 = vld [vmem:[%s7206 + $0xf0] sm:$0xff]
        %v7238 = vld [vmem:[%s7206 + $0xf8] sm:$0xff]
        %v7239 = vld [vmem:[%s7206 + $0x100] sm:$0xff]
        %v7240 = vld [vmem:[%s7206 + $0x108] sm:$0xff]
        %v7241 = vld [vmem:[%s7206 + $0x110] sm:$0xff]
        %v7242 = vld [vmem:[%s7206 + $0x118] sm:$0xff]
        %v7243 = vld [vmem:[%s7206 + $0x120] sm:$0xff]
        %v7244 = vld [vmem:[%s7206 + $0x128] sm:$0xff]
        %v7245 = vld [vmem:[%s7206 + $0x130] sm:$0xff]
        %v7246 = vld [vmem:[%s7206 + $0x138] sm:$0xff]
        %v7247 = vld [vmem:[%s7206 + $0x140] sm:$0xff]
        %v7248 = vld [vmem:[%s7206 + $0x148] sm:$0xff]
        %v7249 = vld [vmem:[%s7206 + $0x150] sm:$0xff]
        %v7250 = vld [vmem:[%s7206 + $0x158] sm:$0xff]
        %v7251 = vld [vmem:[%s7206 + $0x160] sm:$0xff]
        %v7252 = vld [vmem:[%s7206 + $0x168] sm:$0xff]
        %v7253 = vld [vmem:[%s7206 + $0x170] sm:$0xff]
        %v7254 = vld [vmem:[%s7206 + $0x178] sm:$0xff]
        %v7255 = vld [vmem:[%s7206 + $0x180] sm:$0xff]
        %v7256 = vld [vmem:[%s7206 + $0x188] sm:$0xff]
        %v7257 = vld [vmem:[%s7206 + $0x190] sm:$0xff]
        %v7258 = vld [vmem:[%s7206 + $0x198] sm:$0xff]
        %v7259 = vld [vmem:[%s7206 + $0x1a0] sm:$0xff]
        %v7260 = vld [vmem:[%s7206 + $0x1a8] sm:$0xff]
        %v7261 = vld [vmem:[%s7206 + $0x1b0] sm:$0xff]
        %v7262 = vld [vmem:[%s7206 + $0x1b8] sm:$0xff]
        %v7263 = vld [vmem:[%s7206 + $0x1c0] sm:$0xff]
        %v7264 = vld [vmem:[%s7206 + $0x1c8] sm:$0xff]
        %v7265 = vld [vmem:[%s7206 + $0x1d0] sm:$0xff]
        %v7266 = vld [vmem:[%s7206 + $0x1d8] sm:$0xff]
        %v7267 = vld [vmem:[%s7206 + $0x1e0] sm:$0xff]
        %v7268 = vld [vmem:[%s7206 + $0x1e8] sm:$0xff]
        %v7269 = vld [vmem:[%s7206 + $0x1f0] sm:$0xff]
        %v7270 = vld [vmem:[%s7206 + $0x1f8] sm:$0xff]
        %v7271 = vld [vmem:[%s7206 + $0x200] sm:$0xff]
        %v7272 = vld [vmem:[%s7206 + $0x208] sm:$0xff]
        %v7273 = vld [vmem:[%s7206 + $0x210] sm:$0xff]
        %v7274 = vld [vmem:[%s7206 + $0x218] sm:$0xff]
        %v7275 = vld [vmem:[%s7206 + $0x220] sm:$0xff]
        %v7276 = vld [vmem:[%s7206 + $0x228] sm:$0xff]
        %v7277 = vld [vmem:[%s7206 + $0x230] sm:$0xff]
        %v7278 = vld [vmem:[%s7206 + $0x238] sm:$0xff]
        %v7279 = vld [vmem:[%s7206 + $0x240] sm:$0xff]
        %v7280 = vld [vmem:[%s7206 + $0x248] sm:$0xff]
        %v7281 = vld [vmem:[%s7206 + $0x250] sm:$0xff]
        %v7282 = vld [vmem:[%s7206 + $0x258] sm:$0xff]
        %v7283 = vld [vmem:[%s7206 + $0x260] sm:$0xff]
        %v7284 = vld [vmem:[%s7206 + $0x268] sm:$0xff]
        %v7285 = vld [vmem:[%s7206 + $0x270] sm:$0xff]
        %v7286 = vld [vmem:[%s7206 + $0x278] sm:$0xff]
        %v7287 = vld [vmem:[%s7206 + $0x280] sm:$0xff]
        %v7288 = vld [vmem:[%s7206 + $0x288] sm:$0xff]
        %v7289 = vld [vmem:[%s7206 + $0x290] sm:$0xff]
        %v7290 = vld [vmem:[%s7206 + $0x298] sm:$0xff]
        %v7291 = vld [vmem:[%s7206 + $0x2a0] sm:$0xff]
        %v7292 = vld [vmem:[%s7206 + $0x2a8] sm:$0xff]
        %v7293 = vld [vmem:[%s7206 + $0x2b0] sm:$0xff]
        %v7294 = vld [vmem:[%s7206 + $0x2b8] sm:$0xff]
        %v7295 = vld [vmem:[%s7206 + $0x2c0] sm:$0xff]
        %v7296 = vld [vmem:[%s7206 + $0x2c8] sm:$0xff]
        %v7297 = vld [vmem:[%s7206 + $0x2d0] sm:$0xff]
        %v7298 = vld [vmem:[%s7206 + $0x2d8] sm:$0xff]
        %v7299 = vld [vmem:[%s7206 + $0x2e0] sm:$0xff]
        %v7300 = vld [vmem:[%s7206 + $0x2e8] sm:$0xff]
        %v7301 = vld [vmem:[%s7206 + $0x2f0] sm:$0xff]
        %v7302 = vld [vmem:[%s7206 + $0x2f8] sm:$0xff]
        %v7305 = vunpack.c.l.b16 %v7204
        %v7306 = vunpack.c.h.b16 %v7204
        %v7307 = vunpack.c.l.b16 %v7205
        %v7308 = vpack.c.b16 %v7305, %v6468
        %v7309 = vpack.c.b16 %v7306, %v6469
        %v7310 = vpack.c.b16 %v7307, %v6470
        %vm7311 = vsmask.f32 5376
        %v7313 = vshrl.u32 %v6474, 16
        %v7315 = vrot.slane %v7313, 2
        %v7316 = vshll.u32 %v6474, 16
        %v7318 = vrot.slane %v7316, 3
        %v7319 = vor.u32 %v7315, %v7318
        %v7321 = vshrl.u32 %v7308, 16
        %v7323 = vrot.slane %v7321, 2
        %v7324 = vshll.u32 %v7308, 16
        %v7326 = vrot.slane %v7324, 3
        %v7327 = vor.u32 %v7323, %v7326
        %v7328 = vsel %vm7311, %v7319, %v7327
        %v7330 = vshrl.u32 %v6475, 16
        %v7332 = vrot.slane %v7330, 2
        %v7333 = vshll.u32 %v6475, 16
        %v7335 = vrot.slane %v7333, 3
        %v7336 = vor.u32 %v7332, %v7335
        %v7338 = vshrl.u32 %v7309, 16
        %v7340 = vrot.slane %v7338, 2
        %v7341 = vshll.u32 %v7309, 16
        %v7343 = vrot.slane %v7341, 3
        %v7344 = vor.u32 %v7340, %v7343
        %v7345 = vsel %vm7311, %v7336, %v7344
        %v7347 = vshrl.u32 %v6476, 16
        %v7349 = vrot.slane %v7347, 2
        %v7350 = vshll.u32 %v6476, 16
        %v7352 = vrot.slane %v7350, 3
        %v7353 = vor.u32 %v7349, %v7352
        %v7355 = vshrl.u32 %v7310, 16
        %v7357 = vrot.slane %v7355, 2
        %v7358 = vshll.u32 %v7310, 16
        %v7360 = vrot.slane %v7358, 3
        %v7361 = vor.u32 %v7357, %v7360
        %v7362 = vsel %vm7311, %v7353, %v7361
        %v7465 = vunpack.c.l.b16 %v7207
        %v7466 = vunpack.c.h.b16 %v7207
        %v7467 = vunpack.c.l.b16 %v7208
        %v7468 = vunpack.c.h.b16 %v7208
        %v7469 = vunpack.c.l.b16 %v7209
        %v7470 = vunpack.c.h.b16 %v7209
        %v7471 = vunpack.c.l.b16 %v7210
        %v7472 = vunpack.c.h.b16 %v7210
        %v7473 = vunpack.c.l.b16 %v7211
        %v7474 = vunpack.c.h.b16 %v7211
        %v7475 = vunpack.c.l.b16 %v7212
        %v7476 = vunpack.c.h.b16 %v7212
        %v7477 = vunpack.c.l.b16 %v7213
        %v7478 = vunpack.c.h.b16 %v7213
        %v7479 = vunpack.c.l.b16 %v7214
        %v7480 = vunpack.c.h.b16 %v7214
        %v7481 = vunpack.c.l.b16 %v7215
        %v7482 = vunpack.c.h.b16 %v7215
        %v7483 = vunpack.c.l.b16 %v7216
        %v7484 = vunpack.c.h.b16 %v7216
        %v7485 = vunpack.c.l.b16 %v7217
        %v7486 = vunpack.c.h.b16 %v7217
        %v7487 = vunpack.c.l.b16 %v7218
        %v7488 = vunpack.c.h.b16 %v7218
        %v7489 = vunpack.c.l.b16 %v7219
        %v7490 = vunpack.c.h.b16 %v7219
        %v7491 = vunpack.c.l.b16 %v7220
        %v7492 = vunpack.c.h.b16 %v7220
        %v7493 = vunpack.c.l.b16 %v7221
        %v7494 = vunpack.c.h.b16 %v7221
        %v7495 = vunpack.c.l.b16 %v7222
        %v7496 = vunpack.c.h.b16 %v7222
        %v7497 = vunpack.c.l.b16 %v7223
        %v7498 = vunpack.c.h.b16 %v7223
        %v7499 = vunpack.c.l.b16 %v7224
        %v7500 = vunpack.c.h.b16 %v7224
        %v7501 = vunpack.c.l.b16 %v7225
        %v7502 = vunpack.c.h.b16 %v7225
        %v7503 = vunpack.c.l.b16 %v7226
        %v7504 = vunpack.c.h.b16 %v7226
        %v7505 = vunpack.c.l.b16 %v7227
        %v7506 = vunpack.c.h.b16 %v7227
        %v7507 = vunpack.c.l.b16 %v7228
        %v7508 = vunpack.c.h.b16 %v7228
        %v7509 = vunpack.c.l.b16 %v7229
        %v7510 = vunpack.c.h.b16 %v7229
        %v7511 = vunpack.c.l.b16 %v7230
        %v7512 = vunpack.c.h.b16 %v7230
        %v7513 = vunpack.c.l.b16 %v7231
        %v7514 = vunpack.c.h.b16 %v7231
        %v7515 = vunpack.c.l.b16 %v7232
        %v7516 = vunpack.c.h.b16 %v7232
        %v7517 = vunpack.c.l.b16 %v7233
        %v7518 = vunpack.c.h.b16 %v7233
        %v7519 = vunpack.c.l.b16 %v7234
        %v7520 = vunpack.c.h.b16 %v7234
        %v7521 = vunpack.c.l.b16 %v7235
        %v7522 = vunpack.c.h.b16 %v7235
        %v7523 = vunpack.c.l.b16 %v7236
        %v7524 = vunpack.c.h.b16 %v7236
        %v7525 = vunpack.c.l.b16 %v7237
        %v7526 = vunpack.c.h.b16 %v7237
        %v7527 = vunpack.c.l.b16 %v7238
        %v7528 = vunpack.c.h.b16 %v7238
        %v7529 = vunpack.c.l.b16 %v7239
        %v7530 = vunpack.c.h.b16 %v7239
        %v7531 = vunpack.c.l.b16 %v7240
        %v7532 = vunpack.c.h.b16 %v7240
        %v7533 = vunpack.c.l.b16 %v7241
        %v7534 = vunpack.c.h.b16 %v7241
        %v7535 = vunpack.c.l.b16 %v7242
        %v7536 = vunpack.c.h.b16 %v7242
        %v7537 = vunpack.c.l.b16 %v7243
        %v7538 = vunpack.c.h.b16 %v7243
        %v7539 = vunpack.c.l.b16 %v7244
        %v7540 = vunpack.c.h.b16 %v7244
        %v7541 = vunpack.c.l.b16 %v7245
        %v7542 = vunpack.c.h.b16 %v7245
        %v7543 = vunpack.c.l.b16 %v7246
        %v7544 = vunpack.c.h.b16 %v7246
        %v7545 = vunpack.c.l.b16 %v7247
        %v7546 = vunpack.c.h.b16 %v7247
        %v7547 = vunpack.c.l.b16 %v7248
        %v7548 = vunpack.c.h.b16 %v7248
        %v7549 = vunpack.c.l.b16 %v7249
        %v7550 = vunpack.c.h.b16 %v7249
        %v7551 = vunpack.c.l.b16 %v7250
        %v7552 = vunpack.c.h.b16 %v7250
        %v7553 = vunpack.c.l.b16 %v7251
        %v7554 = vunpack.c.h.b16 %v7251
        %v7555 = vunpack.c.l.b16 %v7252
        %v7556 = vunpack.c.h.b16 %v7252
        %v7557 = vunpack.c.l.b16 %v7253
        %v7558 = vunpack.c.h.b16 %v7253
        %v7559 = vunpack.c.l.b16 %v7254
        %v7560 = vunpack.c.h.b16 %v7254
        %v7561 = vunpack.c.l.b16 %v7255
        %v7562 = vunpack.c.h.b16 %v7255
        %v7563 = vunpack.c.l.b16 %v7256
        %v7564 = vunpack.c.h.b16 %v7256
        %v7565 = vunpack.c.l.b16 %v7257
        %v7566 = vunpack.c.h.b16 %v7257
        %v7567 = vunpack.c.l.b16 %v7258
        %v7568 = vunpack.c.h.b16 %v7258
        %v7569 = vunpack.c.l.b16 %v7259
        %v7570 = vunpack.c.h.b16 %v7259
        %v7571 = vunpack.c.l.b16 %v7260
        %v7572 = vunpack.c.h.b16 %v7260
        %v7573 = vunpack.c.l.b16 %v7261
        %v7574 = vunpack.c.h.b16 %v7261
        %v7575 = vunpack.c.l.b16 %v7262
        %v7576 = vunpack.c.h.b16 %v7262
        %v7577 = vunpack.c.l.b16 %v7263
        %v7578 = vunpack.c.h.b16 %v7263
        %v7579 = vunpack.c.l.b16 %v7264
        %v7580 = vunpack.c.h.b16 %v7264
        %v7581 = vunpack.c.l.b16 %v7265
        %v7582 = vunpack.c.h.b16 %v7265
        %v7583 = vunpack.c.l.b16 %v7266
        %v7584 = vunpack.c.h.b16 %v7266
        %v7585 = vunpack.c.l.b16 %v7267
        %v7586 = vunpack.c.h.b16 %v7267
        %v7587 = vunpack.c.l.b16 %v7268
        %v7588 = vunpack.c.h.b16 %v7268
        %v7589 = vunpack.c.l.b16 %v7269
        %v7590 = vunpack.c.h.b16 %v7269
        %v7591 = vunpack.c.l.b16 %v7270
        %v7592 = vunpack.c.h.b16 %v7270
        %v7593 = vunpack.c.l.b16 %v7271
        %v7594 = vunpack.c.h.b16 %v7271
        %v7595 = vunpack.c.l.b16 %v7272
        %v7596 = vunpack.c.h.b16 %v7272
        %v7597 = vunpack.c.l.b16 %v7273
        %v7598 = vunpack.c.h.b16 %v7273
        %v7599 = vunpack.c.l.b16 %v7274
        %v7600 = vunpack.c.h.b16 %v7274
        %v7601 = vunpack.c.l.b16 %v7275
        %v7602 = vunpack.c.h.b16 %v7275
        %v7603 = vunpack.c.l.b16 %v7276
        %v7604 = vunpack.c.h.b16 %v7276
        %v7605 = vunpack.c.l.b16 %v7277
        %v7606 = vunpack.c.h.b16 %v7277
        %v7607 = vunpack.c.l.b16 %v7278
        %v7608 = vunpack.c.h.b16 %v7278
        %v7609 = vunpack.c.l.b16 %v7279
        %v7610 = vunpack.c.h.b16 %v7279
        %v7611 = vunpack.c.l.b16 %v7280
        %v7612 = vunpack.c.h.b16 %v7280
        %v7613 = vunpack.c.l.b16 %v7281
        %v7614 = vunpack.c.h.b16 %v7281
        %v7615 = vunpack.c.l.b16 %v7282
        %v7616 = vunpack.c.h.b16 %v7282
        %v7617 = vunpack.c.l.b16 %v7283
        %v7618 = vunpack.c.h.b16 %v7283
        %v7619 = vunpack.c.l.b16 %v7284
        %v7620 = vunpack.c.h.b16 %v7284
        %v7621 = vunpack.c.l.b16 %v7285
        %v7622 = vunpack.c.h.b16 %v7285
        %v7623 = vunpack.c.l.b16 %v7286
        %v7624 = vunpack.c.h.b16 %v7286
        %v7625 = vunpack.c.l.b16 %v7287
        %v7626 = vunpack.c.h.b16 %v7287
        %v7627 = vunpack.c.l.b16 %v7288
        %v7628 = vunpack.c.h.b16 %v7288
        %v7629 = vunpack.c.l.b16 %v7289
        %v7630 = vunpack.c.h.b16 %v7289
        %v7631 = vunpack.c.l.b16 %v7290
        %v7632 = vunpack.c.h.b16 %v7290
        %v7633 = vunpack.c.l.b16 %v7291
        %v7634 = vunpack.c.h.b16 %v7291
        %v7635 = vunpack.c.l.b16 %v7292
        %v7636 = vunpack.c.h.b16 %v7292
        %v7637 = vunpack.c.l.b16 %v7293
        %v7638 = vunpack.c.h.b16 %v7293
        %v7639 = vunpack.c.l.b16 %v7294
        %v7640 = vunpack.c.h.b16 %v7294
        %v7641 = vunpack.c.l.b16 %v7295
        %v7642 = vunpack.c.h.b16 %v7295
        %v7643 = vunpack.c.l.b16 %v7296
        %v7644 = vunpack.c.h.b16 %v7296
        %v7645 = vunpack.c.l.b16 %v7297
        %v7646 = vunpack.c.h.b16 %v7297
        %v7647 = vunpack.c.l.b16 %v7298
        %v7648 = vunpack.c.h.b16 %v7298
        %v7649 = vunpack.c.l.b16 %v7299
        %v7650 = vunpack.c.h.b16 %v7299
        %v7651 = vunpack.c.l.b16 %v7300
        %v7652 = vunpack.c.h.b16 %v7300
        %v7653 = vunpack.c.l.b16 %v7301
        %v7654 = vunpack.c.h.b16 %v7301
        %v7655 = vunpack.c.l.b16 %v7302
        %v7656 = vunpack.c.h.b16 %v7302
        %v7657 = vpack.c.b16 %v7469, %v7465
        %v7658 = vpack.c.b16 %v7470, %v7466
        %v7659 = vpack.c.b16 %v7471, %v7467
        %v7660 = vpack.c.b16 %v7472, %v7468
        %v7661 = vpack.c.b16 %v7477, %v7473
        %v7662 = vpack.c.b16 %v7478, %v7474
        %v7663 = vpack.c.b16 %v7479, %v7475
        %v7664 = vpack.c.b16 %v7480, %v7476
        %v7665 = vpack.c.b16 %v7485, %v7481
        %v7666 = vpack.c.b16 %v7486, %v7482
        %v7667 = vpack.c.b16 %v7487, %v7483
        %v7668 = vpack.c.b16 %v7488, %v7484
        %v7669 = vpack.c.b16 %v7493, %v7489
        %v7670 = vpack.c.b16 %v7494, %v7490
        %v7671 = vpack.c.b16 %v7495, %v7491
        %v7672 = vpack.c.b16 %v7496, %v7492
        %v7673 = vpack.c.b16 %v7501, %v7497
        %v7674 = vpack.c.b16 %v7502, %v7498
        %v7675 = vpack.c.b16 %v7503, %v7499
        %v7676 = vpack.c.b16 %v7504, %v7500
        %v7677 = vpack.c.b16 %v7509, %v7505
        %v7678 = vpack.c.b16 %v7510, %v7506
        %v7679 = vpack.c.b16 %v7511, %v7507
        %v7680 = vpack.c.b16 %v7512, %v7508
        %v7681 = vpack.c.b16 %v7517, %v7513
        %v7682 = vpack.c.b16 %v7518, %v7514
        %v7683 = vpack.c.b16 %v7519, %v7515
        %v7684 = vpack.c.b16 %v7520, %v7516
        %v7685 = vpack.c.b16 %v7525, %v7521
        %v7686 = vpack.c.b16 %v7526, %v7522
        %v7687 = vpack.c.b16 %v7527, %v7523
        %v7688 = vpack.c.b16 %v7528, %v7524
        %v7689 = vpack.c.b16 %v7533, %v7529
        %v7690 = vpack.c.b16 %v7534, %v7530
        %v7691 = vpack.c.b16 %v7535, %v7531
        %v7692 = vpack.c.b16 %v7536, %v7532
        %v7693 = vpack.c.b16 %v7541, %v7537
        %v7694 = vpack.c.b16 %v7542, %v7538
        %v7695 = vpack.c.b16 %v7543, %v7539
        %v7696 = vpack.c.b16 %v7544, %v7540
        %v7697 = vpack.c.b16 %v7549, %v7545
        %v7698 = vpack.c.b16 %v7550, %v7546
        %v7699 = vpack.c.b16 %v7551, %v7547
        %v7700 = vpack.c.b16 %v7552, %v7548
        %v7701 = vpack.c.b16 %v7557, %v7553
        %v7702 = vpack.c.b16 %v7558, %v7554
        %v7703 = vpack.c.b16 %v7559, %v7555
        %v7704 = vpack.c.b16 %v7560, %v7556
        %v7705 = vpack.c.b16 %v7565, %v7561
        %v7706 = vpack.c.b16 %v7566, %v7562
        %v7707 = vpack.c.b16 %v7567, %v7563
        %v7708 = vpack.c.b16 %v7568, %v7564
        %v7709 = vpack.c.b16 %v7573, %v7569
        %v7710 = vpack.c.b16 %v7574, %v7570
        %v7711 = vpack.c.b16 %v7575, %v7571
        %v7712 = vpack.c.b16 %v7576, %v7572
        %v7713 = vpack.c.b16 %v7581, %v7577
        %v7714 = vpack.c.b16 %v7582, %v7578
        %v7715 = vpack.c.b16 %v7583, %v7579
        %v7716 = vpack.c.b16 %v7584, %v7580
        %v7717 = vpack.c.b16 %v7589, %v7585
        %v7718 = vpack.c.b16 %v7590, %v7586
        %v7719 = vpack.c.b16 %v7591, %v7587
        %v7720 = vpack.c.b16 %v7592, %v7588
        %v7721 = vpack.c.b16 %v7597, %v7593
        %v7722 = vpack.c.b16 %v7598, %v7594
        %v7723 = vpack.c.b16 %v7599, %v7595
        %v7724 = vpack.c.b16 %v7600, %v7596
        %v7725 = vpack.c.b16 %v7605, %v7601
        %v7726 = vpack.c.b16 %v7606, %v7602
        %v7727 = vpack.c.b16 %v7607, %v7603
        %v7728 = vpack.c.b16 %v7608, %v7604
        %v7729 = vpack.c.b16 %v7613, %v7609
        %v7730 = vpack.c.b16 %v7614, %v7610
        %v7731 = vpack.c.b16 %v7615, %v7611
        %v7732 = vpack.c.b16 %v7616, %v7612
        %v7733 = vpack.c.b16 %v7621, %v7617
        %v7734 = vpack.c.b16 %v7622, %v7618
        %v7735 = vpack.c.b16 %v7623, %v7619
        %v7736 = vpack.c.b16 %v7624, %v7620
        %v7737 = vpack.c.b16 %v7629, %v7625
        %v7738 = vpack.c.b16 %v7630, %v7626
        %v7739 = vpack.c.b16 %v7631, %v7627
        %v7740 = vpack.c.b16 %v7632, %v7628
        %v7741 = vpack.c.b16 %v7637, %v7633
        %v7742 = vpack.c.b16 %v7638, %v7634
        %v7743 = vpack.c.b16 %v7639, %v7635
        %v7744 = vpack.c.b16 %v7640, %v7636
        %v7745 = vpack.c.b16 %v7645, %v7641
        %v7746 = vpack.c.b16 %v7646, %v7642
        %v7747 = vpack.c.b16 %v7647, %v7643
        %v7748 = vpack.c.b16 %v7648, %v7644
        %v7749 = vpack.c.b16 %v7653, %v7649
        %v7750 = vpack.c.b16 %v7654, %v7650
        %v7751 = vpack.c.b16 %v7655, %v7651
        %v7752 = vpack.c.b16 %v7656, %v7652
        %7849 = vmatpush.bf16.msra.mxu0 %v7685
        %7850 = vmatpush.bf16.msra.mxu0 %v7681
        %7851 = vmatpush.bf16.msra.mxu0 %v7677
        %7852 = vmatpush.bf16.msra.mxu0 %v7673
        %7853 = vmatpush.bf16.msra.mxu0 %v7669
        %7854 = vmatpush.bf16.msra.mxu0 %v7665
        %7855 = vmatpush.bf16.msra.mxu0 %v7661
        %7856 = vmatpush.bf16.msra.mxu0 %v7657
        %7857 = vmatmul.bf16.gmra.mxu0 %v7328
        %v7858 = vpop.f32.mrf.mxu0
        %v7859 = vadd.f32 0.0, %v7858
        %v7860 = vpop.f32.mrf.mxu0
        %v7861 = vadd.f32 0.0, %v7860
        %7862 = vmatmul.bf16.gmra.mxu0 %v7327
        %v7863 = vpop.f32.mrf.mxu0
        %v7864 = vadd.f32 0.0, %v7863
        %v7865 = vpop.f32.mrf.mxu0
        %7866 = vdwg.mxu0
        %7867 = vmatpush.bf16.msra.mxu0 %v7717
        %7868 = vmatpush.bf16.msra.mxu0 %v7713
        %7869 = vmatpush.bf16.msra.mxu0 %v7709
        %7870 = vmatpush.bf16.msra.mxu0 %v7705
        %7871 = vmatpush.bf16.msra.mxu0 %v7701
        %7872 = vmatpush.bf16.msra.mxu0 %v7697
        %7873 = vmatpush.bf16.msra.mxu0 %v7693
        %7874 = vmatpush.bf16.msra.mxu0 %v7689
        %7875 = vmatmul.bf16.gmra.mxu0 %v7345
        %v7876 = vpop.f32.mrf.mxu0
        %v7877 = vadd.f32 %v7859, %v7876
        %v7878 = vpop.f32.mrf.mxu0
        %v7879 = vadd.f32 %v7861, %v7878
        %7880 = vmatmul.bf16.gmra.mxu0 %v7344
        %v7881 = vpop.f32.mrf.mxu0
        %v7882 = vadd.f32 %v7864, %v7881
        %v7883 = vpop.f32.mrf.mxu0
        %7884 = vdwg.mxu0
        %7885 = vmatpush.bf16.msra.mxu0 %v7749
        %7886 = vmatpush.bf16.msra.mxu0 %v7745
        %7887 = vmatpush.bf16.msra.mxu0 %v7741
        %7888 = vmatpush.bf16.msra.mxu0 %v7737
        %7889 = vmatpush.bf16.msra.mxu0 %v7733
        %7890 = vmatpush.bf16.msra.mxu0 %v7729
        %7891 = vmatpush.bf16.msra.mxu0 %v7725
        %7892 = vmatpush.bf16.msra.mxu0 %v7721
        %7893 = vmatmul.bf16.gmra.mxu0 %v7362
        %v7894 = vpop.f32.mrf.mxu0
        %v7895 = vadd.f32 %v7877, %v7894
        %v7896 = vpop.f32.mrf.mxu0
        %v7897 = vadd.f32 %v7879, %v7896
        %7898 = vmatmul.bf16.gmra.mxu0 %v7361
        %v7899 = vpop.f32.mrf.mxu0
        %v7900 = vadd.f32 %v7882, %v7899
        %v7901 = vpop.f32.mrf.mxu0
        %7902 = vdwg.mxu0
        %7903 = vmatpush.bf16.msra.mxu0 %v7686
        %7904 = vmatpush.bf16.msra.mxu0 %v7682
        %7905 = vmatpush.bf16.msra.mxu0 %v7678
        %7906 = vmatpush.bf16.msra.mxu0 %v7674
        %7907 = vmatpush.bf16.msra.mxu0 %v7670
        %7908 = vmatpush.bf16.msra.mxu0 %v7666
        %7909 = vmatpush.bf16.msra.mxu0 %v7662
        %7910 = vmatpush.bf16.msra.mxu0 %v7658
        %7911 = vmatmul.bf16.gmra.mxu0 %v7328
        %v7912 = vpop.f32.mrf.mxu0
        %v7913 = vadd.f32 0.0, %v7912
        %v7914 = vpop.f32.mrf.mxu0
        %v7915 = vadd.f32 0.0, %v7914
        %7916 = vmatmul.bf16.gmra.mxu0 %v7327
        %v7917 = vpop.f32.mrf.mxu0
        %v7918 = vadd.f32 0.0, %v7917
        %v7919 = vpop.f32.mrf.mxu0
        %7920 = vdwg.mxu0
        %7921 = vmatpush.bf16.msra.mxu0 %v7718
        %7922 = vmatpush.bf16.msra.mxu0 %v7714
        %7923 = vmatpush.bf16.msra.mxu0 %v7710
        %7924 = vmatpush.bf16.msra.mxu0 %v7706
        %7925 = vmatpush.bf16.msra.mxu0 %v7702
        %7926 = vmatpush.bf16.msra.mxu0 %v7698
        %7927 = vmatpush.bf16.msra.mxu0 %v7694
        %7928 = vmatpush.bf16.msra.mxu0 %v7690
        %7929 = vmatmul.bf16.gmra.mxu0 %v7345
        %v7930 = vpop.f32.mrf.mxu0
        %v7931 = vadd.f32 %v7913, %v7930
        %v7932 = vpop.f32.mrf.mxu0
        %v7933 = vadd.f32 %v7915, %v7932
        %7934 = vmatmul.bf16.gmra.mxu0 %v7344
        %v7935 = vpop.f32.mrf.mxu0
        %v7936 = vadd.f32 %v7918, %v7935
        %v7937 = vpop.f32.mrf.mxu0
        %7938 = vdwg.mxu0
        %7939 = vmatpush.bf16.msra.mxu0 %v7750
        %7940 = vmatpush.bf16.msra.mxu0 %v7746
        %7941 = vmatpush.bf16.msra.mxu0 %v7742
        %7942 = vmatpush.bf16.msra.mxu0 %v7738
        %7943 = vmatpush.bf16.msra.mxu0 %v7734
        %7944 = vmatpush.bf16.msra.mxu0 %v7730
        %7945 = vmatpush.bf16.msra.mxu0 %v7726
        %7946 = vmatpush.bf16.msra.mxu0 %v7722
        %7947 = vmatmul.bf16.gmra.mxu0 %v7362
        %v7948 = vpop.f32.mrf.mxu0
        %v7949 = vadd.f32 %v7931, %v7948
        %v7950 = vpop.f32.mrf.mxu0
        %v7951 = vadd.f32 %v7933, %v7950
        %7952 = vmatmul.bf16.gmra.mxu0 %v7361
        %v7953 = vpop.f32.mrf.mxu0
        %v7954 = vadd.f32 %v7936, %v7953
        %v7955 = vpop.f32.mrf.mxu0
        %7956 = vdwg.mxu0
        %7957 = vmatpush.bf16.msra.mxu0 %v7687
        %7958 = vmatpush.bf16.msra.mxu0 %v7683
        %7959 = vmatpush.bf16.msra.mxu0 %v7679
        %7960 = vmatpush.bf16.msra.mxu0 %v7675
        %7961 = vmatpush.bf16.msra.mxu0 %v7671
        %7962 = vmatpush.bf16.msra.mxu0 %v7667
        %7963 = vmatpush.bf16.msra.mxu0 %v7663
        %7964 = vmatpush.bf16.msra.mxu0 %v7659
        %7965 = vmatmul.bf16.gmra.mxu0 %v7328
        %v7966 = vpop.f32.mrf.mxu0
        %v7967 = vadd.f32 0.0, %v7966
        %v7968 = vpop.f32.mrf.mxu0
        %v7969 = vadd.f32 0.0, %v7968
        %7970 = vmatmul.bf16.gmra.mxu0 %v7327
        %v7971 = vpop.f32.mrf.mxu0
        %v7972 = vadd.f32 0.0, %v7971
        %v7973 = vpop.f32.mrf.mxu0
        %7974 = vdwg.mxu0
        %7975 = vmatpush.bf16.msra.mxu0 %v7719
        %7976 = vmatpush.bf16.msra.mxu0 %v7715
        %7977 = vmatpush.bf16.msra.mxu0 %v7711
        %7978 = vmatpush.bf16.msra.mxu0 %v7707
        %7979 = vmatpush.bf16.msra.mxu0 %v7703
        %7980 = vmatpush.bf16.msra.mxu0 %v7699
        %7981 = vmatpush.bf16.msra.mxu0 %v7695
        %7982 = vmatpush.bf16.msra.mxu0 %v7691
        %7983 = vmatmul.bf16.gmra.mxu0 %v7345
        %v7984 = vpop.f32.mrf.mxu0
        %v7985 = vadd.f32 %v7967, %v7984
        %v7986 = vpop.f32.mrf.mxu0
        %v7987 = vadd.f32 %v7969, %v7986
        %7988 = vmatmul.bf16.gmra.mxu0 %v7344
        %v7989 = vpop.f32.mrf.mxu0
        %v7990 = vadd.f32 %v7972, %v7989
        %v7991 = vpop.f32.mrf.mxu0
        %7992 = vdwg.mxu0
        %7993 = vmatpush.bf16.msra.mxu0 %v7751
        %7994 = vmatpush.bf16.msra.mxu0 %v7747
        %7995 = vmatpush.bf16.msra.mxu0 %v7743
        %7996 = vmatpush.bf16.msra.mxu0 %v7739
        %7997 = vmatpush.bf16.msra.mxu0 %v7735
        %7998 = vmatpush.bf16.msra.mxu0 %v7731
        %7999 = vmatpush.bf16.msra.mxu0 %v7727
        %8000 = vmatpush.bf16.msra.mxu0 %v7723
        %8001 = vmatmul.bf16.gmra.mxu0 %v7362
        %v8002 = vpop.f32.mrf.mxu0
        %v8003 = vadd.f32 %v7985, %v8002
        %v8004 = vpop.f32.mrf.mxu0
        %v8005 = vadd.f32 %v7987, %v8004
        %8006 = vmatmul.bf16.gmra.mxu0 %v7361
        %v8007 = vpop.f32.mrf.mxu0
        %v8008 = vadd.f32 %v7990, %v8007
        %v8009 = vpop.f32.mrf.mxu0
        %8010 = vdwg.mxu0
        %8011 = vmatpush.bf16.msra.mxu0 %v7688
        %8012 = vmatpush.bf16.msra.mxu0 %v7684
        %8013 = vmatpush.bf16.msra.mxu0 %v7680
        %8014 = vmatpush.bf16.msra.mxu0 %v7676
        %8015 = vmatpush.bf16.msra.mxu0 %v7672
        %8016 = vmatpush.bf16.msra.mxu0 %v7668
        %8017 = vmatpush.bf16.msra.mxu0 %v7664
        %8018 = vmatpush.bf16.msra.mxu0 %v7660
        %8019 = vmatmul.bf16.gmra.mxu0 %v7328
        %v8020 = vpop.f32.mrf.mxu0
        %v8021 = vadd.f32 0.0, %v8020
        %v8022 = vpop.f32.mrf.mxu0
        %v8023 = vadd.f32 0.0, %v8022
        %8024 = vmatmul.bf16.gmra.mxu0 %v7327
        %v8025 = vpop.f32.mrf.mxu0
        %v8026 = vadd.f32 0.0, %v8025
        %v8027 = vpop.f32.mrf.mxu0
        %8028 = vdwg.mxu0
        %8029 = vmatpush.bf16.msra.mxu0 %v7720
        %8030 = vmatpush.bf16.msra.mxu0 %v7716
        %8031 = vmatpush.bf16.msra.mxu0 %v7712
        %8032 = vmatpush.bf16.msra.mxu0 %v7708
        %8033 = vmatpush.bf16.msra.mxu0 %v7704
        %8034 = vmatpush.bf16.msra.mxu0 %v7700
        %8035 = vmatpush.bf16.msra.mxu0 %v7696
        %8036 = vmatpush.bf16.msra.mxu0 %v7692
        %8037 = vmatmul.bf16.gmra.mxu0 %v7345
        %v8038 = vpop.f32.mrf.mxu0
        %v8039 = vadd.f32 %v8021, %v8038
        %v8040 = vpop.f32.mrf.mxu0
        %v8041 = vadd.f32 %v8023, %v8040
        %8042 = vmatmul.bf16.gmra.mxu0 %v7344
        %v8043 = vpop.f32.mrf.mxu0
        %v8044 = vadd.f32 %v8026, %v8043
        %v8045 = vpop.f32.mrf.mxu0
        %8046 = vdwg.mxu0
        %8047 = vmatpush.bf16.msra.mxu0 %v7752
        %8048 = vmatpush.bf16.msra.mxu0 %v7748
        %8049 = vmatpush.bf16.msra.mxu0 %v7744
        %8050 = vmatpush.bf16.msra.mxu0 %v7740
        %8051 = vmatpush.bf16.msra.mxu0 %v7736
        %8052 = vmatpush.bf16.msra.mxu0 %v7732
        %8053 = vmatpush.bf16.msra.mxu0 %v7728
        %8054 = vmatpush.bf16.msra.mxu0 %v7724
        %8055 = vmatmul.bf16.gmra.mxu0 %v7362
        %v8056 = vpop.f32.mrf.mxu0
        %v8057 = vadd.f32 %v8039, %v8056
        %v8058 = vpop.f32.mrf.mxu0
        %v8059 = vadd.f32 %v8041, %v8058
        %8060 = vmatmul.bf16.gmra.mxu0 %v7361
        %v8061 = vpop.f32.mrf.mxu0
        %v8062 = vadd.f32 %v8044, %v8061
        %v8063 = vpop.f32.mrf.mxu0
        %8064 = vdwg.mxu0
        %v8065 = vadd.f32 %v7192, %v7895
        %v8066 = vadd.f32 %v7193, %v7949
        %v8067 = vadd.f32 %v7194, %v8003
        %v8068 = vadd.f32 %v7195, %v8057
        %v8069 = vadd.f32 %v7196, %v7897
        %v8070 = vadd.f32 %v7197, %v7951
        %v8071 = vadd.f32 %v7198, %v8005
        %v8072 = vadd.f32 %v7199, %v8059
        %v8073 = vadd.f32 %v7200, %v7900
        %v8074 = vadd.f32 %v7201, %v7954
        %v8075 = vadd.f32 %v7202, %v8008
        %v8076 = vadd.f32 %v7203, %v8062
        %v8077 = vld [vmem:[#allocation2 + $0xc] sm:$0x88]
        %v8078 = vld [vmem:[#allocation2 + $0x14] sm:$0x8]
        %s8079 = scalar_lea.vmem %s3, 6144
        %v8080 = vld [vmem:[%s8079] sm:$0xff]
        %v8081 = vld [vmem:[%s8079 + $0x8] sm:$0xff]
        %v8082 = vld [vmem:[%s8079 + $0x10] sm:$0xff]
        %v8083 = vld [vmem:[%s8079 + $0x18] sm:$0xff]
        %v8084 = vld [vmem:[%s8079 + $0x20] sm:$0xff]
        %v8085 = vld [vmem:[%s8079 + $0x28] sm:$0xff]
        %v8086 = vld [vmem:[%s8079 + $0x30] sm:$0xff]
        %v8087 = vld [vmem:[%s8079 + $0x38] sm:$0xff]
        %v8088 = vld [vmem:[%s8079 + $0x40] sm:$0xff]
        %v8089 = vld [vmem:[%s8079 + $0x48] sm:$0xff]
        %v8090 = vld [vmem:[%s8079 + $0x50] sm:$0xff]
        %v8091 = vld [vmem:[%s8079 + $0x58] sm:$0xff]
        %v8092 = vld [vmem:[%s8079 + $0x60] sm:$0xff]
        %v8093 = vld [vmem:[%s8079 + $0x68] sm:$0xff]
        %v8094 = vld [vmem:[%s8079 + $0x70] sm:$0xff]
        %v8095 = vld [vmem:[%s8079 + $0x78] sm:$0xff]
        %v8096 = vld [vmem:[%s8079 + $0x80] sm:$0xff]
        %v8097 = vld [vmem:[%s8079 + $0x88] sm:$0xff]
        %v8098 = vld [vmem:[%s8079 + $0x90] sm:$0xff]
        %v8099 = vld [vmem:[%s8079 + $0x98] sm:$0xff]
        %v8100 = vld [vmem:[%s8079 + $0xa0] sm:$0xff]
        %v8101 = vld [vmem:[%s8079 + $0xa8] sm:$0xff]
        %v8102 = vld [vmem:[%s8079 + $0xb0] sm:$0xff]
        %v8103 = vld [vmem:[%s8079 + $0xb8] sm:$0xff]
        %v8104 = vld [vmem:[%s8079 + $0xc0] sm:$0xff]
        %v8105 = vld [vmem:[%s8079 + $0xc8] sm:$0xff]
        %v8106 = vld [vmem:[%s8079 + $0xd0] sm:$0xff]
        %v8107 = vld [vmem:[%s8079 + $0xd8] sm:$0xff]
        %v8108 = vld [vmem:[%s8079 + $0xe0] sm:$0xff]
        %v8109 = vld [vmem:[%s8079 + $0xe8] sm:$0xff]
        %v8110 = vld [vmem:[%s8079 + $0xf0] sm:$0xff]
        %v8111 = vld [vmem:[%s8079 + $0xf8] sm:$0xff]
        %v8112 = vld [vmem:[%s8079 + $0x100] sm:$0xff]
        %v8113 = vld [vmem:[%s8079 + $0x108] sm:$0xff]
        %v8114 = vld [vmem:[%s8079 + $0x110] sm:$0xff]
        %v8115 = vld [vmem:[%s8079 + $0x118] sm:$0xff]
        %v8116 = vld [vmem:[%s8079 + $0x120] sm:$0xff]
        %v8117 = vld [vmem:[%s8079 + $0x128] sm:$0xff]
        %v8118 = vld [vmem:[%s8079 + $0x130] sm:$0xff]
        %v8119 = vld [vmem:[%s8079 + $0x138] sm:$0xff]
        %v8120 = vld [vmem:[%s8079 + $0x140] sm:$0xff]
        %v8121 = vld [vmem:[%s8079 + $0x148] sm:$0xff]
        %v8122 = vld [vmem:[%s8079 + $0x150] sm:$0xff]
        %v8123 = vld [vmem:[%s8079 + $0x158] sm:$0xff]
        %v8124 = vld [vmem:[%s8079 + $0x160] sm:$0xff]
        %v8125 = vld [vmem:[%s8079 + $0x168] sm:$0xff]
        %v8126 = vld [vmem:[%s8079 + $0x170] sm:$0xff]
        %v8127 = vld [vmem:[%s8079 + $0x178] sm:$0xff]
        %v8128 = vld [vmem:[%s8079 + $0x180] sm:$0xff]
        %v8129 = vld [vmem:[%s8079 + $0x188] sm:$0xff]
        %v8130 = vld [vmem:[%s8079 + $0x190] sm:$0xff]
        %v8131 = vld [vmem:[%s8079 + $0x198] sm:$0xff]
        %v8132 = vld [vmem:[%s8079 + $0x1a0] sm:$0xff]
        %v8133 = vld [vmem:[%s8079 + $0x1a8] sm:$0xff]
        %v8134 = vld [vmem:[%s8079 + $0x1b0] sm:$0xff]
        %v8135 = vld [vmem:[%s8079 + $0x1b8] sm:$0xff]
        %v8136 = vld [vmem:[%s8079 + $0x1c0] sm:$0xff]
        %v8137 = vld [vmem:[%s8079 + $0x1c8] sm:$0xff]
        %v8138 = vld [vmem:[%s8079 + $0x1d0] sm:$0xff]
        %v8139 = vld [vmem:[%s8079 + $0x1d8] sm:$0xff]
        %v8140 = vld [vmem:[%s8079 + $0x1e0] sm:$0xff]
        %v8141 = vld [vmem:[%s8079 + $0x1e8] sm:$0xff]
        %v8142 = vld [vmem:[%s8079 + $0x1f0] sm:$0xff]
        %v8143 = vld [vmem:[%s8079 + $0x1f8] sm:$0xff]
        %v8144 = vld [vmem:[%s8079 + $0x200] sm:$0xff]
        %v8145 = vld [vmem:[%s8079 + $0x208] sm:$0xff]
        %v8146 = vld [vmem:[%s8079 + $0x210] sm:$0xff]
        %v8147 = vld [vmem:[%s8079 + $0x218] sm:$0xff]
        %v8148 = vld [vmem:[%s8079 + $0x220] sm:$0xff]
        %v8149 = vld [vmem:[%s8079 + $0x228] sm:$0xff]
        %v8150 = vld [vmem:[%s8079 + $0x230] sm:$0xff]
        %v8151 = vld [vmem:[%s8079 + $0x238] sm:$0xff]
        %v8152 = vld [vmem:[%s8079 + $0x240] sm:$0xff]
        %v8153 = vld [vmem:[%s8079 + $0x248] sm:$0xff]
        %v8154 = vld [vmem:[%s8079 + $0x250] sm:$0xff]
        %v8155 = vld [vmem:[%s8079 + $0x258] sm:$0xff]
        %v8156 = vld [vmem:[%s8079 + $0x260] sm:$0xff]
        %v8157 = vld [vmem:[%s8079 + $0x268] sm:$0xff]
        %v8158 = vld [vmem:[%s8079 + $0x270] sm:$0xff]
        %v8159 = vld [vmem:[%s8079 + $0x278] sm:$0xff]
        %v8160 = vld [vmem:[%s8079 + $0x280] sm:$0xff]
        %v8161 = vld [vmem:[%s8079 + $0x288] sm:$0xff]
        %v8162 = vld [vmem:[%s8079 + $0x290] sm:$0xff]
        %v8163 = vld [vmem:[%s8079 + $0x298] sm:$0xff]
        %v8164 = vld [vmem:[%s8079 + $0x2a0] sm:$0xff]
        %v8165 = vld [vmem:[%s8079 + $0x2a8] sm:$0xff]
        %v8166 = vld [vmem:[%s8079 + $0x2b0] sm:$0xff]
        %v8167 = vld [vmem:[%s8079 + $0x2b8] sm:$0xff]
        %v8168 = vld [vmem:[%s8079 + $0x2c0] sm:$0xff]
        %v8169 = vld [vmem:[%s8079 + $0x2c8] sm:$0xff]
        %v8170 = vld [vmem:[%s8079 + $0x2d0] sm:$0xff]
        %v8171 = vld [vmem:[%s8079 + $0x2d8] sm:$0xff]
        %v8172 = vld [vmem:[%s8079 + $0x2e0] sm:$0xff]
        %v8173 = vld [vmem:[%s8079 + $0x2e8] sm:$0xff]
        %v8174 = vld [vmem:[%s8079 + $0x2f0] sm:$0xff]
        %v8175 = vld [vmem:[%s8079 + $0x2f8] sm:$0xff]
        %v8178 = vunpack.c.l.b16 %v8077
        %v8179 = vunpack.c.h.b16 %v8077
        %v8180 = vunpack.c.l.b16 %v8078
        %v8181 = vpack.c.b16 %v6465, %v8178
        %v8182 = vpack.c.b16 %v6466, %v8179
        %v8183 = vpack.c.b16 %v6467, %v8180
        %v8184 = vrot.slane %v8181, 3
        %v8185 = vrot.slane %v7308, 3
        %v8186 = vsel %vm3935, %v8184, %v8185
        %v8187 = vrot.slane %v8182, 3
        %v8188 = vrot.slane %v7309, 3
        %v8189 = vsel %vm3935, %v8187, %v8188
        %v8190 = vrot.slane %v8183, 3
        %v8191 = vrot.slane %v7310, 3
        %v8192 = vsel %vm3935, %v8190, %v8191
        %v8295 = vunpack.c.l.b16 %v8080
        %v8296 = vunpack.c.h.b16 %v8080
        %v8297 = vunpack.c.l.b16 %v8081
        %v8298 = vunpack.c.h.b16 %v8081
        %v8299 = vunpack.c.l.b16 %v8082
        %v8300 = vunpack.c.h.b16 %v8082
        %v8301 = vunpack.c.l.b16 %v8083
        %v8302 = vunpack.c.h.b16 %v8083
        %v8303 = vunpack.c.l.b16 %v8084
        %v8304 = vunpack.c.h.b16 %v8084
        %v8305 = vunpack.c.l.b16 %v8085
        %v8306 = vunpack.c.h.b16 %v8085
        %v8307 = vunpack.c.l.b16 %v8086
        %v8308 = vunpack.c.h.b16 %v8086
        %v8309 = vunpack.c.l.b16 %v8087
        %v8310 = vunpack.c.h.b16 %v8087
        %v8311 = vunpack.c.l.b16 %v8088
        %v8312 = vunpack.c.h.b16 %v8088
        %v8313 = vunpack.c.l.b16 %v8089
        %v8314 = vunpack.c.h.b16 %v8089
        %v8315 = vunpack.c.l.b16 %v8090
        %v8316 = vunpack.c.h.b16 %v8090
        %v8317 = vunpack.c.l.b16 %v8091
        %v8318 = vunpack.c.h.b16 %v8091
        %v8319 = vunpack.c.l.b16 %v8092
        %v8320 = vunpack.c.h.b16 %v8092
        %v8321 = vunpack.c.l.b16 %v8093
        %v8322 = vunpack.c.h.b16 %v8093
        %v8323 = vunpack.c.l.b16 %v8094
        %v8324 = vunpack.c.h.b16 %v8094
        %v8325 = vunpack.c.l.b16 %v8095
        %v8326 = vunpack.c.h.b16 %v8095
        %v8327 = vunpack.c.l.b16 %v8096
        %v8328 = vunpack.c.h.b16 %v8096
        %v8329 = vunpack.c.l.b16 %v8097
        %v8330 = vunpack.c.h.b16 %v8097
        %v8331 = vunpack.c.l.b16 %v8098
        %v8332 = vunpack.c.h.b16 %v8098
        %v8333 = vunpack.c.l.b16 %v8099
        %v8334 = vunpack.c.h.b16 %v8099
        %v8335 = vunpack.c.l.b16 %v8100
        %v8336 = vunpack.c.h.b16 %v8100
        %v8337 = vunpack.c.l.b16 %v8101
        %v8338 = vunpack.c.h.b16 %v8101
        %v8339 = vunpack.c.l.b16 %v8102
        %v8340 = vunpack.c.h.b16 %v8102
        %v8341 = vunpack.c.l.b16 %v8103
        %v8342 = vunpack.c.h.b16 %v8103
        %v8343 = vunpack.c.l.b16 %v8104
        %v8344 = vunpack.c.h.b16 %v8104
        %v8345 = vunpack.c.l.b16 %v8105
        %v8346 = vunpack.c.h.b16 %v8105
        %v8347 = vunpack.c.l.b16 %v8106
        %v8348 = vunpack.c.h.b16 %v8106
        %v8349 = vunpack.c.l.b16 %v8107
        %v8350 = vunpack.c.h.b16 %v8107
        %v8351 = vunpack.c.l.b16 %v8108
        %v8352 = vunpack.c.h.b16 %v8108
        %v8353 = vunpack.c.l.b16 %v8109
        %v8354 = vunpack.c.h.b16 %v8109
        %v8355 = vunpack.c.l.b16 %v8110
        %v8356 = vunpack.c.h.b16 %v8110
        %v8357 = vunpack.c.l.b16 %v8111
        %v8358 = vunpack.c.h.b16 %v8111
        %v8359 = vunpack.c.l.b16 %v8112
        %v8360 = vunpack.c.h.b16 %v8112
        %v8361 = vunpack.c.l.b16 %v8113
        %v8362 = vunpack.c.h.b16 %v8113
        %v8363 = vunpack.c.l.b16 %v8114
        %v8364 = vunpack.c.h.b16 %v8114
        %v8365 = vunpack.c.l.b16 %v8115
        %v8366 = vunpack.c.h.b16 %v8115
        %v8367 = vunpack.c.l.b16 %v8116
        %v8368 = vunpack.c.h.b16 %v8116
        %v8369 = vunpack.c.l.b16 %v8117
        %v8370 = vunpack.c.h.b16 %v8117
        %v8371 = vunpack.c.l.b16 %v8118
        %v8372 = vunpack.c.h.b16 %v8118
        %v8373 = vunpack.c.l.b16 %v8119
        %v8374 = vunpack.c.h.b16 %v8119
        %v8375 = vunpack.c.l.b16 %v8120
        %v8376 = vunpack.c.h.b16 %v8120
        %v8377 = vunpack.c.l.b16 %v8121
        %v8378 = vunpack.c.h.b16 %v8121
        %v8379 = vunpack.c.l.b16 %v8122
        %v8380 = vunpack.c.h.b16 %v8122
        %v8381 = vunpack.c.l.b16 %v8123
        %v8382 = vunpack.c.h.b16 %v8123
        %v8383 = vunpack.c.l.b16 %v8124
        %v8384 = vunpack.c.h.b16 %v8124
        %v8385 = vunpack.c.l.b16 %v8125
        %v8386 = vunpack.c.h.b16 %v8125
        %v8387 = vunpack.c.l.b16 %v8126
        %v8388 = vunpack.c.h.b16 %v8126
        %v8389 = vunpack.c.l.b16 %v8127
        %v8390 = vunpack.c.h.b16 %v8127
        %v8391 = vunpack.c.l.b16 %v8128
        %v8392 = vunpack.c.h.b16 %v8128
        %v8393 = vunpack.c.l.b16 %v8129
        %v8394 = vunpack.c.h.b16 %v8129
        %v8395 = vunpack.c.l.b16 %v8130
        %v8396 = vunpack.c.h.b16 %v8130
        %v8397 = vunpack.c.l.b16 %v8131
        %v8398 = vunpack.c.h.b16 %v8131
        %v8399 = vunpack.c.l.b16 %v8132
        %v8400 = vunpack.c.h.b16 %v8132
        %v8401 = vunpack.c.l.b16 %v8133
        %v8402 = vunpack.c.h.b16 %v8133
        %v8403 = vunpack.c.l.b16 %v8134
        %v8404 = vunpack.c.h.b16 %v8134
        %v8405 = vunpack.c.l.b16 %v8135
        %v8406 = vunpack.c.h.b16 %v8135
        %v8407 = vunpack.c.l.b16 %v8136
        %v8408 = vunpack.c.h.b16 %v8136
        %v8409 = vunpack.c.l.b16 %v8137
        %v8410 = vunpack.c.h.b16 %v8137
        %v8411 = vunpack.c.l.b16 %v8138
        %v8412 = vunpack.c.h.b16 %v8138
        %v8413 = vunpack.c.l.b16 %v8139
        %v8414 = vunpack.c.h.b16 %v8139
        %v8415 = vunpack.c.l.b16 %v8140
        %v8416 = vunpack.c.h.b16 %v8140
        %v8417 = vunpack.c.l.b16 %v8141
        %v8418 = vunpack.c.h.b16 %v8141
        %v8419 = vunpack.c.l.b16 %v8142
        %v8420 = vunpack.c.h.b16 %v8142
        %v8421 = vunpack.c.l.b16 %v8143
        %v8422 = vunpack.c.h.b16 %v8143
        %v8423 = vunpack.c.l.b16 %v8144
        %v8424 = vunpack.c.h.b16 %v8144
        %v8425 = vunpack.c.l.b16 %v8145
        %v8426 = vunpack.c.h.b16 %v8145
        %v8427 = vunpack.c.l.b16 %v8146
        %v8428 = vunpack.c.h.b16 %v8146
        %v8429 = vunpack.c.l.b16 %v8147
        %v8430 = vunpack.c.h.b16 %v8147
        %v8431 = vunpack.c.l.b16 %v8148
        %v8432 = vunpack.c.h.b16 %v8148
        %v8433 = vunpack.c.l.b16 %v8149
        %v8434 = vunpack.c.h.b16 %v8149
        %v8435 = vunpack.c.l.b16 %v8150
        %v8436 = vunpack.c.h.b16 %v8150
        %v8437 = vunpack.c.l.b16 %v8151
        %v8438 = vunpack.c.h.b16 %v8151
        %v8439 = vunpack.c.l.b16 %v8152
        %v8440 = vunpack.c.h.b16 %v8152
        %v8441 = vunpack.c.l.b16 %v8153
        %v8442 = vunpack.c.h.b16 %v8153
        %v8443 = vunpack.c.l.b16 %v8154
        %v8444 = vunpack.c.h.b16 %v8154
        %v8445 = vunpack.c.l.b16 %v8155
        %v8446 = vunpack.c.h.b16 %v8155
        %v8447 = vunpack.c.l.b16 %v8156
        %v8448 = vunpack.c.h.b16 %v8156
        %v8449 = vunpack.c.l.b16 %v8157
        %v8450 = vunpack.c.h.b16 %v8157
        %v8451 = vunpack.c.l.b16 %v8158
        %v8452 = vunpack.c.h.b16 %v8158
        %v8453 = vunpack.c.l.b16 %v8159
        %v8454 = vunpack.c.h.b16 %v8159
        %v8455 = vunpack.c.l.b16 %v8160
        %v8456 = vunpack.c.h.b16 %v8160
        %v8457 = vunpack.c.l.b16 %v8161
        %v8458 = vunpack.c.h.b16 %v8161
        %v8459 = vunpack.c.l.b16 %v8162
        %v8460 = vunpack.c.h.b16 %v8162
        %v8461 = vunpack.c.l.b16 %v8163
        %v8462 = vunpack.c.h.b16 %v8163
        %v8463 = vunpack.c.l.b16 %v8164
        %v8464 = vunpack.c.h.b16 %v8164
        %v8465 = vunpack.c.l.b16 %v8165
        %v8466 = vunpack.c.h.b16 %v8165
        %v8467 = vunpack.c.l.b16 %v8166
        %v8468 = vunpack.c.h.b16 %v8166
        %v8469 = vunpack.c.l.b16 %v8167
        %v8470 = vunpack.c.h.b16 %v8167
        %v8471 = vunpack.c.l.b16 %v8168
        %v8472 = vunpack.c.h.b16 %v8168
        %v8473 = vunpack.c.l.b16 %v8169
        %v8474 = vunpack.c.h.b16 %v8169
        %v8475 = vunpack.c.l.b16 %v8170
        %v8476 = vunpack.c.h.b16 %v8170
        %v8477 = vunpack.c.l.b16 %v8171
        %v8478 = vunpack.c.h.b16 %v8171
        %v8479 = vunpack.c.l.b16 %v8172
        %v8480 = vunpack.c.h.b16 %v8172
        %v8481 = vunpack.c.l.b16 %v8173
        %v8482 = vunpack.c.h.b16 %v8173
        %v8483 = vunpack.c.l.b16 %v8174
        %v8484 = vunpack.c.h.b16 %v8174
        %v8485 = vunpack.c.l.b16 %v8175
        %v8486 = vunpack.c.h.b16 %v8175
        %v8487 = vpack.c.b16 %v8299, %v8295
        %v8488 = vpack.c.b16 %v8300, %v8296
        %v8489 = vpack.c.b16 %v8301, %v8297
        %v8490 = vpack.c.b16 %v8302, %v8298
        %v8491 = vpack.c.b16 %v8307, %v8303
        %v8492 = vpack.c.b16 %v8308, %v8304
        %v8493 = vpack.c.b16 %v8309, %v8305
        %v8494 = vpack.c.b16 %v8310, %v8306
        %v8495 = vpack.c.b16 %v8315, %v8311
        %v8496 = vpack.c.b16 %v8316, %v8312
        %v8497 = vpack.c.b16 %v8317, %v8313
        %v8498 = vpack.c.b16 %v8318, %v8314
        %v8499 = vpack.c.b16 %v8323, %v8319
        %v8500 = vpack.c.b16 %v8324, %v8320
        %v8501 = vpack.c.b16 %v8325, %v8321
        %v8502 = vpack.c.b16 %v8326, %v8322
        %v8503 = vpack.c.b16 %v8331, %v8327
        %v8504 = vpack.c.b16 %v8332, %v8328
        %v8505 = vpack.c.b16 %v8333, %v8329
        %v8506 = vpack.c.b16 %v8334, %v8330
        %v8507 = vpack.c.b16 %v8339, %v8335
        %v8508 = vpack.c.b16 %v8340, %v8336
        %v8509 = vpack.c.b16 %v8341, %v8337
        %v8510 = vpack.c.b16 %v8342, %v8338
        %v8511 = vpack.c.b16 %v8347, %v8343
        %v8512 = vpack.c.b16 %v8348, %v8344
        %v8513 = vpack.c.b16 %v8349, %v8345
        %v8514 = vpack.c.b16 %v8350, %v8346
        %v8515 = vpack.c.b16 %v8355, %v8351
        %v8516 = vpack.c.b16 %v8356, %v8352
        %v8517 = vpack.c.b16 %v8357, %v8353
        %v8518 = vpack.c.b16 %v8358, %v8354
        %v8519 = vpack.c.b16 %v8363, %v8359
        %v8520 = vpack.c.b16 %v8364, %v8360
        %v8521 = vpack.c.b16 %v8365, %v8361
        %v8522 = vpack.c.b16 %v8366, %v8362
        %v8523 = vpack.c.b16 %v8371, %v8367
        %v8524 = vpack.c.b16 %v8372, %v8368
        %v8525 = vpack.c.b16 %v8373, %v8369
        %v8526 = vpack.c.b16 %v8374, %v8370
        %v8527 = vpack.c.b16 %v8379, %v8375
        %v8528 = vpack.c.b16 %v8380, %v8376
        %v8529 = vpack.c.b16 %v8381, %v8377
        %v8530 = vpack.c.b16 %v8382, %v8378
        %v8531 = vpack.c.b16 %v8387, %v8383
        %v8532 = vpack.c.b16 %v8388, %v8384
        %v8533 = vpack.c.b16 %v8389, %v8385
        %v8534 = vpack.c.b16 %v8390, %v8386
        %v8535 = vpack.c.b16 %v8395, %v8391
        %v8536 = vpack.c.b16 %v8396, %v8392
        %v8537 = vpack.c.b16 %v8397, %v8393
        %v8538 = vpack.c.b16 %v8398, %v8394
        %v8539 = vpack.c.b16 %v8403, %v8399
        %v8540 = vpack.c.b16 %v8404, %v8400
        %v8541 = vpack.c.b16 %v8405, %v8401
        %v8542 = vpack.c.b16 %v8406, %v8402
        %v8543 = vpack.c.b16 %v8411, %v8407
        %v8544 = vpack.c.b16 %v8412, %v8408
        %v8545 = vpack.c.b16 %v8413, %v8409
        %v8546 = vpack.c.b16 %v8414, %v8410
        %v8547 = vpack.c.b16 %v8419, %v8415
        %v8548 = vpack.c.b16 %v8420, %v8416
        %v8549 = vpack.c.b16 %v8421, %v8417
        %v8550 = vpack.c.b16 %v8422, %v8418
        %v8551 = vpack.c.b16 %v8427, %v8423
        %v8552 = vpack.c.b16 %v8428, %v8424
        %v8553 = vpack.c.b16 %v8429, %v8425
        %v8554 = vpack.c.b16 %v8430, %v8426
        %v8555 = vpack.c.b16 %v8435, %v8431
        %v8556 = vpack.c.b16 %v8436, %v8432
        %v8557 = vpack.c.b16 %v8437, %v8433
        %v8558 = vpack.c.b16 %v8438, %v8434
        %v8559 = vpack.c.b16 %v8443, %v8439
        %v8560 = vpack.c.b16 %v8444, %v8440
        %v8561 = vpack.c.b16 %v8445, %v8441
        %v8562 = vpack.c.b16 %v8446, %v8442
        %v8563 = vpack.c.b16 %v8451, %v8447
        %v8564 = vpack.c.b16 %v8452, %v8448
        %v8565 = vpack.c.b16 %v8453, %v8449
        %v8566 = vpack.c.b16 %v8454, %v8450
        %v8567 = vpack.c.b16 %v8459, %v8455
        %v8568 = vpack.c.b16 %v8460, %v8456
        %v8569 = vpack.c.b16 %v8461, %v8457
        %v8570 = vpack.c.b16 %v8462, %v8458
        %v8571 = vpack.c.b16 %v8467, %v8463
        %v8572 = vpack.c.b16 %v8468, %v8464
        %v8573 = vpack.c.b16 %v8469, %v8465
        %v8574 = vpack.c.b16 %v8470, %v8466
        %v8575 = vpack.c.b16 %v8475, %v8471
        %v8576 = vpack.c.b16 %v8476, %v8472
        %v8577 = vpack.c.b16 %v8477, %v8473
        %v8578 = vpack.c.b16 %v8478, %v8474
        %v8579 = vpack.c.b16 %v8483, %v8479
        %v8580 = vpack.c.b16 %v8484, %v8480
        %v8581 = vpack.c.b16 %v8485, %v8481
        %v8582 = vpack.c.b16 %v8486, %v8482
        %8679 = vmatpush.bf16.msra.mxu0 %v8515
        %8680 = vmatpush.bf16.msra.mxu0 %v8511
        %8681 = vmatpush.bf16.msra.mxu0 %v8507
        %8682 = vmatpush.bf16.msra.mxu0 %v8503
        %8683 = vmatpush.bf16.msra.mxu0 %v8499
        %8684 = vmatpush.bf16.msra.mxu0 %v8495
        %8685 = vmatpush.bf16.msra.mxu0 %v8491
        %8686 = vmatpush.bf16.msra.mxu0 %v8487
        %8687 = vmatmul.bf16.gmra.mxu0 %v8186
        %v8688 = vpop.f32.mrf.mxu0
        %v8689 = vadd.f32 0.0, %v8688
        %v8690 = vpop.f32.mrf.mxu0
        %v8691 = vadd.f32 0.0, %v8690
        %8692 = vmatmul.bf16.gmra.mxu0 %v8185
        %v8693 = vpop.f32.mrf.mxu0
        %v8694 = vadd.f32 0.0, %v8693
        %v8695 = vpop.f32.mrf.mxu0
        %8696 = vdwg.mxu0
        %8697 = vmatpush.bf16.msra.mxu0 %v8547
        %8698 = vmatpush.bf16.msra.mxu0 %v8543
        %8699 = vmatpush.bf16.msra.mxu0 %v8539
        %8700 = vmatpush.bf16.msra.mxu0 %v8535
        %8701 = vmatpush.bf16.msra.mxu0 %v8531
        %8702 = vmatpush.bf16.msra.mxu0 %v8527
        %8703 = vmatpush.bf16.msra.mxu0 %v8523
        %8704 = vmatpush.bf16.msra.mxu0 %v8519
        %8705 = vmatmul.bf16.gmra.mxu0 %v8189
        %v8706 = vpop.f32.mrf.mxu0
        %v8707 = vadd.f32 %v8689, %v8706
        %v8708 = vpop.f32.mrf.mxu0
        %v8709 = vadd.f32 %v8691, %v8708
        %8710 = vmatmul.bf16.gmra.mxu0 %v8188
        %v8711 = vpop.f32.mrf.mxu0
        %v8712 = vadd.f32 %v8694, %v8711
        %v8713 = vpop.f32.mrf.mxu0
        %8714 = vdwg.mxu0
        %8715 = vmatpush.bf16.msra.mxu0 %v8579
        %8716 = vmatpush.bf16.msra.mxu0 %v8575
        %8717 = vmatpush.bf16.msra.mxu0 %v8571
        %8718 = vmatpush.bf16.msra.mxu0 %v8567
        %8719 = vmatpush.bf16.msra.mxu0 %v8563
        %8720 = vmatpush.bf16.msra.mxu0 %v8559
        %8721 = vmatpush.bf16.msra.mxu0 %v8555
        %8722 = vmatpush.bf16.msra.mxu0 %v8551
        %8723 = vmatmul.bf16.gmra.mxu0 %v8192
        %v8724 = vpop.f32.mrf.mxu0
        %v8725 = vadd.f32 %v8707, %v8724
        %v8726 = vpop.f32.mrf.mxu0
        %v8727 = vadd.f32 %v8709, %v8726
        %8728 = vmatmul.bf16.gmra.mxu0 %v8191
        %v8729 = vpop.f32.mrf.mxu0
        %v8730 = vadd.f32 %v8712, %v8729
        %v8731 = vpop.f32.mrf.mxu0
        %8732 = vdwg.mxu0
        %8733 = vmatpush.bf16.msra.mxu0 %v8516
        %8734 = vmatpush.bf16.msra.mxu0 %v8512
        %8735 = vmatpush.bf16.msra.mxu0 %v8508
        %8736 = vmatpush.bf16.msra.mxu0 %v8504
        %8737 = vmatpush.bf16.msra.mxu0 %v8500
        %8738 = vmatpush.bf16.msra.mxu0 %v8496
        %8739 = vmatpush.bf16.msra.mxu0 %v8492
        %8740 = vmatpush.bf16.msra.mxu0 %v8488
        %8741 = vmatmul.bf16.gmra.mxu0 %v8186
        %v8742 = vpop.f32.mrf.mxu0
        %v8743 = vadd.f32 0.0, %v8742
        %v8744 = vpop.f32.mrf.mxu0
        %v8745 = vadd.f32 0.0, %v8744
        %8746 = vmatmul.bf16.gmra.mxu0 %v8185
        %v8747 = vpop.f32.mrf.mxu0
        %v8748 = vadd.f32 0.0, %v8747
        %v8749 = vpop.f32.mrf.mxu0
        %8750 = vdwg.mxu0
        %8751 = vmatpush.bf16.msra.mxu0 %v8548
        %8752 = vmatpush.bf16.msra.mxu0 %v8544
        %8753 = vmatpush.bf16.msra.mxu0 %v8540
        %8754 = vmatpush.bf16.msra.mxu0 %v8536
        %8755 = vmatpush.bf16.msra.mxu0 %v8532
        %8756 = vmatpush.bf16.msra.mxu0 %v8528
        %8757 = vmatpush.bf16.msra.mxu0 %v8524
        %8758 = vmatpush.bf16.msra.mxu0 %v8520
        %8759 = vmatmul.bf16.gmra.mxu0 %v8189
        %v8760 = vpop.f32.mrf.mxu0
        %v8761 = vadd.f32 %v8743, %v8760
        %v8762 = vpop.f32.mrf.mxu0
        %v8763 = vadd.f32 %v8745, %v8762
        %8764 = vmatmul.bf16.gmra.mxu0 %v8188
        %v8765 = vpop.f32.mrf.mxu0
        %v8766 = vadd.f32 %v8748, %v8765
        %v8767 = vpop.f32.mrf.mxu0
        %8768 = vdwg.mxu0
        %8769 = vmatpush.bf16.msra.mxu0 %v8580
        %8770 = vmatpush.bf16.msra.mxu0 %v8576
        %8771 = vmatpush.bf16.msra.mxu0 %v8572
        %8772 = vmatpush.bf16.msra.mxu0 %v8568
        %8773 = vmatpush.bf16.msra.mxu0 %v8564
        %8774 = vmatpush.bf16.msra.mxu0 %v8560
        %8775 = vmatpush.bf16.msra.mxu0 %v8556
        %8776 = vmatpush.bf16.msra.mxu0 %v8552
        %8777 = vmatmul.bf16.gmra.mxu0 %v8192
        %v8778 = vpop.f32.mrf.mxu0
        %v8779 = vadd.f32 %v8761, %v8778
        %v8780 = vpop.f32.mrf.mxu0
        %v8781 = vadd.f32 %v8763, %v8780
        %8782 = vmatmul.bf16.gmra.mxu0 %v8191
        %v8783 = vpop.f32.mrf.mxu0
        %v8784 = vadd.f32 %v8766, %v8783
        %v8785 = vpop.f32.mrf.mxu0
        %8786 = vdwg.mxu0
        %8787 = vmatpush.bf16.msra.mxu0 %v8517
        %8788 = vmatpush.bf16.msra.mxu0 %v8513
        %8789 = vmatpush.bf16.msra.mxu0 %v8509
        %8790 = vmatpush.bf16.msra.mxu0 %v8505
        %8791 = vmatpush.bf16.msra.mxu0 %v8501
        %8792 = vmatpush.bf16.msra.mxu0 %v8497
        %8793 = vmatpush.bf16.msra.mxu0 %v8493
        %8794 = vmatpush.bf16.msra.mxu0 %v8489
        %8795 = vmatmul.bf16.gmra.mxu0 %v8186
        %v8796 = vpop.f32.mrf.mxu0
        %v8797 = vadd.f32 0.0, %v8796
        %v8798 = vpop.f32.mrf.mxu0
        %v8799 = vadd.f32 0.0, %v8798
        %8800 = vmatmul.bf16.gmra.mxu0 %v8185
        %v8801 = vpop.f32.mrf.mxu0
        %v8802 = vadd.f32 0.0, %v8801
        %v8803 = vpop.f32.mrf.mxu0
        %8804 = vdwg.mxu0
        %8805 = vmatpush.bf16.msra.mxu0 %v8549
        %8806 = vmatpush.bf16.msra.mxu0 %v8545
        %8807 = vmatpush.bf16.msra.mxu0 %v8541
        %8808 = vmatpush.bf16.msra.mxu0 %v8537
        %8809 = vmatpush.bf16.msra.mxu0 %v8533
        %8810 = vmatpush.bf16.msra.mxu0 %v8529
        %8811 = vmatpush.bf16.msra.mxu0 %v8525
        %8812 = vmatpush.bf16.msra.mxu0 %v8521
        %8813 = vmatmul.bf16.gmra.mxu0 %v8189
        %v8814 = vpop.f32.mrf.mxu0
        %v8815 = vadd.f32 %v8797, %v8814
        %v8816 = vpop.f32.mrf.mxu0
        %v8817 = vadd.f32 %v8799, %v8816
        %8818 = vmatmul.bf16.gmra.mxu0 %v8188
        %v8819 = vpop.f32.mrf.mxu0
        %v8820 = vadd.f32 %v8802, %v8819
        %v8821 = vpop.f32.mrf.mxu0
        %8822 = vdwg.mxu0
        %8823 = vmatpush.bf16.msra.mxu0 %v8581
        %8824 = vmatpush.bf16.msra.mxu0 %v8577
        %8825 = vmatpush.bf16.msra.mxu0 %v8573
        %8826 = vmatpush.bf16.msra.mxu0 %v8569
        %8827 = vmatpush.bf16.msra.mxu0 %v8565
        %8828 = vmatpush.bf16.msra.mxu0 %v8561
        %8829 = vmatpush.bf16.msra.mxu0 %v8557
        %8830 = vmatpush.bf16.msra.mxu0 %v8553
        %8831 = vmatmul.bf16.gmra.mxu0 %v8192
        %v8832 = vpop.f32.mrf.mxu0
        %v8833 = vadd.f32 %v8815, %v8832
        %v8834 = vpop.f32.mrf.mxu0
        %v8835 = vadd.f32 %v8817, %v8834
        %8836 = vmatmul.bf16.gmra.mxu0 %v8191
        %v8837 = vpop.f32.mrf.mxu0
        %v8838 = vadd.f32 %v8820, %v8837
        %v8839 = vpop.f32.mrf.mxu0
        %8840 = vdwg.mxu0
        %8841 = vmatpush.bf16.msra.mxu0 %v8518
        %8842 = vmatpush.bf16.msra.mxu0 %v8514
        %8843 = vmatpush.bf16.msra.mxu0 %v8510
        %8844 = vmatpush.bf16.msra.mxu0 %v8506
        %8845 = vmatpush.bf16.msra.mxu0 %v8502
        %8846 = vmatpush.bf16.msra.mxu0 %v8498
        %8847 = vmatpush.bf16.msra.mxu0 %v8494
        %8848 = vmatpush.bf16.msra.mxu0 %v8490
        %8849 = vmatmul.bf16.gmra.mxu0 %v8186
        %v8850 = vpop.f32.mrf.mxu0
        %v8851 = vadd.f32 0.0, %v8850
        %v8852 = vpop.f32.mrf.mxu0
        %v8853 = vadd.f32 0.0, %v8852
        %8854 = vmatmul.bf16.gmra.mxu0 %v8185
        %v8855 = vpop.f32.mrf.mxu0
        %v8856 = vadd.f32 0.0, %v8855
        %v8857 = vpop.f32.mrf.mxu0
        %8858 = vdwg.mxu0
        %8859 = vmatpush.bf16.msra.mxu0 %v8550
        %8860 = vmatpush.bf16.msra.mxu0 %v8546
        %8861 = vmatpush.bf16.msra.mxu0 %v8542
        %8862 = vmatpush.bf16.msra.mxu0 %v8538
        %8863 = vmatpush.bf16.msra.mxu0 %v8534
        %8864 = vmatpush.bf16.msra.mxu0 %v8530
        %8865 = vmatpush.bf16.msra.mxu0 %v8526
        %8866 = vmatpush.bf16.msra.mxu0 %v8522
        %8867 = vmatmul.bf16.gmra.mxu0 %v8189
        %v8868 = vpop.f32.mrf.mxu0
        %v8869 = vadd.f32 %v8851, %v8868
        %v8870 = vpop.f32.mrf.mxu0
        %v8871 = vadd.f32 %v8853, %v8870
        %8872 = vmatmul.bf16.gmra.mxu0 %v8188
        %v8873 = vpop.f32.mrf.mxu0
        %v8874 = vadd.f32 %v8856, %v8873
        %v8875 = vpop.f32.mrf.mxu0
        %8876 = vdwg.mxu0
        %8877 = vmatpush.bf16.msra.mxu0 %v8582
        %8878 = vmatpush.bf16.msra.mxu0 %v8578
        %8879 = vmatpush.bf16.msra.mxu0 %v8574
        %8880 = vmatpush.bf16.msra.mxu0 %v8570
        %8881 = vmatpush.bf16.msra.mxu0 %v8566
        %8882 = vmatpush.bf16.msra.mxu0 %v8562
        %8883 = vmatpush.bf16.msra.mxu0 %v8558
        %8884 = vmatpush.bf16.msra.mxu0 %v8554
        %8885 = vmatmul.bf16.gmra.mxu0 %v8192
        %v8886 = vpop.f32.mrf.mxu0
        %v8887 = vadd.f32 %v8869, %v8886
        %v8888 = vpop.f32.mrf.mxu0
        %v8889 = vadd.f32 %v8871, %v8888
        %8890 = vmatmul.bf16.gmra.mxu0 %v8191
        %v8891 = vpop.f32.mrf.mxu0
        %v8892 = vadd.f32 %v8874, %v8891
        %v8893 = vpop.f32.mrf.mxu0
        %8894 = vdwg.mxu0
        %v8895 = vadd.f32 %v8065, %v8725
        %v8896 = vadd.f32 %v8066, %v8779
        %v8897 = vadd.f32 %v8067, %v8833
        %v8898 = vadd.f32 %v8068, %v8887
        %v8899 = vadd.f32 %v8069, %v8727
        %v8900 = vadd.f32 %v8070, %v8781
        %v8901 = vadd.f32 %v8071, %v8835
        %v8902 = vadd.f32 %v8072, %v8889
        %v8903 = vadd.f32 %v8073, %v8730
        %v8904 = vadd.f32 %v8074, %v8784
        %v8905 = vadd.f32 %v8075, %v8838
        %v8906 = vadd.f32 %v8076, %v8892
        %v8907 = vld [vmem:[%s4] sm:$0xf]
        %v8909 = vperm.slane %v8907, 0
        %v8910 = vperm.slane %v8907, 1
        %v8911 = vperm.slane %v8907, 2
        %v8912 = vperm.slane %v8907, 3
        %v8917 = vadd.f32 %v8895, %v8909
        %v8918 = vadd.f32 %v8896, %v8910
        %v8919 = vadd.f32 %v8897, %v8911
        %v8920 = vadd.f32 %v8898, %v8912
        %v8921 = vadd.f32 %v8899, %v8909
        %v8922 = vadd.f32 %v8900, %v8910
        %v8923 = vadd.f32 %v8901, %v8911
        %v8924 = vadd.f32 %v8902, %v8912
        %v8925 = vadd.f32 %v8903, %v8909
        %v8926 = vadd.f32 %v8904, %v8910
        %v8927 = vadd.f32 %v8905, %v8911
        %v8928 = vadd.f32 %v8906, %v8912
        %8929 = vst [vmem:[#allocation3] sm:$0xff] %v8917
        %8930 = vst [vmem:[#allocation3 + $0x8] sm:$0xff] %v8918
        %8931 = vst [vmem:[#allocation3 + $0x10] sm:$0xff] %v8919
        %8932 = vst.msk [vmem:[#allocation3 + $0x18] sm:$0xff] %vm987, %v8920
        %8933 = vst [vmem:[#allocation3 + $0x20] sm:$0xff] %v8921
        %8934 = vst [vmem:[#allocation3 + $0x28] sm:$0xff] %v8922
        %8935 = vst [vmem:[#allocation3 + $0x30] sm:$0xff] %v8923
        %8936 = vst.msk [vmem:[#allocation3 + $0x38] sm:$0xff] %vm987, %v8924
        %8937 = vst [vmem:[#allocation3 + $0x40] sm:$0x3f] %v8925
        %8938 = vst [vmem:[#allocation3 + $0x48] sm:$0x3f] %v8926
        %8939 = vst [vmem:[#allocation3 + $0x50] sm:$0x3f] %v8927
        %vm8940 = vcmask 521216
        %8941 = vst.msk [vmem:[#allocation3 + $0x58] sm:$0x3f] %vm8940, %v8928
        %v8942 = vld [vmem:[#allocation3 + $0x10] sm:$0xff]
        %v8943 = vld [vmem:[#allocation3 + $0x18] sm:$0xff]
        %v8944 = vpack.c.bf16 %v8942, %v8942
        %v8945 = vpack.c.bf16 %v8943, %v8943
        %v8946 = vld [vmem:[%s5] sm:$0xf]
        %v8947 = vld [vmem:[%s5 + $0x4] sm:$0xf]
        %v8948 = vld [vmem:[%s5 + $0x8] sm:$0xf]
        %v8949 = vld [vmem:[%s5 + $0xc] sm:$0xf]
        %v8950 = vld [vmem:[%s5 + $0x10] sm:$0xf]
        %v8951 = vld [vmem:[%s5 + $0x14] sm:$0xf]
        %v8952 = vld [vmem:[%s5 + $0x18] sm:$0xf]
        %v8953 = vld [vmem:[%s5 + $0x1c] sm:$0xf]
        %v8954 = vld [vmem:[%s5 + $0x20] sm:$0xf]
        %v8955 = vld [vmem:[%s5 + $0x24] sm:$0xf]
        %v8956 = vld [vmem:[%s5 + $0x28] sm:$0xf]
        %v8957 = vld [vmem:[%s5 + $0x2c] sm:$0xf]
        %v8958 = vld [vmem:[%s5 + $0x30] sm:$0xf]
        %v8959 = vld [vmem:[%s5 + $0x34] sm:$0xf]
        %v8960 = vld [vmem:[%s5 + $0x38] sm:$0xf]
        %v8961 = vld [vmem:[%s5 + $0x3c] sm:$0xf]
        %v8962 = vld [vmem:[#allocation3 + $0x10] sm:$0xfe]
        %v8963 = vld [vmem:[#allocation3 + $0x18] sm:$0xfe]
        %v8964 = vld [vmem:[#allocation3 + $0x30] sm:$0x1]
        %v8965 = vld [vmem:[#allocation3 + $0x38] sm:$0x1]
        %v8966 = vpack.c.bf16 %v8964, %v8962
        %v8967 = vpack.c.bf16 %v8965, %v8963
        %s8968 = scalar_lea.vmem %s5, 64
        %v8969 = vld [vmem:[%s8968] sm:$0xf]
        %v8970 = vld [vmem:[%s8968 + $0x4] sm:$0xf]
        %v8971 = vld [vmem:[%s8968 + $0x8] sm:$0xf]
        %v8972 = vld [vmem:[%s8968 + $0xc] sm:$0xf]
        %v8973 = vld [vmem:[%s8968 + $0x10] sm:$0xf]
        %v8974 = vld [vmem:[%s8968 + $0x14] sm:$0xf]
        %v8975 = vld [vmem:[%s8968 + $0x18] sm:$0xf]
        %v8976 = vld [vmem:[%s8968 + $0x1c] sm:$0xf]
        %v8977 = vld [vmem:[%s8968 + $0x20] sm:$0xf]
        %v8978 = vld [vmem:[%s8968 + $0x24] sm:$0xf]
        %v8979 = vld [vmem:[%s8968 + $0x28] sm:$0xf]
        %v8980 = vld [vmem:[%s8968 + $0x2c] sm:$0xf]
        %v8981 = vld [vmem:[%s8968 + $0x30] sm:$0xf]
        %v8982 = vld [vmem:[%s8968 + $0x34] sm:$0xf]
        %v8983 = vld [vmem:[%s8968 + $0x38] sm:$0xf]
        %v8984 = vld [vmem:[%s8968 + $0x3c] sm:$0xf]
        %v8986 = vshrl.u32 %v8966, 16
        %v8988 = vshll.u32 %v8966, 16
        %v8990 = vrot.slane %v8988, 1
        %v8991 = vor.u32 %v8986, %v8990
        %v8993 = vshrl.u32 %v8967, 16
        %v8995 = vshll.u32 %v8967, 16
        %v8997 = vrot.slane %v8995, 1
        %v8998 = vor.u32 %v8993, %v8997
        %8999 = vrot.lane.b32.xlu0 %v8991, 64
        %v9000 = vpop.permute.xlu0 %8999
        %9001 = vrot.lane.b32.xlu0 %v8998, 64
        %v9002 = vpop.permute.xlu0 %9001
        %vm9003 = vcmask 523264
        %v9004 = vsel %vm9003, %v9000, %v9002
        %v9022 = vunpack.c.l.b16 %v8969
        %v9023 = vunpack.c.l.b16 %v8970
        %v9024 = vunpack.c.l.b16 %v8971
        %v9025 = vunpack.c.l.b16 %v8972
        %v9026 = vunpack.c.l.b16 %v8973
        %v9027 = vunpack.c.l.b16 %v8974
        %v9028 = vunpack.c.l.b16 %v8975
        %v9029 = vunpack.c.l.b16 %v8976
        %v9030 = vunpack.c.l.b16 %v8977
        %v9031 = vunpack.c.l.b16 %v8978
        %v9032 = vunpack.c.l.b16 %v8979
        %v9033 = vunpack.c.l.b16 %v8980
        %v9034 = vunpack.c.l.b16 %v8981
        %v9035 = vunpack.c.l.b16 %v8982
        %v9036 = vunpack.c.l.b16 %v8983
        %v9037 = vunpack.c.l.b16 %v8984
        %v9038 = vpack.c.b16 %v9023, %v9022
        %v9039 = vpack.c.b16 %v9025, %v9024
        %v9040 = vpack.c.b16 %v9027, %v9026
        %v9041 = vpack.c.b16 %v9029, %v9028
        %v9042 = vpack.c.b16 %v9031, %v9030
        %v9043 = vpack.c.b16 %v9033, %v9032
        %v9044 = vpack.c.b16 %v9035, %v9034
        %v9045 = vpack.c.b16 %v9037, %v9036
        %9054 = vmatpush.bf16.msra.mxu0 %v9045
        %9055 = vmatpush.bf16.msra.mxu0 %v9044
        %9056 = vmatpush.bf16.msra.mxu0 %v9043
        %9057 = vmatpush.bf16.msra.mxu0 %v9042
        %9058 = vmatpush.bf16.msra.mxu0 %v9041
        %9059 = vmatpush.bf16.msra.mxu0 %v9040
        %9060 = vmatpush.bf16.msra.mxu0 %v9039
        %9061 = vmatpush.bf16.msra.mxu0 %v9038
        %9062 = vmatmul.bf16.gmra.mxu0 %v9004
        %v9063 = vpop.f32.mrf.mxu0
        %v9064 = vadd.f32 0.0, %v9063
        %v9065 = vpop.f32.mrf.mxu0
        %9066 = vdwg.mxu0
        %9069 = vrot.lane.b32.xlu0 %v8944, 64
        %v9070 = vpop.permute.xlu0 %9069
        %9071 = vrot.lane.b32.xlu0 %v8945, 64
        %v9072 = vpop.permute.xlu0 %9071
        %v9073 = vsel %vm9003, %v9070, %v9072
        %v9091 = vunpack.c.l.b16 %v8946
        %v9092 = vunpack.c.l.b16 %v8947
        %v9093 = vunpack.c.l.b16 %v8948
        %v9094 = vunpack.c.l.b16 %v8949
        %v9095 = vunpack.c.l.b16 %v8950
        %v9096 = vunpack.c.l.b16 %v8951
        %v9097 = vunpack.c.l.b16 %v8952
        %v9098 = vunpack.c.l.b16 %v8953
        %v9099 = vunpack.c.l.b16 %v8954
        %v9100 = vunpack.c.l.b16 %v8955
        %v9101 = vunpack.c.l.b16 %v8956
        %v9102 = vunpack.c.l.b16 %v8957
        %v9103 = vunpack.c.l.b16 %v8958
        %v9104 = vunpack.c.l.b16 %v8959
        %v9105 = vunpack.c.l.b16 %v8960
        %v9106 = vunpack.c.l.b16 %v8961
        %v9107 = vpack.c.b16 %v9092, %v9091
        %v9108 = vpack.c.b16 %v9094, %v9093
        %v9109 = vpack.c.b16 %v9096, %v9095
        %v9110 = vpack.c.b16 %v9098, %v9097
        %v9111 = vpack.c.b16 %v9100, %v9099
        %v9112 = vpack.c.b16 %v9102, %v9101
        %v9113 = vpack.c.b16 %v9104, %v9103
        %v9114 = vpack.c.b16 %v9106, %v9105
        %9123 = vmatpush.bf16.msra.mxu0 %v9114
        %9124 = vmatpush.bf16.msra.mxu0 %v9113
        %9125 = vmatpush.bf16.msra.mxu0 %v9112
        %9126 = vmatpush.bf16.msra.mxu0 %v9111
        %9127 = vmatpush.bf16.msra.mxu0 %v9110
        %9128 = vmatpush.bf16.msra.mxu0 %v9109
        %9129 = vmatpush.bf16.msra.mxu0 %v9108
        %9130 = vmatpush.bf16.msra.mxu0 %v9107
        %9131 = vmatmul.bf16.gmra.mxu0 %v9073
        %v9132 = vpop.f32.mrf.mxu0
        %v9133 = vadd.f32 %v9064, %v9132
        %v9134 = vpop.f32.mrf.mxu0
        %9135 = vdwg.mxu0
        %v9136 = vld [vmem:[#allocation3 + $0x10] sm:$0xfc]
        %v9137 = vld [vmem:[#allocation3 + $0x18] sm:$0xfc]
        %v9138 = vld [vmem:[#allocation3 + $0x30] sm:$0x3]
        %v9139 = vld [vmem:[#allocation3 + $0x38] sm:$0x3]
        %v9140 = vpack.c.bf16 %v9138, %v9136
        %v9141 = vpack.c.bf16 %v9139, %v9137
        %s9142 = scalar_lea.vmem %s5, 128
        %v9143 = vld [vmem:[%s9142] sm:$0xf]
        %v9144 = vld [vmem:[%s9142 + $0x4] sm:$0xf]
        %v9145 = vld [vmem:[%s9142 + $0x8] sm:$0xf]
        %v9146 = vld [vmem:[%s9142 + $0xc] sm:$0xf]
        %v9147 = vld [vmem:[%s9142 + $0x10] sm:$0xf]
        %v9148 = vld [vmem:[%s9142 + $0x14] sm:$0xf]
        %v9149 = vld [vmem:[%s9142 + $0x18] sm:$0xf]
        %v9150 = vld [vmem:[%s9142 + $0x1c] sm:$0xf]
        %v9151 = vld [vmem:[%s9142 + $0x20] sm:$0xf]
        %v9152 = vld [vmem:[%s9142 + $0x24] sm:$0xf]
        %v9153 = vld [vmem:[%s9142 + $0x28] sm:$0xf]
        %v9154 = vld [vmem:[%s9142 + $0x2c] sm:$0xf]
        %v9155 = vld [vmem:[%s9142 + $0x30] sm:$0xf]
        %v9156 = vld [vmem:[%s9142 + $0x34] sm:$0xf]
        %v9157 = vld [vmem:[%s9142 + $0x38] sm:$0xf]
        %v9158 = vld [vmem:[%s9142 + $0x3c] sm:$0xf]
        %v9161 = vrot.slane %v9140, 1
        %v9162 = vrot.slane %v9141, 1
        %9163 = vrot.lane.b32.xlu0 %v9161, 64
        %v9164 = vpop.permute.xlu0 %9163
        %9165 = vrot.lane.b32.xlu0 %v9162, 64
        %v9166 = vpop.permute.xlu0 %9165
        %v9167 = vsel %vm9003, %v9164, %v9166
        %v9185 = vunpack.c.l.b16 %v9143
        %v9186 = vunpack.c.l.b16 %v9144
        %v9187 = vunpack.c.l.b16 %v9145
        %v9188 = vunpack.c.l.b16 %v9146
        %v9189 = vunpack.c.l.b16 %v9147
        %v9190 = vunpack.c.l.b16 %v9148
        %v9191 = vunpack.c.l.b16 %v9149
        %v9192 = vunpack.c.l.b16 %v9150
        %v9193 = vunpack.c.l.b16 %v9151
        %v9194 = vunpack.c.l.b16 %v9152
        %v9195 = vunpack.c.l.b16 %v9153
        %v9196 = vunpack.c.l.b16 %v9154
        %v9197 = vunpack.c.l.b16 %v9155
        %v9198 = vunpack.c.l.b16 %v9156
        %v9199 = vunpack.c.l.b16 %v9157
        %v9200 = vunpack.c.l.b16 %v9158
        %v9201 = vpack.c.b16 %v9186, %v9185
        %v9202 = vpack.c.b16 %v9188, %v9187
        %v9203 = vpack.c.b16 %v9190, %v9189
        %v9204 = vpack.c.b16 %v9192, %v9191
        %v9205 = vpack.c.b16 %v9194, %v9193
        %v9206 = vpack.c.b16 %v9196, %v9195
        %v9207 = vpack.c.b16 %v9198, %v9197
        %v9208 = vpack.c.b16 %v9200, %v9199
        %9217 = vmatpush.bf16.msra.mxu0 %v9208
        %9218 = vmatpush.bf16.msra.mxu0 %v9207
        %9219 = vmatpush.bf16.msra.mxu0 %v9206
        %9220 = vmatpush.bf16.msra.mxu0 %v9205
        %9221 = vmatpush.bf16.msra.mxu0 %v9204
        %9222 = vmatpush.bf16.msra.mxu0 %v9203
        %9223 = vmatpush.bf16.msra.mxu0 %v9202
        %9224 = vmatpush.bf16.msra.mxu0 %v9201
        %9225 = vmatmul.bf16.gmra.mxu0 %v9167
        %v9226 = vpop.f32.mrf.mxu0
        %v9227 = vadd.f32 0.0, %v9226
        %v9228 = vpop.f32.mrf.mxu0
        %9229 = vdwg.mxu0
        %v9230 = vadd.f32 %v9133, %v9227
        %v9231 = vld [vmem:[#allocation3 + $0x10] sm:$0xc0]
        %v9232 = vld [vmem:[#allocation3 + $0x18] sm:$0xc0]
        %v9233 = vld [vmem:[#allocation3 + $0x30] sm:$0x3f]
        %v9234 = vld [vmem:[#allocation3 + $0x38] sm:$0x3f]
        %v9235 = vpack.c.bf16 %v9233, %v9231
        %v9236 = vpack.c.bf16 %v9234, %v9232
        %s9237 = scalar_lea.vmem %s5, 192
        %v9238 = vld [vmem:[%s9237] sm:$0xf]
        %v9239 = vld [vmem:[%s9237 + $0x4] sm:$0xf]
        %v9240 = vld [vmem:[%s9237 + $0x8] sm:$0xf]
        %v9241 = vld [vmem:[%s9237 + $0xc] sm:$0xf]
        %v9242 = vld [vmem:[%s9237 + $0x10] sm:$0xf]
        %v9243 = vld [vmem:[%s9237 + $0x14] sm:$0xf]
        %v9244 = vld [vmem:[%s9237 + $0x18] sm:$0xf]
        %v9245 = vld [vmem:[%s9237 + $0x1c] sm:$0xf]
        %v9246 = vld [vmem:[%s9237 + $0x20] sm:$0xf]
        %v9247 = vld [vmem:[%s9237 + $0x24] sm:$0xf]
        %v9248 = vld [vmem:[%s9237 + $0x28] sm:$0xf]
        %v9249 = vld [vmem:[%s9237 + $0x2c] sm:$0xf]
        %v9250 = vld [vmem:[%s9237 + $0x30] sm:$0xf]
        %v9251 = vld [vmem:[%s9237 + $0x34] sm:$0xf]
        %v9252 = vld [vmem:[%s9237 + $0x38] sm:$0xf]
        %v9253 = vld [vmem:[%s9237 + $0x3c] sm:$0xf]
        %v9256 = vrot.slane %v9235, 3
        %v9257 = vrot.slane %v9236, 3
        %9258 = vrot.lane.b32.xlu0 %v9256, 64
        %v9259 = vpop.permute.xlu0 %9258
        %9260 = vrot.lane.b32.xlu0 %v9257, 64
        %v9261 = vpop.permute.xlu0 %9260
        %v9262 = vsel %vm9003, %v9259, %v9261
        %v9280 = vunpack.c.l.b16 %v9238
        %v9281 = vunpack.c.l.b16 %v9239
        %v9282 = vunpack.c.l.b16 %v9240
        %v9283 = vunpack.c.l.b16 %v9241
        %v9284 = vunpack.c.l.b16 %v9242
        %v9285 = vunpack.c.l.b16 %v9243
        %v9286 = vunpack.c.l.b16 %v9244
        %v9287 = vunpack.c.l.b16 %v9245
        %v9288 = vunpack.c.l.b16 %v9246
        %v9289 = vunpack.c.l.b16 %v9247
        %v9290 = vunpack.c.l.b16 %v9248
        %v9291 = vunpack.c.l.b16 %v9249
        %v9292 = vunpack.c.l.b16 %v9250
        %v9293 = vunpack.c.l.b16 %v9251
        %v9294 = vunpack.c.l.b16 %v9252
        %v9295 = vunpack.c.l.b16 %v9253
        %v9296 = vpack.c.b16 %v9281, %v9280
        %v9297 = vpack.c.b16 %v9283, %v9282
        %v9298 = vpack.c.b16 %v9285, %v9284
        %v9299 = vpack.c.b16 %v9287, %v9286
        %v9300 = vpack.c.b16 %v9289, %v9288
        %v9301 = vpack.c.b16 %v9291, %v9290
        %v9302 = vpack.c.b16 %v9293, %v9292
        %v9303 = vpack.c.b16 %v9295, %v9294
        %9312 = vmatpush.bf16.msra.mxu0 %v9303
        %9313 = vmatpush.bf16.msra.mxu0 %v9302
        %9314 = vmatpush.bf16.msra.mxu0 %v9301
        %9315 = vmatpush.bf16.msra.mxu0 %v9300
        %9316 = vmatpush.bf16.msra.mxu0 %v9299
        %9317 = vmatpush.bf16.msra.mxu0 %v9298
        %9318 = vmatpush.bf16.msra.mxu0 %v9297
        %9319 = vmatpush.bf16.msra.mxu0 %v9296
        %9320 = vmatmul.bf16.gmra.mxu0 %v9262
        %v9321 = vpop.f32.mrf.mxu0
        %v9322 = vadd.f32 0.0, %v9321
        %v9323 = vpop.f32.mrf.mxu0
        %9324 = vdwg.mxu0
        %v9325 = vadd.f32 %v9230, %v9322
        %v9326 = vld [vmem:[#allocation3 + $0x10] sm:$0x80]
        %v9327 = vld [vmem:[#allocation3 + $0x18] sm:$0x80]
        %v9328 = vld [vmem:[#allocation3 + $0x30] sm:$0x7f]
        %v9329 = vld [vmem:[#allocation3 + $0x38] sm:$0x7f]
        %v9330 = vpack.c.bf16 %v9328, %v9326
        %v9331 = vpack.c.bf16 %v9329, %v9327
        %s9332 = scalar_lea.vmem %s5, 256
        %v9333 = vld [vmem:[%s9332] sm:$0xf]
        %v9334 = vld [vmem:[%s9332 + $0x4] sm:$0xf]
        %v9335 = vld [vmem:[%s9332 + $0x8] sm:$0xf]
        %v9336 = vld [vmem:[%s9332 + $0xc] sm:$0xf]
        %v9337 = vld [vmem:[%s9332 + $0x10] sm:$0xf]
        %v9338 = vld [vmem:[%s9332 + $0x14] sm:$0xf]
        %v9339 = vld [vmem:[%s9332 + $0x18] sm:$0xf]
        %v9340 = vld [vmem:[%s9332 + $0x1c] sm:$0xf]
        %v9341 = vld [vmem:[%s9332 + $0x20] sm:$0xf]
        %v9342 = vld [vmem:[%s9332 + $0x24] sm:$0xf]
        %v9343 = vld [vmem:[%s9332 + $0x28] sm:$0xf]
        %v9344 = vld [vmem:[%s9332 + $0x2c] sm:$0xf]
        %v9345 = vld [vmem:[%s9332 + $0x30] sm:$0xf]
        %v9346 = vld [vmem:[%s9332 + $0x34] sm:$0xf]
        %v9347 = vld [vmem:[%s9332 + $0x38] sm:$0xf]
        %v9348 = vld [vmem:[%s9332 + $0x3c] sm:$0xf]
        %v9350 = vshrl.u32 %v9330, 16
        %v9352 = vrot.slane %v9350, 3
        %v9353 = vshll.u32 %v9330, 16
        %v9355 = vrot.slane %v9353, 4
        %v9356 = vor.u32 %v9352, %v9355
        %v9358 = vshrl.u32 %v9331, 16
        %v9360 = vrot.slane %v9358, 3
        %v9361 = vshll.u32 %v9331, 16
        %v9363 = vrot.slane %v9361, 4
        %v9364 = vor.u32 %v9360, %v9363
        %9365 = vrot.lane.b32.xlu0 %v9356, 64
        %v9366 = vpop.permute.xlu0 %9365
        %9367 = vrot.lane.b32.xlu0 %v9364, 64
        %v9368 = vpop.permute.xlu0 %9367
        %v9369 = vsel %vm9003, %v9366, %v9368
        %v9387 = vunpack.c.l.b16 %v9333
        %v9388 = vunpack.c.l.b16 %v9334
        %v9389 = vunpack.c.l.b16 %v9335
        %v9390 = vunpack.c.l.b16 %v9336
        %v9391 = vunpack.c.l.b16 %v9337
        %v9392 = vunpack.c.l.b16 %v9338
        %v9393 = vunpack.c.l.b16 %v9339
        %v9394 = vunpack.c.l.b16 %v9340
        %v9395 = vunpack.c.l.b16 %v9341
        %v9396 = vunpack.c.l.b16 %v9342
        %v9397 = vunpack.c.l.b16 %v9343
        %v9398 = vunpack.c.l.b16 %v9344
        %v9399 = vunpack.c.l.b16 %v9345
        %v9400 = vunpack.c.l.b16 %v9346
        %v9401 = vunpack.c.l.b16 %v9347
        %v9402 = vunpack.c.l.b16 %v9348
        %v9403 = vpack.c.b16 %v9388, %v9387
        %v9404 = vpack.c.b16 %v9390, %v9389
        %v9405 = vpack.c.b16 %v9392, %v9391
        %v9406 = vpack.c.b16 %v9394, %v9393
        %v9407 = vpack.c.b16 %v9396, %v9395
        %v9408 = vpack.c.b16 %v9398, %v9397
        %v9409 = vpack.c.b16 %v9400, %v9399
        %v9410 = vpack.c.b16 %v9402, %v9401
        %9419 = vmatpush.bf16.msra.mxu0 %v9410
        %9420 = vmatpush.bf16.msra.mxu0 %v9409
        %9421 = vmatpush.bf16.msra.mxu0 %v9408
        %9422 = vmatpush.bf16.msra.mxu0 %v9407
        %9423 = vmatpush.bf16.msra.mxu0 %v9406
        %9424 = vmatpush.bf16.msra.mxu0 %v9405
        %9425 = vmatpush.bf16.msra.mxu0 %v9404
        %9426 = vmatpush.bf16.msra.mxu0 %v9403
        %9427 = vmatmul.bf16.gmra.mxu0 %v9369
        %v9428 = vpop.f32.mrf.mxu0
        %v9429 = vadd.f32 0.0, %v9428
        %v9430 = vpop.f32.mrf.mxu0
        %9431 = vdwg.mxu0
        %v9432 = vadd.f32 %v9325, %v9429
        %v9433 = vld [vmem:[#allocation3 + $0x30] sm:$0xff]
        %v9434 = vld [vmem:[#allocation3 + $0x38] sm:$0xff]
        %v9435 = vpack.c.bf16 %v9433, %v9433
        %v9436 = vpack.c.bf16 %v9434, %v9434
        %s9437 = scalar_lea.vmem %s5, 320
        %v9438 = vld [vmem:[%s9437] sm:$0xf]
        %v9439 = vld [vmem:[%s9437 + $0x4] sm:$0xf]
        %v9440 = vld [vmem:[%s9437 + $0x8] sm:$0xf]
        %v9441 = vld [vmem:[%s9437 + $0xc] sm:$0xf]
        %v9442 = vld [vmem:[%s9437 + $0x10] sm:$0xf]
        %v9443 = vld [vmem:[%s9437 + $0x14] sm:$0xf]
        %v9444 = vld [vmem:[%s9437 + $0x18] sm:$0xf]
        %v9445 = vld [vmem:[%s9437 + $0x1c] sm:$0xf]
        %v9446 = vld [vmem:[%s9437 + $0x20] sm:$0xf]
        %v9447 = vld [vmem:[%s9437 + $0x24] sm:$0xf]
        %v9448 = vld [vmem:[%s9437 + $0x28] sm:$0xf]
        %v9449 = vld [vmem:[%s9437 + $0x2c] sm:$0xf]
        %v9450 = vld [vmem:[%s9437 + $0x30] sm:$0xf]
        %v9451 = vld [vmem:[%s9437 + $0x34] sm:$0xf]
        %v9452 = vld [vmem:[%s9437 + $0x38] sm:$0xf]
        %v9453 = vld [vmem:[%s9437 + $0x3c] sm:$0xf]
        %9456 = vrot.lane.b32.xlu0 %v9435, 64
        %v9457 = vpop.permute.xlu0 %9456
        %9458 = vrot.lane.b32.xlu0 %v9436, 64
        %v9459 = vpop.permute.xlu0 %9458
        %v9460 = vsel %vm9003, %v9457, %v9459
        %v9478 = vunpack.c.l.b16 %v9438
        %v9479 = vunpack.c.l.b16 %v9439
        %v9480 = vunpack.c.l.b16 %v9440
        %v9481 = vunpack.c.l.b16 %v9441
        %v9482 = vunpack.c.l.b16 %v9442
        %v9483 = vunpack.c.l.b16 %v9443
        %v9484 = vunpack.c.l.b16 %v9444
        %v9485 = vunpack.c.l.b16 %v9445
        %v9486 = vunpack.c.l.b16 %v9446
        %v9487 = vunpack.c.l.b16 %v9447
        %v9488 = vunpack.c.l.b16 %v9448
        %v9489 = vunpack.c.l.b16 %v9449
        %v9490 = vunpack.c.l.b16 %v9450
        %v9491 = vunpack.c.l.b16 %v9451
        %v9492 = vunpack.c.l.b16 %v9452
        %v9493 = vunpack.c.l.b16 %v9453
        %v9494 = vpack.c.b16 %v9479, %v9478
        %v9495 = vpack.c.b16 %v9481, %v9480
        %v9496 = vpack.c.b16 %v9483, %v9482
        %v9497 = vpack.c.b16 %v9485, %v9484
        %v9498 = vpack.c.b16 %v9487, %v9486
        %v9499 = vpack.c.b16 %v9489, %v9488
        %v9500 = vpack.c.b16 %v9491, %v9490
        %v9501 = vpack.c.b16 %v9493, %v9492
        %9510 = vmatpush.bf16.msra.mxu0 %v9501
        %9511 = vmatpush.bf16.msra.mxu0 %v9500
        %9512 = vmatpush.bf16.msra.mxu0 %v9499
        %9513 = vmatpush.bf16.msra.mxu0 %v9498
        %9514 = vmatpush.bf16.msra.mxu0 %v9497
        %9515 = vmatpush.bf16.msra.mxu0 %v9496
        %9516 = vmatpush.bf16.msra.mxu0 %v9495
        %9517 = vmatpush.bf16.msra.mxu0 %v9494
        %9518 = vmatmul.bf16.gmra.mxu0 %v9460
        %v9519 = vpop.f32.mrf.mxu0
        %v9520 = vadd.f32 0.0, %v9519
        %v9521 = vpop.f32.mrf.mxu0
        %9522 = vdwg.mxu0
        %v9523 = vadd.f32 %v9432, %v9520
        %v9524 = vld [vmem:[#allocation3 + $0x30] sm:$0xf0]
        %v9525 = vld [vmem:[#allocation3 + $0x38] sm:$0xf0]
        %v9526 = vld [vmem:[#allocation3 + $0x50] sm:$0xf]
        %v9527 = vld [vmem:[#allocation3 + $0x58] sm:$0xf]
        %v9528 = vpack.c.bf16 %v9526, %v9524
        %v9529 = vpack.c.bf16 %v9527, %v9525
        %s9530 = scalar_lea.vmem %s5, 384
        %v9531 = vld [vmem:[%s9530] sm:$0xf]
        %v9532 = vld [vmem:[%s9530 + $0x4] sm:$0xf]
        %v9533 = vld [vmem:[%s9530 + $0x8] sm:$0xf]
        %v9534 = vld [vmem:[%s9530 + $0xc] sm:$0xf]
        %v9535 = vld [vmem:[%s9530 + $0x10] sm:$0xf]
        %v9536 = vld [vmem:[%s9530 + $0x14] sm:$0xf]
        %v9537 = vld [vmem:[%s9530 + $0x18] sm:$0xf]
        %v9538 = vld [vmem:[%s9530 + $0x1c] sm:$0xf]
        %v9539 = vld [vmem:[%s9530 + $0x20] sm:$0xf]
        %v9540 = vld [vmem:[%s9530 + $0x24] sm:$0xf]
        %v9541 = vld [vmem:[%s9530 + $0x28] sm:$0xf]
        %v9542 = vld [vmem:[%s9530 + $0x2c] sm:$0xf]
        %v9543 = vld [vmem:[%s9530 + $0x30] sm:$0xf]
        %v9544 = vld [vmem:[%s9530 + $0x34] sm:$0xf]
        %v9545 = vld [vmem:[%s9530 + $0x38] sm:$0xf]
        %v9546 = vld [vmem:[%s9530 + $0x3c] sm:$0xf]
        %v9549 = vrot.slane %v9528, 2
        %v9550 = vrot.slane %v9529, 2
        %9551 = vrot.lane.b32.xlu0 %v9549, 64
        %v9552 = vpop.permute.xlu0 %9551
        %9553 = vrot.lane.b32.xlu0 %v9550, 64
        %v9554 = vpop.permute.xlu0 %9553
        %v9555 = vsel %vm9003, %v9552, %v9554
        %v9573 = vunpack.c.l.b16 %v9531
        %v9574 = vunpack.c.l.b16 %v9532
        %v9575 = vunpack.c.l.b16 %v9533
        %v9576 = vunpack.c.l.b16 %v9534
        %v9577 = vunpack.c.l.b16 %v9535
        %v9578 = vunpack.c.l.b16 %v9536
        %v9579 = vunpack.c.l.b16 %v9537
        %v9580 = vunpack.c.l.b16 %v9538
        %v9581 = vunpack.c.l.b16 %v9539
        %v9582 = vunpack.c.l.b16 %v9540
        %v9583 = vunpack.c.l.b16 %v9541
        %v9584 = vunpack.c.l.b16 %v9542
        %v9585 = vunpack.c.l.b16 %v9543
        %v9586 = vunpack.c.l.b16 %v9544
        %v9587 = vunpack.c.l.b16 %v9545
        %v9588 = vunpack.c.l.b16 %v9546
        %v9589 = vpack.c.b16 %v9574, %v9573
        %v9590 = vpack.c.b16 %v9576, %v9575
        %v9591 = vpack.c.b16 %v9578, %v9577
        %v9592 = vpack.c.b16 %v9580, %v9579
        %v9593 = vpack.c.b16 %v9582, %v9581
        %v9594 = vpack.c.b16 %v9584, %v9583
        %v9595 = vpack.c.b16 %v9586, %v9585
        %v9596 = vpack.c.b16 %v9588, %v9587
        %9605 = vmatpush.bf16.msra.mxu0 %v9596
        %9606 = vmatpush.bf16.msra.mxu0 %v9595
        %9607 = vmatpush.bf16.msra.mxu0 %v9594
        %9608 = vmatpush.bf16.msra.mxu0 %v9593
        %9609 = vmatpush.bf16.msra.mxu0 %v9592
        %9610 = vmatpush.bf16.msra.mxu0 %v9591
        %9611 = vmatpush.bf16.msra.mxu0 %v9590
        %9612 = vmatpush.bf16.msra.mxu0 %v9589
        %9613 = vmatmul.bf16.gmra.mxu0 %v9555
        %v9614 = vpop.f32.mrf.mxu0
        %v9615 = vadd.f32 0.0, %v9614
        %v9616 = vpop.f32.mrf.mxu0
        %9617 = vdwg.mxu0
        %v9618 = vadd.f32 %v9523, %v9615
        %v9619 = vld [vmem:[#allocation3 + $0x30] sm:$0xe0]
        %v9620 = vld [vmem:[#allocation3 + $0x38] sm:$0xe0]
        %v9621 = vld [vmem:[#allocation3 + $0x50] sm:$0x1f]
        %v9622 = vld [vmem:[#allocation3 + $0x58] sm:$0x1f]
        %v9623 = vpack.c.bf16 %v9621, %v9619
        %v9624 = vpack.c.bf16 %v9622, %v9620
        %s9625 = scalar_lea.vmem %s5, 448
        %v9626 = vld [vmem:[%s9625] sm:$0xf]
        %v9627 = vld [vmem:[%s9625 + $0x4] sm:$0xf]
        %v9628 = vld [vmem:[%s9625 + $0x8] sm:$0xf]
        %v9629 = vld [vmem:[%s9625 + $0xc] sm:$0xf]
        %v9630 = vld [vmem:[%s9625 + $0x10] sm:$0xf]
        %v9631 = vld [vmem:[%s9625 + $0x14] sm:$0xf]
        %v9632 = vld [vmem:[%s9625 + $0x18] sm:$0xf]
        %v9633 = vld [vmem:[%s9625 + $0x1c] sm:$0xf]
        %v9634 = vld [vmem:[%s9625 + $0x20] sm:$0xf]
        %v9635 = vld [vmem:[%s9625 + $0x24] sm:$0xf]
        %v9636 = vld [vmem:[%s9625 + $0x28] sm:$0xf]
        %v9637 = vld [vmem:[%s9625 + $0x2c] sm:$0xf]
        %v9638 = vld [vmem:[%s9625 + $0x30] sm:$0xf]
        %v9639 = vld [vmem:[%s9625 + $0x34] sm:$0xf]
        %v9640 = vld [vmem:[%s9625 + $0x38] sm:$0xf]
        %v9641 = vld [vmem:[%s9625 + $0x3c] sm:$0xf]
        %v9643 = vshrl.u32 %v9623, 16
        %v9645 = vrot.slane %v9643, 2
        %v9646 = vshll.u32 %v9623, 16
        %v9648 = vrot.slane %v9646, 3
        %v9649 = vor.u32 %v9645, %v9648
        %v9651 = vshrl.u32 %v9624, 16
        %v9653 = vrot.slane %v9651, 2
        %v9654 = vshll.u32 %v9624, 16
        %v9656 = vrot.slane %v9654, 3
        %v9657 = vor.u32 %v9653, %v9656
        %9658 = vrot.lane.b32.xlu0 %v9649, 64
        %v9659 = vpop.permute.xlu0 %9658
        %9660 = vrot.lane.b32.xlu0 %v9657, 64
        %v9661 = vpop.permute.xlu0 %9660
        %v9662 = vsel %vm9003, %v9659, %v9661
        %v9680 = vunpack.c.l.b16 %v9626
        %v9681 = vunpack.c.l.b16 %v9627
        %v9682 = vunpack.c.l.b16 %v9628
        %v9683 = vunpack.c.l.b16 %v9629
        %v9684 = vunpack.c.l.b16 %v9630
        %v9685 = vunpack.c.l.b16 %v9631
        %v9686 = vunpack.c.l.b16 %v9632
        %v9687 = vunpack.c.l.b16 %v9633
        %v9688 = vunpack.c.l.b16 %v9634
        %v9689 = vunpack.c.l.b16 %v9635
        %v9690 = vunpack.c.l.b16 %v9636
        %v9691 = vunpack.c.l.b16 %v9637
        %v9692 = vunpack.c.l.b16 %v9638
        %v9693 = vunpack.c.l.b16 %v9639
        %v9694 = vunpack.c.l.b16 %v9640
        %v9695 = vunpack.c.l.b16 %v9641
        %v9696 = vpack.c.b16 %v9681, %v9680
        %v9697 = vpack.c.b16 %v9683, %v9682
        %v9698 = vpack.c.b16 %v9685, %v9684
        %v9699 = vpack.c.b16 %v9687, %v9686
        %v9700 = vpack.c.b16 %v9689, %v9688
        %v9701 = vpack.c.b16 %v9691, %v9690
        %v9702 = vpack.c.b16 %v9693, %v9692
        %v9703 = vpack.c.b16 %v9695, %v9694
        %9712 = vmatpush.bf16.msra.mxu0 %v9703
        %9713 = vmatpush.bf16.msra.mxu0 %v9702
        %9714 = vmatpush.bf16.msra.mxu0 %v9701
        %9715 = vmatpush.bf16.msra.mxu0 %v9700
        %9716 = vmatpush.bf16.msra.mxu0 %v9699
        %9717 = vmatpush.bf16.msra.mxu0 %v9698
        %9718 = vmatpush.bf16.msra.mxu0 %v9697
        %9719 = vmatpush.bf16.msra.mxu0 %v9696
        %9720 = vmatmul.bf16.gmra.mxu0 %v9662
        %v9721 = vpop.f32.mrf.mxu0
        %v9722 = vadd.f32 0.0, %v9721
        %v9723 = vpop.f32.mrf.mxu0
        %9724 = vdwg.mxu0
        %v9725 = vadd.f32 %v9618, %v9722
        %v9726 = vld [vmem:[#allocation3 + $0x30] sm:$0xc0]
        %v9727 = vld [vmem:[#allocation3 + $0x38] sm:$0xc0]
        %v9728 = vld [vmem:[#allocation3 + $0x50] sm:$0x3f]
        %v9729 = vld [vmem:[#allocation3 + $0x58] sm:$0x3f]
        %v9730 = vpack.c.bf16 %v9728, %v9726
        %v9731 = vpack.c.bf16 %v9729, %v9727
        %s9732 = scalar_lea.vmem %s5, 512
        %v9733 = vld [vmem:[%s9732] sm:$0xf]
        %v9734 = vld [vmem:[%s9732 + $0x4] sm:$0xf]
        %v9735 = vld [vmem:[%s9732 + $0x8] sm:$0xf]
        %v9736 = vld [vmem:[%s9732 + $0xc] sm:$0xf]
        %v9737 = vld [vmem:[%s9732 + $0x10] sm:$0xf]
        %v9738 = vld [vmem:[%s9732 + $0x14] sm:$0xf]
        %v9739 = vld [vmem:[%s9732 + $0x18] sm:$0xf]
        %v9740 = vld [vmem:[%s9732 + $0x1c] sm:$0xf]
        %v9741 = vld [vmem:[%s9732 + $0x20] sm:$0xf]
        %v9742 = vld [vmem:[%s9732 + $0x24] sm:$0xf]
        %v9743 = vld [vmem:[%s9732 + $0x28] sm:$0xf]
        %v9744 = vld [vmem:[%s9732 + $0x2c] sm:$0xf]
        %v9745 = vld [vmem:[%s9732 + $0x30] sm:$0xf]
        %v9746 = vld [vmem:[%s9732 + $0x34] sm:$0xf]
        %v9747 = vld [vmem:[%s9732 + $0x38] sm:$0xf]
        %v9748 = vld [vmem:[%s9732 + $0x3c] sm:$0xf]
        %v9751 = vrot.slane %v9730, 3
        %v9752 = vrot.slane %v9731, 3
        %9753 = vrot.lane.b32.xlu0 %v9751, 64
        %v9754 = vpop.permute.xlu0 %9753
        %9755 = vrot.lane.b32.xlu0 %v9752, 64
        %v9756 = vpop.permute.xlu0 %9755
        %v9757 = vsel %vm9003, %v9754, %v9756
        %v9775 = vunpack.c.l.b16 %v9733
        %v9776 = vunpack.c.l.b16 %v9734
        %v9777 = vunpack.c.l.b16 %v9735
        %v9778 = vunpack.c.l.b16 %v9736
        %v9779 = vunpack.c.l.b16 %v9737
        %v9780 = vunpack.c.l.b16 %v9738
        %v9781 = vunpack.c.l.b16 %v9739
        %v9782 = vunpack.c.l.b16 %v9740
        %v9783 = vunpack.c.l.b16 %v9741
        %v9784 = vunpack.c.l.b16 %v9742
        %v9785 = vunpack.c.l.b16 %v9743
        %v9786 = vunpack.c.l.b16 %v9744
        %v9787 = vunpack.c.l.b16 %v9745
        %v9788 = vunpack.c.l.b16 %v9746
        %v9789 = vunpack.c.l.b16 %v9747
        %v9790 = vunpack.c.l.b16 %v9748
        %v9791 = vpack.c.b16 %v9776, %v9775
        %v9792 = vpack.c.b16 %v9778, %v9777
        %v9793 = vpack.c.b16 %v9780, %v9779
        %v9794 = vpack.c.b16 %v9782, %v9781
        %v9795 = vpack.c.b16 %v9784, %v9783
        %v9796 = vpack.c.b16 %v9786, %v9785
        %v9797 = vpack.c.b16 %v9788, %v9787
        %v9798 = vpack.c.b16 %v9790, %v9789
        %9807 = vmatpush.bf16.msra.mxu0 %v9798
        %9808 = vmatpush.bf16.msra.mxu0 %v9797
        %9809 = vmatpush.bf16.msra.mxu0 %v9796
        %9810 = vmatpush.bf16.msra.mxu0 %v9795
        %9811 = vmatpush.bf16.msra.mxu0 %v9794
        %9812 = vmatpush.bf16.msra.mxu0 %v9793
        %9813 = vmatpush.bf16.msra.mxu0 %v9792
        %9814 = vmatpush.bf16.msra.mxu0 %v9791
        %9815 = vmatmul.bf16.gmra.mxu0 %v9757
        %v9816 = vpop.f32.mrf.mxu0
        %v9817 = vadd.f32 0.0, %v9816
        %v9818 = vpop.f32.mrf.mxu0
        %9819 = vdwg.mxu0
        %v9820 = vadd.f32 %v9725, %v9817
        %v9821 = vld [vmem:[%s6] sm:$0x1]
        %v9823 = vperm.slane %v9821, 0
        %v9825 = vadd.f32 %v9820, %v9823
        %9826 = vst [vmem:[#allocation4] sm:$0xff] %v9825
        %v9827 = vld [vmem:[%s385] sm:$0xff]
        %v9828 = vld [vmem:[%s385 + $0x8] sm:$0xff]
        %v9829 = vld [vmem:[%s385 + $0x10] sm:$0xff]
        %v9830 = vld [vmem:[%s385 + $0x18] sm:$0xff]
        %v9831 = vld [vmem:[%s385 + $0x20] sm:$0xff]
        %v9832 = vld [vmem:[%s385 + $0x28] sm:$0xff]
        %v9833 = vld [vmem:[%s385 + $0x30] sm:$0xff]
        %v9834 = vld [vmem:[%s385 + $0x38] sm:$0xff]
        %v9835 = vld [vmem:[%s385 + $0x40] sm:$0x3f]
        %v9836 = vld [vmem:[%s385 + $0x48] sm:$0x3f]
        %v9837 = vld [vmem:[%s385 + $0x50] sm:$0x3f]
        %v9838 = vld [vmem:[%s385 + $0x58] sm:$0x3f]
        %v9839 = vld [vmem:[%s385] sm:$0xfe]
        %v9840 = vld [vmem:[%s385 + $0x8] sm:$0xfe]
        %v9841 = vld [vmem:[%s385 + $0x10] sm:$0xfe]
        %v9842 = vld [vmem:[%s385 + $0x18] sm:$0xfe]
        %v9843 = vld [vmem:[%s385 + $0x40] sm:$0x7f]
        %v9844 = vld [vmem:[%s385 + $0x48] sm:$0x7f]
        %v9845 = vld [vmem:[%s385 + $0x50] sm:$0x7f]
        %v9846 = vld [vmem:[%s385 + $0x58] sm:$0x7f]
        %vm9859 = vcmask 1046528
        %v9860 = vrot.slane %v9839, 1
        %v9861 = vrot.slane %v9831, 1
        %v9862 = vsel %vm9859, %v9860, %v9861
        %v9863 = vrot.slane %v9840, 1
        %v9864 = vrot.slane %v9832, 1
        %v9865 = vsel %vm9859, %v9863, %v9864
        %v9866 = vrot.slane %v9841, 1
        %v9867 = vrot.slane %v9833, 1
        %v9868 = vsel %vm9859, %v9866, %v9867
        %v9869 = vrot.slane %v9842, 1
        %v9870 = vrot.slane %v9834, 1
        %v9871 = vsel %vm9859, %v9869, %v9870
        %v9872 = vrot.slane %v9843, 1
        %v9873 = vsel %vm9859, %v9861, %v9872
        %v9874 = vrot.slane %v9844, 1
        %v9875 = vsel %vm9859, %v9864, %v9874
        %v9876 = vrot.slane %v9845, 1
        %v9877 = vsel %vm9859, %v9867, %v9876
        %v9878 = vrot.slane %v9846, 1
        %v9879 = vsel %vm9859, %v9870, %v9878
        %v9892 = vmax.f32 %v9827, %v9862
        %v9893 = vmax.f32 %v9828, %v9865
        %v9894 = vmax.f32 %v9829, %v9868
        %v9895 = vmax.f32 %v9830, %v9871
        %v9896 = vmax.f32 %v9831, %v9873
        %v9897 = vmax.f32 %v9832, %v9875
        %v9898 = vmax.f32 %v9833, %v9877
        %v9899 = vmax.f32 %v9834, %v9879
        %v9900 = vmax.f32 %v9835, %v9872
        %v9901 = vmax.f32 %v9836, %v9874
        %v9902 = vmax.f32 %v9837, %v9876
        %v9903 = vmax.f32 %v9838, %v9878
        %v9904 = vld [vmem:[%s385] sm:$0xfc]
        %v9905 = vld [vmem:[%s385 + $0x8] sm:$0xfc]
        %v9906 = vld [vmem:[%s385 + $0x10] sm:$0xfc]
        %v9907 = vld [vmem:[%s385 + $0x18] sm:$0xfc]
        %v9908 = vld [vmem:[%s385 + $0x40] sm:$0xff]
        %v9909 = vld [vmem:[%s385 + $0x48] sm:$0xff]
        %v9910 = vld [vmem:[%s385 + $0x50] sm:$0xff]
        %v9911 = vld [vmem:[%s385 + $0x58] sm:$0xff]
        %vm9920 = vcmask 1045504
        %v9921 = vrot.slane %v9904, 2
        %v9922 = vrot.slane %v9831, 2
        %v9923 = vsel %vm9920, %v9921, %v9922
        %v9924 = vrot.slane %v9905, 2
        %v9925 = vrot.slane %v9832, 2
        %v9926 = vsel %vm9920, %v9924, %v9925
        %v9927 = vrot.slane %v9906, 2
        %v9928 = vrot.slane %v9833, 2
        %v9929 = vsel %vm9920, %v9927, %v9928
        %v9930 = vrot.slane %v9907, 2
        %v9931 = vrot.slane %v9834, 2
        %v9932 = vsel %vm9920, %v9930, %v9931
        %v9933 = vrot.slane %v9908, 2
        %v9934 = vsel %vm9920, %v9922, %v9933
        %v9935 = vrot.slane %v9909, 2
        %v9936 = vsel %vm9920, %v9925, %v9935
        %v9937 = vrot.slane %v9910, 2
        %v9938 = vsel %vm9920, %v9928, %v9937
        %v9939 = vrot.slane %v9911, 2
        %v9940 = vsel %vm9920, %v9931, %v9939
        %v9953 = vmax.f32 %v9892, %v9923
        %v9954 = vmax.f32 %v9893, %v9926
        %v9955 = vmax.f32 %v9894, %v9929
        %v9956 = vmax.f32 %v9895, %v9932
        %v9957 = vmax.f32 %v9896, %v9934
        %v9958 = vmax.f32 %v9897, %v9936
        %v9959 = vmax.f32 %v9898, %v9938
        %v9960 = vmax.f32 %v9899, %v9940
        %v9961 = vmax.f32 %v9900, %v9933
        %v9962 = vmax.f32 %v9901, %v9935
        %v9963 = vmax.f32 %v9902, %v9937
        %v9964 = vmax.f32 %v9903, %v9939
        %v9965 = vld [vmem:[%s385] sm:$0xc0]
        %v9966 = vld [vmem:[%s385 + $0x8] sm:$0xc0]
        %v9967 = vld [vmem:[%s385 + $0x10] sm:$0xc0]
        %v9968 = vld [vmem:[%s385 + $0x18] sm:$0xc0]
        %v9969 = vld [vmem:[%s385 + $0x60] sm:$0xf]
        %v9970 = vld [vmem:[%s385 + $0x68] sm:$0xf]
        %v9971 = vld [vmem:[%s385 + $0x70] sm:$0xf]
        %v9972 = vld [vmem:[%s385 + $0x78] sm:$0xf]
        %vm9981 = vcmask 1041408
        %v9982 = vrot.slane %v9965, 6
        %v9983 = vrot.slane %v9831, 6
        %v9984 = vsel %vm9981, %v9982, %v9983
        %v9985 = vrot.slane %v9966, 6
        %v9986 = vrot.slane %v9832, 6
        %v9987 = vsel %vm9981, %v9985, %v9986
        %v9988 = vrot.slane %v9967, 6
        %v9989 = vrot.slane %v9833, 6
        %v9990 = vsel %vm9981, %v9988, %v9989
        %v9991 = vrot.slane %v9968, 6
        %v9992 = vrot.slane %v9834, 6
        %v9993 = vsel %vm9981, %v9991, %v9992
        %v9994 = vrot.slane %v9908, 6
        %v9995 = vsel %vm9981, %v9983, %v9994
        %v9996 = vrot.slane %v9909, 6
        %v9997 = vsel %vm9981, %v9986, %v9996
        %v9998 = vrot.slane %v9910, 6
        %v9999 = vsel %vm9981, %v9989, %v9998
        %v10000 = vrot.slane %v9911, 6
        %v10001 = vsel %vm9981, %v9992, %v10000
        %v10002 = vrot.slane %v9969, 6
        %v10003 = vsel %vm9981, %v9994, %v10002
        %v10004 = vrot.slane %v9970, 6
        %v10005 = vsel %vm9981, %v9996, %v10004
        %v10006 = vrot.slane %v9971, 6
        %v10007 = vsel %vm9981, %v9998, %v10006
        %v10008 = vrot.slane %v9972, 6
        %v10009 = vsel %vm9981, %v10000, %v10008
        %v10022 = vmax.f32 %v9953, %v9984
        %v10023 = vmax.f32 %v9954, %v9987
        %v10024 = vmax.f32 %v9955, %v9990
        %v10025 = vmax.f32 %v9956, %v9993
        %v10026 = vmax.f32 %v9957, %v9995
        %v10027 = vmax.f32 %v9958, %v9997
        %v10028 = vmax.f32 %v9959, %v9999
        %v10029 = vmax.f32 %v9960, %v10001
        %v10030 = vmax.f32 %v9961, %v10003
        %v10031 = vmax.f32 %v9962, %v10005
        %v10032 = vmax.f32 %v9963, %v10007
        %v10033 = vmax.f32 %v9964, %v10009
        %v10034 = vld [vmem:[%s385] sm:$0x80]
        %v10035 = vld [vmem:[%s385 + $0x8] sm:$0x80]
        %v10036 = vld [vmem:[%s385 + $0x10] sm:$0x80]
        %v10037 = vld [vmem:[%s385 + $0x18] sm:$0x80]
        %v10038 = vld [vmem:[%s385 + $0x60] sm:$0x1f]
        %v10039 = vld [vmem:[%s385 + $0x68] sm:$0x1f]
        %v10040 = vld [vmem:[%s385 + $0x70] sm:$0x1f]
        %v10041 = vld [vmem:[%s385 + $0x78] sm:$0x1f]
        %vm10050 = vcmask 1040384
        %v10051 = vrot.slane %v10034, 7
        %v10052 = vrot.slane %v9831, 7
        %v10053 = vsel %vm10050, %v10051, %v10052
        %v10054 = vrot.slane %v10035, 7
        %v10055 = vrot.slane %v9832, 7
        %v10056 = vsel %vm10050, %v10054, %v10055
        %v10057 = vrot.slane %v10036, 7
        %v10058 = vrot.slane %v9833, 7
        %v10059 = vsel %vm10050, %v10057, %v10058
        %v10060 = vrot.slane %v10037, 7
        %v10061 = vrot.slane %v9834, 7
        %v10062 = vsel %vm10050, %v10060, %v10061
        %v10063 = vrot.slane %v9908, 7
        %v10064 = vsel %vm10050, %v10052, %v10063
        %v10065 = vrot.slane %v9909, 7
        %v10066 = vsel %vm10050, %v10055, %v10065
        %v10067 = vrot.slane %v9910, 7
        %v10068 = vsel %vm10050, %v10058, %v10067
        %v10069 = vrot.slane %v9911, 7
        %v10070 = vsel %vm10050, %v10061, %v10069
        %v10071 = vrot.slane %v10038, 7
        %v10072 = vsel %vm10050, %v10063, %v10071
        %v10073 = vrot.slane %v10039, 7
        %v10074 = vsel %vm10050, %v10065, %v10073
        %v10075 = vrot.slane %v10040, 7
        %v10076 = vsel %vm10050, %v10067, %v10075
        %v10077 = vrot.slane %v10041, 7
        %v10078 = vsel %vm10050, %v10069, %v10077
        %v10091 = vmax.f32 %v10022, %v10053
        %v10092 = vmax.f32 %v10023, %v10056
        %v10093 = vmax.f32 %v10024, %v10059
        %v10094 = vmax.f32 %v10025, %v10062
        %v10095 = vmax.f32 %v10026, %v10064
        %v10096 = vmax.f32 %v10027, %v10066
        %v10097 = vmax.f32 %v10028, %v10068
        %v10098 = vmax.f32 %v10029, %v10070
        %v10099 = vmax.f32 %v10030, %v10072
        %v10100 = vmax.f32 %v10031, %v10074
        %v10101 = vmax.f32 %v10032, %v10076
        %v10102 = vmax.f32 %v10033, %v10078
        %v10103 = vld [vmem:[%s385 + $0x60] sm:$0x3f]
        %v10104 = vld [vmem:[%s385 + $0x68] sm:$0x3f]
        %v10105 = vld [vmem:[%s385 + $0x70] sm:$0x3f]
        %v10106 = vld [vmem:[%s385 + $0x78] sm:$0x3f]
        %v10107 = vmax.f32 %v10091, %v9831
        %v10108 = vmax.f32 %v10092, %v9832
        %v10109 = vmax.f32 %v10093, %v9833
        %v10110 = vmax.f32 %v10094, %v9834
        %v10111 = vmax.f32 %v10095, %v9908
        %v10112 = vmax.f32 %v10096, %v9909
        %v10113 = vmax.f32 %v10097, %v9910
        %v10114 = vmax.f32 %v10098, %v9911
        %v10115 = vmax.f32 %v10099, %v10103
        %v10116 = vmax.f32 %v10100, %v10104
        %v10117 = vmax.f32 %v10101, %v10105
        %v10118 = vmax.f32 %v10102, %v10106
        %v10119 = vld [vmem:[%s385 + $0x20] sm:$0xf0]
        %v10120 = vld [vmem:[%s385 + $0x28] sm:$0xf0]
        %v10121 = vld [vmem:[%s385 + $0x30] sm:$0xf0]
        %v10122 = vld [vmem:[%s385 + $0x38] sm:$0xf0]
        %v10123 = vld [vmem:[%s385 + $0x60] sm:$0xff]
        %v10124 = vld [vmem:[%s385 + $0x68] sm:$0xff]
        %v10125 = vld [vmem:[%s385 + $0x70] sm:$0xff]
        %v10126 = vld [vmem:[%s385 + $0x78] sm:$0xff]
        %v10127 = vld [vmem:[%s385 + $0x80] sm:$0x3]
        %v10128 = vld [vmem:[%s385 + $0x88] sm:$0x3]
        %v10129 = vld [vmem:[%s385 + $0x90] sm:$0x3]
        %v10130 = vld [vmem:[%s385 + $0x98] sm:$0x3]
        %vm10143 = vcmask 1043456
        %v10144 = vrot.slane %v10119, 4
        %v10145 = vrot.slane %v9908, 4
        %v10146 = vsel %vm10143, %v10144, %v10145
        %v10147 = vrot.slane %v10120, 4
        %v10148 = vrot.slane %v9909, 4
        %v10149 = vsel %vm10143, %v10147, %v10148
        %v10150 = vrot.slane %v10121, 4
        %v10151 = vrot.slane %v9910, 4
        %v10152 = vsel %vm10143, %v10150, %v10151
        %v10153 = vrot.slane %v10122, 4
        %v10154 = vrot.slane %v9911, 4
        %v10155 = vsel %vm10143, %v10153, %v10154
        %v10156 = vrot.slane %v10123, 4
        %v10157 = vsel %vm10143, %v10145, %v10156
        %v10158 = vrot.slane %v10124, 4
        %v10159 = vsel %vm10143, %v10148, %v10158
        %v10160 = vrot.slane %v10125, 4
        %v10161 = vsel %vm10143, %v10151, %v10160
        %v10162 = vrot.slane %v10126, 4
        %v10163 = vsel %vm10143, %v10154, %v10162
        %v10164 = vrot.slane %v10127, 4
        %v10165 = vsel %vm10143, %v10156, %v10164
        %v10166 = vrot.slane %v10128, 4
        %v10167 = vsel %vm10143, %v10158, %v10166
        %v10168 = vrot.slane %v10129, 4
        %v10169 = vsel %vm10143, %v10160, %v10168
        %v10170 = vrot.slane %v10130, 4
        %v10171 = vsel %vm10143, %v10162, %v10170
        %v10184 = vmax.f32 %v10107, %v10146
        %v10185 = vmax.f32 %v10108, %v10149
        %v10186 = vmax.f32 %v10109, %v10152
        %v10187 = vmax.f32 %v10110, %v10155
        %v10188 = vmax.f32 %v10111, %v10157
        %v10189 = vmax.f32 %v10112, %v10159
        %v10190 = vmax.f32 %v10113, %v10161
        %v10191 = vmax.f32 %v10114, %v10163
        %v10192 = vmax.f32 %v10115, %v10165
        %v10193 = vmax.f32 %v10116, %v10167
        %v10194 = vmax.f32 %v10117, %v10169
        %v10195 = vmax.f32 %v10118, %v10171
        %v10196 = vld [vmem:[%s385 + $0x20] sm:$0xe0]
        %v10197 = vld [vmem:[%s385 + $0x28] sm:$0xe0]
        %v10198 = vld [vmem:[%s385 + $0x30] sm:$0xe0]
        %v10199 = vld [vmem:[%s385 + $0x38] sm:$0xe0]
        %v10200 = vld [vmem:[%s385 + $0x80] sm:$0x7]
        %v10201 = vld [vmem:[%s385 + $0x88] sm:$0x7]
        %v10202 = vld [vmem:[%s385 + $0x90] sm:$0x7]
        %v10203 = vld [vmem:[%s385 + $0x98] sm:$0x7]
        %vm10212 = vcmask 1042432
        %v10213 = vrot.slane %v10196, 5
        %v10214 = vrot.slane %v9908, 5
        %v10215 = vsel %vm10212, %v10213, %v10214
        %v10216 = vrot.slane %v10197, 5
        %v10217 = vrot.slane %v9909, 5
        %v10218 = vsel %vm10212, %v10216, %v10217
        %v10219 = vrot.slane %v10198, 5
        %v10220 = vrot.slane %v9910, 5
        %v10221 = vsel %vm10212, %v10219, %v10220
        %v10222 = vrot.slane %v10199, 5
        %v10223 = vrot.slane %v9911, 5
        %v10224 = vsel %vm10212, %v10222, %v10223
        %v10225 = vrot.slane %v10123, 5
        %v10226 = vsel %vm10212, %v10214, %v10225
        %v10227 = vrot.slane %v10124, 5
        %v10228 = vsel %vm10212, %v10217, %v10227
        %v10229 = vrot.slane %v10125, 5
        %v10230 = vsel %vm10212, %v10220, %v10229
        %v10231 = vrot.slane %v10126, 5
        %v10232 = vsel %vm10212, %v10223, %v10231
        %v10233 = vrot.slane %v10200, 5
        %v10234 = vsel %vm10212, %v10225, %v10233
        %v10235 = vrot.slane %v10201, 5
        %v10236 = vsel %vm10212, %v10227, %v10235
        %v10237 = vrot.slane %v10202, 5
        %v10238 = vsel %vm10212, %v10229, %v10237
        %v10239 = vrot.slane %v10203, 5
        %v10240 = vsel %vm10212, %v10231, %v10239
        %v10253 = vmax.f32 %v10184, %v10215
        %v10254 = vmax.f32 %v10185, %v10218
        %v10255 = vmax.f32 %v10186, %v10221
        %v10256 = vmax.f32 %v10187, %v10224
        %v10257 = vmax.f32 %v10188, %v10226
        %v10258 = vmax.f32 %v10189, %v10228
        %v10259 = vmax.f32 %v10190, %v10230
        %v10260 = vmax.f32 %v10191, %v10232
        %v10261 = vmax.f32 %v10192, %v10234
        %v10262 = vmax.f32 %v10193, %v10236
        %v10263 = vmax.f32 %v10194, %v10238
        %v10264 = vmax.f32 %v10195, %v10240
        %v10265 = vld [vmem:[%s385 + $0x20] sm:$0xc0]
        %v10266 = vld [vmem:[%s385 + $0x28] sm:$0xc0]
        %v10267 = vld [vmem:[%s385 + $0x30] sm:$0xc0]
        %v10268 = vld [vmem:[%s385 + $0x38] sm:$0xc0]
        %v10269 = vld [vmem:[%s385 + $0x80] sm:$0xf]
        %v10270 = vld [vmem:[%s385 + $0x88] sm:$0xf]
        %v10271 = vld [vmem:[%s385 + $0x90] sm:$0xf]
        %v10272 = vld [vmem:[%s385 + $0x98] sm:$0xf]
        %v10281 = vrot.slane %v10265, 6
        %v10282 = vsel %vm9981, %v10281, %v9994
        %v10283 = vrot.slane %v10266, 6
        %v10284 = vsel %vm9981, %v10283, %v9996
        %v10285 = vrot.slane %v10267, 6
        %v10286 = vsel %vm9981, %v10285, %v9998
        %v10287 = vrot.slane %v10268, 6
        %v10288 = vsel %vm9981, %v10287, %v10000
        %v10289 = vrot.slane %v10123, 6
        %v10290 = vsel %vm9981, %v9994, %v10289
        %v10291 = vrot.slane %v10124, 6
        %v10292 = vsel %vm9981, %v9996, %v10291
        %v10293 = vrot.slane %v10125, 6
        %v10294 = vsel %vm9981, %v9998, %v10293
        %v10295 = vrot.slane %v10126, 6
        %v10296 = vsel %vm9981, %v10000, %v10295
        %v10297 = vrot.slane %v10269, 6
        %v10298 = vsel %vm9981, %v10289, %v10297
        %v10299 = vrot.slane %v10270, 6
        %v10300 = vsel %vm9981, %v10291, %v10299
        %v10301 = vrot.slane %v10271, 6
        %v10302 = vsel %vm9981, %v10293, %v10301
        %v10303 = vrot.slane %v10272, 6
        %v10304 = vsel %vm9981, %v10295, %v10303
        %v10317 = vmax.f32 %v10253, %v10282
        %v10318 = vmax.f32 %v10254, %v10284
        %v10319 = vmax.f32 %v10255, %v10286
        %v10320 = vmax.f32 %v10256, %v10288
        %v10321 = vmax.f32 %v10257, %v10290
        %v10322 = vmax.f32 %v10258, %v10292
        %v10323 = vmax.f32 %v10259, %v10294
        %v10324 = vmax.f32 %v10260, %v10296
        %v10325 = vmax.f32 %v10261, %v10298
        %v10326 = vmax.f32 %v10262, %v10300
        %v10327 = vmax.f32 %v10263, %v10302
        %v10328 = vmax.f32 %v10264, %v10304
        %10329 = vst [vmem:[#allocation5] sm:$0xff] %v10317
        %10330 = vst [vmem:[#allocation5 + $0x8] sm:$0xff] %v10318
        %10331 = vst [vmem:[#allocation5 + $0x10] sm:$0xff] %v10319
        %10332 = vst.msk [vmem:[#allocation5 + $0x18] sm:$0xff] %vm987, %v10320
        %10333 = vst [vmem:[#allocation5 + $0x20] sm:$0xff] %v10321
        %10334 = vst [vmem:[#allocation5 + $0x28] sm:$0xff] %v10322
        %10335 = vst [vmem:[#allocation5 + $0x30] sm:$0xff] %v10323
        %10336 = vst.msk [vmem:[#allocation5 + $0x38] sm:$0xff] %vm987, %v10324
        %10337 = vst [vmem:[#allocation5 + $0x40] sm:$0x3f] %v10325
        %10338 = vst [vmem:[#allocation5 + $0x48] sm:$0x3f] %v10326
        %10339 = vst [vmem:[#allocation5 + $0x50] sm:$0x3f] %v10327
        %10340 = vst.msk [vmem:[#allocation5 + $0x58] sm:$0x3f] %vm8940, %v10328
        %v10341 = vld [vmem:[#allocation5] ss:$8 sm:$0xf]
        %v10342 = vlaneseq
        %vm10343 = vcmp.ge.s32.totalorder %v10342, 0
        %vm10344 = vcmp.lt.s32.totalorder %v10342, 448
        %vm10345 = vmand %vm10343, %vm10344
        %10346 = vst.msk [vmem:[%s359] ss:$4 sm:$0xf] %vm10345, %v10341
        %v10347 = vld [vmem:[#allocation3] ss:$8 sm:$0x3]
        %vm10348 = vcmp.lt.s32.totalorder %v10342, 192
        %vm10349 = vmand %vm10343, %vm10348
        %10350 = vst.msk [vmem:[%s366] ss:$4 sm:$0x3] %vm10349, %v10347
        %v10351 = vld [vmem:[#allocation3 + $0x8] ss:$0 sm:$0xff]
        %v10352 = vld [vmem:[#allocation3 + $0x10] ss:$0 sm:$0xff]
        %10355 = vrot.lane.b32.xlu0 %v10351, 64
        %v10356 = vpop.permute.xlu0 %10355
        %10357 = vrot.lane.b32.xlu0 %v10352, 64
        %v10358 = vpop.permute.xlu0 %10357
        %v10359 = vsel %vm987, %v10356, %v10358
        %10361 = vst [vmem:[%s373] sm:$0x1] %v10359
        %v10362 = vld [vmem:[#allocation4] sm:$0x1]
        %10363 = vst [vmem:[%s380] sm:$0x1] %v10362
        %s10364 = scalar_lea.vmem [#allocation5], 3
        %v10365 = vld [vmem:[%s10364] ss:$8 sm:$0xf]
        %s10366 = scalar_lea.vmem %s359, 1 [#allocation6]
        %10367 = vst.msk [vmem:[%s10366] ss:$4 sm:$0xf] %vm10345, %v10365
        %s10368 = scalar_lea.vmem [#allocation3], 2
        %v10369 = vld [vmem:[%s10368] ss:$8 sm:$0x3]
        %s10370 = scalar_lea.vmem %s366, 1 [#allocation8]
        %10371 = vst.msk [vmem:[%s10370] ss:$4 sm:$0x3] %vm10349, %v10369
        %v10372 = vld [vmem:[#allocation3 + $0xa] ss:$0 sm:$0xff]
        %v10373 = vld [vmem:[#allocation3 + $0x12] ss:$0 sm:$0xff]
        %10376 = vrot.lane.b32.xlu0 %v10372, 64
        %v10377 = vpop.permute.xlu0 %10376
        %10378 = vrot.lane.b32.xlu0 %v10373, 64
        %v10379 = vpop.permute.xlu0 %10378
        %v10380 = vsel %vm987, %v10377, %v10379
        %10382 = vst [vmem:[%s373 + $0x1] sm:$0x1] %v10380
        %v10383 = vld [vmem:[#allocation4 + $0x1] sm:$0x1]
        %10384 = vst [vmem:[%s380 + $0x1] sm:$0x1] %v10383
        %s10385 = scalar_lea.vmem [#allocation5], 66
        %v10386 = vld [vmem:[%s10385] ss:$8 sm:$0xf]
        %s10387 = scalar_lea.vmem %s359, 2 [#allocation6]
        %10388 = vst.msk [vmem:[%s10387] ss:$4 sm:$0xf] %vm10345, %v10386
        %s10389 = scalar_lea.vmem [#allocation3], 36
        %v10390 = vld [vmem:[%s10389] ss:$8 sm:$0x3]
        %s10391 = scalar_lea.vmem %s366, 2 [#allocation8]
        %10392 = vst.msk [vmem:[%s10391] ss:$4 sm:$0x3] %vm10349, %v10390
        %v10393 = vld [vmem:[#allocation3 + $0x2c] ss:$0 sm:$0xff]
        %v10394 = vld [vmem:[#allocation3 + $0x34] ss:$0 sm:$0xff]
        %10397 = vrot.lane.b32.xlu0 %v10393, 64
        %v10398 = vpop.permute.xlu0 %10397
        %10399 = vrot.lane.b32.xlu0 %v10394, 64
        %v10400 = vpop.permute.xlu0 %10399
        %v10401 = vsel %vm987, %v10398, %v10400
        %10403 = vst [vmem:[%s373 + $0x2] sm:$0x1] %v10401
        %v10404 = vld [vmem:[#allocation4 + $0x6] sm:$0x1]
        %10405 = vst [vmem:[%s380 + $0x2] sm:$0x1] %v10404
        %s10406 = scalar_lea.vmem [#allocation5], 69
        %v10407 = vld [vmem:[%s10406] ss:$8 sm:$0xf]
        %s10408 = scalar_lea.vmem %s359, 3 [#allocation6]
        %10409 = vst.msk [vmem:[%s10408] ss:$4 sm:$0xf] %vm10345, %v10407
        %s10410 = scalar_lea.vmem [#allocation3], 38
        %v10411 = vld [vmem:[%s10410] ss:$8 sm:$0x3]
        %s10412 = scalar_lea.vmem %s366, 3 [#allocation8]
        %10413 = vst.msk [vmem:[%s10412] ss:$4 sm:$0x3] %vm10349, %v10411
        %v10414 = vld [vmem:[#allocation3 + $0x2e] ss:$0 sm:$0xff]
        %v10415 = vld [vmem:[#allocation3 + $0x36] ss:$0 sm:$0xff]
        %10418 = vrot.lane.b32.xlu0 %v10414, 64
        %v10419 = vpop.permute.xlu0 %10418
        %10420 = vrot.lane.b32.xlu0 %v10415, 64
        %v10421 = vpop.permute.xlu0 %10420
        %v10422 = vsel %vm987, %v10419, %v10421
        %10424 = vst [vmem:[%s373 + $0x3] sm:$0x1] %v10422
        %v10425 = vld [vmem:[#allocation4 + $0x7] sm:$0x1]
        %10426 = vst [vmem:[%s380 + $0x3] sm:$0x1] %v10425
        %s10427 = sand.u32 %s191, 1
        %s10428 = scalar_lea.sflag [#allocation7], %s10427
        %s10429 = sand.u32 %s191, 1
        %s10430 = smul.addr %s10429, 16
        %s10431 = scalar_lea.vmem [#allocation6], %s10430
        %s10432 = sand.u32 %s31, 1
        %s10433 = scalar_lea.sflag [#allocation9], %s10432
        %s10434 = sand.u32 %s217, 1
        %s10435 = smul.addr %s10434, 8
        %s10436 = scalar_lea.vmem [#allocation8], %s10435
        %s10437 = sand.u32 %s31, 1
        %s10438 = scalar_lea.sflag [#allocation9], %s10437
        %s10439 = sand.u32 %s243, 1
        %s10440 = smul.addr %s10439, 4
        %s10441 = scalar_lea.vmem [#allocation10], %s10440
        %s10442 = sand.u32 %s269, 1
        %s10443 = scalar_lea.sflag [#allocation12], %s10442
        %s10444 = sand.u32 %s269, 1
        %s10445 = smul.addr %s10444, 4
        %s10446 = scalar_lea.vmem [#allocation11], %s10445
        // Predicated region
        $region49: #{tpu_custom_call.1} parent=47 // pred_check
          %p10447 = pneg %p201
        $region50: #{tpu_custom_call.1} parent=47 // pred_check_branch
          %10449 = sbr.rel (%p10447) target = $region52
        $region51: #{tpu_custom_call.1} parent=47 // pred_region
          %10451 = vsyncadd %s10428, 0
          %s10452 = smul.addr %s31, 4
          %s10453 = smul.addr %s10452, 4
          %s10454 = scalar_lea.hbm %s7, %s10453
          %s10456 = sshll.u32 %s10431, 4
          %s10457 = int_to_ptr.vmem [resolvable:$true] %s10456
          %s10458 = sshll.u32 %s10454, 4
          %s10459 = int_to_ptr.hbm [resolvable:$true] %s10458
          %10461 = dma.vmem_to_hbm [thread:$0]  %s10457, 256, %s10459, %s10428
        $region52: #{tpu_custom_call.1} parent=47 // pred_fallthru
          _
        // Predicated region
        $region53: #{tpu_custom_call.1} parent=47 // pred_check
          %p10462 = pneg %p227
        $region54: #{tpu_custom_call.1} parent=47 // pred_check_branch
          %10464 = sbr.rel (%p10462) target = $region56
        $region55: #{tpu_custom_call.1} parent=47 // pred_region
          %10466 = vsyncadd %s10433, 0
          %s10467 = smul.addr %s31, 2
          %s10468 = smul.addr %s10467, 4
          %s10469 = scalar_lea.hbm %s8, %s10468
          %s10471 = sshll.u32 %s10436, 4
          %s10472 = int_to_ptr.vmem [resolvable:$true] %s10471
          %s10473 = sshll.u32 %s10469, 4
          %s10474 = int_to_ptr.hbm [resolvable:$true] %s10473
          %10476 = dma.vmem_to_hbm [thread:$0]  %s10472, 128, %s10474, %s10433
        $region56: #{tpu_custom_call.1} parent=47 // pred_fallthru
          _
        // Predicated region
        $region57: #{tpu_custom_call.1} parent=47 // pred_check
          %p10477 = pneg %p253
        $region58: #{tpu_custom_call.1} parent=47 // pred_check_branch
          %10479 = sbr.rel (%p10477) target = $region60
        $region59: #{tpu_custom_call.1} parent=47 // pred_region
          %10481 = vsyncadd %s10438, 0
          %s10482 = smul.addr %s31, 4
          %s10483 = scalar_lea.hbm %s9, %s10482
          %s10485 = sshll.u32 %s10441, 4
          %s10486 = int_to_ptr.vmem [resolvable:$true] %s10485
          %s10487 = sshll.u32 %s10483, 4
          %s10488 = int_to_ptr.hbm [resolvable:$true] %s10487
          %10490 = dma.vmem_to_hbm [thread:$0]  %s10486, 64, %s10488, %s10438
        $region60: #{tpu_custom_call.1} parent=47 // pred_fallthru
          _
        // Predicated region
        $region61: #{tpu_custom_call.1} parent=47 // pred_check
          %p10491 = pneg %p279
        $region62: #{tpu_custom_call.1} parent=47 // pred_check_branch
          %10493 = sbr.rel (%p10491) target = $region64
        $region63: #{tpu_custom_call.1} parent=47 // pred_region
          %10495 = vsyncadd %s10443, 0
          %s10496 = smul.addr %s31, 4
          %s10497 = scalar_lea.hbm %s10, %s10496
          %s10499 = sshll.u32 %s10446, 4
          %s10500 = int_to_ptr.vmem [resolvable:$true] %s10499
          %s10501 = sshll.u32 %s10497, 4
          %s10502 = int_to_ptr.hbm [resolvable:$true] %s10501
          %10504 = dma.vmem_to_hbm [thread:$0]  %s10500, 64, %s10502, %s10443
        $region64: #{tpu_custom_call.1} parent=47 // pred_fallthru
          _
      $region48: #{tpu_custom_call.1} parent=5 // pred_fallthru
        _
      %p10505 = scmp.le.s32.totalorder 2, %s26
      // Predicated region
      $region65: #{tpu_custom_call.1} parent=5 // pred_check
        %p10506 = pneg %p10505
      $region66: #{tpu_custom_call.1} parent=5 // pred_check_branch
        %10508 = sbr.rel (%p10506) target = $region68
      $region67: #{tpu_custom_call.1} parent=5 // pred_region
        %s10509 = ssub.s32 %s26, 2
        // Predicated region
        $region69: #{tpu_custom_call.1} parent=67 // pred_check
          %p10510 = pneg %p207
        $region70: #{tpu_custom_call.1} parent=67 // pred_check_branch
          %10512 = sbr.rel (%p10510) target = $region72
        $region71: #{tpu_custom_call.1} parent=67 // pred_region
          %s10513 = sand.u32 %s192, 1
          %s10514 = scalar_lea.sflag [#allocation7], %s10513
          %s10515 = sand.u32 %s192, 1
          %s10516 = smul.addr %s10515, 16
          %s10517 = scalar_lea.vmem [#allocation6], %s10516
          %10519 = dma.done %s10514, 256
        $region72: #{tpu_custom_call.1} parent=67 // pred_fallthru
          _
        // Predicated region
        $region73: #{tpu_custom_call.1} parent=67 // pred_check
          %p10520 = pneg %p233
        $region74: #{tpu_custom_call.1} parent=67 // pred_check_branch
          %10522 = sbr.rel (%p10520) target = $region76
        $region75: #{tpu_custom_call.1} parent=67 // pred_region
          %s10523 = sand.u32 %s32, 1
          %s10524 = scalar_lea.sflag [#allocation9], %s10523
          %s10525 = sand.u32 %s218, 1
          %s10526 = smul.addr %s10525, 8
          %s10527 = scalar_lea.vmem [#allocation8], %s10526
          %10529 = dma.done %s10524, 128
        $region76: #{tpu_custom_call.1} parent=67 // pred_fallthru
          _
        // Predicated region
        $region77: #{tpu_custom_call.1} parent=67 // pred_check
          %p10530 = pneg %p259
        $region78: #{tpu_custom_call.1} parent=67 // pred_check_branch
          %10532 = sbr.rel (%p10530) target = $region80
        $region79: #{tpu_custom_call.1} parent=67 // pred_region
          %s10533 = sand.u32 %s32, 1
          %s10534 = scalar_lea.sflag [#allocation9], %s10533
          %s10535 = sand.u32 %s244, 1
          %s10536 = smul.addr %s10535, 4
          %s10537 = scalar_lea.vmem [#allocation10], %s10536
          %10539 = dma.done %s10534, 64
        $region80: #{tpu_custom_call.1} parent=67 // pred_fallthru
          _
        // Predicated region
        $region81: #{tpu_custom_call.1} parent=67 // pred_check
          %p10540 = pneg %p285
        $region82: #{tpu_custom_call.1} parent=67 // pred_check_branch
          %10542 = sbr.rel (%p10540) target = $region84
        $region83: #{tpu_custom_call.1} parent=67 // pred_region
          %s10543 = sand.u32 %s270, 1
          %s10544 = scalar_lea.sflag [#allocation12], %s10543
          %s10545 = sand.u32 %s270, 1
          %s10546 = smul.addr %s10545, 4
          %s10547 = scalar_lea.vmem [#allocation11], %s10546
          %10549 = dma.done %s10544, 64
        $region84: #{tpu_custom_call.1} parent=67 // pred_fallthru
          _
      $region68: #{tpu_custom_call.1} parent=5 // pred_fallthru
        _
    $region6: #{tpu_custom_call.1} parent=1 // loop_footer
      %s30 = sadd.s32 1, %s26
    $region7: #{tpu_custom_call.1} parent=1 // loop_footer_branch
      %25 = sbr.rel target = $region3
    $region8: #{tpu_custom_call.1} parent=1 // loop_exit
      _
    %10550 = vsyncpa [#allocation7], 1
    %s10551 = scalar_lea.sflag [#allocation7], 1
    %10552 = vsyncpa %s10551, 1
    %10553 = vsyncpa [#allocation9], 1
    %s10554 = scalar_lea.sflag [#allocation9], 1
    %10555 = vsyncpa %s10554, 1
    %10556 = vsyncpa [#allocation12], 1
    %s10557 = scalar_lea.sflag [#allocation12], 1
    %10558 = vsyncpa %s10557, 1

</llo_original>
